<compile_context>
chip_gen: v7x
topology: tpu7x:2x2x1
jax: 0.10.0
libtpu: 0.0.40
codegen_flags: <defaults>
</compile_context>

<pallas_src>
import functools

import jax
import jax.numpy as jnp
from jax.experimental import pallas as pl
from jax.experimental.pallas import tpu as pltpu

EPS = 1e-5
VMEM_LIMIT = 32 * 1024 * 1024


def _round_up(x, m):
    return (x + m - 1) // m * m


# ---------------------------------------------------------------------------
# In-kernel helpers
# ---------------------------------------------------------------------------
def _halo_store(dst_ref, interior_bf16, *, H, W, CP):
    """Zero the 1-px halo of a (H+2, W+2, CP) scratch and store the interior.

    The halo is re-zeroed every grid step (not once under pl.when) so the
    kernel stays correct when the "parallel" batch axis is sharded across
    TensorCores (per-core scratch, per-core first step).
    TODO(synk): fold the two 1-wide column stores into W+2-wide interior row
    stores once in-register pad/concat layouts are verified under Mosaic.
    """
    dst_ref[0:1, :, :] = jnp.zeros((1, W + 2, CP), jnp.bfloat16)
    dst_ref[H + 1:H + 2, :, :] = jnp.zeros((1, W + 2, CP), jnp.bfloat16)
    dst_ref[1:H + 1, 0:1, :] = jnp.zeros((H, 1, CP), jnp.bfloat16)
    dst_ref[1:H + 1, W + 1:W + 2, :] = jnp.zeros((H, 1, CP), jnp.bfloat16)
    dst_ref[1:H + 1, 1:W + 1, :] = interior_bf16


def _conv3x3(src_ref, w_ref, *, H, W, CP):
    """3x3 conv as 9 accumulating shifted MXU matmuls (no im2col slab).

    src_ref: (H+2, W+2, CP) bf16 halo-padded activation in VMEM.
    w_ref:   (3, 3, CP, CP) bf16 weights laid out (kh, kw, c_in, c_out).
    Returns the (H*W, CP) f32 conv output.
    """
    acc = jnp.zeros((H * W, CP), jnp.float32)
    for kh in range(3):
        for kw in range(3):
            a = src_ref[kh:kh + H, kw:kw + W, :].reshape(H * W, CP)
            acc = acc + jnp.dot(a, w_ref[kh, kw],
                                preferred_element_type=jnp.float32)
    return acc


def _partial_stats(y, inv_count):
    """Per-image BN partials: (mean, centered sum of squares), both (1, CP)."""
    mu = jnp.sum(y, axis=0, keepdims=True) * inv_count
    d = y - mu
    return mu, jnp.sum(d * d, axis=0, keepdims=True)


# ---------------------------------------------------------------------------
# Kernels (one image per grid step)
# ---------------------------------------------------------------------------
def _conv1_kernel(x_ref, w1_ref, y_ref, mu_ref, m2_ref, xpad_ref, *, H, W, CP):
    _halo_store(xpad_ref, x_ref[...].astype(jnp.bfloat16), H=H, W=W, CP=CP)
    y = _conv3x3(xpad_ref, w1_ref, H=H, W=W, CP=CP)
    mu, m2 = _partial_stats(y, 1.0 / (H * W))
    y_ref[...] = y.reshape(H, W, CP)
    mu_ref[...] = mu
    m2_ref[...] = m2


def _bn_relu_conv2_kernel(y_ref, s1_ref, t1_ref, w2_ref,
                          z_ref, mu_ref, m2_ref, ypad_ref, *, H, W, CP):
    # bn1 + relu fused directly into the bf16 store feeding conv2.
    a = jnp.maximum(y_ref[...].reshape(H * W, CP) * s1_ref[...] + t1_ref[...],
                    0.0)
    _halo_store(ypad_ref, a.astype(jnp.bfloat16).reshape(H, W, CP),
                H=H, W=W, CP=CP)
    z = _conv3x3(ypad_ref, w2_ref, H=H, W=W, CP=CP)
    mu, m2 = _partial_stats(z, 1.0 / (H * W))
    z_ref[...] = z.reshape(H, W, CP)
    mu_ref[...] = mu
    m2_ref[...] = m2


def _bn_add_relu_kernel(z_ref, x_ref, s2_ref, t2_ref, o_ref, *, H, W, CP):
    z = z_ref[...].reshape(H * W, CP)
    x = x_ref[...].reshape(H * W, CP)
    o_ref[...] = jnp.maximum(z * s2_ref[...] + t2_ref[...] + x,
                             0.0).reshape(H, W, CP)


# ---------------------------------------------------------------------------
# BlockSpecs / pallas_call wrappers
# ---------------------------------------------------------------------------
def _img_spec(H, W, CP):
    return pl.BlockSpec((None, H, W, CP), lambda n: (n, 0, 0, 0))


def _stat_spec(CP):
    return pl.BlockSpec((None, 1, CP), lambda n: (n, 0, 0))


def _chan_spec(CP):
    return pl.BlockSpec((1, CP), lambda n: (0, 0))


def _weight_spec(CP):
    return pl.BlockSpec((3, 3, CP, CP), lambda n: (0, 0, 0, 0))


def _compiler_params():
    return pltpu.CompilerParams(dimension_semantics=("parallel",),
                                vmem_limit_bytes=VMEM_LIMIT)


def _conv1_pass(x_cp, w1, *, N, H, W, CP, C):
    flops = 2 * N * H * W * (9 * C) * C          # real channels, not CP
    bytes_accessed = (x_cp.size * 4 + w1.size * 2
                      + N * H * W * CP * 4 + 2 * N * CP * 4)
    return pl.pallas_call(
        functools.partial(_conv1_kernel, H=H, W=W, CP=CP),
        grid=(N,),
        in_specs=[_img_spec(H, W, CP), _weight_spec(CP)],
        out_specs=(_img_spec(H, W, CP), _stat_spec(CP), _stat_spec(CP)),
        out_shape=(jax.ShapeDtypeStruct((N, H, W, CP), jnp.float32),
                   jax.ShapeDtypeStruct((N, 1, CP), jnp.float32),
                   jax.ShapeDtypeStruct((N, 1, CP), jnp.float32)),
        scratch_shapes=[pltpu.VMEM((H + 2, W + 2, CP), jnp.bfloat16)],
        compiler_params=_compiler_params(),
        cost_estimate=pl.CostEstimate(flops=flops, transcendentals=0,
                                      bytes_accessed=int(bytes_accessed)),
    )(x_cp, w1)


def _conv2_pass(y1, scale1, shift1, w2, *, N, H, W, CP, C):
    flops = 2 * N * H * W * (9 * C) * C
    bytes_accessed = (y1.size * 4 + w2.size * 2 + 2 * CP * 4
                      + N * H * W * CP * 4 + 2 * N * CP * 4)
    return pl.pallas_call(
        functools.partial(_bn_relu_conv2_kernel, H=H, W=W, CP=CP),
        grid=(N,),
        in_specs=[_img_spec(H, W, CP), _chan_spec(CP), _chan_spec(CP),
                  _weight_spec(CP)],
        out_specs=(_img_spec(H, W, CP), _stat_spec(CP), _stat_spec(CP)),
        out_shape=(jax.ShapeDtypeStruct((N, H, W, CP), jnp.float32),
                   jax.ShapeDtypeStruct((N, 1, CP), jnp.float32),
                   jax.ShapeDtypeStruct((N, 1, CP), jnp.float32)),
        scratch_shapes=[pltpu.VMEM((H + 2, W + 2, CP), jnp.bfloat16)],
        compiler_params=_compiler_params(),
        cost_estimate=pl.CostEstimate(flops=flops, transcendentals=0,
                                      bytes_accessed=int(bytes_accessed)),
    )(y1, scale1, shift1, w2)


def _epilogue_pass(z, x_cp, scale2, shift2, *, N, H, W, CP):
    bytes_accessed = 3 * N * H * W * CP * 4 + 2 * CP * 4
    return pl.pallas_call(
        functools.partial(_bn_add_relu_kernel, H=H, W=W, CP=CP),
        grid=(N,),
        in_specs=[_img_spec(H, W, CP), _img_spec(H, W, CP),
                  _chan_spec(CP), _chan_spec(CP)],
        out_specs=_img_spec(H, W, CP),
        out_shape=jax.ShapeDtypeStruct((N, H, W, CP), jnp.float32),
        compiler_params=_compiler_params(),
        cost_estimate=pl.CostEstimate(flops=3 * N * H * W * CP,
                                      transcendentals=0,
                                      bytes_accessed=int(bytes_accessed)),
    )(z, x_cp, scale2, shift2)


# ---------------------------------------------------------------------------
# Host-side helpers
# ---------------------------------------------------------------------------
def _combine_bn(mu_i, m2_i, count_per_image, gamma, beta):
    """Chan parallel-variance combine of per-image partials -> (scale, shift)."""
    n_img = mu_i.shape[0]
    total = n_img * count_per_image
    mean = jnp.mean(mu_i, axis=0)                                    # (1, CP)
    m2 = (jnp.sum(m2_i, axis=0)
          + count_per_image * jnp.sum(jnp.square(mu_i - mean), axis=0))
    var = m2 / total                 # biased, as in torch BN training forward
    scale = gamma * jax.lax.rsqrt(var + EPS)
    shift = beta - mean * scale
    return scale, shift


def _pack_conv_weight(w_oihw, CP):
    """OIHW conv weight -> (3, 3, CP, CP) bf16 (kh, kw, c_in, c_out)."""
    c_out, c_in, _, _ = w_oihw.shape
    w = jnp.transpose(jnp.asarray(w_oihw, jnp.float32), (2, 3, 1, 0))
    w = jnp.pad(w, ((0, 0), (0, 0), (0, CP - c_in), (0, CP - c_out)))
    return w.astype(jnp.bfloat16)


def _pad_vec(v, CP):
    v = jnp.asarray(v, jnp.float32).reshape(-1)
    return jnp.pad(v, (0, CP - v.shape[0])).reshape(1, CP)


def basic_block_forward(x_nchw, params):
    """x_nchw: (N, Cin, H, W) f32; returns (N, C, H, W) f32."""
    N, Cin, H, W = x_nchw.shape
    C = params["w1"].shape[0]
    assert Cin == C, "identity shortcut requires dim_in == dim"
    CP = _round_up(C, 128)       # lane-dense channel width

    # NCHW -> NHWC relayout fused with the channel pad (single HBM copy);
    # spatial halo padding now happens inside the kernels.
    # TODO(synk): keep activations NHWC across blocks at the model level so
    # this relayout happens once per network, not once per block.
    x_cp = jnp.pad(jnp.transpose(x_nchw, (0, 2, 3, 1)).astype(jnp.float32),
                   ((0, 0), (0, 0), (0, 0), (0, CP - C)))

    w1 = _pack_conv_weight(params["w1"], CP)
    w2 = _pack_conv_weight(params["w2"], CP)
    g1, b1 = _pad_vec(params["g1"], CP), _pad_vec(params["b1"], CP)
    g2, b2 = _pad_vec(params["g2"], CP), _pad_vec(params["b2"], CP)

    # Pass 1: conv1 + per-image BN partial statistics.
    y1, mu1, m2_1 = _conv1_pass(x_cp, w1, N=N, H=H, W=W, CP=CP, C=C)
    scale1, shift1 = _combine_bn(mu1, m2_1, H * W, g1, b1)

    # Pass 2: bn1 + relu fused into conv2 + per-image BN partial statistics.
    z, mu2, m2_2 = _conv2_pass(y1, scale1, shift1, w2,
                               N=N, H=H, W=W, CP=CP, C=C)
    scale2, shift2 = _combine_bn(mu2, m2_2, H * W, g2, b2)

    # Pass 3: bn2 + identity residual + relu.
    out = _epilogue_pass(z, x_cp, scale2, shift2, N=N, H=H, W=W, CP=CP)

    # Drop padded channels, back to NCHW.
    return jnp.transpose(out[:, :, :, :C], (0, 3, 1, 2))


def basic_block_reference(x, params, conv_dtype=jnp.float32):
    """Plain-JAX NCHW reference (matches PyTorch BasicBlock forward).

    conv_dtype=jnp.bfloat16 gives a precision-matched reference for the
    kernel's bf16 MXU path (accumulation stays f32).
    """
    def conv(x_, w):
        return jax.lax.conv_general_dilated(
            x_.astype(conv_dtype),
            jnp.asarray(w, jnp.float32).astype(conv_dtype),
            window_strides=(1, 1), padding=((1, 1), (1, 1)),
            dimension_numbers=("NCHW", "OIHW", "NCHW"),
            preferred_element_type=jnp.float32)

    def bn(y, g, b):
        mean = jnp.mean(y, axis=(0, 2, 3), keepdims=True)
        var = jnp.mean(jnp.square(y - mean), axis=(0, 2, 3), keepdims=True)
        return ((y - mean) * jax.lax.rsqrt(var + EPS) * g.reshape(1, -1, 1, 1)
                + b.reshape(1, -1, 1, 1))

    y = jnp.maximum(bn(conv(x, params["w1"]), params["g1"], params["b1"]), 0.0)
    z = bn(conv(y, params["w2"]), params["g2"], params["b2"])
    return jnp.maximum(z + x, 0.0)


if __name__ == "__main__":
    N, C, H, W = 2, 4, 16, 16  # dim_in == dim == 4, stride=1, downsample=None

    key = jax.random.PRNGKey(0)
    kx, kw1, kw2, kg1, kb1, kg2, kb2 = jax.random.split(key, 7)

    x = jax.random.normal(kx, (N, C, H, W), dtype=jnp.float32)
    params = {
        "w1": 0.1 * jax.random.normal(kw1, (C, C, 3, 3), dtype=jnp.float32),
        "w2": 0.1 * jax.random.normal(kw2, (C, C, 3, 3), dtype=jnp.float32),
        # BN affine params (PyTorch inits to 1/0; perturb deterministically).
        "g1": 1.0 + 0.1 * jax.random.normal(kg1, (C,), dtype=jnp.float32),
        "b1": 0.1 * jax.random.normal(kb1, (C,), dtype=jnp.float32),
        "g2": 1.0 + 0.1 * jax.random.normal(kg2, (C,), dtype=jnp.float32),
        "b2": 0.1 * jax.random.normal(kb2, (C,), dtype=jnp.float32),
    }

    fwd = jax.jit(basic_block_forward)
    out = jax.block_until_ready(fwd(x, params))
    assert out.shape == (N, C, H, W)

    # Tight check against a precision-matched reference (bf16 conv operands,
    # f32 accumulation — same arithmetic as the kernel's MXU path).
    ref_bf16 = jax.block_until_ready(
        basic_block_reference(x, params, conv_dtype=jnp.bfloat16))
    assert jnp.allclose(out, ref_bf16, atol=1e-2, rtol=1e-2), (
        float(jnp.max(jnp.abs(out - ref_bf16))))

    # Sanity check against the pure-f32 module semantics (looser tolerance
    # only accounts for the bf16 conv operands; BN/residual/ReLU are f32).
    ref_f32 = jax.block_until_ready(basic_block_reference(x, params))
    assert jnp.allclose(out, ref_f32, atol=5e-2, rtol=5e-2), (
        float(jnp.max(jnp.abs(out - ref_f32))))

    print("KERNEL_OK")
</pallas_src>

<mosaic_0001>
module attributes {stable_mosaic.version = 11 : i64} {
  func.func @_conv1_kernel(%arg0: i32, %arg1: memref<1x16x16x128xf32, #tpu.memory_space<vmem>>, %arg2: memref<3x3x128x128xbf16, #tpu.memory_space<vmem>>, %arg3: memref<1x16x16x128xf32, #tpu.memory_space<vmem>>, %arg4: memref<1x1x128xf32, #tpu.memory_space<vmem>>, %arg5: memref<1x1x128xf32, #tpu.memory_space<vmem>>, %arg6: memref<18x18x128xbf16, #tpu.memory_space<vmem>>) attributes {dimension_semantics = [#tpu.dimension_semantics<parallel>], iteration_bounds = array<i64: 2>, scalar_prefetch = 0 : i64, scratch_operands = 1 : i64, tpu.core_type = #tpu.core_type<tc>, window_params = [{transform_indices = @transform_0, window_bounds = array<i64: 1, 16, 16, 128>}, {pipeline_mode = #tpu.pipeline_mode<synchronous>, transform_indices = @transform_1, window_bounds = array<i64: 3, 3, 128, 128>}, {transform_indices = @transform_2, window_bounds = array<i64: 1, 16, 16, 128>}, {transform_indices = @transform_3, window_bounds = array<i64: 1, 1, 128>}, {transform_indices = @transform_4, window_bounds = array<i64: 1, 1, 128>}]} {
    %c0 = arith.constant 0 : index
    %c0_0 = arith.constant 0 : index
    %c0_1 = arith.constant 0 : index
    %c0_2 = arith.constant 0 : index
    %0 = vector.load %arg1[%c0, %c0_0, %c0_1, %c0_2] : memref<1x16x16x128xf32, #tpu.memory_space<vmem>>, vector<1x16x16x128xf32>
    %1 = vector.shape_cast %0 : vector<1x16x16x128xf32> to vector<16x16x128xf32>
    %2 = arith.truncf %1 : vector<16x16x128xf32> to vector<16x16x128xbf16>
    %cst = arith.constant 0.000000e+00 : bf16
    %3 = vector.broadcast %cst : bf16 to vector<1x18x128xbf16>
    %c0_3 = arith.constant 0 : index
    %c0_4 = arith.constant 0 : index
    %c0_5 = arith.constant 0 : index
    %4 = vector.load %arg6[%c0_3, %c0_4, %c0_5] : memref<18x18x128xbf16, #tpu.memory_space<vmem>>, vector<1x18x128xbf16>
    tpu.vector_store %arg6[%c0_3, %c0_4, %c0_5], %3 {strides = array<i32>} : memref<18x18x128xbf16, #tpu.memory_space<vmem>>, vector<1x18x128xbf16>,
    %cst_6 = arith.constant 0.000000e+00 : bf16
    %5 = vector.broadcast %cst_6 : bf16 to vector<1x18x128xbf16>
    %c17 = arith.constant 17 : index
    %c0_7 = arith.constant 0 : index
    %c0_8 = arith.constant 0 : index
    %6 = vector.load %arg6[%c17, %c0_7, %c0_8] : memref<18x18x128xbf16, #tpu.memory_space<vmem>>, vector<1x18x128xbf16>
    tpu.vector_store %arg6[%c17, %c0_7, %c0_8], %5 {strides = array<i32>} : memref<18x18x128xbf16, #tpu.memory_space<vmem>>, vector<1x18x128xbf16>,
    %cst_9 = arith.constant 0.000000e+00 : bf16
    %7 = vector.broadcast %cst_9 : bf16 to vector<16x1x128xbf16>
    %c1 = arith.constant 1 : index
    %c0_10 = arith.constant 0 : index
    %c0_11 = arith.constant 0 : index
    %8 = vector.load %arg6[%c1, %c0_10, %c0_11] : memref<18x18x128xbf16, #tpu.memory_space<vmem>>, vector<16x1x128xbf16>
    tpu.vector_store %arg6[%c1, %c0_10, %c0_11], %7 {strides = array<i32>} : memref<18x18x128xbf16, #tpu.memory_space<vmem>>, vector<16x1x128xbf16>,
    %cst_12 = arith.constant 0.000000e+00 : bf16
    %9 = vector.broadcast %cst_12 : bf16 to vector<16x1x128xbf16>
    %c1_13 = arith.constant 1 : index
    %c17_14 = arith.constant 17 : index
    %c0_15 = arith.constant 0 : index
    %10 = vector.load %arg6[%c1_13, %c17_14, %c0_15] : memref<18x18x128xbf16, #tpu.memory_space<vmem>>, vector<16x1x128xbf16>
    tpu.vector_store %arg6[%c1_13, %c17_14, %c0_15], %9 {strides = array<i32>} : memref<18x18x128xbf16, #tpu.memory_space<vmem>>, vector<16x1x128xbf16>,
    %c1_16 = arith.constant 1 : index
    %c1_17 = arith.constant 1 : index
    %c0_18 = arith.constant 0 : index
    %11 = vector.load %arg6[%c1_16, %c1_17, %c0_18] : memref<18x18x128xbf16, #tpu.memory_space<vmem>>, vector<16x16x128xbf16>
    tpu.vector_store %arg6[%c1_16, %c1_17, %c0_18], %2 {strides = array<i32>} : memref<18x18x128xbf16, #tpu.memory_space<vmem>>, vector<16x16x128xbf16>,
    %cst_19 = arith.constant 0.000000e+00 : f32
    %12 = vector.broadcast %cst_19 : f32 to vector<256x128xf32>
    %c0_20 = arith.constant 0 : index
    %c0_21 = arith.constant 0 : index
    %c0_22 = arith.constant 0 : index
    %13 = vector.load %arg6[%c0_20, %c0_21, %c0_22] : memref<18x18x128xbf16, #tpu.memory_space<vmem>>, vector<16x16x128xbf16>
    %14 = vector.shape_cast %13 : vector<16x16x128xbf16> to vector<256x128xbf16>
    %c0_23 = arith.constant 0 : index
    %c0_24 = arith.constant 0 : index
    %c0_25 = arith.constant 0 : index
    %c0_26 = arith.constant 0 : index
    %15 = vector.load %arg2[%c0_23, %c0_24, %c0_25, %c0_26] : memref<3x3x128x128xbf16, #tpu.memory_space<vmem>>, vector<1x1x128x128xbf16>
    %16 = vector.shape_cast %15 : vector<1x1x128x128xbf16> to vector<128x128xbf16>
    %cst_27 = arith.constant dense<0.000000e+00> : vector<256x128xf32>
    %17 = tpu.matmul %14, %16, %cst_27 {dimension_numbers = #tpu.dot_dimension_numbers<[1], [0], [0], [1], [0, 0, 1, 1], [], []>} : vector<256x128xbf16>, vector<128x128xbf16>, vector<256x128xf32> -> vector<256x128xf32>
    %18 = arith.addf %12, %17 : vector<256x128xf32>
    %c0_28 = arith.constant 0 : index
    %c1_29 = arith.constant 1 : index
    %c0_30 = arith.constant 0 : index
    %19 = vector.load %arg6[%c0_28, %c1_29, %c0_30] : memref<18x18x128xbf16, #tpu.memory_space<vmem>>, vector<16x16x128xbf16>
    %20 = vector.shape_cast %19 : vector<16x16x128xbf16> to vector<256x128xbf16>
    %c0_31 = arith.constant 0 : index
    %c1_32 = arith.constant 1 : index
    %c0_33 = arith.constant 0 : index
    %c0_34 = arith.constant 0 : index
    %21 = vector.load %arg2[%c0_31, %c1_32, %c0_33, %c0_34] : memref<3x3x128x128xbf16, #tpu.memory_space<vmem>>, vector<1x1x128x128xbf16>
    %22 = vector.shape_cast %21 : vector<1x1x128x128xbf16> to vector<128x128xbf16>
    %cst_35 = arith.constant dense<0.000000e+00> : vector<256x128xf32>
    %23 = tpu.matmul %20, %22, %cst_35 {dimension_numbers = #tpu.dot_dimension_numbers<[1], [0], [0], [1], [0, 0, 1, 1], [], []>} : vector<256x128xbf16>, vector<128x128xbf16>, vector<256x128xf32> -> vector<256x128xf32>
    %24 = arith.addf %18, %23 : vector<256x128xf32>
    %c0_36 = arith.constant 0 : index
    %c2 = arith.constant 2 : index
    %c0_37 = arith.constant 0 : index
    %25 = vector.load %arg6[%c0_36, %c2, %c0_37] : memref<18x18x128xbf16, #tpu.memory_space<vmem>>, vector<16x16x128xbf16>
    %26 = vector.shape_cast %25 : vector<16x16x128xbf16> to vector<256x128xbf16>
    %c0_38 = arith.constant 0 : index
    %c2_39 = arith.constant 2 : index
    %c0_40 = arith.constant 0 : index
    %c0_41 = arith.constant 0 : index
    %27 = vector.load %arg2[%c0_38, %c2_39, %c0_40, %c0_41] : memref<3x3x128x128xbf16, #tpu.memory_space<vmem>>, vector<1x1x128x128xbf16>
    %28 = vector.shape_cast %27 : vector<1x1x128x128xbf16> to vector<128x128xbf16>
    %cst_42 = arith.constant dense<0.000000e+00> : vector<256x128xf32>
    %29 = tpu.matmul %26, %28, %cst_42 {dimension_numbers = #tpu.dot_dimension_numbers<[1], [0], [0], [1], [0, 0, 1, 1], [], []>} : vector<256x128xbf16>, vector<128x128xbf16>, vector<256x128xf32> -> vector<256x128xf32>
    %30 = arith.addf %24, %29 : vector<256x128xf32>
    %c1_43 = arith.constant 1 : index
    %c0_44 = arith.constant 0 : index
    %c0_45 = arith.constant 0 : index
    %31 = vector.load %arg6[%c1_43, %c0_44, %c0_45] : memref<18x18x128xbf16, #tpu.memory_space<vmem>>, vector<16x16x128xbf16>
    %32 = vector.shape_cast %31 : vector<16x16x128xbf16> to vector<256x128xbf16>
    %c1_46 = arith.constant 1 : index
    %c0_47 = arith.constant 0 : index
    %c0_48 = arith.constant 0 : index
    %c0_49 = arith.constant 0 : index
    %33 = vector.load %arg2[%c1_46, %c0_47, %c0_48, %c0_49] : memref<3x3x128x128xbf16, #tpu.memory_space<vmem>>, vector<1x1x128x128xbf16>
    %34 = vector.shape_cast %33 : vector<1x1x128x128xbf16> to vector<128x128xbf16>
    %cst_50 = arith.constant dense<0.000000e+00> : vector<256x128xf32>
    %35 = tpu.matmul %32, %34, %cst_50 {dimension_numbers = #tpu.dot_dimension_numbers<[1], [0], [0], [1], [0, 0, 1, 1], [], []>} : vector<256x128xbf16>, vector<128x128xbf16>, vector<256x128xf32> -> vector<256x128xf32>
    %36 = arith.addf %30, %35 : vector<256x128xf32>
    %c1_51 = arith.constant 1 : index
    %c1_52 = arith.constant 1 : index
    %c0_53 = arith.constant 0 : index
    %37 = vector.load %arg6[%c1_51, %c1_52, %c0_53] : memref<18x18x128xbf16, #tpu.memory_space<vmem>>, vector<16x16x128xbf16>
    %38 = vector.shape_cast %37 : vector<16x16x128xbf16> to vector<256x128xbf16>
    %c1_54 = arith.constant 1 : index
    %c1_55 = arith.constant 1 : index
    %c0_56 = arith.constant 0 : index
    %c0_57 = arith.constant 0 : index
    %39 = vector.load %arg2[%c1_54, %c1_55, %c0_56, %c0_57] : memref<3x3x128x128xbf16, #tpu.memory_space<vmem>>, vector<1x1x128x128xbf16>
    %40 = vector.shape_cast %39 : vector<1x1x128x128xbf16> to vector<128x128xbf16>
    %cst_58 = arith.constant dense<0.000000e+00> : vector<256x128xf32>
    %41 = tpu.matmul %38, %40, %cst_58 {dimension_numbers = #tpu.dot_dimension_numbers<[1], [0], [0], [1], [0, 0, 1, 1], [], []>} : vector<256x128xbf16>, vector<128x128xbf16>, vector<256x128xf32> -> vector<256x128xf32>
    %42 = arith.addf %36, %41 : vector<256x128xf32>
    %c1_59 = arith.constant 1 : index
    %c2_60 = arith.constant 2 : index
    %c0_61 = arith.constant 0 : index
    %43 = vector.load %arg6[%c1_59, %c2_60, %c0_61] : memref<18x18x128xbf16, #tpu.memory_space<vmem>>, vector<16x16x128xbf16>
    %44 = vector.shape_cast %43 : vector<16x16x128xbf16> to vector<256x128xbf16>
    %c1_62 = arith.constant 1 : index
    %c2_63 = arith.constant 2 : index
    %c0_64 = arith.constant 0 : index
    %c0_65 = arith.constant 0 : index
    %45 = vector.load %arg2[%c1_62, %c2_63, %c0_64, %c0_65] : memref<3x3x128x128xbf16, #tpu.memory_space<vmem>>, vector<1x1x128x128xbf16>
    %46 = vector.shape_cast %45 : vector<1x1x128x128xbf16> to vector<128x128xbf16>
    %cst_66 = arith.constant dense<0.000000e+00> : vector<256x128xf32>
    %47 = tpu.matmul %44, %46, %cst_66 {dimension_numbers = #tpu.dot_dimension_numbers<[1], [0], [0], [1], [0, 0, 1, 1], [], []>} : vector<256x128xbf16>, vector<128x128xbf16>, vector<256x128xf32> -> vector<256x128xf32>
    %48 = arith.addf %42, %47 : vector<256x128xf32>
    %c2_67 = arith.constant 2 : index
    %c0_68 = arith.constant 0 : index
    %c0_69 = arith.constant 0 : index
    %49 = vector.load %arg6[%c2_67, %c0_68, %c0_69] : memref<18x18x128xbf16, #tpu.memory_space<vmem>>, vector<16x16x128xbf16>
    %50 = vector.shape_cast %49 : vector<16x16x128xbf16> to vector<256x128xbf16>
    %c2_70 = arith.constant 2 : index
    %c0_71 = arith.constant 0 : index
    %c0_72 = arith.constant 0 : index
    %c0_73 = arith.constant 0 : index
    %51 = vector.load %arg2[%c2_70, %c0_71, %c0_72, %c0_73] : memref<3x3x128x128xbf16, #tpu.memory_space<vmem>>, vector<1x1x128x128xbf16>
    %52 = vector.shape_cast %51 : vector<1x1x128x128xbf16> to vector<128x128xbf16>
    %cst_74 = arith.constant dense<0.000000e+00> : vector<256x128xf32>
    %53 = tpu.matmul %50, %52, %cst_74 {dimension_numbers = #tpu.dot_dimension_numbers<[1], [0], [0], [1], [0, 0, 1, 1], [], []>} : vector<256x128xbf16>, vector<128x128xbf16>, vector<256x128xf32> -> vector<256x128xf32>
    %54 = arith.addf %48, %53 : vector<256x128xf32>
    %c2_75 = arith.constant 2 : index
    %c1_76 = arith.constant 1 : index
    %c0_77 = arith.constant 0 : index
    %55 = vector.load %arg6[%c2_75, %c1_76, %c0_77] : memref<18x18x128xbf16, #tpu.memory_space<vmem>>, vector<16x16x128xbf16>
    %56 = vector.shape_cast %55 : vector<16x16x128xbf16> to vector<256x128xbf16>
    %c2_78 = arith.constant 2 : index
    %c1_79 = arith.constant 1 : index
    %c0_80 = arith.constant 0 : index
    %c0_81 = arith.constant 0 : index
    %57 = vector.load %arg2[%c2_78, %c1_79, %c0_80, %c0_81] : memref<3x3x128x128xbf16, #tpu.memory_space<vmem>>, vector<1x1x128x128xbf16>
    %58 = vector.shape_cast %57 : vector<1x1x128x128xbf16> to vector<128x128xbf16>
    %cst_82 = arith.constant dense<0.000000e+00> : vector<256x128xf32>
    %59 = tpu.matmul %56, %58, %cst_82 {dimension_numbers = #tpu.dot_dimension_numbers<[1], [0], [0], [1], [0, 0, 1, 1], [], []>} : vector<256x128xbf16>, vector<128x128xbf16>, vector<256x128xf32> -> vector<256x128xf32>
    %60 = arith.addf %54, %59 : vector<256x128xf32>
    %c2_83 = arith.constant 2 : index
    %c2_84 = arith.constant 2 : index
    %c0_85 = arith.constant 0 : index
    %61 = vector.load %arg6[%c2_83, %c2_84, %c0_85] : memref<18x18x128xbf16, #tpu.memory_space<vmem>>, vector<16x16x128xbf16>
    %62 = vector.shape_cast %61 : vector<16x16x128xbf16> to vector<256x128xbf16>
    %c2_86 = arith.constant 2 : index
    %c2_87 = arith.constant 2 : index
    %c0_88 = arith.constant 0 : index
    %c0_89 = arith.constant 0 : index
    %63 = vector.load %arg2[%c2_86, %c2_87, %c0_88, %c0_89] : memref<3x3x128x128xbf16, #tpu.memory_space<vmem>>, vector<1x1x128x128xbf16>
    %64 = vector.shape_cast %63 : vector<1x1x128x128xbf16> to vector<128x128xbf16>
    %cst_90 = arith.constant dense<0.000000e+00> : vector<256x128xf32>
    %65 = tpu.matmul %62, %64, %cst_90 {dimension_numbers = #tpu.dot_dimension_numbers<[1], [0], [0], [1], [0, 0, 1, 1], [], []>} : vector<256x128xbf16>, vector<128x128xbf16>, vector<256x128xf32> -> vector<256x128xf32>
    %66 = arith.addf %60, %65 : vector<256x128xf32>
    %cst_91 = arith.constant dense<0.000000e+00> : vector<128xf32>
    %67 = vector.multi_reduction <add>, %66, %cst_91 [0] : vector<256x128xf32> to vector<128xf32>
    %68 = vector.shape_cast %67 : vector<128xf32> to vector<1x128xf32>
    %cst_92 = arith.constant 3.906250e-03 : f32
    %69 = vector.broadcast %cst_92 : f32 to vector<1x128xf32>
    %70 = arith.mulf %68, %69 : vector<1x128xf32>
    %71 = vector.broadcast %70 : vector<1x128xf32> to vector<256x128xf32>
    %72 = arith.subf %66, %71 : vector<256x128xf32>
    %73 = arith.mulf %72, %72 : vector<256x128xf32>
    %cst_93 = arith.constant dense<0.000000e+00> : vector<128xf32>
    %74 = vector.multi_reduction <add>, %73, %cst_93 [0] : vector<256x128xf32> to vector<128xf32>
    %75 = vector.shape_cast %74 : vector<128xf32> to vector<1x128xf32>
    %76 = vector.shape_cast %66 : vector<256x128xf32> to vector<16x16x128xf32>
    %c0_94 = arith.constant 0 : index
    %c0_95 = arith.constant 0 : index
    %c0_96 = arith.constant 0 : index
    %c0_97 = arith.constant 0 : index
    %77 = vector.load %arg3[%c0_94, %c0_95, %c0_96, %c0_97] : memref<1x16x16x128xf32, #tpu.memory_space<vmem>>, vector<1x16x16x128xf32>
    %78 = vector.shape_cast %77 : vector<1x16x16x128xf32> to vector<16x16x128xf32>
    %79 = vector.shape_cast %76 : vector<16x16x128xf32> to vector<1x16x16x128xf32>
    tpu.vector_store %arg3[%c0_94, %c0_95, %c0_96, %c0_97], %79 {strides = array<i32>} : memref<1x16x16x128xf32, #tpu.memory_space<vmem>>, vector<1x16x16x128xf32>,
    %c0_98 = arith.constant 0 : index
    %c0_99 = arith.constant 0 : index
    %c0_100 = arith.constant 0 : index
    %80 = vector.load %arg4[%c0_98, %c0_99, %c0_100] : memref<1x1x128xf32, #tpu.memory_space<vmem>>, vector<1x1x128xf32>
    %81 = vector.shape_cast %80 : vector<1x1x128xf32> to vector<1x128xf32>
    %82 = vector.shape_cast %70 : vector<1x128xf32> to vector<1x1x128xf32>
    tpu.vector_store %arg4[%c0_98, %c0_99, %c0_100], %82 {strides = array<i32>} : memref<1x1x128xf32, #tpu.memory_space<vmem>>, vector<1x1x128xf32>,
    %c0_101 = arith.constant 0 : index
    %c0_102 = arith.constant 0 : index
    %c0_103 = arith.constant 0 : index
    %83 = vector.load %arg5[%c0_101, %c0_102, %c0_103] : memref<1x1x128xf32, #tpu.memory_space<vmem>>, vector<1x1x128xf32>
    %84 = vector.shape_cast %83 : vector<1x1x128xf32> to vector<1x128xf32>
    %85 = vector.shape_cast %75 : vector<1x128xf32> to vector<1x1x128xf32>
    tpu.vector_store %arg5[%c0_101, %c0_102, %c0_103], %85 {strides = array<i32>} : memref<1x1x128xf32, #tpu.memory_space<vmem>>, vector<1x1x128xf32>,
    return
  }
  func.func @transform_0(%arg0: i32) -> (i32, i32, i32, i32) {
    %c0_i32 = arith.constant 0 : i32
    %c0_i32_0 = arith.constant 0 : i32
    %c0_i32_1 = arith.constant 0 : i32
    %c0_i32_2 = arith.constant 0 : i32
    return %arg0, %c0_i32, %c0_i32_0, %c0_i32_1 : i32, i32, i32, i32
  }
  func.func @transform_1(%arg0: i32) -> (i32, i32, i32, i32) {
    %c0_i32 = arith.constant 0 : i32
    %c0_i32_0 = arith.constant 0 : i32
    %c0_i32_1 = arith.constant 0 : i32
    %c0_i32_2 = arith.constant 0 : i32
    %c0_i32_3 = arith.constant 0 : i32
    return %c0_i32, %c0_i32_0, %c0_i32_1, %c0_i32_2 : i32, i32, i32, i32
  }
  func.func @transform_2(%arg0: i32) -> (i32, i32, i32, i32) {
    %c0_i32 = arith.constant 0 : i32
    %c0_i32_0 = arith.constant 0 : i32
    %c0_i32_1 = arith.constant 0 : i32
    %c0_i32_2 = arith.constant 0 : i32
    return %arg0, %c0_i32, %c0_i32_0, %c0_i32_1 : i32, i32, i32, i32
  }
  func.func @transform_3(%arg0: i32) -> (i32, i32, i32) {
    %c0_i32 = arith.constant 0 : i32
    %c0_i32_0 = arith.constant 0 : i32
    %c0_i32_1 = arith.constant 0 : i32
    return %arg0, %c0_i32, %c0_i32_0 : i32, i32, i32
  }
  func.func @transform_4(%arg0: i32) -> (i32, i32, i32) {
    %c0_i32 = arith.constant 0 : i32
    %c0_i32_0 = arith.constant 0 : i32
    %c0_i32_1 = arith.constant 0 : i32
    return %arg0, %c0_i32, %c0_i32_0 : i32, i32, i32
  }
}

module attributes {stable_mosaic.version = 11 : i64} {
  func.func @_bn_add_relu_kernel(%arg0: i32, %arg1: memref<1x16x16x128xf32, #tpu.memory_space<vmem>>, %arg2: memref<1x16x16x128xf32, #tpu.memory_space<vmem>>, %arg3: memref<1x128xf32, #tpu.memory_space<vmem>>, %arg4: memref<1x128xf32, #tpu.memory_space<vmem>>, %arg5: memref<1x16x16x128xf32, #tpu.memory_space<vmem>>) attributes {dimension_semantics = [#tpu.dimension_semantics<parallel>], iteration_bounds = array<i64: 2>, scalar_prefetch = 0 : i64, scratch_operands = 0 : i64, tpu.core_type = #tpu.core_type<tc>, window_params = [{transform_indices = @transform_0, window_bounds = array<i64: 1, 16, 16, 128>}, {transform_indices = @transform_1, window_bounds = array<i64: 1, 16, 16, 128>}, {pipeline_mode = #tpu.pipeline_mode<synchronous>, transform_indices = @transform_2, window_bounds = array<i64: 1, 128>}, {pipeline_mode = #tpu.pipeline_mode<synchronous>, transform_indices = @transform_3, window_bounds = array<i64: 1, 128>}, {transform_indices = @transform_4, window_bounds = array<i64: 1, 16, 16, 128>}]} {
    %c0 = arith.constant 0 : index
    %c0_0 = arith.constant 0 : index
    %c0_1 = arith.constant 0 : index
    %c0_2 = arith.constant 0 : index
    %0 = vector.load %arg1[%c0, %c0_0, %c0_1, %c0_2] : memref<1x16x16x128xf32, #tpu.memory_space<vmem>>, vector<1x16x16x128xf32>
    %1 = vector.shape_cast %0 : vector<1x16x16x128xf32> to vector<16x16x128xf32>
    %2 = vector.shape_cast %1 : vector<16x16x128xf32> to vector<256x128xf32>
    %c0_3 = arith.constant 0 : index
    %c0_4 = arith.constant 0 : index
    %c0_5 = arith.constant 0 : index
    %c0_6 = arith.constant 0 : index
    %3 = vector.load %arg2[%c0_3, %c0_4, %c0_5, %c0_6] : memref<1x16x16x128xf32, #tpu.memory_space<vmem>>, vector<1x16x16x128xf32>
    %4 = vector.shape_cast %3 : vector<1x16x16x128xf32> to vector<16x16x128xf32>
    %5 = vector.shape_cast %4 : vector<16x16x128xf32> to vector<256x128xf32>
    %c0_7 = arith.constant 0 : index
    %c0_8 = arith.constant 0 : index
    %6 = vector.load %arg3[%c0_7, %c0_8] : memref<1x128xf32, #tpu.memory_space<vmem>>, vector<1x128xf32>
    %7 = vector.broadcast %6 : vector<1x128xf32> to vector<256x128xf32>
    %8 = arith.mulf %2, %7 : vector<256x128xf32>
    %c0_9 = arith.constant 0 : index
    %c0_10 = arith.constant 0 : index
    %9 = vector.load %arg4[%c0_9, %c0_10] : memref<1x128xf32, #tpu.memory_space<vmem>>, vector<1x128xf32>
    %10 = vector.broadcast %9 : vector<1x128xf32> to vector<256x128xf32>
    %11 = arith.addf %8, %10 : vector<256x128xf32>
    %12 = arith.addf %11, %5 : vector<256x128xf32>
    %cst = arith.constant 0.000000e+00 : f32
    %13 = vector.broadcast %cst : f32 to vector<256x128xf32>
    %14 = arith.maximumf %12, %13 : vector<256x128xf32>
    %15 = vector.shape_cast %14 : vector<256x128xf32> to vector<16x16x128xf32>
    %c0_11 = arith.constant 0 : index
    %c0_12 = arith.constant 0 : index
    %c0_13 = arith.constant 0 : index
    %c0_14 = arith.constant 0 : index
    %16 = vector.load %arg5[%c0_11, %c0_12, %c0_13, %c0_14] : memref<1x16x16x128xf32, #tpu.memory_space<vmem>>, vector<1x16x16x128xf32>
    %17 = vector.shape_cast %16 : vector<1x16x16x128xf32> to vector<16x16x128xf32>
    %18 = vector.shape_cast %15 : vector<16x16x128xf32> to vector<1x16x16x128xf32>
    tpu.vector_store %arg5[%c0_11, %c0_12, %c0_13, %c0_14], %18 {strides = array<i32>} : memref<1x16x16x128xf32, #tpu.memory_space<vmem>>, vector<1x16x16x128xf32>,
    return
  }
  func.func @transform_0(%arg0: i32) -> (i32, i32, i32, i32) {
    %c0_i32 = arith.constant 0 : i32
    %c0_i32_0 = arith.constant 0 : i32
    %c0_i32_1 = arith.constant 0 : i32
    %c0_i32_2 = arith.constant 0 : i32
    return %arg0, %c0_i32, %c0_i32_0, %c0_i32_1 : i32, i32, i32, i32
  }
  func.func @transform_1(%arg0: i32) -> (i32, i32, i32, i32) {
    %c0_i32 = arith.constant 0 : i32
    %c0_i32_0 = arith.constant 0 : i32
    %c0_i32_1 = arith.constant 0 : i32
    %c0_i32_2 = arith.constant 0 : i32
    return %arg0, %c0_i32, %c0_i32_0, %c0_i32_1 : i32, i32, i32, i32
  }
  func.func @transform_2(%arg0: i32) -> (i32, i32) {
    %c0_i32 = arith.constant 0 : i32
    %c0_i32_0 = arith.constant 0 : i32
    %c0_i32_1 = arith.constant 0 : i32
    return %c0_i32, %c0_i32_0 : i32, i32
  }
  func.func @transform_3(%arg0: i32) -> (i32, i32) {
    %c0_i32 = arith.constant 0 : i32
    %c0_i32_0 = arith.constant 0 : i32
    %c0_i32_1 = arith.constant 0 : i32
    return %c0_i32, %c0_i32_0 : i32, i32
  }
  func.func @transform_4(%arg0: i32) -> (i32, i32, i32, i32) {
    %c0_i32 = arith.constant 0 : i32
    %c0_i32_0 = arith.constant 0 : i32
    %c0_i32_1 = arith.constant 0 : i32
    %c0_i32_2 = arith.constant 0 : i32
    return %arg0, %c0_i32, %c0_i32_0, %c0_i32_1 : i32, i32, i32, i32
  }
}

module attributes {stable_mosaic.version = 11 : i64} {
  func.func @_bn_relu_conv2_kernel(%arg0: i32, %arg1: memref<1x16x16x128xf32, #tpu.memory_space<vmem>>, %arg2: memref<1x128xf32, #tpu.memory_space<vmem>>, %arg3: memref<1x128xf32, #tpu.memory_space<vmem>>, %arg4: memref<3x3x128x128xbf16, #tpu.memory_space<vmem>>, %arg5: memref<1x16x16x128xf32, #tpu.memory_space<vmem>>, %arg6: memref<1x1x128xf32, #tpu.memory_space<vmem>>, %arg7: memref<1x1x128xf32, #tpu.memory_space<vmem>>, %arg8: memref<18x18x128xbf16, #tpu.memory_space<vmem>>) attributes {dimension_semantics = [#tpu.dimension_semantics<parallel>], iteration_bounds = array<i64: 2>, scalar_prefetch = 0 : i64, scratch_operands = 1 : i64, tpu.core_type = #tpu.core_type<tc>, window_params = [{transform_indices = @transform_0, window_bounds = array<i64: 1, 16, 16, 128>}, {pipeline_mode = #tpu.pipeline_mode<synchronous>, transform_indices = @transform_1, window_bounds = array<i64: 1, 128>}, {pipeline_mode = #tpu.pipeline_mode<synchronous>, transform_indices = @transform_2, window_bounds = array<i64: 1, 128>}, {pipeline_mode = #tpu.pipeline_mode<synchronous>, transform_indices = @transform_3, window_bounds = array<i64: 3, 3, 128, 128>}, {transform_indices = @transform_4, window_bounds = array<i64: 1, 16, 16, 128>}, {transform_indices = @transform_5, window_bounds = array<i64: 1, 1, 128>}, {transform_indices = @transform_6, window_bounds = array<i64: 1, 1, 128>}]} {
    %c0 = arith.constant 0 : index
    %c0_0 = arith.constant 0 : index
    %c0_1 = arith.constant 0 : index
    %c0_2 = arith.constant 0 : index
    %0 = vector.load %arg1[%c0, %c0_0, %c0_1, %c0_2] : memref<1x16x16x128xf32, #tpu.memory_space<vmem>>, vector<1x16x16x128xf32>
    %1 = vector.shape_cast %0 : vector<1x16x16x128xf32> to vector<16x16x128xf32>
    %2 = vector.shape_cast %1 : vector<16x16x128xf32> to vector<256x128xf32>
    %c0_3 = arith.constant 0 : index
    %c0_4 = arith.constant 0 : index
    %3 = vector.load %arg2[%c0_3, %c0_4] : memref<1x128xf32, #tpu.memory_space<vmem>>, vector<1x128xf32>
    %4 = vector.broadcast %3 : vector<1x128xf32> to vector<256x128xf32>
    %5 = arith.mulf %2, %4 : vector<256x128xf32>
    %c0_5 = arith.constant 0 : index
    %c0_6 = arith.constant 0 : index
    %6 = vector.load %arg3[%c0_5, %c0_6] : memref<1x128xf32, #tpu.memory_space<vmem>>, vector<1x128xf32>
    %7 = vector.broadcast %6 : vector<1x128xf32> to vector<256x128xf32>
    %8 = arith.addf %5, %7 : vector<256x128xf32>
    %cst = arith.constant 0.000000e+00 : f32
    %9 = vector.broadcast %cst : f32 to vector<256x128xf32>
    %10 = arith.maximumf %8, %9 : vector<256x128xf32>
    %11 = arith.truncf %10 : vector<256x128xf32> to vector<256x128xbf16>
    %12 = vector.shape_cast %11 : vector<256x128xbf16> to vector<16x16x128xbf16>
    %cst_7 = arith.constant 0.000000e+00 : bf16
    %13 = vector.broadcast %cst_7 : bf16 to vector<1x18x128xbf16>
    %c0_8 = arith.constant 0 : index
    %c0_9 = arith.constant 0 : index
    %c0_10 = arith.constant 0 : index
    %14 = vector.load %arg8[%c0_8, %c0_9, %c0_10] : memref<18x18x128xbf16, #tpu.memory_space<vmem>>, vector<1x18x128xbf16>
    tpu.vector_store %arg8[%c0_8, %c0_9, %c0_10], %13 {strides = array<i32>} : memref<18x18x128xbf16, #tpu.memory_space<vmem>>, vector<1x18x128xbf16>,
    %cst_11 = arith.constant 0.000000e+00 : bf16
    %15 = vector.broadcast %cst_11 : bf16 to vector<1x18x128xbf16>
    %c17 = arith.constant 17 : index
    %c0_12 = arith.constant 0 : index
    %c0_13 = arith.constant 0 : index
    %16 = vector.load %arg8[%c17, %c0_12, %c0_13] : memref<18x18x128xbf16, #tpu.memory_space<vmem>>, vector<1x18x128xbf16>
    tpu.vector_store %arg8[%c17, %c0_12, %c0_13], %15 {strides = array<i32>} : memref<18x18x128xbf16, #tpu.memory_space<vmem>>, vector<1x18x128xbf16>,
    %cst_14 = arith.constant 0.000000e+00 : bf16
    %17 = vector.broadcast %cst_14 : bf16 to vector<16x1x128xbf16>
    %c1 = arith.constant 1 : index
    %c0_15 = arith.constant 0 : index
    %c0_16 = arith.constant 0 : index
    %18 = vector.load %arg8[%c1, %c0_15, %c0_16] : memref<18x18x128xbf16, #tpu.memory_space<vmem>>, vector<16x1x128xbf16>
    tpu.vector_store %arg8[%c1, %c0_15, %c0_16], %17 {strides = array<i32>} : memref<18x18x128xbf16, #tpu.memory_space<vmem>>, vector<16x1x128xbf16>,
    %cst_17 = arith.constant 0.000000e+00 : bf16
    %19 = vector.broadcast %cst_17 : bf16 to vector<16x1x128xbf16>
    %c1_18 = arith.constant 1 : index
    %c17_19 = arith.constant 17 : index
    %c0_20 = arith.constant 0 : index
    %20 = vector.load %arg8[%c1_18, %c17_19, %c0_20] : memref<18x18x128xbf16, #tpu.memory_space<vmem>>, vector<16x1x128xbf16>
    tpu.vector_store %arg8[%c1_18, %c17_19, %c0_20], %19 {strides = array<i32>} : memref<18x18x128xbf16, #tpu.memory_space<vmem>>, vector<16x1x128xbf16>,
    %c1_21 = arith.constant 1 : index
    %c1_22 = arith.constant 1 : index
    %c0_23 = arith.constant 0 : index
    %21 = vector.load %arg8[%c1_21, %c1_22, %c0_23] : memref<18x18x128xbf16, #tpu.memory_space<vmem>>, vector<16x16x128xbf16>
    tpu.vector_store %arg8[%c1_21, %c1_22, %c0_23], %12 {strides = array<i32>} : memref<18x18x128xbf16, #tpu.memory_space<vmem>>, vector<16x16x128xbf16>,
    %cst_24 = arith.constant 0.000000e+00 : f32
    %22 = vector.broadcast %cst_24 : f32 to vector<256x128xf32>
    %c0_25 = arith.constant 0 : index
    %c0_26 = arith.constant 0 : index
    %c0_27 = arith.constant 0 : index
    %23 = vector.load %arg8[%c0_25, %c0_26, %c0_27] : memref<18x18x128xbf16, #tpu.memory_space<vmem>>, vector<16x16x128xbf16>
    %24 = vector.shape_cast %23 : vector<16x16x128xbf16> to vector<256x128xbf16>
    %c0_28 = arith.constant 0 : index
    %c0_29 = arith.constant 0 : index
    %c0_30 = arith.constant 0 : index
    %c0_31 = arith.constant 0 : index
    %25 = vector.load %arg4[%c0_28, %c0_29, %c0_30, %c0_31] : memref<3x3x128x128xbf16, #tpu.memory_space<vmem>>, vector<1x1x128x128xbf16>
    %26 = vector.shape_cast %25 : vector<1x1x128x128xbf16> to vector<128x128xbf16>
    %cst_32 = arith.constant dense<0.000000e+00> : vector<256x128xf32>
    %27 = tpu.matmul %24, %26, %cst_32 {dimension_numbers = #tpu.dot_dimension_numbers<[1], [0], [0], [1], [0, 0, 1, 1], [], []>} : vector<256x128xbf16>, vector<128x128xbf16>, vector<256x128xf32> -> vector<256x128xf32>
    %28 = arith.addf %22, %27 : vector<256x128xf32>
    %c0_33 = arith.constant 0 : index
    %c1_34 = arith.constant 1 : index
    %c0_35 = arith.constant 0 : index
    %29 = vector.load %arg8[%c0_33, %c1_34, %c0_35] : memref<18x18x128xbf16, #tpu.memory_space<vmem>>, vector<16x16x128xbf16>
    %30 = vector.shape_cast %29 : vector<16x16x128xbf16> to vector<256x128xbf16>
    %c0_36 = arith.constant 0 : index
    %c1_37 = arith.constant 1 : index
    %c0_38 = arith.constant 0 : index
    %c0_39 = arith.constant 0 : index
    %31 = vector.load %arg4[%c0_36, %c1_37, %c0_38, %c0_39] : memref<3x3x128x128xbf16, #tpu.memory_space<vmem>>, vector<1x1x128x128xbf16>
    %32 = vector.shape_cast %31 : vector<1x1x128x128xbf16> to vector<128x128xbf16>
    %cst_40 = arith.constant dense<0.000000e+00> : vector<256x128xf32>
    %33 = tpu.matmul %30, %32, %cst_40 {dimension_numbers = #tpu.dot_dimension_numbers<[1], [0], [0], [1], [0, 0, 1, 1], [], []>} : vector<256x128xbf16>, vector<128x128xbf16>, vector<256x128xf32> -> vector<256x128xf32>
    %34 = arith.addf %28, %33 : vector<256x128xf32>
    %c0_41 = arith.constant 0 : index
    %c2 = arith.constant 2 : index
    %c0_42 = arith.constant 0 : index
    %35 = vector.load %arg8[%c0_41, %c2, %c0_42] : memref<18x18x128xbf16, #tpu.memory_space<vmem>>, vector<16x16x128xbf16>
    %36 = vector.shape_cast %35 : vector<16x16x128xbf16> to vector<256x128xbf16>
    %c0_43 = arith.constant 0 : index
    %c2_44 = arith.constant 2 : index
    %c0_45 = arith.constant 0 : index
    %c0_46 = arith.constant 0 : index
    %37 = vector.load %arg4[%c0_43, %c2_44, %c0_45, %c0_46] : memref<3x3x128x128xbf16, #tpu.memory_space<vmem>>, vector<1x1x128x128xbf16>
    %38 = vector.shape_cast %37 : vector<1x1x128x128xbf16> to vector<128x128xbf16>
    %cst_47 = arith.constant dense<0.000000e+00> : vector<256x128xf32>
    %39 = tpu.matmul %36, %38, %cst_47 {dimension_numbers = #tpu.dot_dimension_numbers<[1], [0], [0], [1], [0, 0, 1, 1], [], []>} : vector<256x128xbf16>, vector<128x128xbf16>, vector<256x128xf32> -> vector<256x128xf32>
    %40 = arith.addf %34, %39 : vector<256x128xf32>
    %c1_48 = arith.constant 1 : index
    %c0_49 = arith.constant 0 : index
    %c0_50 = arith.constant 0 : index
    %41 = vector.load %arg8[%c1_48, %c0_49, %c0_50] : memref<18x18x128xbf16, #tpu.memory_space<vmem>>, vector<16x16x128xbf16>
    %42 = vector.shape_cast %41 : vector<16x16x128xbf16> to vector<256x128xbf16>
    %c1_51 = arith.constant 1 : index
    %c0_52 = arith.constant 0 : index
    %c0_53 = arith.constant 0 : index
    %c0_54 = arith.constant 0 : index
    %43 = vector.load %arg4[%c1_51, %c0_52, %c0_53, %c0_54] : memref<3x3x128x128xbf16, #tpu.memory_space<vmem>>, vector<1x1x128x128xbf16>
    %44 = vector.shape_cast %43 : vector<1x1x128x128xbf16> to vector<128x128xbf16>
    %cst_55 = arith.constant dense<0.000000e+00> : vector<256x128xf32>
    %45 = tpu.matmul %42, %44, %cst_55 {dimension_numbers = #tpu.dot_dimension_numbers<[1], [0], [0], [1], [0, 0, 1, 1], [], []>} : vector<256x128xbf16>, vector<128x128xbf16>, vector<256x128xf32> -> vector<256x128xf32>
    %46 = arith.addf %40, %45 : vector<256x128xf32>
    %c1_56 = arith.constant 1 : index
    %c1_57 = arith.constant 1 : index
    %c0_58 = arith.constant 0 : index
    %47 = vector.load %arg8[%c1_56, %c1_57, %c0_58] : memref<18x18x128xbf16, #tpu.memory_space<vmem>>, vector<16x16x128xbf16>
    %48 = vector.shape_cast %47 : vector<16x16x128xbf16> to vector<256x128xbf16>
    %c1_59 = arith.constant 1 : index
    %c1_60 = arith.constant 1 : index
    %c0_61 = arith.constant 0 : index
    %c0_62 = arith.constant 0 : index
    %49 = vector.load %arg4[%c1_59, %c1_60, %c0_61, %c0_62] : memref<3x3x128x128xbf16, #tpu.memory_space<vmem>>, vector<1x1x128x128xbf16>
    %50 = vector.shape_cast %49 : vector<1x1x128x128xbf16> to vector<128x128xbf16>
    %cst_63 = arith.constant dense<0.000000e+00> : vector<256x128xf32>
    %51 = tpu.matmul %48, %50, %cst_63 {dimension_numbers = #tpu.dot_dimension_numbers<[1], [0], [0], [1], [0, 0, 1, 1], [], []>} : vector<256x128xbf16>, vector<128x128xbf16>, vector<256x128xf32> -> vector<256x128xf32>
    %52 = arith.addf %46, %51 : vector<256x128xf32>
    %c1_64 = arith.constant 1 : index
    %c2_65 = arith.constant 2 : index
    %c0_66 = arith.constant 0 : index
    %53 = vector.load %arg8[%c1_64, %c2_65, %c0_66] : memref<18x18x128xbf16, #tpu.memory_space<vmem>>, vector<16x16x128xbf16>
    %54 = vector.shape_cast %53 : vector<16x16x128xbf16> to vector<256x128xbf16>
    %c1_67 = arith.constant 1 : index
    %c2_68 = arith.constant 2 : index
    %c0_69 = arith.constant 0 : index
    %c0_70 = arith.constant 0 : index
    %55 = vector.load %arg4[%c1_67, %c2_68, %c0_69, %c0_70] : memref<3x3x128x128xbf16, #tpu.memory_space<vmem>>, vector<1x1x128x128xbf16>
    %56 = vector.shape_cast %55 : vector<1x1x128x128xbf16> to vector<128x128xbf16>
    %cst_71 = arith.constant dense<0.000000e+00> : vector<256x128xf32>
    %57 = tpu.matmul %54, %56, %cst_71 {dimension_numbers = #tpu.dot_dimension_numbers<[1], [0], [0], [1], [0, 0, 1, 1], [], []>} : vector<256x128xbf16>, vector<128x128xbf16>, vector<256x128xf32> -> vector<256x128xf32>
    %58 = arith.addf %52, %57 : vector<256x128xf32>
    %c2_72 = arith.constant 2 : index
    %c0_73 = arith.constant 0 : index
    %c0_74 = arith.constant 0 : index
    %59 = vector.load %arg8[%c2_72, %c0_73, %c0_74] : memref<18x18x128xbf16, #tpu.memory_space<vmem>>, vector<16x16x128xbf16>
    %60 = vector.shape_cast %59 : vector<16x16x128xbf16> to vector<256x128xbf16>
    %c2_75 = arith.constant 2 : index
    %c0_76 = arith.constant 0 : index
    %c0_77 = arith.constant 0 : index
    %c0_78 = arith.constant 0 : index
    %61 = vector.load %arg4[%c2_75, %c0_76, %c0_77, %c0_78] : memref<3x3x128x128xbf16, #tpu.memory_space<vmem>>, vector<1x1x128x128xbf16>
    %62 = vector.shape_cast %61 : vector<1x1x128x128xbf16> to vector<128x128xbf16>
    %cst_79 = arith.constant dense<0.000000e+00> : vector<256x128xf32>
    %63 = tpu.matmul %60, %62, %cst_79 {dimension_numbers = #tpu.dot_dimension_numbers<[1], [0], [0], [1], [0, 0, 1, 1], [], []>} : vector<256x128xbf16>, vector<128x128xbf16>, vector<256x128xf32> -> vector<256x128xf32>
    %64 = arith.addf %58, %63 : vector<256x128xf32>
    %c2_80 = arith.constant 2 : index
    %c1_81 = arith.constant 1 : index
    %c0_82 = arith.constant 0 : index
    %65 = vector.load %arg8[%c2_80, %c1_81, %c0_82] : memref<18x18x128xbf16, #tpu.memory_space<vmem>>, vector<16x16x128xbf16>
    %66 = vector.shape_cast %65 : vector<16x16x128xbf16> to vector<256x128xbf16>
    %c2_83 = arith.constant 2 : index
    %c1_84 = arith.constant 1 : index
    %c0_85 = arith.constant 0 : index
    %c0_86 = arith.constant 0 : index
    %67 = vector.load %arg4[%c2_83, %c1_84, %c0_85, %c0_86] : memref<3x3x128x128xbf16, #tpu.memory_space<vmem>>, vector<1x1x128x128xbf16>
    %68 = vector.shape_cast %67 : vector<1x1x128x128xbf16> to vector<128x128xbf16>
    %cst_87 = arith.constant dense<0.000000e+00> : vector<256x128xf32>
    %69 = tpu.matmul %66, %68, %cst_87 {dimension_numbers = #tpu.dot_dimension_numbers<[1], [0], [0], [1], [0, 0, 1, 1], [], []>} : vector<256x128xbf16>, vector<128x128xbf16>, vector<256x128xf32> -> vector<256x128xf32>
    %70 = arith.addf %64, %69 : vector<256x128xf32>
    %c2_88 = arith.constant 2 : index
    %c2_89 = arith.constant 2 : index
    %c0_90 = arith.constant 0 : index
    %71 = vector.load %arg8[%c2_88, %c2_89, %c0_90] : memref<18x18x128xbf16, #tpu.memory_space<vmem>>, vector<16x16x128xbf16>
    %72 = vector.shape_cast %71 : vector<16x16x128xbf16> to vector<256x128xbf16>
    %c2_91 = arith.constant 2 : index
    %c2_92 = arith.constant 2 : index
    %c0_93 = arith.constant 0 : index
    %c0_94 = arith.constant 0 : index
    %73 = vector.load %arg4[%c2_91, %c2_92, %c0_93, %c0_94] : memref<3x3x128x128xbf16, #tpu.memory_space<vmem>>, vector<1x1x128x128xbf16>
    %74 = vector.shape_cast %73 : vector<1x1x128x128xbf16> to vector<128x128xbf16>
    %cst_95 = arith.constant dense<0.000000e+00> : vector<256x128xf32>
    %75 = tpu.matmul %72, %74, %cst_95 {dimension_numbers = #tpu.dot_dimension_numbers<[1], [0], [0], [1], [0, 0, 1, 1], [], []>} : vector<256x128xbf16>, vector<128x128xbf16>, vector<256x128xf32> -> vector<256x128xf32>
    %76 = arith.addf %70, %75 : vector<256x128xf32>
    %cst_96 = arith.constant dense<0.000000e+00> : vector<128xf32>
    %77 = vector.multi_reduction <add>, %76, %cst_96 [0] : vector<256x128xf32> to vector<128xf32>
    %78 = vector.shape_cast %77 : vector<128xf32> to vector<1x128xf32>
    %cst_97 = arith.constant 3.906250e-03 : f32
    %79 = vector.broadcast %cst_97 : f32 to vector<1x128xf32>
    %80 = arith.mulf %78, %79 : vector<1x128xf32>
    %81 = vector.broadcast %80 : vector<1x128xf32> to vector<256x128xf32>
    %82 = arith.subf %76, %81 : vector<256x128xf32>
    %83 = arith.mulf %82, %82 : vector<256x128xf32>
    %cst_98 = arith.constant dense<0.000000e+00> : vector<128xf32>
    %84 = vector.multi_reduction <add>, %83, %cst_98 [0] : vector<256x128xf32> to vector<128xf32>
    %85 = vector.shape_cast %84 : vector<128xf32> to vector<1x128xf32>
    %86 = vector.shape_cast %76 : vector<256x128xf32> to vector<16x16x128xf32>
    %c0_99 = arith.constant 0 : index
    %c0_100 = arith.constant 0 : index
    %c0_101 = arith.constant 0 : index
    %c0_102 = arith.constant 0 : index
    %87 = vector.load %arg5[%c0_99, %c0_100, %c0_101, %c0_102] : memref<1x16x16x128xf32, #tpu.memory_space<vmem>>, vector<1x16x16x128xf32>
    %88 = vector.shape_cast %87 : vector<1x16x16x128xf32> to vector<16x16x128xf32>
    %89 = vector.shape_cast %86 : vector<16x16x128xf32> to vector<1x16x16x128xf32>
    tpu.vector_store %arg5[%c0_99, %c0_100, %c0_101, %c0_102], %89 {strides = array<i32>} : memref<1x16x16x128xf32, #tpu.memory_space<vmem>>, vector<1x16x16x128xf32>,
    %c0_103 = arith.constant 0 : index
    %c0_104 = arith.constant 0 : index
    %c0_105 = arith.constant 0 : index
    %90 = vector.load %arg6[%c0_103, %c0_104, %c0_105] : memref<1x1x128xf32, #tpu.memory_space<vmem>>, vector<1x1x128xf32>
    %91 = vector.shape_cast %90 : vector<1x1x128xf32> to vector<1x128xf32>
    %92 = vector.shape_cast %80 : vector<1x128xf32> to vector<1x1x128xf32>
    tpu.vector_store %arg6[%c0_103, %c0_104, %c0_105], %92 {strides = array<i32>} : memref<1x1x128xf32, #tpu.memory_space<vmem>>, vector<1x1x128xf32>,
    %c0_106 = arith.constant 0 : index
    %c0_107 = arith.constant 0 : index
    %c0_108 = arith.constant 0 : index
    %93 = vector.load %arg7[%c0_106, %c0_107, %c0_108] : memref<1x1x128xf32, #tpu.memory_space<vmem>>, vector<1x1x128xf32>
    %94 = vector.shape_cast %93 : vector<1x1x128xf32> to vector<1x128xf32>
    %95 = vector.shape_cast %85 : vector<1x128xf32> to vector<1x1x128xf32>
    tpu.vector_store %arg7[%c0_106, %c0_107, %c0_108], %95 {strides = array<i32>} : memref<1x1x128xf32, #tpu.memory_space<vmem>>, vector<1x1x128xf32>,
    return
  }
  func.func @transform_0(%arg0: i32) -> (i32, i32, i32, i32) {
    %c0_i32 = arith.constant 0 : i32
    %c0_i32_0 = arith.constant 0 : i32
    %c0_i32_1 = arith.constant 0 : i32
    %c0_i32_2 = arith.constant 0 : i32
    return %arg0, %c0_i32, %c0_i32_0, %c0_i32_1 : i32, i32, i32, i32
  }
  func.func @transform_1(%arg0: i32) -> (i32, i32) {
    %c0_i32 = arith.constant 0 : i32
    %c0_i32_0 = arith.constant 0 : i32
    %c0_i32_1 = arith.constant 0 : i32
    return %c0_i32, %c0_i32_0 : i32, i32
  }
  func.func @transform_2(%arg0: i32) -> (i32, i32) {
    %c0_i32 = arith.constant 0 : i32
    %c0_i32_0 = arith.constant 0 : i32
    %c0_i32_1 = arith.constant 0 : i32
    return %c0_i32, %c0_i32_0 : i32, i32
  }
  func.func @transform_3(%arg0: i32) -> (i32, i32, i32, i32) {
    %c0_i32 = arith.constant 0 : i32
    %c0_i32_0 = arith.constant 0 : i32
    %c0_i32_1 = arith.constant 0 : i32
    %c0_i32_2 = arith.constant 0 : i32
    %c0_i32_3 = arith.constant 0 : i32
    return %c0_i32, %c0_i32_0, %c0_i32_1, %c0_i32_2 : i32, i32, i32, i32
  }
  func.func @transform_4(%arg0: i32) -> (i32, i32, i32, i32) {
    %c0_i32 = arith.constant 0 : i32
    %c0_i32_0 = arith.constant 0 : i32
    %c0_i32_1 = arith.constant 0 : i32
    %c0_i32_2 = arith.constant 0 : i32
    return %arg0, %c0_i32, %c0_i32_0, %c0_i32_1 : i32, i32, i32, i32
  }
  func.func @transform_5(%arg0: i32) -> (i32, i32, i32) {
    %c0_i32 = arith.constant 0 : i32
    %c0_i32_0 = arith.constant 0 : i32
    %c0_i32_1 = arith.constant 0 : i32
    return %arg0, %c0_i32, %c0_i32_0 : i32, i32, i32
  }
  func.func @transform_6(%arg0: i32) -> (i32, i32, i32) {
    %c0_i32 = arith.constant 0 : i32
    %c0_i32_0 = arith.constant 0 : i32
    %c0_i32_1 = arith.constant 0 : i32
    return %arg0, %c0_i32, %c0_i32_0 : i32, i32, i32
  }
}

</mosaic_0001>

<llo_original>
// kernel: basic_block_forward.5
$region0: #{basic_block_forward.5}
  #allocation0 [shape = 'u32[]', space=smem, size = 0x4, offset = 0x4, fixed_abs, tag = 'smem constant byte address 0x4 - core index']
  #allocation1 [shape = 'u32[144,128]{1,0:T(1,128)}', space=vmem, size = 0x12000, scoped, tag = 'internal scratch']
  %s0 = inlined_call_operand.vmem [shape: f32[2,16,16,128], index: 0, kind: input, shape index: {}]
  %s1 = inlined_call_operand.vmem [shape: f32[2,16,16,128], index: 1, kind: input, shape index: {}]
  %s2 = inlined_call_operand.vmem [shape: f32[1,128], index: 2, kind: input, shape index: {}]
  %s3 = inlined_call_operand.vmem [shape: f32[1,128], index: 3, kind: input, shape index: {}]
  %s4 = inlined_call_operand.vmem [shape: f32[2,16,16,128], index: 4, kind: output, shape index: {}]
  %s5 = sld [smem:[#allocation0]]
  $region49: #{basic_block_forward.5} parent=0
    _
  %s7 = ssub.s32 1, %s5
  %s8 = scalar_select 0, %s7, %s5
  loop: start=0, step=1, limit=4
  $region2: #{basic_block_forward.5} parent=0 // loop_pre_header
    _
  $region3: #{basic_block_forward.5} parent=0 // loop_header
    %s10 = sphi 0, %s14
    %p11 = scmp.ge.s32.totalorder %s10, 4
    %s20 = sphi 0, %s22
    %s23 = sphi 0, %s20
    %s24 = sphi 0, %s23
    %s40 = sphi 0, %s24
    %s46 = sphi 0, %s48
    %s49 = sphi 0, %s46
    %s50 = sphi 0, %s49
    %s66 = sphi 0, %s50
    %s70 = sphi 0, %s70
    %s72 = sphi 0, %s70
    %s73 = sphi 0, %s72
    %s87 = sphi 0, %s73
    %s91 = sphi 0, %s91
    %s93 = sphi 0, %s91
    %s94 = sphi 0, %s93
    %s108 = sphi 0, %s94
    %s114 = sphi 0, %s116
    %s117 = sphi 0, %s114
    %s118 = sphi 0, %s117
    %s134 = sphi 0, %s118
  $region4: #{basic_block_forward.5} parent=0 // loop_header_branch
    %13 = sbr.rel (%p11) target = $region8
  $region5: #{basic_block_forward.5} parent=0 // loop_body
    %s15 = ssub.s32 %s10, 1
    %s16 = ssub.s32 %s10, 2
    %s17 = sadd.s32 %s10, 1
    %s18 = ssub.s32 %s10, %s17
    %p19 = scmp.eq.s32.totalorder %s18, 0
    %s21 = sadd.s32 %s20, 1
    %s22 = scalar_select %p19, %s20, %s21
    %p25 = pneg %p19
    %p26 = scmp.eq.s32.totalorder %s10, 1
    %p27 = por %p25, %p26
    %p28 = scmp.ne.s32.totalorder %s20, %s23
    %p29 = scmp.eq.s32.totalorder %s10, 0
    %p30 = por %p28, %p29
    %p31 = scmp.ne.s32.totalorder %s20, %s23
    %p32 = scmp.eq.s32.totalorder %s15, 1
    %p33 = por %p31, %p32
    %p34 = scmp.ne.s32.totalorder %s23, %s24
    %p35 = scmp.eq.s32.totalorder %s15, 0
    %p36 = por %p34, %p35
    %p37 = scmp.ne.s32.totalorder %s23, %s24
    %p38 = scmp.eq.s32.totalorder %s16, 1
    %p39 = por %p37, %p38
    %p41 = scmp.ne.s32.totalorder %s24, %s40
    %p42 = scmp.eq.s32.totalorder %s16, 0
    %p43 = por %p41, %p42
    %s44 = ssub.s32 %s10, %s17
    %p45 = scmp.eq.s32.totalorder %s44, 0
    %s47 = sadd.s32 %s46, 1
    %s48 = scalar_select %p45, %s46, %s47
    %p51 = pneg %p45
    %p52 = scmp.eq.s32.totalorder %s10, 1
    %p53 = por %p51, %p52
    %p54 = scmp.ne.s32.totalorder %s46, %s49
    %p55 = scmp.eq.s32.totalorder %s10, 0
    %p56 = por %p54, %p55
    %p57 = scmp.ne.s32.totalorder %s46, %s49
    %p58 = scmp.eq.s32.totalorder %s15, 1
    %p59 = por %p57, %p58
    %p60 = scmp.ne.s32.totalorder %s49, %s50
    %p61 = scmp.eq.s32.totalorder %s15, 0
    %p62 = por %p60, %p61
    %p63 = scmp.ne.s32.totalorder %s49, %s50
    %p64 = scmp.eq.s32.totalorder %s16, 1
    %p65 = por %p63, %p64
    %p67 = scmp.ne.s32.totalorder %s50, %s66
    %p68 = scmp.eq.s32.totalorder %s16, 0
    %p69 = por %p67, %p68
    %s71 = sadd.s32 %s70, 1
    %p74 = scmp.eq.s32.totalorder %s10, 1
    %p75 = scmp.ne.s32.totalorder %s70, %s72
    %p76 = scmp.eq.s32.totalorder %s10, 0
    %p77 = por %p75, %p76
    %p78 = scmp.ne.s32.totalorder %s70, %s72
    %p79 = scmp.eq.s32.totalorder %s15, 1
    %p80 = por %p78, %p79
    %p81 = scmp.ne.s32.totalorder %s72, %s73
    %p82 = scmp.eq.s32.totalorder %s15, 0
    %p83 = por %p81, %p82
    %p84 = scmp.ne.s32.totalorder %s72, %s73
    %p85 = scmp.eq.s32.totalorder %s16, 1
    %p86 = por %p84, %p85
    %p88 = scmp.ne.s32.totalorder %s73, %s87
    %p89 = scmp.eq.s32.totalorder %s16, 0
    %p90 = por %p88, %p89
    %s92 = sadd.s32 %s91, 1
    %p95 = scmp.eq.s32.totalorder %s10, 1
    %p96 = scmp.ne.s32.totalorder %s91, %s93
    %p97 = scmp.eq.s32.totalorder %s10, 0
    %p98 = por %p96, %p97
    %p99 = scmp.ne.s32.totalorder %s91, %s93
    %p100 = scmp.eq.s32.totalorder %s15, 1
    %p101 = por %p99, %p100
    %p102 = scmp.ne.s32.totalorder %s93, %s94
    %p103 = scmp.eq.s32.totalorder %s15, 0
    %p104 = por %p102, %p103
    %p105 = scmp.ne.s32.totalorder %s93, %s94
    %p106 = scmp.eq.s32.totalorder %s16, 1
    %p107 = por %p105, %p106
    %p109 = scmp.ne.s32.totalorder %s94, %s108
    %p110 = scmp.eq.s32.totalorder %s16, 0
    %p111 = por %p109, %p110
    %s112 = ssub.s32 %s10, %s17
    %p113 = scmp.eq.s32.totalorder %s112, 0
    %s115 = sadd.s32 %s114, 1
    %s116 = scalar_select %p113, %s114, %s115
    %p119 = pneg %p113
    %p120 = scmp.eq.s32.totalorder %s10, 1
    %p121 = por %p119, %p120
    %p122 = scmp.ne.s32.totalorder %s114, %s117
    %p123 = scmp.eq.s32.totalorder %s10, 0
    %p124 = por %p122, %p123
    %p125 = scmp.ne.s32.totalorder %s114, %s117
    %p126 = scmp.eq.s32.totalorder %s15, 1
    %p127 = por %p125, %p126
    %p128 = scmp.ne.s32.totalorder %s117, %s118
    %p129 = scmp.eq.s32.totalorder %s15, 0
    %p130 = por %p128, %p129
    %p131 = scmp.ne.s32.totalorder %s117, %s118
    %p132 = scmp.eq.s32.totalorder %s16, 1
    %p133 = por %p131, %p132
    %p135 = scmp.ne.s32.totalorder %s118, %s134
    %p136 = scmp.eq.s32.totalorder %s16, 0
    %p137 = por %p135, %p136
    %p138 = scmp.le.s32.totalorder 1, %s10
    %p139 = scmp.lt.s32.totalorder %s10, 3
    %p140 = pnand %p138, %p139
    %p141 = pneg %p140
    // Predicated region
    $region9: #{basic_block_forward.5} parent=5 // pred_check
      _
    $region10: #{basic_block_forward.5} parent=5 // pred_check_branch
      %143 = sbr.rel (%p140) target = $region12
    $region11: #{basic_block_forward.5} parent=5 // pred_region
      %s144 = ssub.s32 %s10, 1
      // Predicated region
      $region13: #{basic_block_forward.5} parent=11 // pred_check
        %p145 = pneg %p83
      $region14: #{basic_block_forward.5} parent=11 // pred_check_branch
        %147 = sbr.rel (%p145) target = $region16
      $region15: #{basic_block_forward.5} parent=11 // pred_region
        _
      $region16: #{basic_block_forward.5} parent=11 // pred_fallthru
        _
      // Predicated region
      $region17: #{basic_block_forward.5} parent=11 // pred_check
        %p148 = pneg %p104
      $region18: #{basic_block_forward.5} parent=11 // pred_check_branch
        %150 = sbr.rel (%p148) target = $region20
      $region19: #{basic_block_forward.5} parent=11 // pred_region
        _
      $region20: #{basic_block_forward.5} parent=11 // pred_fallthru
        _
    $region12: #{basic_block_forward.5} parent=5 // pred_fallthru
      _
    %p151 = scmp.lt.s32.totalorder %s10, 2
    // Predicated region
    $region21: #{basic_block_forward.5} parent=5 // pred_check
      %p152 = pneg %p151
    $region22: #{basic_block_forward.5} parent=5 // pred_check_branch
      %154 = sbr.rel (%p152) target = $region24
    $region23: #{basic_block_forward.5} parent=5 // pred_region
      // Predicated region
      $region25: #{basic_block_forward.5} parent=23 // pred_check
        %p155 = pneg %p30
      $region26: #{basic_block_forward.5} parent=23 // pred_check_branch
        %157 = sbr.rel (%p155) target = $region28
      $region27: #{basic_block_forward.5} parent=23 // pred_region
        %p158 = scmp.lt.s32.totalorder %s10, 1
        %s159 = scalar_select %p158, %s10, 1
        %s160 = smul.addr %s159, 32
        %s161 = smul.addr %s160, 8
        %s162 = scalar_lea.vmem %s0, %s161
      $region28: #{basic_block_forward.5} parent=23 // pred_fallthru
        _
      // Predicated region
      $region29: #{basic_block_forward.5} parent=23 // pred_check
        %p163 = pneg %p56
      $region30: #{basic_block_forward.5} parent=23 // pred_check_branch
        %165 = sbr.rel (%p163) target = $region32
      $region31: #{basic_block_forward.5} parent=23 // pred_region
        %p166 = scmp.lt.s32.totalorder %s10, 1
        %s167 = scalar_select %p166, %s10, 1
        %s168 = smul.addr %s167, 32
        %s169 = smul.addr %s168, 8
        %s170 = scalar_lea.vmem %s1, %s169
      $region32: #{basic_block_forward.5} parent=23 // pred_fallthru
        _
    $region24: #{basic_block_forward.5} parent=5 // pred_fallthru
      _
    %p171 = scmp.le.s32.totalorder 1, %s10
    %p172 = scmp.lt.s32.totalorder %s10, 3
    %p173 = pnand %p171, %p172
    %p174 = pneg %p173
    // Predicated region
    $region33: #{basic_block_forward.5} parent=5 // pred_check
      _
    $region34: #{basic_block_forward.5} parent=5 // pred_check_branch
      %176 = sbr.rel (%p173) target = $region36
    $region35: #{basic_block_forward.5} parent=5 // pred_region
      %s177 = ssub.s32 %s10, 1
      %p178 = scmp.lt.s32.totalorder %s15, 1
      %s179 = scalar_select %p178, %s15, 1
      %s180 = smul.addr %s179, 32
      %s181 = smul.addr %s180, 8
      %s182 = scalar_lea.vmem %s0, %s181
      %p183 = pneg %p36
      %p184 = pneg %p33
      %p185 = scmp.lt.s32.totalorder %s15, 1
      %s186 = scalar_select %p185, %s15, 1
      %s187 = smul.addr %s186, 32
      %s188 = smul.addr %s187, 8
      %s189 = scalar_lea.vmem %s1, %s188
      %p190 = pneg %p62
      %p191 = pneg %p59
      %p192 = pneg %p83
      %p193 = pneg %p80
      %p194 = pneg %p104
      %p195 = pneg %p101
      %p196 = pneg %p130
      %p197 = pneg %p127
      %p198 = scmp.lt.s32.totalorder %s15, 1
      %s199 = scalar_select %p198, %s15, 1
      %s200 = smul.addr %s199, 32
      %s201 = smul.addr %s200, 8
      %s202 = scalar_lea.vmem %s4, %s201
      %p203 = scmp.lt.s32.totalorder %s15, 1
      %s204 = scalar_select %p203, %s15, 1
      %s205 = smul.addr %s204, 32
      %s206 = smul.addr %s205, 8
      %s207 = scalar_lea.vmem %s0, %s206
      %p208 = scmp.lt.s32.totalorder %s15, 1
      %s209 = scalar_select %p208, %s15, 1
      %s210 = smul.addr %s209, 32
      %s211 = smul.addr %s210, 8
      %s212 = scalar_lea.vmem %s1, %s211
      %p213 = scmp.lt.s32.totalorder %s15, 1
      %s214 = scalar_select %p213, %s15, 1
      %s215 = smul.addr %s214, 32
      %s216 = smul.addr %s215, 8
      %s217 = scalar_lea.vmem %s4, %s216
      %v218 = vld [vmem:[%s207] sm:$0xff]
      %v219 = vld [vmem:[%s207 + $0x8] sm:$0xff]
      %v220 = vld [vmem:[%s207 + $0x10] sm:$0xff]
      %v221 = vld [vmem:[%s207 + $0x18] sm:$0xff]
      %v222 = vld [vmem:[%s207 + $0x20] sm:$0xff]
      %v223 = vld [vmem:[%s207 + $0x28] sm:$0xff]
      %v224 = vld [vmem:[%s207 + $0x30] sm:$0xff]
      %v225 = vld [vmem:[%s207 + $0x38] sm:$0xff]
      %v226 = vld [vmem:[%s207 + $0x40] sm:$0xff]
      %v227 = vld [vmem:[%s207 + $0x48] sm:$0xff]
      %v228 = vld [vmem:[%s207 + $0x50] sm:$0xff]
      %v229 = vld [vmem:[%s207 + $0x58] sm:$0xff]
      %v230 = vld [vmem:[%s207 + $0x60] sm:$0xff]
      %v231 = vld [vmem:[%s207 + $0x68] sm:$0xff]
      %v232 = vld [vmem:[%s207 + $0x70] sm:$0xff]
      %v233 = vld [vmem:[%s207 + $0x78] sm:$0xff]
      %v234 = vld [vmem:[%s207 + $0x80] sm:$0xff]
      %v235 = vld [vmem:[%s207 + $0x88] sm:$0xff]
      %v236 = vld [vmem:[%s207 + $0x90] sm:$0xff]
      %v237 = vld [vmem:[%s207 + $0x98] sm:$0xff]
      %v238 = vld [vmem:[%s207 + $0xa0] sm:$0xff]
      %v239 = vld [vmem:[%s207 + $0xa8] sm:$0xff]
      %v240 = vld [vmem:[%s207 + $0xb0] sm:$0xff]
      %v241 = vld [vmem:[%s207 + $0xb8] sm:$0xff]
      %v242 = vld [vmem:[%s207 + $0xc0] sm:$0xff]
      %v243 = vld [vmem:[%s207 + $0xc8] sm:$0xff]
      %v244 = vld [vmem:[%s207 + $0xd0] sm:$0xff]
      %v245 = vld [vmem:[%s207 + $0xd8] sm:$0xff]
      %v246 = vld [vmem:[%s207 + $0xe0] sm:$0xff]
      %v247 = vld [vmem:[%s207 + $0xe8] sm:$0xff]
      %v248 = vld [vmem:[%s207 + $0xf0] sm:$0xff]
      %v249 = vld [vmem:[%s207 + $0xf8] sm:$0xff]
      %v250 = vld [vmem:[%s212] sm:$0xff]
      %v251 = vld [vmem:[%s212 + $0x8] sm:$0xff]
      %v252 = vld [vmem:[%s212 + $0x10] sm:$0xff]
      %v253 = vld [vmem:[%s212 + $0x18] sm:$0xff]
      %v254 = vld [vmem:[%s212 + $0x20] sm:$0xff]
      %v255 = vld [vmem:[%s212 + $0x28] sm:$0xff]
      %v256 = vld [vmem:[%s212 + $0x30] sm:$0xff]
      %v257 = vld [vmem:[%s212 + $0x38] sm:$0xff]
      %v258 = vld [vmem:[%s212 + $0x40] sm:$0xff]
      %v259 = vld [vmem:[%s212 + $0x48] sm:$0xff]
      %v260 = vld [vmem:[%s212 + $0x50] sm:$0xff]
      %v261 = vld [vmem:[%s212 + $0x58] sm:$0xff]
      %v262 = vld [vmem:[%s212 + $0x60] sm:$0xff]
      %v263 = vld [vmem:[%s212 + $0x68] sm:$0xff]
      %v264 = vld [vmem:[%s212 + $0x70] sm:$0xff]
      %v265 = vld [vmem:[%s212 + $0x78] sm:$0xff]
      %v266 = vld [vmem:[%s212 + $0x80] sm:$0xff]
      %v267 = vld [vmem:[%s212 + $0x88] sm:$0xff]
      %v268 = vld [vmem:[%s212 + $0x90] sm:$0xff]
      %v269 = vld [vmem:[%s212 + $0x98] sm:$0xff]
      %v270 = vld [vmem:[%s212 + $0xa0] sm:$0xff]
      %v271 = vld [vmem:[%s212 + $0xa8] sm:$0xff]
      %v272 = vld [vmem:[%s212 + $0xb0] sm:$0xff]
      %v273 = vld [vmem:[%s212 + $0xb8] sm:$0xff]
      %v274 = vld [vmem:[%s212 + $0xc0] sm:$0xff]
      %v275 = vld [vmem:[%s212 + $0xc8] sm:$0xff]
      %v276 = vld [vmem:[%s212 + $0xd0] sm:$0xff]
      %v277 = vld [vmem:[%s212 + $0xd8] sm:$0xff]
      %v278 = vld [vmem:[%s212 + $0xe0] sm:$0xff]
      %v279 = vld [vmem:[%s212 + $0xe8] sm:$0xff]
      %v280 = vld [vmem:[%s212 + $0xf0] sm:$0xff]
      %v281 = vld [vmem:[%s212 + $0xf8] sm:$0xff]
      %v282 = vld [vmem:[%s2] sm:$0x1]
      %v284 = vlaneseq
      %v285 = vshrl.u32 %v284, 7
      %v286 = vsub.s32 0, %v285
      %v287 = vrot.slane %v282, %v286
      %v289 = vmul.f32 %v218, %v287
      %v290 = vmul.f32 %v219, %v287
      %v291 = vmul.f32 %v220, %v287
      %v292 = vmul.f32 %v221, %v287
      %v293 = vmul.f32 %v222, %v287
      %v294 = vmul.f32 %v223, %v287
      %v295 = vmul.f32 %v224, %v287
      %v296 = vmul.f32 %v225, %v287
      %v297 = vmul.f32 %v226, %v287
      %v298 = vmul.f32 %v227, %v287
      %v299 = vmul.f32 %v228, %v287
      %v300 = vmul.f32 %v229, %v287
      %v301 = vmul.f32 %v230, %v287
      %v302 = vmul.f32 %v231, %v287
      %v303 = vmul.f32 %v232, %v287
      %v304 = vmul.f32 %v233, %v287
      %v305 = vmul.f32 %v234, %v287
      %v306 = vmul.f32 %v235, %v287
      %v307 = vmul.f32 %v236, %v287
      %v308 = vmul.f32 %v237, %v287
      %v309 = vmul.f32 %v238, %v287
      %v310 = vmul.f32 %v239, %v287
      %v311 = vmul.f32 %v240, %v287
      %v312 = vmul.f32 %v241, %v287
      %v313 = vmul.f32 %v242, %v287
      %v314 = vmul.f32 %v243, %v287
      %v315 = vmul.f32 %v244, %v287
      %v316 = vmul.f32 %v245, %v287
      %v317 = vmul.f32 %v246, %v287
      %v318 = vmul.f32 %v247, %v287
      %v319 = vmul.f32 %v248, %v287
      %v320 = vmul.f32 %v249, %v287
      %v321 = vld [vmem:[%s3] sm:$0x1]
      %v323 = vlaneseq
      %v324 = vshrl.u32 %v323, 7
      %v325 = vsub.s32 0, %v324
      %v326 = vrot.slane %v321, %v325
      %v328 = vadd.f32 %v289, %v326
      %v329 = vadd.f32 %v290, %v326
      %v330 = vadd.f32 %v291, %v326
      %v331 = vadd.f32 %v292, %v326
      %v332 = vadd.f32 %v293, %v326
      %v333 = vadd.f32 %v294, %v326
      %v334 = vadd.f32 %v295, %v326
      %v335 = vadd.f32 %v296, %v326
      %v336 = vadd.f32 %v297, %v326
      %v337 = vadd.f32 %v298, %v326
      %v338 = vadd.f32 %v299, %v326
      %v339 = vadd.f32 %v300, %v326
      %v340 = vadd.f32 %v301, %v326
      %v341 = vadd.f32 %v302, %v326
      %v342 = vadd.f32 %v303, %v326
      %v343 = vadd.f32 %v304, %v326
      %v344 = vadd.f32 %v305, %v326
      %v345 = vadd.f32 %v306, %v326
      %v346 = vadd.f32 %v307, %v326
      %v347 = vadd.f32 %v308, %v326
      %v348 = vadd.f32 %v309, %v326
      %v349 = vadd.f32 %v310, %v326
      %v350 = vadd.f32 %v311, %v326
      %v351 = vadd.f32 %v312, %v326
      %v352 = vadd.f32 %v313, %v326
      %v353 = vadd.f32 %v314, %v326
      %v354 = vadd.f32 %v315, %v326
      %v355 = vadd.f32 %v316, %v326
      %v356 = vadd.f32 %v317, %v326
      %v357 = vadd.f32 %v318, %v326
      %v358 = vadd.f32 %v319, %v326
      %v359 = vadd.f32 %v320, %v326
      %v360 = vadd.f32 %v328, %v250
      %v361 = vadd.f32 %v329, %v251
      %v362 = vadd.f32 %v330, %v252
      %v363 = vadd.f32 %v331, %v253
      %v364 = vadd.f32 %v332, %v254
      %v365 = vadd.f32 %v333, %v255
      %v366 = vadd.f32 %v334, %v256
      %v367 = vadd.f32 %v335, %v257
      %v368 = vadd.f32 %v336, %v258
      %v369 = vadd.f32 %v337, %v259
      %v370 = vadd.f32 %v338, %v260
      %v371 = vadd.f32 %v339, %v261
      %v372 = vadd.f32 %v340, %v262
      %v373 = vadd.f32 %v341, %v263
      %v374 = vadd.f32 %v342, %v264
      %v375 = vadd.f32 %v343, %v265
      %v376 = vadd.f32 %v344, %v266
      %v377 = vadd.f32 %v345, %v267
      %v378 = vadd.f32 %v346, %v268
      %v379 = vadd.f32 %v347, %v269
      %v380 = vadd.f32 %v348, %v270
      %v381 = vadd.f32 %v349, %v271
      %v382 = vadd.f32 %v350, %v272
      %v383 = vadd.f32 %v351, %v273
      %v384 = vadd.f32 %v352, %v274
      %v385 = vadd.f32 %v353, %v275
      %v386 = vadd.f32 %v354, %v276
      %v387 = vadd.f32 %v355, %v277
      %v388 = vadd.f32 %v356, %v278
      %v389 = vadd.f32 %v357, %v279
      %v390 = vadd.f32 %v358, %v280
      %v391 = vadd.f32 %v359, %v281
      %v392 = vmax.f32 %v360, 0.0
      %v393 = vmax.f32 %v361, 0.0
      %v394 = vmax.f32 %v362, 0.0
      %v395 = vmax.f32 %v363, 0.0
      %v396 = vmax.f32 %v364, 0.0
      %v397 = vmax.f32 %v365, 0.0
      %v398 = vmax.f32 %v366, 0.0
      %v399 = vmax.f32 %v367, 0.0
      %v400 = vmax.f32 %v368, 0.0
      %v401 = vmax.f32 %v369, 0.0
      %v402 = vmax.f32 %v370, 0.0
      %v403 = vmax.f32 %v371, 0.0
      %v404 = vmax.f32 %v372, 0.0
      %v405 = vmax.f32 %v373, 0.0
      %v406 = vmax.f32 %v374, 0.0
      %v407 = vmax.f32 %v375, 0.0
      %v408 = vmax.f32 %v376, 0.0
      %v409 = vmax.f32 %v377, 0.0
      %v410 = vmax.f32 %v378, 0.0
      %v411 = vmax.f32 %v379, 0.0
      %v412 = vmax.f32 %v380, 0.0
      %v413 = vmax.f32 %v381, 0.0
      %v414 = vmax.f32 %v382, 0.0
      %v415 = vmax.f32 %v383, 0.0
      %v416 = vmax.f32 %v384, 0.0
      %v417 = vmax.f32 %v385, 0.0
      %v418 = vmax.f32 %v386, 0.0
      %v419 = vmax.f32 %v387, 0.0
      %v420 = vmax.f32 %v388, 0.0
      %v421 = vmax.f32 %v389, 0.0
      %v422 = vmax.f32 %v390, 0.0
      %v423 = vmax.f32 %v391, 0.0
      %424 = vst [vmem:[%s217] sm:$0xff] %v392
      %425 = vst [vmem:[%s217 + $0x8] sm:$0xff] %v393
      %426 = vst [vmem:[%s217 + $0x10] sm:$0xff] %v394
      %427 = vst [vmem:[%s217 + $0x18] sm:$0xff] %v395
      %428 = vst [vmem:[%s217 + $0x20] sm:$0xff] %v396
      %429 = vst [vmem:[%s217 + $0x28] sm:$0xff] %v397
      %430 = vst [vmem:[%s217 + $0x30] sm:$0xff] %v398
      %431 = vst [vmem:[%s217 + $0x38] sm:$0xff] %v399
      %432 = vst [vmem:[%s217 + $0x40] sm:$0xff] %v400
      %433 = vst [vmem:[%s217 + $0x48] sm:$0xff] %v401
      %434 = vst [vmem:[%s217 + $0x50] sm:$0xff] %v402
      %435 = vst [vmem:[%s217 + $0x58] sm:$0xff] %v403
      %436 = vst [vmem:[%s217 + $0x60] sm:$0xff] %v404
      %437 = vst [vmem:[%s217 + $0x68] sm:$0xff] %v405
      %438 = vst [vmem:[%s217 + $0x70] sm:$0xff] %v406
      %439 = vst [vmem:[%s217 + $0x78] sm:$0xff] %v407
      %440 = vst [vmem:[%s217 + $0x80] sm:$0xff] %v408
      %441 = vst [vmem:[%s217 + $0x88] sm:$0xff] %v409
      %442 = vst [vmem:[%s217 + $0x90] sm:$0xff] %v410
      %443 = vst [vmem:[%s217 + $0x98] sm:$0xff] %v411
      %444 = vst [vmem:[%s217 + $0xa0] sm:$0xff] %v412
      %445 = vst [vmem:[%s217 + $0xa8] sm:$0xff] %v413
      %446 = vst [vmem:[%s217 + $0xb0] sm:$0xff] %v414
      %447 = vst [vmem:[%s217 + $0xb8] sm:$0xff] %v415
      %448 = vst [vmem:[%s217 + $0xc0] sm:$0xff] %v416
      %449 = vst [vmem:[%s217 + $0xc8] sm:$0xff] %v417
      %450 = vst [vmem:[%s217 + $0xd0] sm:$0xff] %v418
      %451 = vst [vmem:[%s217 + $0xd8] sm:$0xff] %v419
      %452 = vst [vmem:[%s217 + $0xe0] sm:$0xff] %v420
      %453 = vst [vmem:[%s217 + $0xe8] sm:$0xff] %v421
      %454 = vst [vmem:[%s217 + $0xf0] sm:$0xff] %v422
      %455 = vst [vmem:[%s217 + $0xf8] sm:$0xff] %v423
      %p456 = scmp.lt.s32.totalorder %s15, 1
      %s457 = scalar_select %p456, %s15, 1
      %s458 = smul.addr %s457, 32
      %s459 = smul.addr %s458, 8
      %s460 = scalar_lea.vmem %s4, %s459
      // Predicated region
      $region37: #{basic_block_forward.5} parent=35 // pred_check
        %p461 = pneg %p127
      $region38: #{basic_block_forward.5} parent=35 // pred_check_branch
        %463 = sbr.rel (%p461) target = $region40
      $region39: #{basic_block_forward.5} parent=35 // pred_region
        _
      $region40: #{basic_block_forward.5} parent=35 // pred_fallthru
        _
    $region36: #{basic_block_forward.5} parent=5 // pred_fallthru
      _
    %p464 = scmp.le.s32.totalorder 2, %s10
    // Predicated region
    $region41: #{basic_block_forward.5} parent=5 // pred_check
      %p465 = pneg %p464
    $region42: #{basic_block_forward.5} parent=5 // pred_check_branch
      %467 = sbr.rel (%p465) target = $region44
    $region43: #{basic_block_forward.5} parent=5 // pred_region
      %s468 = ssub.s32 %s10, 2
      // Predicated region
      $region45: #{basic_block_forward.5} parent=43 // pred_check
        %p469 = pneg %p133
      $region46: #{basic_block_forward.5} parent=43 // pred_check_branch
        %471 = sbr.rel (%p469) target = $region48
      $region47: #{basic_block_forward.5} parent=43 // pred_region
        %p472 = scmp.lt.s32.totalorder %s16, 1
        %s473 = scalar_select %p472, %s16, 1
        %s474 = smul.addr %s473, 32
        %s475 = smul.addr %s474, 8
        %s476 = scalar_lea.vmem %s4, %s475
      $region48: #{basic_block_forward.5} parent=43 // pred_fallthru
        _
    $region44: #{basic_block_forward.5} parent=5 // pred_fallthru
      _
  $region6: #{basic_block_forward.5} parent=0 // loop_footer
    %s14 = sadd.s32 1, %s10
  $region7: #{basic_block_forward.5} parent=0 // loop_footer_branch
    %9 = sbr.rel target = $region3
  $region8: #{basic_block_forward.5} parent=0 // loop_exit
    _

// kernel: basic_block_forward.3
$region0: #{basic_block_forward.3}
  #allocation0 [shape = 'u32[]', space=smem, size = 0x4, offset = 0x4, fixed_abs, tag = 'smem constant byte address 0x4 - core index']
  #allocation1 [shape = 'u32[144,128]{1,0:T(1,128)}', space=vmem, size = 0x12000, scoped, tag = 'internal scratch']
  #allocation2 [shape = 'bf16[18,18,128]{2,1,0:T(8,128)(2,1)}', space=vmem, size = 0x1b000, scoped, tag = 'scratch operand']
  %s0 = inlined_call_operand.vmem [shape: f32[2,16,16,128], index: 0, kind: input, shape index: {}]
  %s1 = inlined_call_operand.vmem [shape: bf16[3,3,128,128], index: 1, kind: input, shape index: {}]
  %s2 = inlined_call_operand.vmem [shape: f32[2,16,16,128], index: 2, kind: output, shape index: {0}]
  %s3 = inlined_call_operand.vmem [shape: f32[2,1,128], index: 3, kind: output, shape index: {1}]
  %s4 = inlined_call_operand.vmem [shape: f32[2,1,128], index: 4, kind: output, shape index: {2}]
  %5 = xla_tuple %s2, %s3, %s4
  %s6 = sld [smem:[#allocation0]]
  $region57: #{basic_block_forward.3} parent=0
    _
  %s8 = ssub.s32 1, %s6
  %s9 = scalar_select 0, %s8, %s6
  loop: start=0, step=1, limit=4
  $region2: #{basic_block_forward.3} parent=0 // loop_pre_header
    _
  $region3: #{basic_block_forward.3} parent=0 // loop_header
    %s11 = sphi 0, %s15
    %p12 = scmp.ge.s32.totalorder %s11, 4
    %s21 = sphi 0, %s23
    %s24 = sphi 0, %s21
    %s25 = sphi 0, %s24
    %s41 = sphi 0, %s25
    %s45 = sphi 0, %s45
    %s47 = sphi 0, %s45
    %s48 = sphi 0, %s47
    %s62 = sphi 0, %s48
    %s68 = sphi 0, %s70
    %s71 = sphi 0, %s68
    %s72 = sphi 0, %s71
    %s88 = sphi 0, %s72
    %s94 = sphi 0, %s96
    %s97 = sphi 0, %s94
    %s98 = sphi 0, %s97
    %s114 = sphi 0, %s98
    %s120 = sphi 0, %s122
    %s123 = sphi 0, %s120
    %s124 = sphi 0, %s123
    %s140 = sphi 0, %s124
  $region4: #{basic_block_forward.3} parent=0 // loop_header_branch
    %14 = sbr.rel (%p12) target = $region8
  $region5: #{basic_block_forward.3} parent=0 // loop_body
    %s16 = ssub.s32 %s11, 1
    %s17 = ssub.s32 %s11, 2
    %s18 = sadd.s32 %s11, 1
    %s19 = ssub.s32 %s11, %s18
    %p20 = scmp.eq.s32.totalorder %s19, 0
    %s22 = sadd.s32 %s21, 1
    %s23 = scalar_select %p20, %s21, %s22
    %p26 = pneg %p20
    %p27 = scmp.eq.s32.totalorder %s11, 1
    %p28 = por %p26, %p27
    %p29 = scmp.ne.s32.totalorder %s21, %s24
    %p30 = scmp.eq.s32.totalorder %s11, 0
    %p31 = por %p29, %p30
    %p32 = scmp.ne.s32.totalorder %s21, %s24
    %p33 = scmp.eq.s32.totalorder %s16, 1
    %p34 = por %p32, %p33
    %p35 = scmp.ne.s32.totalorder %s24, %s25
    %p36 = scmp.eq.s32.totalorder %s16, 0
    %p37 = por %p35, %p36
    %p38 = scmp.ne.s32.totalorder %s24, %s25
    %p39 = scmp.eq.s32.totalorder %s17, 1
    %p40 = por %p38, %p39
    %p42 = scmp.ne.s32.totalorder %s25, %s41
    %p43 = scmp.eq.s32.totalorder %s17, 0
    %p44 = por %p42, %p43
    %s46 = sadd.s32 %s45, 1
    %p49 = scmp.eq.s32.totalorder %s11, 1
    %p50 = scmp.ne.s32.totalorder %s45, %s47
    %p51 = scmp.eq.s32.totalorder %s11, 0
    %p52 = por %p50, %p51
    %p53 = scmp.ne.s32.totalorder %s45, %s47
    %p54 = scmp.eq.s32.totalorder %s16, 1
    %p55 = por %p53, %p54
    %p56 = scmp.ne.s32.totalorder %s47, %s48
    %p57 = scmp.eq.s32.totalorder %s16, 0
    %p58 = por %p56, %p57
    %p59 = scmp.ne.s32.totalorder %s47, %s48
    %p60 = scmp.eq.s32.totalorder %s17, 1
    %p61 = por %p59, %p60
    %p63 = scmp.ne.s32.totalorder %s48, %s62
    %p64 = scmp.eq.s32.totalorder %s17, 0
    %p65 = por %p63, %p64
    %s66 = ssub.s32 %s11, %s18
    %p67 = scmp.eq.s32.totalorder %s66, 0
    %s69 = sadd.s32 %s68, 1
    %s70 = scalar_select %p67, %s68, %s69
    %p73 = pneg %p67
    %p74 = scmp.eq.s32.totalorder %s11, 1
    %p75 = por %p73, %p74
    %p76 = scmp.ne.s32.totalorder %s68, %s71
    %p77 = scmp.eq.s32.totalorder %s11, 0
    %p78 = por %p76, %p77
    %p79 = scmp.ne.s32.totalorder %s68, %s71
    %p80 = scmp.eq.s32.totalorder %s16, 1
    %p81 = por %p79, %p80
    %p82 = scmp.ne.s32.totalorder %s71, %s72
    %p83 = scmp.eq.s32.totalorder %s16, 0
    %p84 = por %p82, %p83
    %p85 = scmp.ne.s32.totalorder %s71, %s72
    %p86 = scmp.eq.s32.totalorder %s17, 1
    %p87 = por %p85, %p86
    %p89 = scmp.ne.s32.totalorder %s72, %s88
    %p90 = scmp.eq.s32.totalorder %s17, 0
    %p91 = por %p89, %p90
    %s92 = ssub.s32 %s11, %s18
    %p93 = scmp.eq.s32.totalorder %s92, 0
    %s95 = sadd.s32 %s94, 1
    %s96 = scalar_select %p93, %s94, %s95
    %p99 = pneg %p93
    %p100 = scmp.eq.s32.totalorder %s11, 1
    %p101 = por %p99, %p100
    %p102 = scmp.ne.s32.totalorder %s94, %s97
    %p103 = scmp.eq.s32.totalorder %s11, 0
    %p104 = por %p102, %p103
    %p105 = scmp.ne.s32.totalorder %s94, %s97
    %p106 = scmp.eq.s32.totalorder %s16, 1
    %p107 = por %p105, %p106
    %p108 = scmp.ne.s32.totalorder %s97, %s98
    %p109 = scmp.eq.s32.totalorder %s16, 0
    %p110 = por %p108, %p109
    %p111 = scmp.ne.s32.totalorder %s97, %s98
    %p112 = scmp.eq.s32.totalorder %s17, 1
    %p113 = por %p111, %p112
    %p115 = scmp.ne.s32.totalorder %s98, %s114
    %p116 = scmp.eq.s32.totalorder %s17, 0
    %p117 = por %p115, %p116
    %s118 = ssub.s32 %s11, %s18
    %p119 = scmp.eq.s32.totalorder %s118, 0
    %s121 = sadd.s32 %s120, 1
    %s122 = scalar_select %p119, %s120, %s121
    %p125 = pneg %p119
    %p126 = scmp.eq.s32.totalorder %s11, 1
    %p127 = por %p125, %p126
    %p128 = scmp.ne.s32.totalorder %s120, %s123
    %p129 = scmp.eq.s32.totalorder %s11, 0
    %p130 = por %p128, %p129
    %p131 = scmp.ne.s32.totalorder %s120, %s123
    %p132 = scmp.eq.s32.totalorder %s16, 1
    %p133 = por %p131, %p132
    %p134 = scmp.ne.s32.totalorder %s123, %s124
    %p135 = scmp.eq.s32.totalorder %s16, 0
    %p136 = por %p134, %p135
    %p137 = scmp.ne.s32.totalorder %s123, %s124
    %p138 = scmp.eq.s32.totalorder %s17, 1
    %p139 = por %p137, %p138
    %p141 = scmp.ne.s32.totalorder %s124, %s140
    %p142 = scmp.eq.s32.totalorder %s17, 0
    %p143 = por %p141, %p142
    %p144 = scmp.le.s32.totalorder 1, %s11
    %p145 = scmp.lt.s32.totalorder %s11, 3
    %p146 = pnand %p144, %p145
    %p147 = pneg %p146
    // Predicated region
    $region9: #{basic_block_forward.3} parent=5 // pred_check
      _
    $region10: #{basic_block_forward.3} parent=5 // pred_check_branch
      %149 = sbr.rel (%p146) target = $region12
    $region11: #{basic_block_forward.3} parent=5 // pred_region
      %s150 = ssub.s32 %s11, 1
      // Predicated region
      $region13: #{basic_block_forward.3} parent=11 // pred_check
        %p151 = pneg %p58
      $region14: #{basic_block_forward.3} parent=11 // pred_check_branch
        %153 = sbr.rel (%p151) target = $region16
      $region15: #{basic_block_forward.3} parent=11 // pred_region
        _
      $region16: #{basic_block_forward.3} parent=11 // pred_fallthru
        _
    $region12: #{basic_block_forward.3} parent=5 // pred_fallthru
      _
    %p154 = scmp.lt.s32.totalorder %s11, 2
    // Predicated region
    $region17: #{basic_block_forward.3} parent=5 // pred_check
      %p155 = pneg %p154
    $region18: #{basic_block_forward.3} parent=5 // pred_check_branch
      %157 = sbr.rel (%p155) target = $region20
    $region19: #{basic_block_forward.3} parent=5 // pred_region
      // Predicated region
      $region21: #{basic_block_forward.3} parent=19 // pred_check
        %p158 = pneg %p31
      $region22: #{basic_block_forward.3} parent=19 // pred_check_branch
        %160 = sbr.rel (%p158) target = $region24
      $region23: #{basic_block_forward.3} parent=19 // pred_region
        %p161 = scmp.lt.s32.totalorder %s11, 1
        %s162 = scalar_select %p161, %s11, 1
        %s163 = smul.addr %s162, 32
        %s164 = smul.addr %s163, 8
        %s165 = scalar_lea.vmem %s0, %s164
      $region24: #{basic_block_forward.3} parent=19 // pred_fallthru
        _
    $region20: #{basic_block_forward.3} parent=5 // pred_fallthru
      _
    %p166 = scmp.le.s32.totalorder 1, %s11
    %p167 = scmp.lt.s32.totalorder %s11, 3
    %p168 = pnand %p166, %p167
    %p169 = pneg %p168
    // Predicated region
    $region25: #{basic_block_forward.3} parent=5 // pred_check
      _
    $region26: #{basic_block_forward.3} parent=5 // pred_check_branch
      %171 = sbr.rel (%p168) target = $region28
    $region27: #{basic_block_forward.3} parent=5 // pred_region
      %s172 = ssub.s32 %s11, 1
      %p173 = scmp.lt.s32.totalorder %s16, 1
      %s174 = scalar_select %p173, %s16, 1
      %s175 = smul.addr %s174, 32
      %s176 = smul.addr %s175, 8
      %s177 = scalar_lea.vmem %s0, %s176
      %p178 = pneg %p37
      %p179 = pneg %p34
      %p180 = pneg %p58
      %p181 = pneg %p55
      %p182 = pneg %p84
      %p183 = pneg %p81
      %p184 = scmp.lt.s32.totalorder %s16, 1
      %s185 = scalar_select %p184, %s16, 1
      %s186 = smul.addr %s185, 32
      %s187 = smul.addr %s186, 8
      %s188 = scalar_lea.vmem %s2, %s187
      %p189 = pneg %p110
      %p190 = pneg %p107
      %p191 = scmp.lt.s32.totalorder %s16, 1
      %s192 = scalar_select %p191, %s16, 1
      %s193 = scalar_lea.vmem %s3, %s192
      %p194 = pneg %p136
      %p195 = pneg %p133
      %p196 = scmp.lt.s32.totalorder %s16, 1
      %s197 = scalar_select %p196, %s16, 1
      %s198 = scalar_lea.vmem %s4, %s197
      %p199 = scmp.lt.s32.totalorder %s16, 1
      %s200 = scalar_select %p199, %s16, 1
      %s201 = smul.addr %s200, 32
      %s202 = smul.addr %s201, 8
      %s203 = scalar_lea.vmem %s0, %s202
      %p204 = scmp.lt.s32.totalorder %s16, 1
      %s205 = scalar_select %p204, %s16, 1
      %s206 = smul.addr %s205, 32
      %s207 = smul.addr %s206, 8
      %s208 = scalar_lea.vmem %s2, %s207
      %p209 = scmp.lt.s32.totalorder %s16, 1
      %s210 = scalar_select %p209, %s16, 1
      %s211 = scalar_lea.vmem %s3, %s210
      %p212 = scmp.lt.s32.totalorder %s16, 1
      %s213 = scalar_select %p212, %s16, 1
      %s214 = scalar_lea.vmem %s4, %s213
      %v216 = vld [vmem:[%s203] sm:$0xff]
      %v217 = vld [vmem:[%s203 + $0x8] sm:$0xff]
      %v218 = vld [vmem:[%s203 + $0x10] sm:$0xff]
      %v219 = vld [vmem:[%s203 + $0x18] sm:$0xff]
      %v220 = vld [vmem:[%s203 + $0x20] sm:$0xff]
      %v221 = vld [vmem:[%s203 + $0x28] sm:$0xff]
      %v222 = vld [vmem:[%s203 + $0x30] sm:$0xff]
      %v223 = vld [vmem:[%s203 + $0x38] sm:$0xff]
      %v224 = vld [vmem:[%s203 + $0x40] sm:$0xff]
      %v225 = vld [vmem:[%s203 + $0x48] sm:$0xff]
      %v226 = vld [vmem:[%s203 + $0x50] sm:$0xff]
      %v227 = vld [vmem:[%s203 + $0x58] sm:$0xff]
      %v228 = vld [vmem:[%s203 + $0x60] sm:$0xff]
      %v229 = vld [vmem:[%s203 + $0x68] sm:$0xff]
      %v230 = vld [vmem:[%s203 + $0x70] sm:$0xff]
      %v231 = vld [vmem:[%s203 + $0x78] sm:$0xff]
      %v232 = vld [vmem:[%s203 + $0x80] sm:$0xff]
      %v233 = vld [vmem:[%s203 + $0x88] sm:$0xff]
      %v234 = vld [vmem:[%s203 + $0x90] sm:$0xff]
      %v235 = vld [vmem:[%s203 + $0x98] sm:$0xff]
      %v236 = vld [vmem:[%s203 + $0xa0] sm:$0xff]
      %v237 = vld [vmem:[%s203 + $0xa8] sm:$0xff]
      %v238 = vld [vmem:[%s203 + $0xb0] sm:$0xff]
      %v239 = vld [vmem:[%s203 + $0xb8] sm:$0xff]
      %v240 = vld [vmem:[%s203 + $0xc0] sm:$0xff]
      %v241 = vld [vmem:[%s203 + $0xc8] sm:$0xff]
      %v242 = vld [vmem:[%s203 + $0xd0] sm:$0xff]
      %v243 = vld [vmem:[%s203 + $0xd8] sm:$0xff]
      %v244 = vld [vmem:[%s203 + $0xe0] sm:$0xff]
      %v245 = vld [vmem:[%s203 + $0xe8] sm:$0xff]
      %v246 = vld [vmem:[%s203 + $0xf0] sm:$0xff]
      %v247 = vld [vmem:[%s203 + $0xf8] sm:$0xff]
      %v248 = vpack.c.bf16 %v217, %v216
      %v249 = vpack.c.bf16 %v219, %v218
      %v250 = vpack.c.bf16 %v221, %v220
      %v251 = vpack.c.bf16 %v223, %v222
      %v252 = vpack.c.bf16 %v225, %v224
      %v253 = vpack.c.bf16 %v227, %v226
      %v254 = vpack.c.bf16 %v229, %v228
      %v255 = vpack.c.bf16 %v231, %v230
      %v256 = vpack.c.bf16 %v233, %v232
      %v257 = vpack.c.bf16 %v235, %v234
      %v258 = vpack.c.bf16 %v237, %v236
      %v259 = vpack.c.bf16 %v239, %v238
      %v260 = vpack.c.bf16 %v241, %v240
      %v261 = vpack.c.bf16 %v243, %v242
      %v262 = vpack.c.bf16 %v245, %v244
      %v263 = vpack.c.bf16 %v247, %v246
      %264 = vst [vmem:[#allocation2] sm:$0xf] 0
      %265 = vst [vmem:[#allocation2 + $0x4] sm:$0xf] 0
      %266 = vst [vmem:[#allocation2 + $0x8] sm:$0x1] 0
      %s267 = scalar_lea.vmem [#allocation2], 204
      %268 = vst [vmem:[%s267] sm:$0xf] 0
      %269 = vst [vmem:[%s267 + $0x4] sm:$0xf] 0
      %270 = vst [vmem:[%s267 + $0x8] sm:$0x1] 0
      %s271 = scalar_lea.vmem [#allocation2], 12
      %vm272 = vcmask 1040384
      %vm273 = vsmask.f32 256
      %vm274 = vmand %vm272, %vm273
      %v275 = vld [vmem:[%s271] sm:$0x1]
      %v276 = vsel %vm274, 0, %v275
      %277 = vst [vmem:[%s271] sm:$0x1] %v276
      %v278 = vld [vmem:[%s271 + $0xc] sm:$0x1]
      %v279 = vsel %vm274, 0, %v278
      %280 = vst [vmem:[%s271 + $0xc] sm:$0x1] %v279
      %v281 = vld [vmem:[%s271 + $0x18] sm:$0x1]
      %v282 = vsel %vm274, 0, %v281
      %283 = vst [vmem:[%s271 + $0x18] sm:$0x1] %v282
      %v284 = vld [vmem:[%s271 + $0x24] sm:$0x1]
      %v285 = vsel %vm274, 0, %v284
      %286 = vst [vmem:[%s271 + $0x24] sm:$0x1] %v285
      %v287 = vld [vmem:[%s271 + $0x30] sm:$0x1]
      %v288 = vsel %vm274, 0, %v287
      %289 = vst [vmem:[%s271 + $0x30] sm:$0x1] %v288
      %v290 = vld [vmem:[%s271 + $0x3c] sm:$0x1]
      %v291 = vsel %vm274, 0, %v290
      %292 = vst [vmem:[%s271 + $0x3c] sm:$0x1] %v291
      %v293 = vld [vmem:[%s271 + $0x48] sm:$0x1]
      %v294 = vsel %vm274, 0, %v293
      %295 = vst [vmem:[%s271 + $0x48] sm:$0x1] %v294
      %v296 = vld [vmem:[%s271 + $0x54] sm:$0x1]
      %v297 = vsel %vm274, 0, %v296
      %298 = vst [vmem:[%s271 + $0x54] sm:$0x1] %v297
      %v299 = vld [vmem:[%s271 + $0x60] sm:$0x1]
      %v300 = vsel %vm274, 0, %v299
      %301 = vst [vmem:[%s271 + $0x60] sm:$0x1] %v300
      %v302 = vld [vmem:[%s271 + $0x6c] sm:$0x1]
      %v303 = vsel %vm274, 0, %v302
      %304 = vst [vmem:[%s271 + $0x6c] sm:$0x1] %v303
      %v305 = vld [vmem:[%s271 + $0x78] sm:$0x1]
      %v306 = vsel %vm274, 0, %v305
      %307 = vst [vmem:[%s271 + $0x78] sm:$0x1] %v306
      %v308 = vld [vmem:[%s271 + $0x84] sm:$0x1]
      %v309 = vsel %vm274, 0, %v308
      %310 = vst [vmem:[%s271 + $0x84] sm:$0x1] %v309
      %v311 = vld [vmem:[%s271 + $0x90] sm:$0x1]
      %v312 = vsel %vm274, 0, %v311
      %313 = vst [vmem:[%s271 + $0x90] sm:$0x1] %v312
      %v314 = vld [vmem:[%s271 + $0x9c] sm:$0x1]
      %v315 = vsel %vm274, 0, %v314
      %316 = vst [vmem:[%s271 + $0x9c] sm:$0x1] %v315
      %v317 = vld [vmem:[%s271 + $0xa8] sm:$0x1]
      %v318 = vsel %vm274, 0, %v317
      %319 = vst [vmem:[%s271 + $0xa8] sm:$0x1] %v318
      %v320 = vld [vmem:[%s271 + $0xb4] sm:$0x1]
      %v321 = vsel %vm274, 0, %v320
      %322 = vst [vmem:[%s271 + $0xb4] sm:$0x1] %v321
      %vm323 = vsmask.f32 7938
      %vm324 = vmand %vm272, %vm323
      %v325 = vld [vmem:[%s271 + $0x8] sm:$0x1]
      %v326 = vsel %vm324, 0, %v325
      %327 = vst [vmem:[%s271 + $0x8] sm:$0x1] %v326
      %v328 = vld [vmem:[%s271 + $0x14] sm:$0x1]
      %v329 = vsel %vm324, 0, %v328
      %330 = vst [vmem:[%s271 + $0x14] sm:$0x1] %v329
      %v331 = vld [vmem:[%s271 + $0x20] sm:$0x1]
      %v332 = vsel %vm324, 0, %v331
      %333 = vst [vmem:[%s271 + $0x20] sm:$0x1] %v332
      %v334 = vld [vmem:[%s271 + $0x2c] sm:$0x1]
      %v335 = vsel %vm324, 0, %v334
      %336 = vst [vmem:[%s271 + $0x2c] sm:$0x1] %v335
      %v337 = vld [vmem:[%s271 + $0x38] sm:$0x1]
      %v338 = vsel %vm324, 0, %v337
      %339 = vst [vmem:[%s271 + $0x38] sm:$0x1] %v338
      %v340 = vld [vmem:[%s271 + $0x44] sm:$0x1]
      %v341 = vsel %vm324, 0, %v340
      %342 = vst [vmem:[%s271 + $0x44] sm:$0x1] %v341
      %v343 = vld [vmem:[%s271 + $0x50] sm:$0x1]
      %v344 = vsel %vm324, 0, %v343
      %345 = vst [vmem:[%s271 + $0x50] sm:$0x1] %v344
      %v346 = vld [vmem:[%s271 + $0x5c] sm:$0x1]
      %v347 = vsel %vm324, 0, %v346
      %348 = vst [vmem:[%s271 + $0x5c] sm:$0x1] %v347
      %v349 = vld [vmem:[%s271 + $0x68] sm:$0x1]
      %v350 = vsel %vm324, 0, %v349
      %351 = vst [vmem:[%s271 + $0x68] sm:$0x1] %v350
      %v352 = vld [vmem:[%s271 + $0x74] sm:$0x1]
      %v353 = vsel %vm324, 0, %v352
      %354 = vst [vmem:[%s271 + $0x74] sm:$0x1] %v353
      %v355 = vld [vmem:[%s271 + $0x80] sm:$0x1]
      %v356 = vsel %vm324, 0, %v355
      %357 = vst [vmem:[%s271 + $0x80] sm:$0x1] %v356
      %v358 = vld [vmem:[%s271 + $0x8c] sm:$0x1]
      %v359 = vsel %vm324, 0, %v358
      %360 = vst [vmem:[%s271 + $0x8c] sm:$0x1] %v359
      %v361 = vld [vmem:[%s271 + $0x98] sm:$0x1]
      %v362 = vsel %vm324, 0, %v361
      %363 = vst [vmem:[%s271 + $0x98] sm:$0x1] %v362
      %v364 = vld [vmem:[%s271 + $0xa4] sm:$0x1]
      %v365 = vsel %vm324, 0, %v364
      %366 = vst [vmem:[%s271 + $0xa4] sm:$0x1] %v365
      %v367 = vld [vmem:[%s271 + $0xb0] sm:$0x1]
      %v368 = vsel %vm324, 0, %v367
      %369 = vst [vmem:[%s271 + $0xb0] sm:$0x1] %v368
      %v370 = vld [vmem:[%s271 + $0xbc] sm:$0x1]
      %v371 = vsel %vm324, 0, %v370
      %372 = vst [vmem:[%s271 + $0xbc] sm:$0x1] %v371
      %v389 = vunpack.c.l.b16 %v248
      %v390 = vunpack.c.h.b16 %v248
      %v391 = vunpack.c.l.b16 %v249
      %v392 = vunpack.c.h.b16 %v249
      %v393 = vunpack.c.l.b16 %v250
      %v394 = vunpack.c.h.b16 %v250
      %v395 = vunpack.c.l.b16 %v251
      %v396 = vunpack.c.h.b16 %v251
      %v397 = vunpack.c.l.b16 %v252
      %v398 = vunpack.c.h.b16 %v252
      %v399 = vunpack.c.l.b16 %v253
      %v400 = vunpack.c.h.b16 %v253
      %v401 = vunpack.c.l.b16 %v254
      %v402 = vunpack.c.h.b16 %v254
      %v403 = vunpack.c.l.b16 %v255
      %v404 = vunpack.c.h.b16 %v255
      %v405 = vunpack.c.l.b16 %v256
      %v406 = vunpack.c.h.b16 %v256
      %v407 = vunpack.c.l.b16 %v257
      %v408 = vunpack.c.h.b16 %v257
      %v409 = vunpack.c.l.b16 %v258
      %v410 = vunpack.c.h.b16 %v258
      %v411 = vunpack.c.l.b16 %v259
      %v412 = vunpack.c.h.b16 %v259
      %v413 = vunpack.c.l.b16 %v260
      %v414 = vunpack.c.h.b16 %v260
      %v415 = vunpack.c.l.b16 %v261
      %v416 = vunpack.c.h.b16 %v261
      %v417 = vunpack.c.l.b16 %v262
      %v418 = vunpack.c.h.b16 %v262
      %v419 = vunpack.c.l.b16 %v263
      %v420 = vunpack.c.h.b16 %v263
      %v421 = vpack.c.b16 %v389, %v389
      %v422 = vpack.c.b16 %v390, %v390
      %v423 = vpack.c.b16 %v391, %v391
      %v424 = vpack.c.b16 %v392, %v392
      %v425 = vpack.c.b16 %v393, %v393
      %v426 = vpack.c.b16 %v394, %v394
      %v427 = vpack.c.b16 %v395, %v395
      %v428 = vpack.c.b16 %v396, %v396
      %v429 = vpack.c.b16 %v397, %v397
      %v430 = vpack.c.b16 %v398, %v398
      %v431 = vpack.c.b16 %v399, %v399
      %v432 = vpack.c.b16 %v400, %v400
      %v433 = vpack.c.b16 %v401, %v401
      %v434 = vpack.c.b16 %v402, %v402
      %v435 = vpack.c.b16 %v403, %v403
      %v436 = vpack.c.b16 %v404, %v404
      %v437 = vpack.c.b16 %v405, %v405
      %v438 = vpack.c.b16 %v406, %v406
      %v439 = vpack.c.b16 %v407, %v407
      %v440 = vpack.c.b16 %v408, %v408
      %v441 = vpack.c.b16 %v409, %v409
      %v442 = vpack.c.b16 %v410, %v410
      %v443 = vpack.c.b16 %v411, %v411
      %v444 = vpack.c.b16 %v412, %v412
      %v445 = vpack.c.b16 %v413, %v413
      %v446 = vpack.c.b16 %v414, %v414
      %v447 = vpack.c.b16 %v415, %v415
      %v448 = vpack.c.b16 %v416, %v416
      %v449 = vpack.c.b16 %v417, %v417
      %v450 = vpack.c.b16 %v418, %v418
      %v451 = vpack.c.b16 %v419, %v419
      %v452 = vpack.c.b16 %v420, %v420
      %vm453 = vsmask.f32 4368
      %vm454 = vmor %vm273, %vm453
      %v456 = vshrl.u32 %v421, 16
      %v458 = vrot.slane %v456, 7
      %v459 = vshll.u32 %v421, 16
      %v461 = vor.u32 %v458, %v459
      %v462 = vrot.slane %v458, 4
      %v464 = vshrl.u32 %v422, 16
      %v466 = vrot.slane %v464, 7
      %v467 = vshll.u32 %v422, 16
      %v469 = vor.u32 %v466, %v467
      %v470 = vsel %vm454, %v462, %v469
      %v471 = vrot.slane %v466, 4
      %v473 = vshrl.u32 %v423, 16
      %v475 = vrot.slane %v473, 7
      %v476 = vshll.u32 %v423, 16
      %v478 = vor.u32 %v475, %v476
      %v479 = vrot.slane %v475, 4
      %v481 = vshrl.u32 %v424, 16
      %v483 = vrot.slane %v481, 7
      %v484 = vshll.u32 %v424, 16
      %v486 = vor.u32 %v483, %v484
      %v487 = vsel %vm454, %v479, %v486
      %v488 = vrot.slane %v483, 4
      %v490 = vshrl.u32 %v425, 16
      %v492 = vrot.slane %v490, 7
      %v493 = vshll.u32 %v425, 16
      %v495 = vor.u32 %v492, %v493
      %v496 = vrot.slane %v492, 4
      %v498 = vshrl.u32 %v426, 16
      %v500 = vrot.slane %v498, 7
      %v501 = vshll.u32 %v426, 16
      %v503 = vor.u32 %v500, %v501
      %v504 = vsel %vm454, %v496, %v503
      %v505 = vrot.slane %v500, 4
      %v507 = vshrl.u32 %v427, 16
      %v509 = vrot.slane %v507, 7
      %v510 = vshll.u32 %v427, 16
      %v512 = vor.u32 %v509, %v510
      %v513 = vrot.slane %v509, 4
      %v515 = vshrl.u32 %v428, 16
      %v517 = vrot.slane %v515, 7
      %v518 = vshll.u32 %v428, 16
      %v520 = vor.u32 %v517, %v518
      %v521 = vsel %vm454, %v513, %v520
      %v522 = vrot.slane %v517, 4
      %v524 = vshrl.u32 %v429, 16
      %v526 = vrot.slane %v524, 7
      %v527 = vshll.u32 %v429, 16
      %v529 = vor.u32 %v526, %v527
      %v530 = vrot.slane %v526, 4
      %v532 = vshrl.u32 %v430, 16
      %v534 = vrot.slane %v532, 7
      %v535 = vshll.u32 %v430, 16
      %v537 = vor.u32 %v534, %v535
      %v538 = vsel %vm454, %v530, %v537
      %v539 = vrot.slane %v534, 4
      %v541 = vshrl.u32 %v431, 16
      %v543 = vrot.slane %v541, 7
      %v544 = vshll.u32 %v431, 16
      %v546 = vor.u32 %v543, %v544
      %v547 = vrot.slane %v543, 4
      %v549 = vshrl.u32 %v432, 16
      %v551 = vrot.slane %v549, 7
      %v552 = vshll.u32 %v432, 16
      %v554 = vor.u32 %v551, %v552
      %v555 = vsel %vm454, %v547, %v554
      %v556 = vrot.slane %v551, 4
      %v558 = vshrl.u32 %v433, 16
      %v560 = vrot.slane %v558, 7
      %v561 = vshll.u32 %v433, 16
      %v563 = vor.u32 %v560, %v561
      %v564 = vrot.slane %v560, 4
      %v566 = vshrl.u32 %v434, 16
      %v568 = vrot.slane %v566, 7
      %v569 = vshll.u32 %v434, 16
      %v571 = vor.u32 %v568, %v569
      %v572 = vsel %vm454, %v564, %v571
      %v573 = vrot.slane %v568, 4
      %v575 = vshrl.u32 %v435, 16
      %v577 = vrot.slane %v575, 7
      %v578 = vshll.u32 %v435, 16
      %v580 = vor.u32 %v577, %v578
      %v581 = vrot.slane %v577, 4
      %v583 = vshrl.u32 %v436, 16
      %v585 = vrot.slane %v583, 7
      %v586 = vshll.u32 %v436, 16
      %v588 = vor.u32 %v585, %v586
      %v589 = vsel %vm454, %v581, %v588
      %v590 = vrot.slane %v585, 4
      %v592 = vshrl.u32 %v437, 16
      %v594 = vrot.slane %v592, 7
      %v595 = vshll.u32 %v437, 16
      %v597 = vor.u32 %v594, %v595
      %v598 = vrot.slane %v594, 4
      %v600 = vshrl.u32 %v438, 16
      %v602 = vrot.slane %v600, 7
      %v603 = vshll.u32 %v438, 16
      %v605 = vor.u32 %v602, %v603
      %v606 = vsel %vm454, %v598, %v605
      %v607 = vrot.slane %v602, 4
      %v609 = vshrl.u32 %v439, 16
      %v611 = vrot.slane %v609, 7
      %v612 = vshll.u32 %v439, 16
      %v614 = vor.u32 %v611, %v612
      %v615 = vrot.slane %v611, 4
      %v617 = vshrl.u32 %v440, 16
      %v619 = vrot.slane %v617, 7
      %v620 = vshll.u32 %v440, 16
      %v622 = vor.u32 %v619, %v620
      %v623 = vsel %vm454, %v615, %v622
      %v624 = vrot.slane %v619, 4
      %v626 = vshrl.u32 %v441, 16
      %v628 = vrot.slane %v626, 7
      %v629 = vshll.u32 %v441, 16
      %v631 = vor.u32 %v628, %v629
      %v632 = vrot.slane %v628, 4
      %v634 = vshrl.u32 %v442, 16
      %v636 = vrot.slane %v634, 7
      %v637 = vshll.u32 %v442, 16
      %v639 = vor.u32 %v636, %v637
      %v640 = vsel %vm454, %v632, %v639
      %v641 = vrot.slane %v636, 4
      %v643 = vshrl.u32 %v443, 16
      %v645 = vrot.slane %v643, 7
      %v646 = vshll.u32 %v443, 16
      %v648 = vor.u32 %v645, %v646
      %v649 = vrot.slane %v645, 4
      %v651 = vshrl.u32 %v444, 16
      %v653 = vrot.slane %v651, 7
      %v654 = vshll.u32 %v444, 16
      %v656 = vor.u32 %v653, %v654
      %v657 = vsel %vm454, %v649, %v656
      %v658 = vrot.slane %v653, 4
      %v660 = vshrl.u32 %v445, 16
      %v662 = vrot.slane %v660, 7
      %v663 = vshll.u32 %v445, 16
      %v665 = vor.u32 %v662, %v663
      %v666 = vrot.slane %v662, 4
      %v668 = vshrl.u32 %v446, 16
      %v670 = vrot.slane %v668, 7
      %v671 = vshll.u32 %v446, 16
      %v673 = vor.u32 %v670, %v671
      %v674 = vsel %vm454, %v666, %v673
      %v675 = vrot.slane %v670, 4
      %v677 = vshrl.u32 %v447, 16
      %v679 = vrot.slane %v677, 7
      %v680 = vshll.u32 %v447, 16
      %v682 = vor.u32 %v679, %v680
      %v683 = vrot.slane %v679, 4
      %v685 = vshrl.u32 %v448, 16
      %v687 = vrot.slane %v685, 7
      %v688 = vshll.u32 %v448, 16
      %v690 = vor.u32 %v687, %v688
      %v691 = vsel %vm454, %v683, %v690
      %v692 = vrot.slane %v687, 4
      %v694 = vshrl.u32 %v449, 16
      %v696 = vrot.slane %v694, 7
      %v697 = vshll.u32 %v449, 16
      %v699 = vor.u32 %v696, %v697
      %v700 = vrot.slane %v696, 4
      %v702 = vshrl.u32 %v450, 16
      %v704 = vrot.slane %v702, 7
      %v705 = vshll.u32 %v450, 16
      %v707 = vor.u32 %v704, %v705
      %v708 = vsel %vm454, %v700, %v707
      %v709 = vrot.slane %v704, 4
      %v711 = vshrl.u32 %v451, 16
      %v713 = vrot.slane %v711, 7
      %v714 = vshll.u32 %v451, 16
      %v716 = vor.u32 %v713, %v714
      %v717 = vrot.slane %v713, 4
      %v719 = vshrl.u32 %v452, 16
      %v721 = vrot.slane %v719, 7
      %v722 = vshll.u32 %v452, 16
      %v724 = vor.u32 %v721, %v722
      %v725 = vsel %vm454, %v717, %v724
      %v726 = vrot.slane %v721, 4
      %vm775 = vcmask 1043456
      %vm776 = vmand %vm775, %vm323
      %v777 = vld [vmem:[%s271] sm:$0xf]
      %v778 = vsel %vm776, %v461, %v777
      %779 = vst [vmem:[%s271] sm:$0xf] %v778
      %780 = vst [vmem:[%s271 + $0x4] sm:$0xf] %v470
      %v781 = vld [vmem:[%s271 + $0x8] sm:$0x1]
      %v782 = vsel %vm274, %v471, %v781
      %783 = vst [vmem:[%s271 + $0x8] sm:$0x1] %v782
      %v784 = vld [vmem:[%s271 + $0xc] sm:$0xf]
      %v785 = vsel %vm776, %v478, %v784
      %786 = vst [vmem:[%s271 + $0xc] sm:$0xf] %v785
      %787 = vst [vmem:[%s271 + $0x10] sm:$0xf] %v487
      %v788 = vld [vmem:[%s271 + $0x14] sm:$0x1]
      %v789 = vsel %vm274, %v488, %v788
      %790 = vst [vmem:[%s271 + $0x14] sm:$0x1] %v789
      %v791 = vld [vmem:[%s271 + $0x18] sm:$0xf]
      %v792 = vsel %vm776, %v495, %v791
      %793 = vst [vmem:[%s271 + $0x18] sm:$0xf] %v792
      %794 = vst [vmem:[%s271 + $0x1c] sm:$0xf] %v504
      %v795 = vld [vmem:[%s271 + $0x20] sm:$0x1]
      %v796 = vsel %vm274, %v505, %v795
      %797 = vst [vmem:[%s271 + $0x20] sm:$0x1] %v796
      %v798 = vld [vmem:[%s271 + $0x24] sm:$0xf]
      %v799 = vsel %vm776, %v512, %v798
      %800 = vst [vmem:[%s271 + $0x24] sm:$0xf] %v799
      %801 = vst [vmem:[%s271 + $0x28] sm:$0xf] %v521
      %v802 = vld [vmem:[%s271 + $0x2c] sm:$0x1]
      %v803 = vsel %vm274, %v522, %v802
      %804 = vst [vmem:[%s271 + $0x2c] sm:$0x1] %v803
      %v805 = vld [vmem:[%s271 + $0x30] sm:$0xf]
      %v806 = vsel %vm776, %v529, %v805
      %807 = vst [vmem:[%s271 + $0x30] sm:$0xf] %v806
      %808 = vst [vmem:[%s271 + $0x34] sm:$0xf] %v538
      %v809 = vld [vmem:[%s271 + $0x38] sm:$0x1]
      %v810 = vsel %vm274, %v539, %v809
      %811 = vst [vmem:[%s271 + $0x38] sm:$0x1] %v810
      %v812 = vld [vmem:[%s271 + $0x3c] sm:$0xf]
      %v813 = vsel %vm776, %v546, %v812
      %814 = vst [vmem:[%s271 + $0x3c] sm:$0xf] %v813
      %815 = vst [vmem:[%s271 + $0x40] sm:$0xf] %v555
      %v816 = vld [vmem:[%s271 + $0x44] sm:$0x1]
      %v817 = vsel %vm274, %v556, %v816
      %818 = vst [vmem:[%s271 + $0x44] sm:$0x1] %v817
      %v819 = vld [vmem:[%s271 + $0x48] sm:$0xf]
      %v820 = vsel %vm776, %v563, %v819
      %821 = vst [vmem:[%s271 + $0x48] sm:$0xf] %v820
      %822 = vst [vmem:[%s271 + $0x4c] sm:$0xf] %v572
      %v823 = vld [vmem:[%s271 + $0x50] sm:$0x1]
      %v824 = vsel %vm274, %v573, %v823
      %825 = vst [vmem:[%s271 + $0x50] sm:$0x1] %v824
      %v826 = vld [vmem:[%s271 + $0x54] sm:$0xf]
      %v827 = vsel %vm776, %v580, %v826
      %828 = vst [vmem:[%s271 + $0x54] sm:$0xf] %v827
      %829 = vst [vmem:[%s271 + $0x58] sm:$0xf] %v589
      %v830 = vld [vmem:[%s271 + $0x5c] sm:$0x1]
      %v831 = vsel %vm274, %v590, %v830
      %832 = vst [vmem:[%s271 + $0x5c] sm:$0x1] %v831
      %v833 = vld [vmem:[%s271 + $0x60] sm:$0xf]
      %v834 = vsel %vm776, %v597, %v833
      %835 = vst [vmem:[%s271 + $0x60] sm:$0xf] %v834
      %836 = vst [vmem:[%s271 + $0x64] sm:$0xf] %v606
      %v837 = vld [vmem:[%s271 + $0x68] sm:$0x1]
      %v838 = vsel %vm274, %v607, %v837
      %839 = vst [vmem:[%s271 + $0x68] sm:$0x1] %v838
      %v840 = vld [vmem:[%s271 + $0x6c] sm:$0xf]
      %v841 = vsel %vm776, %v614, %v840
      %842 = vst [vmem:[%s271 + $0x6c] sm:$0xf] %v841
      %843 = vst [vmem:[%s271 + $0x70] sm:$0xf] %v623
      %v844 = vld [vmem:[%s271 + $0x74] sm:$0x1]
      %v845 = vsel %vm274, %v624, %v844
      %846 = vst [vmem:[%s271 + $0x74] sm:$0x1] %v845
      %v847 = vld [vmem:[%s271 + $0x78] sm:$0xf]
      %v848 = vsel %vm776, %v631, %v847
      %849 = vst [vmem:[%s271 + $0x78] sm:$0xf] %v848
      %850 = vst [vmem:[%s271 + $0x7c] sm:$0xf] %v640
      %v851 = vld [vmem:[%s271 + $0x80] sm:$0x1]
      %v852 = vsel %vm274, %v641, %v851
      %853 = vst [vmem:[%s271 + $0x80] sm:$0x1] %v852
      %v854 = vld [vmem:[%s271 + $0x84] sm:$0xf]
      %v855 = vsel %vm776, %v648, %v854
      %856 = vst [vmem:[%s271 + $0x84] sm:$0xf] %v855
      %857 = vst [vmem:[%s271 + $0x88] sm:$0xf] %v657
      %v858 = vld [vmem:[%s271 + $0x8c] sm:$0x1]
      %v859 = vsel %vm274, %v658, %v858
      %860 = vst [vmem:[%s271 + $0x8c] sm:$0x1] %v859
      %v861 = vld [vmem:[%s271 + $0x90] sm:$0xf]
      %v862 = vsel %vm776, %v665, %v861
      %863 = vst [vmem:[%s271 + $0x90] sm:$0xf] %v862
      %864 = vst [vmem:[%s271 + $0x94] sm:$0xf] %v674
      %v865 = vld [vmem:[%s271 + $0x98] sm:$0x1]
      %v866 = vsel %vm274, %v675, %v865
      %867 = vst [vmem:[%s271 + $0x98] sm:$0x1] %v866
      %v868 = vld [vmem:[%s271 + $0x9c] sm:$0xf]
      %v869 = vsel %vm776, %v682, %v868
      %870 = vst [vmem:[%s271 + $0x9c] sm:$0xf] %v869
      %871 = vst [vmem:[%s271 + $0xa0] sm:$0xf] %v691
      %v872 = vld [vmem:[%s271 + $0xa4] sm:$0x1]
      %v873 = vsel %vm274, %v692, %v872
      %874 = vst [vmem:[%s271 + $0xa4] sm:$0x1] %v873
      %v875 = vld [vmem:[%s271 + $0xa8] sm:$0xf]
      %v876 = vsel %vm776, %v699, %v875
      %877 = vst [vmem:[%s271 + $0xa8] sm:$0xf] %v876
      %878 = vst [vmem:[%s271 + $0xac] sm:$0xf] %v708
      %v879 = vld [vmem:[%s271 + $0xb0] sm:$0x1]
      %v880 = vsel %vm274, %v709, %v879
      %881 = vst [vmem:[%s271 + $0xb0] sm:$0x1] %v880
      %v882 = vld [vmem:[%s271 + $0xb4] sm:$0xf]
      %v883 = vsel %vm776, %v716, %v882
      %884 = vst [vmem:[%s271 + $0xb4] sm:$0xf] %v883
      %885 = vst [vmem:[%s271 + $0xb8] sm:$0xf] %v725
      %v886 = vld [vmem:[%s271 + $0xbc] sm:$0x1]
      %v887 = vsel %vm274, %v726, %v886
      %888 = vst [vmem:[%s271 + $0xbc] sm:$0x1] %v887
      %v889 = vld [vmem:[#allocation2] sm:$0xf]
      %v890 = vld [vmem:[#allocation2 + $0x4] sm:$0xf]
      %v891 = vld [vmem:[#allocation2 + $0xc] sm:$0xf]
      %v892 = vld [vmem:[#allocation2 + $0x10] sm:$0xf]
      %v893 = vld [vmem:[#allocation2 + $0x18] sm:$0xf]
      %v894 = vld [vmem:[#allocation2 + $0x1c] sm:$0xf]
      %v895 = vld [vmem:[#allocation2 + $0x24] sm:$0xf]
      %v896 = vld [vmem:[#allocation2 + $0x28] sm:$0xf]
      %v897 = vld [vmem:[#allocation2 + $0x30] sm:$0xf]
      %v898 = vld [vmem:[#allocation2 + $0x34] sm:$0xf]
      %v899 = vld [vmem:[#allocation2 + $0x3c] sm:$0xf]
      %v900 = vld [vmem:[#allocation2 + $0x40] sm:$0xf]
      %v901 = vld [vmem:[#allocation2 + $0x48] sm:$0xf]
      %v902 = vld [vmem:[#allocation2 + $0x4c] sm:$0xf]
      %v903 = vld [vmem:[#allocation2 + $0x54] sm:$0xf]
      %v904 = vld [vmem:[#allocation2 + $0x58] sm:$0xf]
      %v905 = vld [vmem:[#allocation2 + $0x60] sm:$0xf]
      %v906 = vld [vmem:[#allocation2 + $0x64] sm:$0xf]
      %v907 = vld [vmem:[#allocation2 + $0x6c] sm:$0xf]
      %v908 = vld [vmem:[#allocation2 + $0x70] sm:$0xf]
      %v909 = vld [vmem:[#allocation2 + $0x78] sm:$0xf]
      %v910 = vld [vmem:[#allocation2 + $0x7c] sm:$0xf]
      %v911 = vld [vmem:[#allocation2 + $0x84] sm:$0xf]
      %v912 = vld [vmem:[#allocation2 + $0x88] sm:$0xf]
      %v913 = vld [vmem:[#allocation2 + $0x90] sm:$0xf]
      %v914 = vld [vmem:[#allocation2 + $0x94] sm:$0xf]
      %v915 = vld [vmem:[#allocation2 + $0x9c] sm:$0xf]
      %v916 = vld [vmem:[#allocation2 + $0xa0] sm:$0xf]
      %v917 = vld [vmem:[#allocation2 + $0xa8] sm:$0xf]
      %v918 = vld [vmem:[#allocation2 + $0xac] sm:$0xf]
      %v919 = vld [vmem:[#allocation2 + $0xb4] sm:$0xf]
      %v920 = vld [vmem:[#allocation2 + $0xb8] sm:$0xf]
      %v921 = vld [vmem:[%s1] sm:$0xf]
      %v922 = vld [vmem:[%s1 + $0x4] sm:$0xf]
      %v923 = vld [vmem:[%s1 + $0x8] sm:$0xf]
      %v924 = vld [vmem:[%s1 + $0xc] sm:$0xf]
      %v925 = vld [vmem:[%s1 + $0x10] sm:$0xf]
      %v926 = vld [vmem:[%s1 + $0x14] sm:$0xf]
      %v927 = vld [vmem:[%s1 + $0x18] sm:$0xf]
      %v928 = vld [vmem:[%s1 + $0x1c] sm:$0xf]
      %v929 = vld [vmem:[%s1 + $0x20] sm:$0xf]
      %v930 = vld [vmem:[%s1 + $0x24] sm:$0xf]
      %v931 = vld [vmem:[%s1 + $0x28] sm:$0xf]
      %v932 = vld [vmem:[%s1 + $0x2c] sm:$0xf]
      %v933 = vld [vmem:[%s1 + $0x30] sm:$0xf]
      %v934 = vld [vmem:[%s1 + $0x34] sm:$0xf]
      %v935 = vld [vmem:[%s1 + $0x38] sm:$0xf]
      %v936 = vld [vmem:[%s1 + $0x3c] sm:$0xf]
      %v937 = vld [vmem:[#allocation2 + $0x8] sm:$0x1]
      %v938 = vld [vmem:[#allocation2 + $0x14] sm:$0x1]
      %v939 = vld [vmem:[#allocation2 + $0x20] sm:$0x1]
      %v940 = vld [vmem:[#allocation2 + $0x2c] sm:$0x1]
      %v941 = vld [vmem:[#allocation2 + $0x38] sm:$0x1]
      %v942 = vld [vmem:[#allocation2 + $0x44] sm:$0x1]
      %v943 = vld [vmem:[#allocation2 + $0x50] sm:$0x1]
      %v944 = vld [vmem:[#allocation2 + $0x5c] sm:$0x1]
      %v945 = vld [vmem:[#allocation2 + $0x68] sm:$0x1]
      %v946 = vld [vmem:[#allocation2 + $0x74] sm:$0x1]
      %v947 = vld [vmem:[#allocation2 + $0x80] sm:$0x1]
      %v948 = vld [vmem:[#allocation2 + $0x8c] sm:$0x1]
      %v949 = vld [vmem:[#allocation2 + $0x98] sm:$0x1]
      %v950 = vld [vmem:[#allocation2 + $0xa4] sm:$0x1]
      %v951 = vld [vmem:[#allocation2 + $0xb0] sm:$0x1]
      %v952 = vld [vmem:[#allocation2 + $0xbc] sm:$0x1]
      %vm953 = vsmask.f32 3328
      %vm954 = vsmask.f32 7440
      %vm955 = vmor %vm953, %vm954
      %v957 = vshrl.u32 %v889, 16
      %v959 = vrot.slane %v957, 4
      %v960 = vshll.u32 %v889, 16
      %v962 = vrot.slane %v960, 5
      %v963 = vor.u32 %v959, %v962
      %v964 = vrot.slane %v963, 4
      %v966 = vshll.u32 %v890, 16
      %v968 = vrot.slane %v966, 5
      %v969 = vsel %vm955, %v964, %v968
      %v970 = vshrl.u32 %v890, 16
      %v972 = vrot.slane %v970, 4
      %v973 = vor.u32 %v972, %v968
      %v974 = vrot.slane %v973, 4
      %v976 = vshll.u32 %v937, 16
      %v978 = vrot.slane %v976, 5
      %v979 = vsel %vm955, %v974, %v978
      %v981 = vshrl.u32 %v891, 16
      %v983 = vrot.slane %v981, 4
      %v984 = vshll.u32 %v891, 16
      %v986 = vrot.slane %v984, 5
      %v987 = vor.u32 %v983, %v986
      %v988 = vrot.slane %v987, 4
      %v990 = vshll.u32 %v892, 16
      %v992 = vrot.slane %v990, 5
      %v993 = vsel %vm955, %v988, %v992
      %v994 = vshrl.u32 %v892, 16
      %v996 = vrot.slane %v994, 4
      %v997 = vor.u32 %v996, %v992
      %v998 = vrot.slane %v997, 4
      %v1000 = vshll.u32 %v938, 16
      %v1002 = vrot.slane %v1000, 5
      %v1003 = vsel %vm955, %v998, %v1002
      %v1005 = vshrl.u32 %v893, 16
      %v1007 = vrot.slane %v1005, 4
      %v1008 = vshll.u32 %v893, 16
      %v1010 = vrot.slane %v1008, 5
      %v1011 = vor.u32 %v1007, %v1010
      %v1012 = vrot.slane %v1011, 4
      %v1014 = vshll.u32 %v894, 16
      %v1016 = vrot.slane %v1014, 5
      %v1017 = vsel %vm955, %v1012, %v1016
      %v1018 = vshrl.u32 %v894, 16
      %v1020 = vrot.slane %v1018, 4
      %v1021 = vor.u32 %v1020, %v1016
      %v1022 = vrot.slane %v1021, 4
      %v1024 = vshll.u32 %v939, 16
      %v1026 = vrot.slane %v1024, 5
      %v1027 = vsel %vm955, %v1022, %v1026
      %v1029 = vshrl.u32 %v895, 16
      %v1031 = vrot.slane %v1029, 4
      %v1032 = vshll.u32 %v895, 16
      %v1034 = vrot.slane %v1032, 5
      %v1035 = vor.u32 %v1031, %v1034
      %v1036 = vrot.slane %v1035, 4
      %v1038 = vshll.u32 %v896, 16
      %v1040 = vrot.slane %v1038, 5
      %v1041 = vsel %vm955, %v1036, %v1040
      %v1042 = vshrl.u32 %v896, 16
      %v1044 = vrot.slane %v1042, 4
      %v1045 = vor.u32 %v1044, %v1040
      %v1046 = vrot.slane %v1045, 4
      %v1048 = vshll.u32 %v940, 16
      %v1050 = vrot.slane %v1048, 5
      %v1051 = vsel %vm955, %v1046, %v1050
      %v1053 = vshrl.u32 %v897, 16
      %v1055 = vrot.slane %v1053, 4
      %v1056 = vshll.u32 %v897, 16
      %v1058 = vrot.slane %v1056, 5
      %v1059 = vor.u32 %v1055, %v1058
      %v1060 = vrot.slane %v1059, 4
      %v1062 = vshll.u32 %v898, 16
      %v1064 = vrot.slane %v1062, 5
      %v1065 = vsel %vm955, %v1060, %v1064
      %v1066 = vshrl.u32 %v898, 16
      %v1068 = vrot.slane %v1066, 4
      %v1069 = vor.u32 %v1068, %v1064
      %v1070 = vrot.slane %v1069, 4
      %v1072 = vshll.u32 %v941, 16
      %v1074 = vrot.slane %v1072, 5
      %v1075 = vsel %vm955, %v1070, %v1074
      %v1077 = vshrl.u32 %v899, 16
      %v1079 = vrot.slane %v1077, 4
      %v1080 = vshll.u32 %v899, 16
      %v1082 = vrot.slane %v1080, 5
      %v1083 = vor.u32 %v1079, %v1082
      %v1084 = vrot.slane %v1083, 4
      %v1086 = vshll.u32 %v900, 16
      %v1088 = vrot.slane %v1086, 5
      %v1089 = vsel %vm955, %v1084, %v1088
      %v1090 = vshrl.u32 %v900, 16
      %v1092 = vrot.slane %v1090, 4
      %v1093 = vor.u32 %v1092, %v1088
      %v1094 = vrot.slane %v1093, 4
      %v1096 = vshll.u32 %v942, 16
      %v1098 = vrot.slane %v1096, 5
      %v1099 = vsel %vm955, %v1094, %v1098
      %v1101 = vshrl.u32 %v901, 16
      %v1103 = vrot.slane %v1101, 4
      %v1104 = vshll.u32 %v901, 16
      %v1106 = vrot.slane %v1104, 5
      %v1107 = vor.u32 %v1103, %v1106
      %v1108 = vrot.slane %v1107, 4
      %v1110 = vshll.u32 %v902, 16
      %v1112 = vrot.slane %v1110, 5
      %v1113 = vsel %vm955, %v1108, %v1112
      %v1114 = vshrl.u32 %v902, 16
      %v1116 = vrot.slane %v1114, 4
      %v1117 = vor.u32 %v1116, %v1112
      %v1118 = vrot.slane %v1117, 4
      %v1120 = vshll.u32 %v943, 16
      %v1122 = vrot.slane %v1120, 5
      %v1123 = vsel %vm955, %v1118, %v1122
      %v1125 = vshrl.u32 %v903, 16
      %v1127 = vrot.slane %v1125, 4
      %v1128 = vshll.u32 %v903, 16
      %v1130 = vrot.slane %v1128, 5
      %v1131 = vor.u32 %v1127, %v1130
      %v1132 = vrot.slane %v1131, 4
      %v1134 = vshll.u32 %v904, 16
      %v1136 = vrot.slane %v1134, 5
      %v1137 = vsel %vm955, %v1132, %v1136
      %v1138 = vshrl.u32 %v904, 16
      %v1140 = vrot.slane %v1138, 4
      %v1141 = vor.u32 %v1140, %v1136
      %v1142 = vrot.slane %v1141, 4
      %v1144 = vshll.u32 %v944, 16
      %v1146 = vrot.slane %v1144, 5
      %v1147 = vsel %vm955, %v1142, %v1146
      %v1149 = vshrl.u32 %v905, 16
      %v1151 = vrot.slane %v1149, 4
      %v1152 = vshll.u32 %v905, 16
      %v1154 = vrot.slane %v1152, 5
      %v1155 = vor.u32 %v1151, %v1154
      %v1156 = vrot.slane %v1155, 4
      %v1158 = vshll.u32 %v906, 16
      %v1160 = vrot.slane %v1158, 5
      %v1161 = vsel %vm955, %v1156, %v1160
      %v1162 = vshrl.u32 %v906, 16
      %v1164 = vrot.slane %v1162, 4
      %v1165 = vor.u32 %v1164, %v1160
      %v1166 = vrot.slane %v1165, 4
      %v1168 = vshll.u32 %v945, 16
      %v1170 = vrot.slane %v1168, 5
      %v1171 = vsel %vm955, %v1166, %v1170
      %v1173 = vshrl.u32 %v907, 16
      %v1175 = vrot.slane %v1173, 4
      %v1176 = vshll.u32 %v907, 16
      %v1178 = vrot.slane %v1176, 5
      %v1179 = vor.u32 %v1175, %v1178
      %v1180 = vrot.slane %v1179, 4
      %v1182 = vshll.u32 %v908, 16
      %v1184 = vrot.slane %v1182, 5
      %v1185 = vsel %vm955, %v1180, %v1184
      %v1186 = vshrl.u32 %v908, 16
      %v1188 = vrot.slane %v1186, 4
      %v1189 = vor.u32 %v1188, %v1184
      %v1190 = vrot.slane %v1189, 4
      %v1192 = vshll.u32 %v946, 16
      %v1194 = vrot.slane %v1192, 5
      %v1195 = vsel %vm955, %v1190, %v1194
      %v1197 = vshrl.u32 %v909, 16
      %v1199 = vrot.slane %v1197, 4
      %v1200 = vshll.u32 %v909, 16
      %v1202 = vrot.slane %v1200, 5
      %v1203 = vor.u32 %v1199, %v1202
      %v1204 = vrot.slane %v1203, 4
      %v1206 = vshll.u32 %v910, 16
      %v1208 = vrot.slane %v1206, 5
      %v1209 = vsel %vm955, %v1204, %v1208
      %v1210 = vshrl.u32 %v910, 16
      %v1212 = vrot.slane %v1210, 4
      %v1213 = vor.u32 %v1212, %v1208
      %v1214 = vrot.slane %v1213, 4
      %v1216 = vshll.u32 %v947, 16
      %v1218 = vrot.slane %v1216, 5
      %v1219 = vsel %vm955, %v1214, %v1218
      %v1221 = vshrl.u32 %v911, 16
      %v1223 = vrot.slane %v1221, 4
      %v1224 = vshll.u32 %v911, 16
      %v1226 = vrot.slane %v1224, 5
      %v1227 = vor.u32 %v1223, %v1226
      %v1228 = vrot.slane %v1227, 4
      %v1230 = vshll.u32 %v912, 16
      %v1232 = vrot.slane %v1230, 5
      %v1233 = vsel %vm955, %v1228, %v1232
      %v1234 = vshrl.u32 %v912, 16
      %v1236 = vrot.slane %v1234, 4
      %v1237 = vor.u32 %v1236, %v1232
      %v1238 = vrot.slane %v1237, 4
      %v1240 = vshll.u32 %v948, 16
      %v1242 = vrot.slane %v1240, 5
      %v1243 = vsel %vm955, %v1238, %v1242
      %v1245 = vshrl.u32 %v913, 16
      %v1247 = vrot.slane %v1245, 4
      %v1248 = vshll.u32 %v913, 16
      %v1250 = vrot.slane %v1248, 5
      %v1251 = vor.u32 %v1247, %v1250
      %v1252 = vrot.slane %v1251, 4
      %v1254 = vshll.u32 %v914, 16
      %v1256 = vrot.slane %v1254, 5
      %v1257 = vsel %vm955, %v1252, %v1256
      %v1258 = vshrl.u32 %v914, 16
      %v1260 = vrot.slane %v1258, 4
      %v1261 = vor.u32 %v1260, %v1256
      %v1262 = vrot.slane %v1261, 4
      %v1264 = vshll.u32 %v949, 16
      %v1266 = vrot.slane %v1264, 5
      %v1267 = vsel %vm955, %v1262, %v1266
      %v1269 = vshrl.u32 %v915, 16
      %v1271 = vrot.slane %v1269, 4
      %v1272 = vshll.u32 %v915, 16
      %v1274 = vrot.slane %v1272, 5
      %v1275 = vor.u32 %v1271, %v1274
      %v1276 = vrot.slane %v1275, 4
      %v1278 = vshll.u32 %v916, 16
      %v1280 = vrot.slane %v1278, 5
      %v1281 = vsel %vm955, %v1276, %v1280
      %v1282 = vshrl.u32 %v916, 16
      %v1284 = vrot.slane %v1282, 4
      %v1285 = vor.u32 %v1284, %v1280
      %v1286 = vrot.slane %v1285, 4
      %v1288 = vshll.u32 %v950, 16
      %v1290 = vrot.slane %v1288, 5
      %v1291 = vsel %vm955, %v1286, %v1290
      %v1293 = vshrl.u32 %v917, 16
      %v1295 = vrot.slane %v1293, 4
      %v1296 = vshll.u32 %v917, 16
      %v1298 = vrot.slane %v1296, 5
      %v1299 = vor.u32 %v1295, %v1298
      %v1300 = vrot.slane %v1299, 4
      %v1302 = vshll.u32 %v918, 16
      %v1304 = vrot.slane %v1302, 5
      %v1305 = vsel %vm955, %v1300, %v1304
      %v1306 = vshrl.u32 %v918, 16
      %v1308 = vrot.slane %v1306, 4
      %v1309 = vor.u32 %v1308, %v1304
      %v1310 = vrot.slane %v1309, 4
      %v1312 = vshll.u32 %v951, 16
      %v1314 = vrot.slane %v1312, 5
      %v1315 = vsel %vm955, %v1310, %v1314
      %v1317 = vshrl.u32 %v919, 16
      %v1319 = vrot.slane %v1317, 4
      %v1320 = vshll.u32 %v919, 16
      %v1322 = vrot.slane %v1320, 5
      %v1323 = vor.u32 %v1319, %v1322
      %v1324 = vrot.slane %v1323, 4
      %v1326 = vshll.u32 %v920, 16
      %v1328 = vrot.slane %v1326, 5
      %v1329 = vsel %vm955, %v1324, %v1328
      %v1330 = vshrl.u32 %v920, 16
      %v1332 = vrot.slane %v1330, 4
      %v1333 = vor.u32 %v1332, %v1328
      %v1334 = vrot.slane %v1333, 4
      %v1336 = vshll.u32 %v952, 16
      %v1338 = vrot.slane %v1336, 5
      %v1339 = vsel %vm955, %v1334, %v1338
      %s1340 = scalar_lea.vmem %s1, 64
      %v1341 = vld [vmem:[%s1340] sm:$0xf]
      %v1342 = vld [vmem:[%s1340 + $0x4] sm:$0xf]
      %v1343 = vld [vmem:[%s1340 + $0x8] sm:$0xf]
      %v1344 = vld [vmem:[%s1340 + $0xc] sm:$0xf]
      %v1345 = vld [vmem:[%s1340 + $0x10] sm:$0xf]
      %v1346 = vld [vmem:[%s1340 + $0x14] sm:$0xf]
      %v1347 = vld [vmem:[%s1340 + $0x18] sm:$0xf]
      %v1348 = vld [vmem:[%s1340 + $0x1c] sm:$0xf]
      %v1349 = vld [vmem:[%s1340 + $0x20] sm:$0xf]
      %v1350 = vld [vmem:[%s1340 + $0x24] sm:$0xf]
      %v1351 = vld [vmem:[%s1340 + $0x28] sm:$0xf]
      %v1352 = vld [vmem:[%s1340 + $0x2c] sm:$0xf]
      %v1353 = vld [vmem:[%s1340 + $0x30] sm:$0xf]
      %v1354 = vld [vmem:[%s1340 + $0x34] sm:$0xf]
      %v1355 = vld [vmem:[%s1340 + $0x38] sm:$0xf]
      %v1356 = vld [vmem:[%s1340 + $0x3c] sm:$0xf]
      %v1357 = vunpack.c.l.b16 %v969
      %v1358 = vunpack.c.l.b16 %v979
      %v1359 = vunpack.c.l.b16 %v993
      %v1360 = vunpack.c.l.b16 %v1003
      %v1361 = vunpack.c.l.b16 %v1017
      %v1362 = vunpack.c.l.b16 %v1027
      %v1363 = vunpack.c.l.b16 %v1041
      %v1364 = vunpack.c.l.b16 %v1051
      %v1365 = vunpack.c.l.b16 %v1065
      %v1366 = vunpack.c.l.b16 %v1075
      %v1367 = vunpack.c.l.b16 %v1089
      %v1368 = vunpack.c.l.b16 %v1099
      %v1369 = vunpack.c.l.b16 %v1113
      %v1370 = vunpack.c.l.b16 %v1123
      %v1371 = vunpack.c.l.b16 %v1137
      %v1372 = vunpack.c.l.b16 %v1147
      %v1373 = vunpack.c.l.b16 %v1161
      %v1374 = vunpack.c.l.b16 %v1171
      %v1375 = vunpack.c.l.b16 %v1185
      %v1376 = vunpack.c.l.b16 %v1195
      %v1377 = vunpack.c.l.b16 %v1209
      %v1378 = vunpack.c.l.b16 %v1219
      %v1379 = vunpack.c.l.b16 %v1233
      %v1380 = vunpack.c.l.b16 %v1243
      %v1381 = vunpack.c.l.b16 %v1257
      %v1382 = vunpack.c.l.b16 %v1267
      %v1383 = vunpack.c.l.b16 %v1281
      %v1384 = vunpack.c.l.b16 %v1291
      %v1385 = vunpack.c.l.b16 %v1305
      %v1386 = vunpack.c.l.b16 %v1315
      %v1387 = vunpack.c.l.b16 %v1329
      %v1388 = vunpack.c.l.b16 %v1339
      %v1389 = vpack.c.b16 %v1358, %v1357
      %v1390 = vpack.c.b16 %v1360, %v1359
      %v1391 = vpack.c.b16 %v1362, %v1361
      %v1392 = vpack.c.b16 %v1364, %v1363
      %v1393 = vpack.c.b16 %v1366, %v1365
      %v1394 = vpack.c.b16 %v1368, %v1367
      %v1395 = vpack.c.b16 %v1370, %v1369
      %v1396 = vpack.c.b16 %v1372, %v1371
      %v1397 = vpack.c.b16 %v1374, %v1373
      %v1398 = vpack.c.b16 %v1376, %v1375
      %v1399 = vpack.c.b16 %v1378, %v1377
      %v1400 = vpack.c.b16 %v1380, %v1379
      %v1401 = vpack.c.b16 %v1382, %v1381
      %v1402 = vpack.c.b16 %v1384, %v1383
      %v1403 = vpack.c.b16 %v1386, %v1385
      %v1404 = vpack.c.b16 %v1388, %v1387
      %v1437 = vunpack.c.l.b16 %v1341
      %v1438 = vunpack.c.l.b16 %v1342
      %v1439 = vunpack.c.l.b16 %v1343
      %v1440 = vunpack.c.l.b16 %v1344
      %v1441 = vunpack.c.l.b16 %v1345
      %v1442 = vunpack.c.l.b16 %v1346
      %v1443 = vunpack.c.l.b16 %v1347
      %v1444 = vunpack.c.l.b16 %v1348
      %v1445 = vunpack.c.l.b16 %v1349
      %v1446 = vunpack.c.l.b16 %v1350
      %v1447 = vunpack.c.l.b16 %v1351
      %v1448 = vunpack.c.l.b16 %v1352
      %v1449 = vunpack.c.l.b16 %v1353
      %v1450 = vunpack.c.l.b16 %v1354
      %v1451 = vunpack.c.l.b16 %v1355
      %v1452 = vunpack.c.l.b16 %v1356
      %v1453 = vpack.c.b16 %v1438, %v1437
      %v1454 = vpack.c.b16 %v1440, %v1439
      %v1455 = vpack.c.b16 %v1442, %v1441
      %v1456 = vpack.c.b16 %v1444, %v1443
      %v1457 = vpack.c.b16 %v1446, %v1445
      %v1458 = vpack.c.b16 %v1448, %v1447
      %v1459 = vpack.c.b16 %v1450, %v1449
      %v1460 = vpack.c.b16 %v1452, %v1451
      %1469 = vmatprep.subr.bf16.mxu0 0
      %1470 = vmatpush1.bf16.msra.mxu0 %v1453
      %1471 = vmatprep.subr.bf16.mxu0 0
      %1472 = vmatpush1.bf16.msra.mxu0 %v1454
      %1473 = vmatprep.subr.bf16.mxu0 0
      %1474 = vmatpush1.bf16.msra.mxu0 %v1455
      %1475 = vmatprep.subr.bf16.mxu0 0
      %1476 = vmatpush1.bf16.msra.mxu0 %v1456
      %1477 = vmatprep.subr.bf16.mxu0 0
      %1478 = vmatpush1.bf16.msra.mxu0 %v1457
      %1479 = vmatprep.subr.bf16.mxu0 0
      %1480 = vmatpush1.bf16.msra.mxu0 %v1458
      %1481 = vmatprep.subr.bf16.mxu0 0
      %1482 = vmatpush1.bf16.msra.mxu0 %v1459
      %1483 = vmatprep.subr.bf16.mxu0 0
      %1484 = vmatpush1.bf16.msra.mxu0 %v1460
      %1485 = vmatprep.subr.bf16.mxu0 0
      %1486 = vmatpush1.bf16.msra.mxu0 0
      %1487 = vmatprep.subr.bf16.mxu0 0
      %1488 = vmatpush1.bf16.msra.mxu0 0
      %1489 = vmatprep.subr.bf16.mxu0 0
      %1490 = vmatpush1.bf16.msra.mxu0 0
      %1491 = vmatprep.subr.bf16.mxu0 0
      %1492 = vmatpush1.bf16.msra.mxu0 0
      %1493 = vmatprep.subr.bf16.mxu0 0
      %1494 = vmatpush1.bf16.msra.mxu0 0
      %1495 = vmatprep.subr.bf16.mxu0 0
      %1496 = vmatpush1.bf16.msra.mxu0 0
      %1497 = vmatprep.subr.bf16.mxu0 0
      %1498 = vmatpush1.bf16.msra.mxu0 0
      %1499 = vmatprep.subr.bf16.mxu0 0
      %1500 = vmatpush1.bf16.msra.mxu0 0
      %1501 = vmatprep.mubr.bf16.mxu0 0
      %1502 = vmatmul.mubr.bf16.gmra.mrb[0].mxu0 %v1389
      %v1503 = vpop.f32.mrb[0].mxu0
      %v1504 = vadd.f32 0.0, %v1503
      %v1505 = vpop.f32.mrb[0].mxu0
      %v1506 = vpop.f32.mrb[0].mxu0
      %v1507 = vadd.f32 0.0, %v1506
      %v1508 = vpop.f32.mrb[0].mxu0
      %1509 = vmatprep.mubr.bf16.mxu0 0
      %1510 = vmatmul.mubr.bf16.gmra.mrb[0].mxu0 %v1390
      %v1511 = vpop.f32.mrb[0].mxu0
      %v1512 = vadd.f32 0.0, %v1511
      %v1513 = vpop.f32.mrb[0].mxu0
      %v1514 = vpop.f32.mrb[0].mxu0
      %v1515 = vadd.f32 0.0, %v1514
      %v1516 = vpop.f32.mrb[0].mxu0
      %1517 = vmatprep.mubr.bf16.mxu0 0
      %1518 = vmatmul.mubr.bf16.gmra.mrb[0].mxu0 %v1391
      %v1519 = vpop.f32.mrb[0].mxu0
      %v1520 = vadd.f32 0.0, %v1519
      %v1521 = vpop.f32.mrb[0].mxu0
      %v1522 = vpop.f32.mrb[0].mxu0
      %v1523 = vadd.f32 0.0, %v1522
      %v1524 = vpop.f32.mrb[0].mxu0
      %1525 = vmatprep.mubr.bf16.mxu0 0
      %1526 = vmatmul.mubr.bf16.gmra.mrb[0].mxu0 %v1392
      %v1527 = vpop.f32.mrb[0].mxu0
      %v1528 = vadd.f32 0.0, %v1527
      %v1529 = vpop.f32.mrb[0].mxu0
      %v1530 = vpop.f32.mrb[0].mxu0
      %v1531 = vadd.f32 0.0, %v1530
      %v1532 = vpop.f32.mrb[0].mxu0
      %1533 = vmatprep.mubr.bf16.mxu0 0
      %1534 = vmatmul.mubr.bf16.gmra.mrb[0].mxu0 %v1393
      %v1535 = vpop.f32.mrb[0].mxu0
      %v1536 = vadd.f32 0.0, %v1535
      %v1537 = vpop.f32.mrb[0].mxu0
      %v1538 = vpop.f32.mrb[0].mxu0
      %v1539 = vadd.f32 0.0, %v1538
      %v1540 = vpop.f32.mrb[0].mxu0
      %1541 = vmatprep.mubr.bf16.mxu0 0
      %1542 = vmatmul.mubr.bf16.gmra.mrb[0].mxu0 %v1394
      %v1543 = vpop.f32.mrb[0].mxu0
      %v1544 = vadd.f32 0.0, %v1543
      %v1545 = vpop.f32.mrb[0].mxu0
      %v1546 = vpop.f32.mrb[0].mxu0
      %v1547 = vadd.f32 0.0, %v1546
      %v1548 = vpop.f32.mrb[0].mxu0
      %1549 = vmatprep.mubr.bf16.mxu0 0
      %1550 = vmatmul.mubr.bf16.gmra.mrb[0].mxu0 %v1395
      %v1551 = vpop.f32.mrb[0].mxu0
      %v1552 = vadd.f32 0.0, %v1551
      %v1553 = vpop.f32.mrb[0].mxu0
      %v1554 = vpop.f32.mrb[0].mxu0
      %v1555 = vadd.f32 0.0, %v1554
      %v1556 = vpop.f32.mrb[0].mxu0
      %1557 = vmatprep.mubr.bf16.mxu0 0
      %1558 = vmatmul.mubr.bf16.gmra.mrb[0].mxu0 %v1396
      %v1559 = vpop.f32.mrb[0].mxu0
      %v1560 = vadd.f32 0.0, %v1559
      %v1561 = vpop.f32.mrb[0].mxu0
      %v1562 = vpop.f32.mrb[0].mxu0
      %v1563 = vadd.f32 0.0, %v1562
      %v1564 = vpop.f32.mrb[0].mxu0
      %1565 = vmatprep.mubr.bf16.mxu0 0
      %1566 = vmatmul.mubr.bf16.gmra.mrb[0].mxu0 %v1397
      %v1567 = vpop.f32.mrb[0].mxu0
      %v1568 = vadd.f32 0.0, %v1567
      %v1569 = vpop.f32.mrb[0].mxu0
      %v1570 = vpop.f32.mrb[0].mxu0
      %v1571 = vadd.f32 0.0, %v1570
      %v1572 = vpop.f32.mrb[0].mxu0
      %1573 = vmatprep.mubr.bf16.mxu0 0
      %1574 = vmatmul.mubr.bf16.gmra.mrb[0].mxu0 %v1398
      %v1575 = vpop.f32.mrb[0].mxu0
      %v1576 = vadd.f32 0.0, %v1575
      %v1577 = vpop.f32.mrb[0].mxu0
      %v1578 = vpop.f32.mrb[0].mxu0
      %v1579 = vadd.f32 0.0, %v1578
      %v1580 = vpop.f32.mrb[0].mxu0
      %1581 = vmatprep.mubr.bf16.mxu0 0
      %1582 = vmatmul.mubr.bf16.gmra.mrb[0].mxu0 %v1399
      %v1583 = vpop.f32.mrb[0].mxu0
      %v1584 = vadd.f32 0.0, %v1583
      %v1585 = vpop.f32.mrb[0].mxu0
      %v1586 = vpop.f32.mrb[0].mxu0
      %v1587 = vadd.f32 0.0, %v1586
      %v1588 = vpop.f32.mrb[0].mxu0
      %1589 = vmatprep.mubr.bf16.mxu0 0
      %1590 = vmatmul.mubr.bf16.gmra.mrb[0].mxu0 %v1400
      %v1591 = vpop.f32.mrb[0].mxu0
      %v1592 = vadd.f32 0.0, %v1591
      %v1593 = vpop.f32.mrb[0].mxu0
      %v1594 = vpop.f32.mrb[0].mxu0
      %v1595 = vadd.f32 0.0, %v1594
      %v1596 = vpop.f32.mrb[0].mxu0
      %1597 = vmatprep.mubr.bf16.mxu0 0
      %1598 = vmatmul.mubr.bf16.gmra.mrb[0].mxu0 %v1401
      %v1599 = vpop.f32.mrb[0].mxu0
      %v1600 = vadd.f32 0.0, %v1599
      %v1601 = vpop.f32.mrb[0].mxu0
      %v1602 = vpop.f32.mrb[0].mxu0
      %v1603 = vadd.f32 0.0, %v1602
      %v1604 = vpop.f32.mrb[0].mxu0
      %1605 = vmatprep.mubr.bf16.mxu0 0
      %1606 = vmatmul.mubr.bf16.gmra.mrb[0].mxu0 %v1402
      %v1607 = vpop.f32.mrb[0].mxu0
      %v1608 = vadd.f32 0.0, %v1607
      %v1609 = vpop.f32.mrb[0].mxu0
      %v1610 = vpop.f32.mrb[0].mxu0
      %v1611 = vadd.f32 0.0, %v1610
      %v1612 = vpop.f32.mrb[0].mxu0
      %1613 = vmatprep.mubr.bf16.mxu0 0
      %1614 = vmatmul.mubr.bf16.gmra.mrb[0].mxu0 %v1403
      %v1615 = vpop.f32.mrb[0].mxu0
      %v1616 = vadd.f32 0.0, %v1615
      %v1617 = vpop.f32.mrb[0].mxu0
      %v1618 = vpop.f32.mrb[0].mxu0
      %v1619 = vadd.f32 0.0, %v1618
      %v1620 = vpop.f32.mrb[0].mxu0
      %1621 = vmatprep.mubr.bf16.mxu0 0
      %1622 = vmatmul.mubr.bf16.gmra.mrb[0].mxu0 %v1404
      %v1623 = vpop.f32.mrb[0].mxu0
      %v1624 = vadd.f32 0.0, %v1623
      %v1625 = vpop.f32.mrb[0].mxu0
      %v1626 = vpop.f32.mrb[0].mxu0
      %v1627 = vadd.f32 0.0, %v1626
      %v1628 = vpop.f32.mrb[0].mxu0
      %1629 = vdwg.mxu0
      %v1662 = vunpack.c.l.b16 %v889
      %v1663 = vunpack.c.l.b16 %v890
      %v1664 = vunpack.c.l.b16 %v891
      %v1665 = vunpack.c.l.b16 %v892
      %v1666 = vunpack.c.l.b16 %v893
      %v1667 = vunpack.c.l.b16 %v894
      %v1668 = vunpack.c.l.b16 %v895
      %v1669 = vunpack.c.l.b16 %v896
      %v1670 = vunpack.c.l.b16 %v897
      %v1671 = vunpack.c.l.b16 %v898
      %v1672 = vunpack.c.l.b16 %v899
      %v1673 = vunpack.c.l.b16 %v900
      %v1674 = vunpack.c.l.b16 %v901
      %v1675 = vunpack.c.l.b16 %v902
      %v1676 = vunpack.c.l.b16 %v903
      %v1677 = vunpack.c.l.b16 %v904
      %v1678 = vunpack.c.l.b16 %v905
      %v1679 = vunpack.c.l.b16 %v906
      %v1680 = vunpack.c.l.b16 %v907
      %v1681 = vunpack.c.l.b16 %v908
      %v1682 = vunpack.c.l.b16 %v909
      %v1683 = vunpack.c.l.b16 %v910
      %v1684 = vunpack.c.l.b16 %v911
      %v1685 = vunpack.c.l.b16 %v912
      %v1686 = vunpack.c.l.b16 %v913
      %v1687 = vunpack.c.l.b16 %v914
      %v1688 = vunpack.c.l.b16 %v915
      %v1689 = vunpack.c.l.b16 %v916
      %v1690 = vunpack.c.l.b16 %v917
      %v1691 = vunpack.c.l.b16 %v918
      %v1692 = vunpack.c.l.b16 %v919
      %v1693 = vunpack.c.l.b16 %v920
      %v1694 = vpack.c.b16 %v1663, %v1662
      %v1695 = vpack.c.b16 %v1665, %v1664
      %v1696 = vpack.c.b16 %v1667, %v1666
      %v1697 = vpack.c.b16 %v1669, %v1668
      %v1698 = vpack.c.b16 %v1671, %v1670
      %v1699 = vpack.c.b16 %v1673, %v1672
      %v1700 = vpack.c.b16 %v1675, %v1674
      %v1701 = vpack.c.b16 %v1677, %v1676
      %v1702 = vpack.c.b16 %v1679, %v1678
      %v1703 = vpack.c.b16 %v1681, %v1680
      %v1704 = vpack.c.b16 %v1683, %v1682
      %v1705 = vpack.c.b16 %v1685, %v1684
      %v1706 = vpack.c.b16 %v1687, %v1686
      %v1707 = vpack.c.b16 %v1689, %v1688
      %v1708 = vpack.c.b16 %v1691, %v1690
      %v1709 = vpack.c.b16 %v1693, %v1692
      %v1742 = vunpack.c.l.b16 %v921
      %v1743 = vunpack.c.l.b16 %v922
      %v1744 = vunpack.c.l.b16 %v923
      %v1745 = vunpack.c.l.b16 %v924
      %v1746 = vunpack.c.l.b16 %v925
      %v1747 = vunpack.c.l.b16 %v926
      %v1748 = vunpack.c.l.b16 %v927
      %v1749 = vunpack.c.l.b16 %v928
      %v1750 = vunpack.c.l.b16 %v929
      %v1751 = vunpack.c.l.b16 %v930
      %v1752 = vunpack.c.l.b16 %v931
      %v1753 = vunpack.c.l.b16 %v932
      %v1754 = vunpack.c.l.b16 %v933
      %v1755 = vunpack.c.l.b16 %v934
      %v1756 = vunpack.c.l.b16 %v935
      %v1757 = vunpack.c.l.b16 %v936
      %v1758 = vpack.c.b16 %v1743, %v1742
      %v1759 = vpack.c.b16 %v1745, %v1744
      %v1760 = vpack.c.b16 %v1747, %v1746
      %v1761 = vpack.c.b16 %v1749, %v1748
      %v1762 = vpack.c.b16 %v1751, %v1750
      %v1763 = vpack.c.b16 %v1753, %v1752
      %v1764 = vpack.c.b16 %v1755, %v1754
      %v1765 = vpack.c.b16 %v1757, %v1756
      %1774 = vmatprep.subr.bf16.mxu0 0
      %1775 = vmatpush1.bf16.msra.mxu0 %v1758
      %1776 = vmatprep.subr.bf16.mxu0 0
      %1777 = vmatpush1.bf16.msra.mxu0 %v1759
      %1778 = vmatprep.subr.bf16.mxu0 0
      %1779 = vmatpush1.bf16.msra.mxu0 %v1760
      %1780 = vmatprep.subr.bf16.mxu0 0
      %1781 = vmatpush1.bf16.msra.mxu0 %v1761
      %1782 = vmatprep.subr.bf16.mxu0 0
      %1783 = vmatpush1.bf16.msra.mxu0 %v1762
      %1784 = vmatprep.subr.bf16.mxu0 0
      %1785 = vmatpush1.bf16.msra.mxu0 %v1763
      %1786 = vmatprep.subr.bf16.mxu0 0
      %1787 = vmatpush1.bf16.msra.mxu0 %v1764
      %1788 = vmatprep.subr.bf16.mxu0 0
      %1789 = vmatpush1.bf16.msra.mxu0 %v1765
      %1790 = vmatprep.subr.bf16.mxu0 0
      %1791 = vmatpush1.bf16.msra.mxu0 0
      %1792 = vmatprep.subr.bf16.mxu0 0
      %1793 = vmatpush1.bf16.msra.mxu0 0
      %1794 = vmatprep.subr.bf16.mxu0 0
      %1795 = vmatpush1.bf16.msra.mxu0 0
      %1796 = vmatprep.subr.bf16.mxu0 0
      %1797 = vmatpush1.bf16.msra.mxu0 0
      %1798 = vmatprep.subr.bf16.mxu0 0
      %1799 = vmatpush1.bf16.msra.mxu0 0
      %1800 = vmatprep.subr.bf16.mxu0 0
      %1801 = vmatpush1.bf16.msra.mxu0 0
      %1802 = vmatprep.subr.bf16.mxu0 0
      %1803 = vmatpush1.bf16.msra.mxu0 0
      %1804 = vmatprep.subr.bf16.mxu0 0
      %1805 = vmatpush1.bf16.msra.mxu0 0
      %1806 = vmatprep.mubr.bf16.mxu0 0
      %1807 = vmatmul.mubr.bf16.gmra.mrb[0].mxu0 %v1694
      %v1808 = vpop.f32.mrb[0].mxu0
      %v1809 = vadd.f32 %v1504, %v1808
      %v1810 = vpop.f32.mrb[0].mxu0
      %v1811 = vpop.f32.mrb[0].mxu0
      %v1812 = vadd.f32 %v1507, %v1811
      %v1813 = vpop.f32.mrb[0].mxu0
      %1814 = vmatprep.mubr.bf16.mxu0 0
      %1815 = vmatmul.mubr.bf16.gmra.mrb[0].mxu0 %v1695
      %v1816 = vpop.f32.mrb[0].mxu0
      %v1817 = vadd.f32 %v1512, %v1816
      %v1818 = vpop.f32.mrb[0].mxu0
      %v1819 = vpop.f32.mrb[0].mxu0
      %v1820 = vadd.f32 %v1515, %v1819
      %v1821 = vpop.f32.mrb[0].mxu0
      %1822 = vmatprep.mubr.bf16.mxu0 0
      %1823 = vmatmul.mubr.bf16.gmra.mrb[0].mxu0 %v1696
      %v1824 = vpop.f32.mrb[0].mxu0
      %v1825 = vadd.f32 %v1520, %v1824
      %v1826 = vpop.f32.mrb[0].mxu0
      %v1827 = vpop.f32.mrb[0].mxu0
      %v1828 = vadd.f32 %v1523, %v1827
      %v1829 = vpop.f32.mrb[0].mxu0
      %1830 = vmatprep.mubr.bf16.mxu0 0
      %1831 = vmatmul.mubr.bf16.gmra.mrb[0].mxu0 %v1697
      %v1832 = vpop.f32.mrb[0].mxu0
      %v1833 = vadd.f32 %v1528, %v1832
      %v1834 = vpop.f32.mrb[0].mxu0
      %v1835 = vpop.f32.mrb[0].mxu0
      %v1836 = vadd.f32 %v1531, %v1835
      %v1837 = vpop.f32.mrb[0].mxu0
      %1838 = vmatprep.mubr.bf16.mxu0 0
      %1839 = vmatmul.mubr.bf16.gmra.mrb[0].mxu0 %v1698
      %v1840 = vpop.f32.mrb[0].mxu0
      %v1841 = vadd.f32 %v1536, %v1840
      %v1842 = vpop.f32.mrb[0].mxu0
      %v1843 = vpop.f32.mrb[0].mxu0
      %v1844 = vadd.f32 %v1539, %v1843
      %v1845 = vpop.f32.mrb[0].mxu0
      %1846 = vmatprep.mubr.bf16.mxu0 0
      %1847 = vmatmul.mubr.bf16.gmra.mrb[0].mxu0 %v1699
      %v1848 = vpop.f32.mrb[0].mxu0
      %v1849 = vadd.f32 %v1544, %v1848
      %v1850 = vpop.f32.mrb[0].mxu0
      %v1851 = vpop.f32.mrb[0].mxu0
      %v1852 = vadd.f32 %v1547, %v1851
      %v1853 = vpop.f32.mrb[0].mxu0
      %1854 = vmatprep.mubr.bf16.mxu0 0
      %1855 = vmatmul.mubr.bf16.gmra.mrb[0].mxu0 %v1700
      %v1856 = vpop.f32.mrb[0].mxu0
      %v1857 = vadd.f32 %v1552, %v1856
      %v1858 = vpop.f32.mrb[0].mxu0
      %v1859 = vpop.f32.mrb[0].mxu0
      %v1860 = vadd.f32 %v1555, %v1859
      %v1861 = vpop.f32.mrb[0].mxu0
      %1862 = vmatprep.mubr.bf16.mxu0 0
      %1863 = vmatmul.mubr.bf16.gmra.mrb[0].mxu0 %v1701
      %v1864 = vpop.f32.mrb[0].mxu0
      %v1865 = vadd.f32 %v1560, %v1864
      %v1866 = vpop.f32.mrb[0].mxu0
      %v1867 = vpop.f32.mrb[0].mxu0
      %v1868 = vadd.f32 %v1563, %v1867
      %v1869 = vpop.f32.mrb[0].mxu0
      %1870 = vmatprep.mubr.bf16.mxu0 0
      %1871 = vmatmul.mubr.bf16.gmra.mrb[0].mxu0 %v1702
      %v1872 = vpop.f32.mrb[0].mxu0
      %v1873 = vadd.f32 %v1568, %v1872
      %v1874 = vpop.f32.mrb[0].mxu0
      %v1875 = vpop.f32.mrb[0].mxu0
      %v1876 = vadd.f32 %v1571, %v1875
      %v1877 = vpop.f32.mrb[0].mxu0
      %1878 = vmatprep.mubr.bf16.mxu0 0
      %1879 = vmatmul.mubr.bf16.gmra.mrb[0].mxu0 %v1703
      %v1880 = vpop.f32.mrb[0].mxu0
      %v1881 = vadd.f32 %v1576, %v1880
      %v1882 = vpop.f32.mrb[0].mxu0
      %v1883 = vpop.f32.mrb[0].mxu0
      %v1884 = vadd.f32 %v1579, %v1883
      %v1885 = vpop.f32.mrb[0].mxu0
      %1886 = vmatprep.mubr.bf16.mxu0 0
      %1887 = vmatmul.mubr.bf16.gmra.mrb[0].mxu0 %v1704
      %v1888 = vpop.f32.mrb[0].mxu0
      %v1889 = vadd.f32 %v1584, %v1888
      %v1890 = vpop.f32.mrb[0].mxu0
      %v1891 = vpop.f32.mrb[0].mxu0
      %v1892 = vadd.f32 %v1587, %v1891
      %v1893 = vpop.f32.mrb[0].mxu0
      %1894 = vmatprep.mubr.bf16.mxu0 0
      %1895 = vmatmul.mubr.bf16.gmra.mrb[0].mxu0 %v1705
      %v1896 = vpop.f32.mrb[0].mxu0
      %v1897 = vadd.f32 %v1592, %v1896
      %v1898 = vpop.f32.mrb[0].mxu0
      %v1899 = vpop.f32.mrb[0].mxu0
      %v1900 = vadd.f32 %v1595, %v1899
      %v1901 = vpop.f32.mrb[0].mxu0
      %1902 = vmatprep.mubr.bf16.mxu0 0
      %1903 = vmatmul.mubr.bf16.gmra.mrb[0].mxu0 %v1706
      %v1904 = vpop.f32.mrb[0].mxu0
      %v1905 = vadd.f32 %v1600, %v1904
      %v1906 = vpop.f32.mrb[0].mxu0
      %v1907 = vpop.f32.mrb[0].mxu0
      %v1908 = vadd.f32 %v1603, %v1907
      %v1909 = vpop.f32.mrb[0].mxu0
      %1910 = vmatprep.mubr.bf16.mxu0 0
      %1911 = vmatmul.mubr.bf16.gmra.mrb[0].mxu0 %v1707
      %v1912 = vpop.f32.mrb[0].mxu0
      %v1913 = vadd.f32 %v1608, %v1912
      %v1914 = vpop.f32.mrb[0].mxu0
      %v1915 = vpop.f32.mrb[0].mxu0
      %v1916 = vadd.f32 %v1611, %v1915
      %v1917 = vpop.f32.mrb[0].mxu0
      %1918 = vmatprep.mubr.bf16.mxu0 0
      %1919 = vmatmul.mubr.bf16.gmra.mrb[0].mxu0 %v1708
      %v1920 = vpop.f32.mrb[0].mxu0
      %v1921 = vadd.f32 %v1616, %v1920
      %v1922 = vpop.f32.mrb[0].mxu0
      %v1923 = vpop.f32.mrb[0].mxu0
      %v1924 = vadd.f32 %v1619, %v1923
      %v1925 = vpop.f32.mrb[0].mxu0
      %1926 = vmatprep.mubr.bf16.mxu0 0
      %1927 = vmatmul.mubr.bf16.gmra.mrb[0].mxu0 %v1709
      %v1928 = vpop.f32.mrb[0].mxu0
      %v1929 = vadd.f32 %v1624, %v1928
      %v1930 = vpop.f32.mrb[0].mxu0
      %v1931 = vpop.f32.mrb[0].mxu0
      %v1932 = vadd.f32 %v1627, %v1931
      %v1933 = vpop.f32.mrb[0].mxu0
      %1934 = vdwg.mxu0
      %v1935 = vld [vmem:[#allocation2] sm:$0xe]
      %v1936 = vld [vmem:[#allocation2 + $0xc] sm:$0xe]
      %v1937 = vld [vmem:[#allocation2 + $0x18] sm:$0xe]
      %v1938 = vld [vmem:[#allocation2 + $0x24] sm:$0xe]
      %v1939 = vld [vmem:[#allocation2 + $0x30] sm:$0xe]
      %v1940 = vld [vmem:[#allocation2 + $0x3c] sm:$0xe]
      %v1941 = vld [vmem:[#allocation2 + $0x48] sm:$0xe]
      %v1942 = vld [vmem:[#allocation2 + $0x54] sm:$0xe]
      %v1943 = vld [vmem:[#allocation2 + $0x60] sm:$0xe]
      %v1944 = vld [vmem:[#allocation2 + $0x6c] sm:$0xe]
      %v1945 = vld [vmem:[#allocation2 + $0x78] sm:$0xe]
      %v1946 = vld [vmem:[#allocation2 + $0x84] sm:$0xe]
      %v1947 = vld [vmem:[#allocation2 + $0x90] sm:$0xe]
      %v1948 = vld [vmem:[#allocation2 + $0x9c] sm:$0xe]
      %v1949 = vld [vmem:[#allocation2 + $0xa8] sm:$0xe]
      %v1950 = vld [vmem:[#allocation2 + $0xb4] sm:$0xe]
      %vm1983 = vcmask 1042432
      %vm1984 = vcmask 1046532
      %vm1985 = vmor %vm1983, %vm1984
      %v1986 = vrot.slane %v1935, 5
      %v1987 = vrot.slane %v1986, 4
      %v1988 = vrot.slane %v890, 5
      %v1989 = vsel %vm1985, %v1987, %v1988
      %v1990 = vrot.slane %v1988, 4
      %v1991 = vrot.slane %v937, 5
      %v1992 = vsel %vm1985, %v1990, %v1991
      %v1993 = vrot.slane %v1936, 5
      %v1994 = vrot.slane %v1993, 4
      %v1995 = vrot.slane %v892, 5
      %v1996 = vsel %vm1985, %v1994, %v1995
      %v1997 = vrot.slane %v1995, 4
      %v1998 = vrot.slane %v938, 5
      %v1999 = vsel %vm1985, %v1997, %v1998
      %v2000 = vrot.slane %v1937, 5
      %v2001 = vrot.slane %v2000, 4
      %v2002 = vrot.slane %v894, 5
      %v2003 = vsel %vm1985, %v2001, %v2002
      %v2004 = vrot.slane %v2002, 4
      %v2005 = vrot.slane %v939, 5
      %v2006 = vsel %vm1985, %v2004, %v2005
      %v2007 = vrot.slane %v1938, 5
      %v2008 = vrot.slane %v2007, 4
      %v2009 = vrot.slane %v896, 5
      %v2010 = vsel %vm1985, %v2008, %v2009
      %v2011 = vrot.slane %v2009, 4
      %v2012 = vrot.slane %v940, 5
      %v2013 = vsel %vm1985, %v2011, %v2012
      %v2014 = vrot.slane %v1939, 5
      %v2015 = vrot.slane %v2014, 4
      %v2016 = vrot.slane %v898, 5
      %v2017 = vsel %vm1985, %v2015, %v2016
      %v2018 = vrot.slane %v2016, 4
      %v2019 = vrot.slane %v941, 5
      %v2020 = vsel %vm1985, %v2018, %v2019
      %v2021 = vrot.slane %v1940, 5
      %v2022 = vrot.slane %v2021, 4
      %v2023 = vrot.slane %v900, 5
      %v2024 = vsel %vm1985, %v2022, %v2023
      %v2025 = vrot.slane %v2023, 4
      %v2026 = vrot.slane %v942, 5
      %v2027 = vsel %vm1985, %v2025, %v2026
      %v2028 = vrot.slane %v1941, 5
      %v2029 = vrot.slane %v2028, 4
      %v2030 = vrot.slane %v902, 5
      %v2031 = vsel %vm1985, %v2029, %v2030
      %v2032 = vrot.slane %v2030, 4
      %v2033 = vrot.slane %v943, 5
      %v2034 = vsel %vm1985, %v2032, %v2033
      %v2035 = vrot.slane %v1942, 5
      %v2036 = vrot.slane %v2035, 4
      %v2037 = vrot.slane %v904, 5
      %v2038 = vsel %vm1985, %v2036, %v2037
      %v2039 = vrot.slane %v2037, 4
      %v2040 = vrot.slane %v944, 5
      %v2041 = vsel %vm1985, %v2039, %v2040
      %v2042 = vrot.slane %v1943, 5
      %v2043 = vrot.slane %v2042, 4
      %v2044 = vrot.slane %v906, 5
      %v2045 = vsel %vm1985, %v2043, %v2044
      %v2046 = vrot.slane %v2044, 4
      %v2047 = vrot.slane %v945, 5
      %v2048 = vsel %vm1985, %v2046, %v2047
      %v2049 = vrot.slane %v1944, 5
      %v2050 = vrot.slane %v2049, 4
      %v2051 = vrot.slane %v908, 5
      %v2052 = vsel %vm1985, %v2050, %v2051
      %v2053 = vrot.slane %v2051, 4
      %v2054 = vrot.slane %v946, 5
      %v2055 = vsel %vm1985, %v2053, %v2054
      %v2056 = vrot.slane %v1945, 5
      %v2057 = vrot.slane %v2056, 4
      %v2058 = vrot.slane %v910, 5
      %v2059 = vsel %vm1985, %v2057, %v2058
      %v2060 = vrot.slane %v2058, 4
      %v2061 = vrot.slane %v947, 5
      %v2062 = vsel %vm1985, %v2060, %v2061
      %v2063 = vrot.slane %v1946, 5
      %v2064 = vrot.slane %v2063, 4
      %v2065 = vrot.slane %v912, 5
      %v2066 = vsel %vm1985, %v2064, %v2065
      %v2067 = vrot.slane %v2065, 4
      %v2068 = vrot.slane %v948, 5
      %v2069 = vsel %vm1985, %v2067, %v2068
      %v2070 = vrot.slane %v1947, 5
      %v2071 = vrot.slane %v2070, 4
      %v2072 = vrot.slane %v914, 5
      %v2073 = vsel %vm1985, %v2071, %v2072
      %v2074 = vrot.slane %v2072, 4
      %v2075 = vrot.slane %v949, 5
      %v2076 = vsel %vm1985, %v2074, %v2075
      %v2077 = vrot.slane %v1948, 5
      %v2078 = vrot.slane %v2077, 4
      %v2079 = vrot.slane %v916, 5
      %v2080 = vsel %vm1985, %v2078, %v2079
      %v2081 = vrot.slane %v2079, 4
      %v2082 = vrot.slane %v950, 5
      %v2083 = vsel %vm1985, %v2081, %v2082
      %v2084 = vrot.slane %v1949, 5
      %v2085 = vrot.slane %v2084, 4
      %v2086 = vrot.slane %v918, 5
      %v2087 = vsel %vm1985, %v2085, %v2086
      %v2088 = vrot.slane %v2086, 4
      %v2089 = vrot.slane %v951, 5
      %v2090 = vsel %vm1985, %v2088, %v2089
      %v2091 = vrot.slane %v1950, 5
      %v2092 = vrot.slane %v2091, 4
      %v2093 = vrot.slane %v920, 5
      %v2094 = vsel %vm1985, %v2092, %v2093
      %v2095 = vrot.slane %v2093, 4
      %v2096 = vrot.slane %v952, 5
      %v2097 = vsel %vm1985, %v2095, %v2096
      %s2098 = scalar_lea.vmem %s1, 128
      %v2099 = vld [vmem:[%s2098] sm:$0xf]
      %v2100 = vld [vmem:[%s2098 + $0x4] sm:$0xf]
      %v2101 = vld [vmem:[%s2098 + $0x8] sm:$0xf]
      %v2102 = vld [vmem:[%s2098 + $0xc] sm:$0xf]
      %v2103 = vld [vmem:[%s2098 + $0x10] sm:$0xf]
      %v2104 = vld [vmem:[%s2098 + $0x14] sm:$0xf]
      %v2105 = vld [vmem:[%s2098 + $0x18] sm:$0xf]
      %v2106 = vld [vmem:[%s2098 + $0x1c] sm:$0xf]
      %v2107 = vld [vmem:[%s2098 + $0x20] sm:$0xf]
      %v2108 = vld [vmem:[%s2098 + $0x24] sm:$0xf]
      %v2109 = vld [vmem:[%s2098 + $0x28] sm:$0xf]
      %v2110 = vld [vmem:[%s2098 + $0x2c] sm:$0xf]
      %v2111 = vld [vmem:[%s2098 + $0x30] sm:$0xf]
      %v2112 = vld [vmem:[%s2098 + $0x34] sm:$0xf]
      %v2113 = vld [vmem:[%s2098 + $0x38] sm:$0xf]
      %v2114 = vld [vmem:[%s2098 + $0x3c] sm:$0xf]
      %v2115 = vunpack.c.l.b16 %v1989
      %v2116 = vunpack.c.l.b16 %v1992
      %v2117 = vunpack.c.l.b16 %v1996
      %v2118 = vunpack.c.l.b16 %v1999
      %v2119 = vunpack.c.l.b16 %v2003
      %v2120 = vunpack.c.l.b16 %v2006
      %v2121 = vunpack.c.l.b16 %v2010
      %v2122 = vunpack.c.l.b16 %v2013
      %v2123 = vunpack.c.l.b16 %v2017
      %v2124 = vunpack.c.l.b16 %v2020
      %v2125 = vunpack.c.l.b16 %v2024
      %v2126 = vunpack.c.l.b16 %v2027
      %v2127 = vunpack.c.l.b16 %v2031
      %v2128 = vunpack.c.l.b16 %v2034
      %v2129 = vunpack.c.l.b16 %v2038
      %v2130 = vunpack.c.l.b16 %v2041
      %v2131 = vunpack.c.l.b16 %v2045
      %v2132 = vunpack.c.l.b16 %v2048
      %v2133 = vunpack.c.l.b16 %v2052
      %v2134 = vunpack.c.l.b16 %v2055
      %v2135 = vunpack.c.l.b16 %v2059
      %v2136 = vunpack.c.l.b16 %v2062
      %v2137 = vunpack.c.l.b16 %v2066
      %v2138 = vunpack.c.l.b16 %v2069
      %v2139 = vunpack.c.l.b16 %v2073
      %v2140 = vunpack.c.l.b16 %v2076
      %v2141 = vunpack.c.l.b16 %v2080
      %v2142 = vunpack.c.l.b16 %v2083
      %v2143 = vunpack.c.l.b16 %v2087
      %v2144 = vunpack.c.l.b16 %v2090
      %v2145 = vunpack.c.l.b16 %v2094
      %v2146 = vunpack.c.l.b16 %v2097
      %v2147 = vpack.c.b16 %v2116, %v2115
      %v2148 = vpack.c.b16 %v2118, %v2117
      %v2149 = vpack.c.b16 %v2120, %v2119
      %v2150 = vpack.c.b16 %v2122, %v2121
      %v2151 = vpack.c.b16 %v2124, %v2123
      %v2152 = vpack.c.b16 %v2126, %v2125
      %v2153 = vpack.c.b16 %v2128, %v2127
      %v2154 = vpack.c.b16 %v2130, %v2129
      %v2155 = vpack.c.b16 %v2132, %v2131
      %v2156 = vpack.c.b16 %v2134, %v2133
      %v2157 = vpack.c.b16 %v2136, %v2135
      %v2158 = vpack.c.b16 %v2138, %v2137
      %v2159 = vpack.c.b16 %v2140, %v2139
      %v2160 = vpack.c.b16 %v2142, %v2141
      %v2161 = vpack.c.b16 %v2144, %v2143
      %v2162 = vpack.c.b16 %v2146, %v2145
      %v2195 = vunpack.c.l.b16 %v2099
      %v2196 = vunpack.c.l.b16 %v2100
      %v2197 = vunpack.c.l.b16 %v2101
      %v2198 = vunpack.c.l.b16 %v2102
      %v2199 = vunpack.c.l.b16 %v2103
      %v2200 = vunpack.c.l.b16 %v2104
      %v2201 = vunpack.c.l.b16 %v2105
      %v2202 = vunpack.c.l.b16 %v2106
      %v2203 = vunpack.c.l.b16 %v2107
      %v2204 = vunpack.c.l.b16 %v2108
      %v2205 = vunpack.c.l.b16 %v2109
      %v2206 = vunpack.c.l.b16 %v2110
      %v2207 = vunpack.c.l.b16 %v2111
      %v2208 = vunpack.c.l.b16 %v2112
      %v2209 = vunpack.c.l.b16 %v2113
      %v2210 = vunpack.c.l.b16 %v2114
      %v2211 = vpack.c.b16 %v2196, %v2195
      %v2212 = vpack.c.b16 %v2198, %v2197
      %v2213 = vpack.c.b16 %v2200, %v2199
      %v2214 = vpack.c.b16 %v2202, %v2201
      %v2215 = vpack.c.b16 %v2204, %v2203
      %v2216 = vpack.c.b16 %v2206, %v2205
      %v2217 = vpack.c.b16 %v2208, %v2207
      %v2218 = vpack.c.b16 %v2210, %v2209
      %2227 = vmatprep.subr.bf16.mxu0 0
      %2228 = vmatpush1.bf16.msra.mxu0 %v2211
      %2229 = vmatprep.subr.bf16.mxu0 0
      %2230 = vmatpush1.bf16.msra.mxu0 %v2212
      %2231 = vmatprep.subr.bf16.mxu0 0
      %2232 = vmatpush1.bf16.msra.mxu0 %v2213
      %2233 = vmatprep.subr.bf16.mxu0 0
      %2234 = vmatpush1.bf16.msra.mxu0 %v2214
      %2235 = vmatprep.subr.bf16.mxu0 0
      %2236 = vmatpush1.bf16.msra.mxu0 %v2215
      %2237 = vmatprep.subr.bf16.mxu0 0
      %2238 = vmatpush1.bf16.msra.mxu0 %v2216
      %2239 = vmatprep.subr.bf16.mxu0 0
      %2240 = vmatpush1.bf16.msra.mxu0 %v2217
      %2241 = vmatprep.subr.bf16.mxu0 0
      %2242 = vmatpush1.bf16.msra.mxu0 %v2218
      %2243 = vmatprep.subr.bf16.mxu0 0
      %2244 = vmatpush1.bf16.msra.mxu0 0
      %2245 = vmatprep.subr.bf16.mxu0 0
      %2246 = vmatpush1.bf16.msra.mxu0 0
      %2247 = vmatprep.subr.bf16.mxu0 0
      %2248 = vmatpush1.bf16.msra.mxu0 0
      %2249 = vmatprep.subr.bf16.mxu0 0
      %2250 = vmatpush1.bf16.msra.mxu0 0
      %2251 = vmatprep.subr.bf16.mxu0 0
      %2252 = vmatpush1.bf16.msra.mxu0 0
      %2253 = vmatprep.subr.bf16.mxu0 0
      %2254 = vmatpush1.bf16.msra.mxu0 0
      %2255 = vmatprep.subr.bf16.mxu0 0
      %2256 = vmatpush1.bf16.msra.mxu0 0
      %2257 = vmatprep.subr.bf16.mxu0 0
      %2258 = vmatpush1.bf16.msra.mxu0 0
      %2259 = vmatprep.mubr.bf16.mxu0 0
      %2260 = vmatmul.mubr.bf16.gmra.mrb[0].mxu0 %v2147
      %v2261 = vpop.f32.mrb[0].mxu0
      %v2262 = vadd.f32 0.0, %v2261
      %v2263 = vpop.f32.mrb[0].mxu0
      %v2264 = vpop.f32.mrb[0].mxu0
      %v2265 = vadd.f32 0.0, %v2264
      %v2266 = vpop.f32.mrb[0].mxu0
      %2267 = vmatprep.mubr.bf16.mxu0 0
      %2268 = vmatmul.mubr.bf16.gmra.mrb[0].mxu0 %v2148
      %v2269 = vpop.f32.mrb[0].mxu0
      %v2270 = vadd.f32 0.0, %v2269
      %v2271 = vpop.f32.mrb[0].mxu0
      %v2272 = vpop.f32.mrb[0].mxu0
      %v2273 = vadd.f32 0.0, %v2272
      %v2274 = vpop.f32.mrb[0].mxu0
      %2275 = vmatprep.mubr.bf16.mxu0 0
      %2276 = vmatmul.mubr.bf16.gmra.mrb[0].mxu0 %v2149
      %v2277 = vpop.f32.mrb[0].mxu0
      %v2278 = vadd.f32 0.0, %v2277
      %v2279 = vpop.f32.mrb[0].mxu0
      %v2280 = vpop.f32.mrb[0].mxu0
      %v2281 = vadd.f32 0.0, %v2280
      %v2282 = vpop.f32.mrb[0].mxu0
      %2283 = vmatprep.mubr.bf16.mxu0 0
      %2284 = vmatmul.mubr.bf16.gmra.mrb[0].mxu0 %v2150
      %v2285 = vpop.f32.mrb[0].mxu0
      %v2286 = vadd.f32 0.0, %v2285
      %v2287 = vpop.f32.mrb[0].mxu0
      %v2288 = vpop.f32.mrb[0].mxu0
      %v2289 = vadd.f32 0.0, %v2288
      %v2290 = vpop.f32.mrb[0].mxu0
      %2291 = vmatprep.mubr.bf16.mxu0 0
      %2292 = vmatmul.mubr.bf16.gmra.mrb[0].mxu0 %v2151
      %v2293 = vpop.f32.mrb[0].mxu0
      %v2294 = vadd.f32 0.0, %v2293
      %v2295 = vpop.f32.mrb[0].mxu0
      %v2296 = vpop.f32.mrb[0].mxu0
      %v2297 = vadd.f32 0.0, %v2296
      %v2298 = vpop.f32.mrb[0].mxu0
      %2299 = vmatprep.mubr.bf16.mxu0 0
      %2300 = vmatmul.mubr.bf16.gmra.mrb[0].mxu0 %v2152
      %v2301 = vpop.f32.mrb[0].mxu0
      %v2302 = vadd.f32 0.0, %v2301
      %v2303 = vpop.f32.mrb[0].mxu0
      %v2304 = vpop.f32.mrb[0].mxu0
      %v2305 = vadd.f32 0.0, %v2304
      %v2306 = vpop.f32.mrb[0].mxu0
      %2307 = vmatprep.mubr.bf16.mxu0 0
      %2308 = vmatmul.mubr.bf16.gmra.mrb[0].mxu0 %v2153
      %v2309 = vpop.f32.mrb[0].mxu0
      %v2310 = vadd.f32 0.0, %v2309
      %v2311 = vpop.f32.mrb[0].mxu0
      %v2312 = vpop.f32.mrb[0].mxu0
      %v2313 = vadd.f32 0.0, %v2312
      %v2314 = vpop.f32.mrb[0].mxu0
      %2315 = vmatprep.mubr.bf16.mxu0 0
      %2316 = vmatmul.mubr.bf16.gmra.mrb[0].mxu0 %v2154
      %v2317 = vpop.f32.mrb[0].mxu0
      %v2318 = vadd.f32 0.0, %v2317
      %v2319 = vpop.f32.mrb[0].mxu0
      %v2320 = vpop.f32.mrb[0].mxu0
      %v2321 = vadd.f32 0.0, %v2320
      %v2322 = vpop.f32.mrb[0].mxu0
      %2323 = vmatprep.mubr.bf16.mxu0 0
      %2324 = vmatmul.mubr.bf16.gmra.mrb[0].mxu0 %v2155
      %v2325 = vpop.f32.mrb[0].mxu0
      %v2326 = vadd.f32 0.0, %v2325
      %v2327 = vpop.f32.mrb[0].mxu0
      %v2328 = vpop.f32.mrb[0].mxu0
      %v2329 = vadd.f32 0.0, %v2328
      %v2330 = vpop.f32.mrb[0].mxu0
      %2331 = vmatprep.mubr.bf16.mxu0 0
      %2332 = vmatmul.mubr.bf16.gmra.mrb[0].mxu0 %v2156
      %v2333 = vpop.f32.mrb[0].mxu0
      %v2334 = vadd.f32 0.0, %v2333
      %v2335 = vpop.f32.mrb[0].mxu0
      %v2336 = vpop.f32.mrb[0].mxu0
      %v2337 = vadd.f32 0.0, %v2336
      %v2338 = vpop.f32.mrb[0].mxu0
      %2339 = vmatprep.mubr.bf16.mxu0 0
      %2340 = vmatmul.mubr.bf16.gmra.mrb[0].mxu0 %v2157
      %v2341 = vpop.f32.mrb[0].mxu0
      %v2342 = vadd.f32 0.0, %v2341
      %v2343 = vpop.f32.mrb[0].mxu0
      %v2344 = vpop.f32.mrb[0].mxu0
      %v2345 = vadd.f32 0.0, %v2344
      %v2346 = vpop.f32.mrb[0].mxu0
      %2347 = vmatprep.mubr.bf16.mxu0 0
      %2348 = vmatmul.mubr.bf16.gmra.mrb[0].mxu0 %v2158
      %v2349 = vpop.f32.mrb[0].mxu0
      %v2350 = vadd.f32 0.0, %v2349
      %v2351 = vpop.f32.mrb[0].mxu0
      %v2352 = vpop.f32.mrb[0].mxu0
      %v2353 = vadd.f32 0.0, %v2352
      %v2354 = vpop.f32.mrb[0].mxu0
      %2355 = vmatprep.mubr.bf16.mxu0 0
      %2356 = vmatmul.mubr.bf16.gmra.mrb[0].mxu0 %v2159
      %v2357 = vpop.f32.mrb[0].mxu0
      %v2358 = vadd.f32 0.0, %v2357
      %v2359 = vpop.f32.mrb[0].mxu0
      %v2360 = vpop.f32.mrb[0].mxu0
      %v2361 = vadd.f32 0.0, %v2360
      %v2362 = vpop.f32.mrb[0].mxu0
      %2363 = vmatprep.mubr.bf16.mxu0 0
      %2364 = vmatmul.mubr.bf16.gmra.mrb[0].mxu0 %v2160
      %v2365 = vpop.f32.mrb[0].mxu0
      %v2366 = vadd.f32 0.0, %v2365
      %v2367 = vpop.f32.mrb[0].mxu0
      %v2368 = vpop.f32.mrb[0].mxu0
      %v2369 = vadd.f32 0.0, %v2368
      %v2370 = vpop.f32.mrb[0].mxu0
      %2371 = vmatprep.mubr.bf16.mxu0 0
      %2372 = vmatmul.mubr.bf16.gmra.mrb[0].mxu0 %v2161
      %v2373 = vpop.f32.mrb[0].mxu0
      %v2374 = vadd.f32 0.0, %v2373
      %v2375 = vpop.f32.mrb[0].mxu0
      %v2376 = vpop.f32.mrb[0].mxu0
      %v2377 = vadd.f32 0.0, %v2376
      %v2378 = vpop.f32.mrb[0].mxu0
      %2379 = vmatprep.mubr.bf16.mxu0 0
      %2380 = vmatmul.mubr.bf16.gmra.mrb[0].mxu0 %v2162
      %v2381 = vpop.f32.mrb[0].mxu0
      %v2382 = vadd.f32 0.0, %v2381
      %v2383 = vpop.f32.mrb[0].mxu0
      %v2384 = vpop.f32.mrb[0].mxu0
      %v2385 = vadd.f32 0.0, %v2384
      %v2386 = vpop.f32.mrb[0].mxu0
      %2387 = vdwg.mxu0
      %v2388 = vadd.f32 %v1809, %v2262
      %v2389 = vadd.f32 %v1812, %v2265
      %v2390 = vadd.f32 %v1817, %v2270
      %v2391 = vadd.f32 %v1820, %v2273
      %v2392 = vadd.f32 %v1825, %v2278
      %v2393 = vadd.f32 %v1828, %v2281
      %v2394 = vadd.f32 %v1833, %v2286
      %v2395 = vadd.f32 %v1836, %v2289
      %v2396 = vadd.f32 %v1841, %v2294
      %v2397 = vadd.f32 %v1844, %v2297
      %v2398 = vadd.f32 %v1849, %v2302
      %v2399 = vadd.f32 %v1852, %v2305
      %v2400 = vadd.f32 %v1857, %v2310
      %v2401 = vadd.f32 %v1860, %v2313
      %v2402 = vadd.f32 %v1865, %v2318
      %v2403 = vadd.f32 %v1868, %v2321
      %v2404 = vadd.f32 %v1873, %v2326
      %v2405 = vadd.f32 %v1876, %v2329
      %v2406 = vadd.f32 %v1881, %v2334
      %v2407 = vadd.f32 %v1884, %v2337
      %v2408 = vadd.f32 %v1889, %v2342
      %v2409 = vadd.f32 %v1892, %v2345
      %v2410 = vadd.f32 %v1897, %v2350
      %v2411 = vadd.f32 %v1900, %v2353
      %v2412 = vadd.f32 %v1905, %v2358
      %v2413 = vadd.f32 %v1908, %v2361
      %v2414 = vadd.f32 %v1913, %v2366
      %v2415 = vadd.f32 %v1916, %v2369
      %v2416 = vadd.f32 %v1921, %v2374
      %v2417 = vadd.f32 %v1924, %v2377
      %v2418 = vadd.f32 %v1929, %v2382
      %v2419 = vadd.f32 %v1932, %v2385
      %v2420 = vld [vmem:[%s271] sm:$0xf]
      %v2421 = vld [vmem:[%s271 + $0x4] sm:$0xf]
      %v2422 = vld [vmem:[%s271 + $0xc] sm:$0xf]
      %v2423 = vld [vmem:[%s271 + $0x10] sm:$0xf]
      %v2424 = vld [vmem:[%s271 + $0x18] sm:$0xf]
      %v2425 = vld [vmem:[%s271 + $0x1c] sm:$0xf]
      %v2426 = vld [vmem:[%s271 + $0x24] sm:$0xf]
      %v2427 = vld [vmem:[%s271 + $0x28] sm:$0xf]
      %v2428 = vld [vmem:[%s271 + $0x30] sm:$0xf]
      %v2429 = vld [vmem:[%s271 + $0x34] sm:$0xf]
      %v2430 = vld [vmem:[%s271 + $0x3c] sm:$0xf]
      %v2431 = vld [vmem:[%s271 + $0x40] sm:$0xf]
      %v2432 = vld [vmem:[%s271 + $0x48] sm:$0xf]
      %v2433 = vld [vmem:[%s271 + $0x4c] sm:$0xf]
      %v2434 = vld [vmem:[%s271 + $0x54] sm:$0xf]
      %v2435 = vld [vmem:[%s271 + $0x58] sm:$0xf]
      %v2436 = vld [vmem:[%s271 + $0x60] sm:$0xf]
      %v2437 = vld [vmem:[%s271 + $0x64] sm:$0xf]
      %v2438 = vld [vmem:[%s271 + $0x6c] sm:$0xf]
      %v2439 = vld [vmem:[%s271 + $0x70] sm:$0xf]
      %v2440 = vld [vmem:[%s271 + $0x78] sm:$0xf]
      %v2441 = vld [vmem:[%s271 + $0x7c] sm:$0xf]
      %v2442 = vld [vmem:[%s271 + $0x84] sm:$0xf]
      %v2443 = vld [vmem:[%s271 + $0x88] sm:$0xf]
      %v2444 = vld [vmem:[%s271 + $0x90] sm:$0xf]
      %v2445 = vld [vmem:[%s271 + $0x94] sm:$0xf]
      %v2446 = vld [vmem:[%s271 + $0x9c] sm:$0xf]
      %v2447 = vld [vmem:[%s271 + $0xa0] sm:$0xf]
      %v2448 = vld [vmem:[%s271 + $0xa8] sm:$0xf]
      %v2449 = vld [vmem:[%s271 + $0xac] sm:$0xf]
      %v2450 = vld [vmem:[%s271 + $0xb4] sm:$0xf]
      %v2451 = vld [vmem:[%s271 + $0xb8] sm:$0xf]
      %s2452 = scalar_lea.vmem %s1, 192
      %v2453 = vld [vmem:[%s2452] sm:$0xf]
      %v2454 = vld [vmem:[%s2452 + $0x4] sm:$0xf]
      %v2455 = vld [vmem:[%s2452 + $0x8] sm:$0xf]
      %v2456 = vld [vmem:[%s2452 + $0xc] sm:$0xf]
      %v2457 = vld [vmem:[%s2452 + $0x10] sm:$0xf]
      %v2458 = vld [vmem:[%s2452 + $0x14] sm:$0xf]
      %v2459 = vld [vmem:[%s2452 + $0x18] sm:$0xf]
      %v2460 = vld [vmem:[%s2452 + $0x1c] sm:$0xf]
      %v2461 = vld [vmem:[%s2452 + $0x20] sm:$0xf]
      %v2462 = vld [vmem:[%s2452 + $0x24] sm:$0xf]
      %v2463 = vld [vmem:[%s2452 + $0x28] sm:$0xf]
      %v2464 = vld [vmem:[%s2452 + $0x2c] sm:$0xf]
      %v2465 = vld [vmem:[%s2452 + $0x30] sm:$0xf]
      %v2466 = vld [vmem:[%s2452 + $0x34] sm:$0xf]
      %v2467 = vld [vmem:[%s2452 + $0x38] sm:$0xf]
      %v2468 = vld [vmem:[%s2452 + $0x3c] sm:$0xf]
      %v2501 = vunpack.c.l.b16 %v2420
      %v2502 = vunpack.c.l.b16 %v2421
      %v2503 = vunpack.c.l.b16 %v2422
      %v2504 = vunpack.c.l.b16 %v2423
      %v2505 = vunpack.c.l.b16 %v2424
      %v2506 = vunpack.c.l.b16 %v2425
      %v2507 = vunpack.c.l.b16 %v2426
      %v2508 = vunpack.c.l.b16 %v2427
      %v2509 = vunpack.c.l.b16 %v2428
      %v2510 = vunpack.c.l.b16 %v2429
      %v2511 = vunpack.c.l.b16 %v2430
      %v2512 = vunpack.c.l.b16 %v2431
      %v2513 = vunpack.c.l.b16 %v2432
      %v2514 = vunpack.c.l.b16 %v2433
      %v2515 = vunpack.c.l.b16 %v2434
      %v2516 = vunpack.c.l.b16 %v2435
      %v2517 = vunpack.c.l.b16 %v2436
      %v2518 = vunpack.c.l.b16 %v2437
      %v2519 = vunpack.c.l.b16 %v2438
      %v2520 = vunpack.c.l.b16 %v2439
      %v2521 = vunpack.c.l.b16 %v2440
      %v2522 = vunpack.c.l.b16 %v2441
      %v2523 = vunpack.c.l.b16 %v2442
      %v2524 = vunpack.c.l.b16 %v2443
      %v2525 = vunpack.c.l.b16 %v2444
      %v2526 = vunpack.c.l.b16 %v2445
      %v2527 = vunpack.c.l.b16 %v2446
      %v2528 = vunpack.c.l.b16 %v2447
      %v2529 = vunpack.c.l.b16 %v2448
      %v2530 = vunpack.c.l.b16 %v2449
      %v2531 = vunpack.c.l.b16 %v2450
      %v2532 = vunpack.c.l.b16 %v2451
      %v2533 = vpack.c.b16 %v2502, %v2501
      %v2534 = vpack.c.b16 %v2504, %v2503
      %v2535 = vpack.c.b16 %v2506, %v2505
      %v2536 = vpack.c.b16 %v2508, %v2507
      %v2537 = vpack.c.b16 %v2510, %v2509
      %v2538 = vpack.c.b16 %v2512, %v2511
      %v2539 = vpack.c.b16 %v2514, %v2513
      %v2540 = vpack.c.b16 %v2516, %v2515
      %v2541 = vpack.c.b16 %v2518, %v2517
      %v2542 = vpack.c.b16 %v2520, %v2519
      %v2543 = vpack.c.b16 %v2522, %v2521
      %v2544 = vpack.c.b16 %v2524, %v2523
      %v2545 = vpack.c.b16 %v2526, %v2525
      %v2546 = vpack.c.b16 %v2528, %v2527
      %v2547 = vpack.c.b16 %v2530, %v2529
      %v2548 = vpack.c.b16 %v2532, %v2531
      %v2581 = vunpack.c.l.b16 %v2453
      %v2582 = vunpack.c.l.b16 %v2454
      %v2583 = vunpack.c.l.b16 %v2455
      %v2584 = vunpack.c.l.b16 %v2456
      %v2585 = vunpack.c.l.b16 %v2457
      %v2586 = vunpack.c.l.b16 %v2458
      %v2587 = vunpack.c.l.b16 %v2459
      %v2588 = vunpack.c.l.b16 %v2460
      %v2589 = vunpack.c.l.b16 %v2461
      %v2590 = vunpack.c.l.b16 %v2462
      %v2591 = vunpack.c.l.b16 %v2463
      %v2592 = vunpack.c.l.b16 %v2464
      %v2593 = vunpack.c.l.b16 %v2465
      %v2594 = vunpack.c.l.b16 %v2466
      %v2595 = vunpack.c.l.b16 %v2467
      %v2596 = vunpack.c.l.b16 %v2468
      %v2597 = vpack.c.b16 %v2582, %v2581
      %v2598 = vpack.c.b16 %v2584, %v2583
      %v2599 = vpack.c.b16 %v2586, %v2585
      %v2600 = vpack.c.b16 %v2588, %v2587
      %v2601 = vpack.c.b16 %v2590, %v2589
      %v2602 = vpack.c.b16 %v2592, %v2591
      %v2603 = vpack.c.b16 %v2594, %v2593
      %v2604 = vpack.c.b16 %v2596, %v2595
      %2613 = vmatprep.subr.bf16.mxu0 0
      %2614 = vmatpush1.bf16.msra.mxu0 %v2597
      %2615 = vmatprep.subr.bf16.mxu0 0
      %2616 = vmatpush1.bf16.msra.mxu0 %v2598
      %2617 = vmatprep.subr.bf16.mxu0 0
      %2618 = vmatpush1.bf16.msra.mxu0 %v2599
      %2619 = vmatprep.subr.bf16.mxu0 0
      %2620 = vmatpush1.bf16.msra.mxu0 %v2600
      %2621 = vmatprep.subr.bf16.mxu0 0
      %2622 = vmatpush1.bf16.msra.mxu0 %v2601
      %2623 = vmatprep.subr.bf16.mxu0 0
      %2624 = vmatpush1.bf16.msra.mxu0 %v2602
      %2625 = vmatprep.subr.bf16.mxu0 0
      %2626 = vmatpush1.bf16.msra.mxu0 %v2603
      %2627 = vmatprep.subr.bf16.mxu0 0
      %2628 = vmatpush1.bf16.msra.mxu0 %v2604
      %2629 = vmatprep.subr.bf16.mxu0 0
      %2630 = vmatpush1.bf16.msra.mxu0 0
      %2631 = vmatprep.subr.bf16.mxu0 0
      %2632 = vmatpush1.bf16.msra.mxu0 0
      %2633 = vmatprep.subr.bf16.mxu0 0
      %2634 = vmatpush1.bf16.msra.mxu0 0
      %2635 = vmatprep.subr.bf16.mxu0 0
      %2636 = vmatpush1.bf16.msra.mxu0 0
      %2637 = vmatprep.subr.bf16.mxu0 0
      %2638 = vmatpush1.bf16.msra.mxu0 0
      %2639 = vmatprep.subr.bf16.mxu0 0
      %2640 = vmatpush1.bf16.msra.mxu0 0
      %2641 = vmatprep.subr.bf16.mxu0 0
      %2642 = vmatpush1.bf16.msra.mxu0 0
      %2643 = vmatprep.subr.bf16.mxu0 0
      %2644 = vmatpush1.bf16.msra.mxu0 0
      %2645 = vmatprep.mubr.bf16.mxu0 0
      %2646 = vmatmul.mubr.bf16.gmra.mrb[0].mxu0 %v2533
      %v2647 = vpop.f32.mrb[0].mxu0
      %v2648 = vadd.f32 0.0, %v2647
      %v2649 = vpop.f32.mrb[0].mxu0
      %v2650 = vpop.f32.mrb[0].mxu0
      %v2651 = vadd.f32 0.0, %v2650
      %v2652 = vpop.f32.mrb[0].mxu0
      %2653 = vmatprep.mubr.bf16.mxu0 0
      %2654 = vmatmul.mubr.bf16.gmra.mrb[0].mxu0 %v2534
      %v2655 = vpop.f32.mrb[0].mxu0
      %v2656 = vadd.f32 0.0, %v2655
      %v2657 = vpop.f32.mrb[0].mxu0
      %v2658 = vpop.f32.mrb[0].mxu0
      %v2659 = vadd.f32 0.0, %v2658
      %v2660 = vpop.f32.mrb[0].mxu0
      %2661 = vmatprep.mubr.bf16.mxu0 0
      %2662 = vmatmul.mubr.bf16.gmra.mrb[0].mxu0 %v2535
      %v2663 = vpop.f32.mrb[0].mxu0
      %v2664 = vadd.f32 0.0, %v2663
      %v2665 = vpop.f32.mrb[0].mxu0
      %v2666 = vpop.f32.mrb[0].mxu0
      %v2667 = vadd.f32 0.0, %v2666
      %v2668 = vpop.f32.mrb[0].mxu0
      %2669 = vmatprep.mubr.bf16.mxu0 0
      %2670 = vmatmul.mubr.bf16.gmra.mrb[0].mxu0 %v2536
      %v2671 = vpop.f32.mrb[0].mxu0
      %v2672 = vadd.f32 0.0, %v2671
      %v2673 = vpop.f32.mrb[0].mxu0
      %v2674 = vpop.f32.mrb[0].mxu0
      %v2675 = vadd.f32 0.0, %v2674
      %v2676 = vpop.f32.mrb[0].mxu0
      %2677 = vmatprep.mubr.bf16.mxu0 0
      %2678 = vmatmul.mubr.bf16.gmra.mrb[0].mxu0 %v2537
      %v2679 = vpop.f32.mrb[0].mxu0
      %v2680 = vadd.f32 0.0, %v2679
      %v2681 = vpop.f32.mrb[0].mxu0
      %v2682 = vpop.f32.mrb[0].mxu0
      %v2683 = vadd.f32 0.0, %v2682
      %v2684 = vpop.f32.mrb[0].mxu0
      %2685 = vmatprep.mubr.bf16.mxu0 0
      %2686 = vmatmul.mubr.bf16.gmra.mrb[0].mxu0 %v2538
      %v2687 = vpop.f32.mrb[0].mxu0
      %v2688 = vadd.f32 0.0, %v2687
      %v2689 = vpop.f32.mrb[0].mxu0
      %v2690 = vpop.f32.mrb[0].mxu0
      %v2691 = vadd.f32 0.0, %v2690
      %v2692 = vpop.f32.mrb[0].mxu0
      %2693 = vmatprep.mubr.bf16.mxu0 0
      %2694 = vmatmul.mubr.bf16.gmra.mrb[0].mxu0 %v2539
      %v2695 = vpop.f32.mrb[0].mxu0
      %v2696 = vadd.f32 0.0, %v2695
      %v2697 = vpop.f32.mrb[0].mxu0
      %v2698 = vpop.f32.mrb[0].mxu0
      %v2699 = vadd.f32 0.0, %v2698
      %v2700 = vpop.f32.mrb[0].mxu0
      %2701 = vmatprep.mubr.bf16.mxu0 0
      %2702 = vmatmul.mubr.bf16.gmra.mrb[0].mxu0 %v2540
      %v2703 = vpop.f32.mrb[0].mxu0
      %v2704 = vadd.f32 0.0, %v2703
      %v2705 = vpop.f32.mrb[0].mxu0
      %v2706 = vpop.f32.mrb[0].mxu0
      %v2707 = vadd.f32 0.0, %v2706
      %v2708 = vpop.f32.mrb[0].mxu0
      %2709 = vmatprep.mubr.bf16.mxu0 0
      %2710 = vmatmul.mubr.bf16.gmra.mrb[0].mxu0 %v2541
      %v2711 = vpop.f32.mrb[0].mxu0
      %v2712 = vadd.f32 0.0, %v2711
      %v2713 = vpop.f32.mrb[0].mxu0
      %v2714 = vpop.f32.mrb[0].mxu0
      %v2715 = vadd.f32 0.0, %v2714
      %v2716 = vpop.f32.mrb[0].mxu0
      %2717 = vmatprep.mubr.bf16.mxu0 0
      %2718 = vmatmul.mubr.bf16.gmra.mrb[0].mxu0 %v2542
      %v2719 = vpop.f32.mrb[0].mxu0
      %v2720 = vadd.f32 0.0, %v2719
      %v2721 = vpop.f32.mrb[0].mxu0
      %v2722 = vpop.f32.mrb[0].mxu0
      %v2723 = vadd.f32 0.0, %v2722
      %v2724 = vpop.f32.mrb[0].mxu0
      %2725 = vmatprep.mubr.bf16.mxu0 0
      %2726 = vmatmul.mubr.bf16.gmra.mrb[0].mxu0 %v2543
      %v2727 = vpop.f32.mrb[0].mxu0
      %v2728 = vadd.f32 0.0, %v2727
      %v2729 = vpop.f32.mrb[0].mxu0
      %v2730 = vpop.f32.mrb[0].mxu0
      %v2731 = vadd.f32 0.0, %v2730
      %v2732 = vpop.f32.mrb[0].mxu0
      %2733 = vmatprep.mubr.bf16.mxu0 0
      %2734 = vmatmul.mubr.bf16.gmra.mrb[0].mxu0 %v2544
      %v2735 = vpop.f32.mrb[0].mxu0
      %v2736 = vadd.f32 0.0, %v2735
      %v2737 = vpop.f32.mrb[0].mxu0
      %v2738 = vpop.f32.mrb[0].mxu0
      %v2739 = vadd.f32 0.0, %v2738
      %v2740 = vpop.f32.mrb[0].mxu0
      %2741 = vmatprep.mubr.bf16.mxu0 0
      %2742 = vmatmul.mubr.bf16.gmra.mrb[0].mxu0 %v2545
      %v2743 = vpop.f32.mrb[0].mxu0
      %v2744 = vadd.f32 0.0, %v2743
      %v2745 = vpop.f32.mrb[0].mxu0
      %v2746 = vpop.f32.mrb[0].mxu0
      %v2747 = vadd.f32 0.0, %v2746
      %v2748 = vpop.f32.mrb[0].mxu0
      %2749 = vmatprep.mubr.bf16.mxu0 0
      %2750 = vmatmul.mubr.bf16.gmra.mrb[0].mxu0 %v2546
      %v2751 = vpop.f32.mrb[0].mxu0
      %v2752 = vadd.f32 0.0, %v2751
      %v2753 = vpop.f32.mrb[0].mxu0
      %v2754 = vpop.f32.mrb[0].mxu0
      %v2755 = vadd.f32 0.0, %v2754
      %v2756 = vpop.f32.mrb[0].mxu0
      %2757 = vmatprep.mubr.bf16.mxu0 0
      %2758 = vmatmul.mubr.bf16.gmra.mrb[0].mxu0 %v2547
      %v2759 = vpop.f32.mrb[0].mxu0
      %v2760 = vadd.f32 0.0, %v2759
      %v2761 = vpop.f32.mrb[0].mxu0
      %v2762 = vpop.f32.mrb[0].mxu0
      %v2763 = vadd.f32 0.0, %v2762
      %v2764 = vpop.f32.mrb[0].mxu0
      %2765 = vmatprep.mubr.bf16.mxu0 0
      %2766 = vmatmul.mubr.bf16.gmra.mrb[0].mxu0 %v2548
      %v2767 = vpop.f32.mrb[0].mxu0
      %v2768 = vadd.f32 0.0, %v2767
      %v2769 = vpop.f32.mrb[0].mxu0
      %v2770 = vpop.f32.mrb[0].mxu0
      %v2771 = vadd.f32 0.0, %v2770
      %v2772 = vpop.f32.mrb[0].mxu0
      %2773 = vdwg.mxu0
      %v2774 = vadd.f32 %v2388, %v2648
      %v2775 = vadd.f32 %v2389, %v2651
      %v2776 = vadd.f32 %v2390, %v2656
      %v2777 = vadd.f32 %v2391, %v2659
      %v2778 = vadd.f32 %v2392, %v2664
      %v2779 = vadd.f32 %v2393, %v2667
      %v2780 = vadd.f32 %v2394, %v2672
      %v2781 = vadd.f32 %v2395, %v2675
      %v2782 = vadd.f32 %v2396, %v2680
      %v2783 = vadd.f32 %v2397, %v2683
      %v2784 = vadd.f32 %v2398, %v2688
      %v2785 = vadd.f32 %v2399, %v2691
      %v2786 = vadd.f32 %v2400, %v2696
      %v2787 = vadd.f32 %v2401, %v2699
      %v2788 = vadd.f32 %v2402, %v2704
      %v2789 = vadd.f32 %v2403, %v2707
      %v2790 = vadd.f32 %v2404, %v2712
      %v2791 = vadd.f32 %v2405, %v2715
      %v2792 = vadd.f32 %v2406, %v2720
      %v2793 = vadd.f32 %v2407, %v2723
      %v2794 = vadd.f32 %v2408, %v2728
      %v2795 = vadd.f32 %v2409, %v2731
      %v2796 = vadd.f32 %v2410, %v2736
      %v2797 = vadd.f32 %v2411, %v2739
      %v2798 = vadd.f32 %v2412, %v2744
      %v2799 = vadd.f32 %v2413, %v2747
      %v2800 = vadd.f32 %v2414, %v2752
      %v2801 = vadd.f32 %v2415, %v2755
      %v2802 = vadd.f32 %v2416, %v2760
      %v2803 = vadd.f32 %v2417, %v2763
      %v2804 = vadd.f32 %v2418, %v2768
      %v2805 = vadd.f32 %v2419, %v2771
      %v2806 = vld [vmem:[%s271] sm:$0xf]
      %v2807 = vld [vmem:[%s271 + $0x4] sm:$0xf]
      %v2808 = vld [vmem:[%s271 + $0x8] sm:$0x1]
      %v2809 = vld [vmem:[%s271 + $0xc] sm:$0xf]
      %v2810 = vld [vmem:[%s271 + $0x10] sm:$0xf]
      %v2811 = vld [vmem:[%s271 + $0x14] sm:$0x1]
      %v2812 = vld [vmem:[%s271 + $0x18] sm:$0xf]
      %v2813 = vld [vmem:[%s271 + $0x1c] sm:$0xf]
      %v2814 = vld [vmem:[%s271 + $0x20] sm:$0x1]
      %v2815 = vld [vmem:[%s271 + $0x24] sm:$0xf]
      %v2816 = vld [vmem:[%s271 + $0x28] sm:$0xf]
      %v2817 = vld [vmem:[%s271 + $0x2c] sm:$0x1]
      %v2818 = vld [vmem:[%s271 + $0x30] sm:$0xf]
      %v2819 = vld [vmem:[%s271 + $0x34] sm:$0xf]
      %v2820 = vld [vmem:[%s271 + $0x38] sm:$0x1]
      %v2821 = vld [vmem:[%s271 + $0x3c] sm:$0xf]
      %v2822 = vld [vmem:[%s271 + $0x40] sm:$0xf]
      %v2823 = vld [vmem:[%s271 + $0x44] sm:$0x1]
      %v2824 = vld [vmem:[%s271 + $0x48] sm:$0xf]
      %v2825 = vld [vmem:[%s271 + $0x4c] sm:$0xf]
      %v2826 = vld [vmem:[%s271 + $0x50] sm:$0x1]
      %v2827 = vld [vmem:[%s271 + $0x54] sm:$0xf]
      %v2828 = vld [vmem:[%s271 + $0x58] sm:$0xf]
      %v2829 = vld [vmem:[%s271 + $0x5c] sm:$0x1]
      %v2830 = vld [vmem:[%s271 + $0x60] sm:$0xf]
      %v2831 = vld [vmem:[%s271 + $0x64] sm:$0xf]
      %v2832 = vld [vmem:[%s271 + $0x68] sm:$0x1]
      %v2833 = vld [vmem:[%s271 + $0x6c] sm:$0xf]
      %v2834 = vld [vmem:[%s271 + $0x70] sm:$0xf]
      %v2835 = vld [vmem:[%s271 + $0x74] sm:$0x1]
      %v2836 = vld [vmem:[%s271 + $0x78] sm:$0xf]
      %v2837 = vld [vmem:[%s271 + $0x7c] sm:$0xf]
      %v2838 = vld [vmem:[%s271 + $0x80] sm:$0x1]
      %v2839 = vld [vmem:[%s271 + $0x84] sm:$0xf]
      %v2840 = vld [vmem:[%s271 + $0x88] sm:$0xf]
      %v2841 = vld [vmem:[%s271 + $0x8c] sm:$0x1]
      %v2842 = vld [vmem:[%s271 + $0x90] sm:$0xf]
      %v2843 = vld [vmem:[%s271 + $0x94] sm:$0xf]
      %v2844 = vld [vmem:[%s271 + $0x98] sm:$0x1]
      %v2845 = vld [vmem:[%s271 + $0x9c] sm:$0xf]
      %v2846 = vld [vmem:[%s271 + $0xa0] sm:$0xf]
      %v2847 = vld [vmem:[%s271 + $0xa4] sm:$0x1]
      %v2848 = vld [vmem:[%s271 + $0xa8] sm:$0xf]
      %v2849 = vld [vmem:[%s271 + $0xac] sm:$0xf]
      %v2850 = vld [vmem:[%s271 + $0xb0] sm:$0x1]
      %v2851 = vld [vmem:[%s271 + $0xb4] sm:$0xf]
      %v2852 = vld [vmem:[%s271 + $0xb8] sm:$0xf]
      %v2853 = vld [vmem:[%s271 + $0xbc] sm:$0x1]
      %v2855 = vshrl.u32 %v2806, 16
      %v2857 = vrot.slane %v2855, 4
      %v2858 = vshll.u32 %v2806, 16
      %v2860 = vrot.slane %v2858, 5
      %v2861 = vor.u32 %v2857, %v2860
      %v2862 = vrot.slane %v2861, 4
      %v2864 = vshll.u32 %v2807, 16
      %v2866 = vrot.slane %v2864, 5
      %v2867 = vsel %vm955, %v2862, %v2866
      %v2868 = vshrl.u32 %v2807, 16
      %v2870 = vrot.slane %v2868, 4
      %v2871 = vor.u32 %v2870, %v2866
      %v2872 = vrot.slane %v2871, 4
      %v2874 = vshll.u32 %v2808, 16
      %v2876 = vrot.slane %v2874, 5
      %v2877 = vsel %vm955, %v2872, %v2876
      %v2879 = vshrl.u32 %v2809, 16
      %v2881 = vrot.slane %v2879, 4
      %v2882 = vshll.u32 %v2809, 16
      %v2884 = vrot.slane %v2882, 5
      %v2885 = vor.u32 %v2881, %v2884
      %v2886 = vrot.slane %v2885, 4
      %v2888 = vshll.u32 %v2810, 16
      %v2890 = vrot.slane %v2888, 5
      %v2891 = vsel %vm955, %v2886, %v2890
      %v2892 = vshrl.u32 %v2810, 16
      %v2894 = vrot.slane %v2892, 4
      %v2895 = vor.u32 %v2894, %v2890
      %v2896 = vrot.slane %v2895, 4
      %v2898 = vshll.u32 %v2811, 16
      %v2900 = vrot.slane %v2898, 5
      %v2901 = vsel %vm955, %v2896, %v2900
      %v2903 = vshrl.u32 %v2812, 16
      %v2905 = vrot.slane %v2903, 4
      %v2906 = vshll.u32 %v2812, 16
      %v2908 = vrot.slane %v2906, 5
      %v2909 = vor.u32 %v2905, %v2908
      %v2910 = vrot.slane %v2909, 4
      %v2912 = vshll.u32 %v2813, 16
      %v2914 = vrot.slane %v2912, 5
      %v2915 = vsel %vm955, %v2910, %v2914
      %v2916 = vshrl.u32 %v2813, 16
      %v2918 = vrot.slane %v2916, 4
      %v2919 = vor.u32 %v2918, %v2914
      %v2920 = vrot.slane %v2919, 4
      %v2922 = vshll.u32 %v2814, 16
      %v2924 = vrot.slane %v2922, 5
      %v2925 = vsel %vm955, %v2920, %v2924
      %v2927 = vshrl.u32 %v2815, 16
      %v2929 = vrot.slane %v2927, 4
      %v2930 = vshll.u32 %v2815, 16
      %v2932 = vrot.slane %v2930, 5
      %v2933 = vor.u32 %v2929, %v2932
      %v2934 = vrot.slane %v2933, 4
      %v2936 = vshll.u32 %v2816, 16
      %v2938 = vrot.slane %v2936, 5
      %v2939 = vsel %vm955, %v2934, %v2938
      %v2940 = vshrl.u32 %v2816, 16
      %v2942 = vrot.slane %v2940, 4
      %v2943 = vor.u32 %v2942, %v2938
      %v2944 = vrot.slane %v2943, 4
      %v2946 = vshll.u32 %v2817, 16
      %v2948 = vrot.slane %v2946, 5
      %v2949 = vsel %vm955, %v2944, %v2948
      %v2951 = vshrl.u32 %v2818, 16
      %v2953 = vrot.slane %v2951, 4
      %v2954 = vshll.u32 %v2818, 16
      %v2956 = vrot.slane %v2954, 5
      %v2957 = vor.u32 %v2953, %v2956
      %v2958 = vrot.slane %v2957, 4
      %v2960 = vshll.u32 %v2819, 16
      %v2962 = vrot.slane %v2960, 5
      %v2963 = vsel %vm955, %v2958, %v2962
      %v2964 = vshrl.u32 %v2819, 16
      %v2966 = vrot.slane %v2964, 4
      %v2967 = vor.u32 %v2966, %v2962
      %v2968 = vrot.slane %v2967, 4
      %v2970 = vshll.u32 %v2820, 16
      %v2972 = vrot.slane %v2970, 5
      %v2973 = vsel %vm955, %v2968, %v2972
      %v2975 = vshrl.u32 %v2821, 16
      %v2977 = vrot.slane %v2975, 4
      %v2978 = vshll.u32 %v2821, 16
      %v2980 = vrot.slane %v2978, 5
      %v2981 = vor.u32 %v2977, %v2980
      %v2982 = vrot.slane %v2981, 4
      %v2984 = vshll.u32 %v2822, 16
      %v2986 = vrot.slane %v2984, 5
      %v2987 = vsel %vm955, %v2982, %v2986
      %v2988 = vshrl.u32 %v2822, 16
      %v2990 = vrot.slane %v2988, 4
      %v2991 = vor.u32 %v2990, %v2986
      %v2992 = vrot.slane %v2991, 4
      %v2994 = vshll.u32 %v2823, 16
      %v2996 = vrot.slane %v2994, 5
      %v2997 = vsel %vm955, %v2992, %v2996
      %v2999 = vshrl.u32 %v2824, 16
      %v3001 = vrot.slane %v2999, 4
      %v3002 = vshll.u32 %v2824, 16
      %v3004 = vrot.slane %v3002, 5
      %v3005 = vor.u32 %v3001, %v3004
      %v3006 = vrot.slane %v3005, 4
      %v3008 = vshll.u32 %v2825, 16
      %v3010 = vrot.slane %v3008, 5
      %v3011 = vsel %vm955, %v3006, %v3010
      %v3012 = vshrl.u32 %v2825, 16
      %v3014 = vrot.slane %v3012, 4
      %v3015 = vor.u32 %v3014, %v3010
      %v3016 = vrot.slane %v3015, 4
      %v3018 = vshll.u32 %v2826, 16
      %v3020 = vrot.slane %v3018, 5
      %v3021 = vsel %vm955, %v3016, %v3020
      %v3023 = vshrl.u32 %v2827, 16
      %v3025 = vrot.slane %v3023, 4
      %v3026 = vshll.u32 %v2827, 16
      %v3028 = vrot.slane %v3026, 5
      %v3029 = vor.u32 %v3025, %v3028
      %v3030 = vrot.slane %v3029, 4
      %v3032 = vshll.u32 %v2828, 16
      %v3034 = vrot.slane %v3032, 5
      %v3035 = vsel %vm955, %v3030, %v3034
      %v3036 = vshrl.u32 %v2828, 16
      %v3038 = vrot.slane %v3036, 4
      %v3039 = vor.u32 %v3038, %v3034
      %v3040 = vrot.slane %v3039, 4
      %v3042 = vshll.u32 %v2829, 16
      %v3044 = vrot.slane %v3042, 5
      %v3045 = vsel %vm955, %v3040, %v3044
      %v3047 = vshrl.u32 %v2830, 16
      %v3049 = vrot.slane %v3047, 4
      %v3050 = vshll.u32 %v2830, 16
      %v3052 = vrot.slane %v3050, 5
      %v3053 = vor.u32 %v3049, %v3052
      %v3054 = vrot.slane %v3053, 4
      %v3056 = vshll.u32 %v2831, 16
      %v3058 = vrot.slane %v3056, 5
      %v3059 = vsel %vm955, %v3054, %v3058
      %v3060 = vshrl.u32 %v2831, 16
      %v3062 = vrot.slane %v3060, 4
      %v3063 = vor.u32 %v3062, %v3058
      %v3064 = vrot.slane %v3063, 4
      %v3066 = vshll.u32 %v2832, 16
      %v3068 = vrot.slane %v3066, 5
      %v3069 = vsel %vm955, %v3064, %v3068
      %v3071 = vshrl.u32 %v2833, 16
      %v3073 = vrot.slane %v3071, 4
      %v3074 = vshll.u32 %v2833, 16
      %v3076 = vrot.slane %v3074, 5
      %v3077 = vor.u32 %v3073, %v3076
      %v3078 = vrot.slane %v3077, 4
      %v3080 = vshll.u32 %v2834, 16
      %v3082 = vrot.slane %v3080, 5
      %v3083 = vsel %vm955, %v3078, %v3082
      %v3084 = vshrl.u32 %v2834, 16
      %v3086 = vrot.slane %v3084, 4
      %v3087 = vor.u32 %v3086, %v3082
      %v3088 = vrot.slane %v3087, 4
      %v3090 = vshll.u32 %v2835, 16
      %v3092 = vrot.slane %v3090, 5
      %v3093 = vsel %vm955, %v3088, %v3092
      %v3095 = vshrl.u32 %v2836, 16
      %v3097 = vrot.slane %v3095, 4
      %v3098 = vshll.u32 %v2836, 16
      %v3100 = vrot.slane %v3098, 5
      %v3101 = vor.u32 %v3097, %v3100
      %v3102 = vrot.slane %v3101, 4
      %v3104 = vshll.u32 %v2837, 16
      %v3106 = vrot.slane %v3104, 5
      %v3107 = vsel %vm955, %v3102, %v3106
      %v3108 = vshrl.u32 %v2837, 16
      %v3110 = vrot.slane %v3108, 4
      %v3111 = vor.u32 %v3110, %v3106
      %v3112 = vrot.slane %v3111, 4
      %v3114 = vshll.u32 %v2838, 16
      %v3116 = vrot.slane %v3114, 5
      %v3117 = vsel %vm955, %v3112, %v3116
      %v3119 = vshrl.u32 %v2839, 16
      %v3121 = vrot.slane %v3119, 4
      %v3122 = vshll.u32 %v2839, 16
      %v3124 = vrot.slane %v3122, 5
      %v3125 = vor.u32 %v3121, %v3124
      %v3126 = vrot.slane %v3125, 4
      %v3128 = vshll.u32 %v2840, 16
      %v3130 = vrot.slane %v3128, 5
      %v3131 = vsel %vm955, %v3126, %v3130
      %v3132 = vshrl.u32 %v2840, 16
      %v3134 = vrot.slane %v3132, 4
      %v3135 = vor.u32 %v3134, %v3130
      %v3136 = vrot.slane %v3135, 4
      %v3138 = vshll.u32 %v2841, 16
      %v3140 = vrot.slane %v3138, 5
      %v3141 = vsel %vm955, %v3136, %v3140
      %v3143 = vshrl.u32 %v2842, 16
      %v3145 = vrot.slane %v3143, 4
      %v3146 = vshll.u32 %v2842, 16
      %v3148 = vrot.slane %v3146, 5
      %v3149 = vor.u32 %v3145, %v3148
      %v3150 = vrot.slane %v3149, 4
      %v3152 = vshll.u32 %v2843, 16
      %v3154 = vrot.slane %v3152, 5
      %v3155 = vsel %vm955, %v3150, %v3154
      %v3156 = vshrl.u32 %v2843, 16
      %v3158 = vrot.slane %v3156, 4
      %v3159 = vor.u32 %v3158, %v3154
      %v3160 = vrot.slane %v3159, 4
      %v3162 = vshll.u32 %v2844, 16
      %v3164 = vrot.slane %v3162, 5
      %v3165 = vsel %vm955, %v3160, %v3164
      %v3167 = vshrl.u32 %v2845, 16
      %v3169 = vrot.slane %v3167, 4
      %v3170 = vshll.u32 %v2845, 16
      %v3172 = vrot.slane %v3170, 5
      %v3173 = vor.u32 %v3169, %v3172
      %v3174 = vrot.slane %v3173, 4
      %v3176 = vshll.u32 %v2846, 16
      %v3178 = vrot.slane %v3176, 5
      %v3179 = vsel %vm955, %v3174, %v3178
      %v3180 = vshrl.u32 %v2846, 16
      %v3182 = vrot.slane %v3180, 4
      %v3183 = vor.u32 %v3182, %v3178
      %v3184 = vrot.slane %v3183, 4
      %v3186 = vshll.u32 %v2847, 16
      %v3188 = vrot.slane %v3186, 5
      %v3189 = vsel %vm955, %v3184, %v3188
      %v3191 = vshrl.u32 %v2848, 16
      %v3193 = vrot.slane %v3191, 4
      %v3194 = vshll.u32 %v2848, 16
      %v3196 = vrot.slane %v3194, 5
      %v3197 = vor.u32 %v3193, %v3196
      %v3198 = vrot.slane %v3197, 4
      %v3200 = vshll.u32 %v2849, 16
      %v3202 = vrot.slane %v3200, 5
      %v3203 = vsel %vm955, %v3198, %v3202
      %v3204 = vshrl.u32 %v2849, 16
      %v3206 = vrot.slane %v3204, 4
      %v3207 = vor.u32 %v3206, %v3202
      %v3208 = vrot.slane %v3207, 4
      %v3210 = vshll.u32 %v2850, 16
      %v3212 = vrot.slane %v3210, 5
      %v3213 = vsel %vm955, %v3208, %v3212
      %v3215 = vshrl.u32 %v2851, 16
      %v3217 = vrot.slane %v3215, 4
      %v3218 = vshll.u32 %v2851, 16
      %v3220 = vrot.slane %v3218, 5
      %v3221 = vor.u32 %v3217, %v3220
      %v3222 = vrot.slane %v3221, 4
      %v3224 = vshll.u32 %v2852, 16
      %v3226 = vrot.slane %v3224, 5
      %v3227 = vsel %vm955, %v3222, %v3226
      %v3228 = vshrl.u32 %v2852, 16
      %v3230 = vrot.slane %v3228, 4
      %v3231 = vor.u32 %v3230, %v3226
      %v3232 = vrot.slane %v3231, 4
      %v3234 = vshll.u32 %v2853, 16
      %v3236 = vrot.slane %v3234, 5
      %v3237 = vsel %vm955, %v3232, %v3236
      %s3238 = scalar_lea.vmem %s1, 256
      %v3239 = vld [vmem:[%s3238] sm:$0xf]
      %v3240 = vld [vmem:[%s3238 + $0x4] sm:$0xf]
      %v3241 = vld [vmem:[%s3238 + $0x8] sm:$0xf]
      %v3242 = vld [vmem:[%s3238 + $0xc] sm:$0xf]
      %v3243 = vld [vmem:[%s3238 + $0x10] sm:$0xf]
      %v3244 = vld [vmem:[%s3238 + $0x14] sm:$0xf]
      %v3245 = vld [vmem:[%s3238 + $0x18] sm:$0xf]
      %v3246 = vld [vmem:[%s3238 + $0x1c] sm:$0xf]
      %v3247 = vld [vmem:[%s3238 + $0x20] sm:$0xf]
      %v3248 = vld [vmem:[%s3238 + $0x24] sm:$0xf]
      %v3249 = vld [vmem:[%s3238 + $0x28] sm:$0xf]
      %v3250 = vld [vmem:[%s3238 + $0x2c] sm:$0xf]
      %v3251 = vld [vmem:[%s3238 + $0x30] sm:$0xf]
      %v3252 = vld [vmem:[%s3238 + $0x34] sm:$0xf]
      %v3253 = vld [vmem:[%s3238 + $0x38] sm:$0xf]
      %v3254 = vld [vmem:[%s3238 + $0x3c] sm:$0xf]
      %v3255 = vunpack.c.l.b16 %v2867
      %v3256 = vunpack.c.l.b16 %v2877
      %v3257 = vunpack.c.l.b16 %v2891
      %v3258 = vunpack.c.l.b16 %v2901
      %v3259 = vunpack.c.l.b16 %v2915
      %v3260 = vunpack.c.l.b16 %v2925
      %v3261 = vunpack.c.l.b16 %v2939
      %v3262 = vunpack.c.l.b16 %v2949
      %v3263 = vunpack.c.l.b16 %v2963
      %v3264 = vunpack.c.l.b16 %v2973
      %v3265 = vunpack.c.l.b16 %v2987
      %v3266 = vunpack.c.l.b16 %v2997
      %v3267 = vunpack.c.l.b16 %v3011
      %v3268 = vunpack.c.l.b16 %v3021
      %v3269 = vunpack.c.l.b16 %v3035
      %v3270 = vunpack.c.l.b16 %v3045
      %v3271 = vunpack.c.l.b16 %v3059
      %v3272 = vunpack.c.l.b16 %v3069
      %v3273 = vunpack.c.l.b16 %v3083
      %v3274 = vunpack.c.l.b16 %v3093
      %v3275 = vunpack.c.l.b16 %v3107
      %v3276 = vunpack.c.l.b16 %v3117
      %v3277 = vunpack.c.l.b16 %v3131
      %v3278 = vunpack.c.l.b16 %v3141
      %v3279 = vunpack.c.l.b16 %v3155
      %v3280 = vunpack.c.l.b16 %v3165
      %v3281 = vunpack.c.l.b16 %v3179
      %v3282 = vunpack.c.l.b16 %v3189
      %v3283 = vunpack.c.l.b16 %v3203
      %v3284 = vunpack.c.l.b16 %v3213
      %v3285 = vunpack.c.l.b16 %v3227
      %v3286 = vunpack.c.l.b16 %v3237
      %v3287 = vpack.c.b16 %v3256, %v3255
      %v3288 = vpack.c.b16 %v3258, %v3257
      %v3289 = vpack.c.b16 %v3260, %v3259
      %v3290 = vpack.c.b16 %v3262, %v3261
      %v3291 = vpack.c.b16 %v3264, %v3263
      %v3292 = vpack.c.b16 %v3266, %v3265
      %v3293 = vpack.c.b16 %v3268, %v3267
      %v3294 = vpack.c.b16 %v3270, %v3269
      %v3295 = vpack.c.b16 %v3272, %v3271
      %v3296 = vpack.c.b16 %v3274, %v3273
      %v3297 = vpack.c.b16 %v3276, %v3275
      %v3298 = vpack.c.b16 %v3278, %v3277
      %v3299 = vpack.c.b16 %v3280, %v3279
      %v3300 = vpack.c.b16 %v3282, %v3281
      %v3301 = vpack.c.b16 %v3284, %v3283
      %v3302 = vpack.c.b16 %v3286, %v3285
      %v3335 = vunpack.c.l.b16 %v3239
      %v3336 = vunpack.c.l.b16 %v3240
      %v3337 = vunpack.c.l.b16 %v3241
      %v3338 = vunpack.c.l.b16 %v3242
      %v3339 = vunpack.c.l.b16 %v3243
      %v3340 = vunpack.c.l.b16 %v3244
      %v3341 = vunpack.c.l.b16 %v3245
      %v3342 = vunpack.c.l.b16 %v3246
      %v3343 = vunpack.c.l.b16 %v3247
      %v3344 = vunpack.c.l.b16 %v3248
      %v3345 = vunpack.c.l.b16 %v3249
      %v3346 = vunpack.c.l.b16 %v3250
      %v3347 = vunpack.c.l.b16 %v3251
      %v3348 = vunpack.c.l.b16 %v3252
      %v3349 = vunpack.c.l.b16 %v3253
      %v3350 = vunpack.c.l.b16 %v3254
      %v3351 = vpack.c.b16 %v3336, %v3335
      %v3352 = vpack.c.b16 %v3338, %v3337
      %v3353 = vpack.c.b16 %v3340, %v3339
      %v3354 = vpack.c.b16 %v3342, %v3341
      %v3355 = vpack.c.b16 %v3344, %v3343
      %v3356 = vpack.c.b16 %v3346, %v3345
      %v3357 = vpack.c.b16 %v3348, %v3347
      %v3358 = vpack.c.b16 %v3350, %v3349
      %3367 = vmatprep.subr.bf16.mxu0 0
      %3368 = vmatpush1.bf16.msra.mxu0 %v3351
      %3369 = vmatprep.subr.bf16.mxu0 0
      %3370 = vmatpush1.bf16.msra.mxu0 %v3352
      %3371 = vmatprep.subr.bf16.mxu0 0
      %3372 = vmatpush1.bf16.msra.mxu0 %v3353
      %3373 = vmatprep.subr.bf16.mxu0 0
      %3374 = vmatpush1.bf16.msra.mxu0 %v3354
      %3375 = vmatprep.subr.bf16.mxu0 0
      %3376 = vmatpush1.bf16.msra.mxu0 %v3355
      %3377 = vmatprep.subr.bf16.mxu0 0
      %3378 = vmatpush1.bf16.msra.mxu0 %v3356
      %3379 = vmatprep.subr.bf16.mxu0 0
      %3380 = vmatpush1.bf16.msra.mxu0 %v3357
      %3381 = vmatprep.subr.bf16.mxu0 0
      %3382 = vmatpush1.bf16.msra.mxu0 %v3358
      %3383 = vmatprep.subr.bf16.mxu0 0
      %3384 = vmatpush1.bf16.msra.mxu0 0
      %3385 = vmatprep.subr.bf16.mxu0 0
      %3386 = vmatpush1.bf16.msra.mxu0 0
      %3387 = vmatprep.subr.bf16.mxu0 0
      %3388 = vmatpush1.bf16.msra.mxu0 0
      %3389 = vmatprep.subr.bf16.mxu0 0
      %3390 = vmatpush1.bf16.msra.mxu0 0
      %3391 = vmatprep.subr.bf16.mxu0 0
      %3392 = vmatpush1.bf16.msra.mxu0 0
      %3393 = vmatprep.subr.bf16.mxu0 0
      %3394 = vmatpush1.bf16.msra.mxu0 0
      %3395 = vmatprep.subr.bf16.mxu0 0
      %3396 = vmatpush1.bf16.msra.mxu0 0
      %3397 = vmatprep.subr.bf16.mxu0 0
      %3398 = vmatpush1.bf16.msra.mxu0 0
      %3399 = vmatprep.mubr.bf16.mxu0 0
      %3400 = vmatmul.mubr.bf16.gmra.mrb[0].mxu0 %v3287
      %v3401 = vpop.f32.mrb[0].mxu0
      %v3402 = vadd.f32 0.0, %v3401
      %v3403 = vpop.f32.mrb[0].mxu0
      %v3404 = vpop.f32.mrb[0].mxu0
      %v3405 = vadd.f32 0.0, %v3404
      %v3406 = vpop.f32.mrb[0].mxu0
      %3407 = vmatprep.mubr.bf16.mxu0 0
      %3408 = vmatmul.mubr.bf16.gmra.mrb[0].mxu0 %v3288
      %v3409 = vpop.f32.mrb[0].mxu0
      %v3410 = vadd.f32 0.0, %v3409
      %v3411 = vpop.f32.mrb[0].mxu0
      %v3412 = vpop.f32.mrb[0].mxu0
      %v3413 = vadd.f32 0.0, %v3412
      %v3414 = vpop.f32.mrb[0].mxu0
      %3415 = vmatprep.mubr.bf16.mxu0 0
      %3416 = vmatmul.mubr.bf16.gmra.mrb[0].mxu0 %v3289
      %v3417 = vpop.f32.mrb[0].mxu0
      %v3418 = vadd.f32 0.0, %v3417
      %v3419 = vpop.f32.mrb[0].mxu0
      %v3420 = vpop.f32.mrb[0].mxu0
      %v3421 = vadd.f32 0.0, %v3420
      %v3422 = vpop.f32.mrb[0].mxu0
      %3423 = vmatprep.mubr.bf16.mxu0 0
      %3424 = vmatmul.mubr.bf16.gmra.mrb[0].mxu0 %v3290
      %v3425 = vpop.f32.mrb[0].mxu0
      %v3426 = vadd.f32 0.0, %v3425
      %v3427 = vpop.f32.mrb[0].mxu0
      %v3428 = vpop.f32.mrb[0].mxu0
      %v3429 = vadd.f32 0.0, %v3428
      %v3430 = vpop.f32.mrb[0].mxu0
      %3431 = vmatprep.mubr.bf16.mxu0 0
      %3432 = vmatmul.mubr.bf16.gmra.mrb[0].mxu0 %v3291
      %v3433 = vpop.f32.mrb[0].mxu0
      %v3434 = vadd.f32 0.0, %v3433
      %v3435 = vpop.f32.mrb[0].mxu0
      %v3436 = vpop.f32.mrb[0].mxu0
      %v3437 = vadd.f32 0.0, %v3436
      %v3438 = vpop.f32.mrb[0].mxu0
      %3439 = vmatprep.mubr.bf16.mxu0 0
      %3440 = vmatmul.mubr.bf16.gmra.mrb[0].mxu0 %v3292
      %v3441 = vpop.f32.mrb[0].mxu0
      %v3442 = vadd.f32 0.0, %v3441
      %v3443 = vpop.f32.mrb[0].mxu0
      %v3444 = vpop.f32.mrb[0].mxu0
      %v3445 = vadd.f32 0.0, %v3444
      %v3446 = vpop.f32.mrb[0].mxu0
      %3447 = vmatprep.mubr.bf16.mxu0 0
      %3448 = vmatmul.mubr.bf16.gmra.mrb[0].mxu0 %v3293
      %v3449 = vpop.f32.mrb[0].mxu0
      %v3450 = vadd.f32 0.0, %v3449
      %v3451 = vpop.f32.mrb[0].mxu0
      %v3452 = vpop.f32.mrb[0].mxu0
      %v3453 = vadd.f32 0.0, %v3452
      %v3454 = vpop.f32.mrb[0].mxu0
      %3455 = vmatprep.mubr.bf16.mxu0 0
      %3456 = vmatmul.mubr.bf16.gmra.mrb[0].mxu0 %v3294
      %v3457 = vpop.f32.mrb[0].mxu0
      %v3458 = vadd.f32 0.0, %v3457
      %v3459 = vpop.f32.mrb[0].mxu0
      %v3460 = vpop.f32.mrb[0].mxu0
      %v3461 = vadd.f32 0.0, %v3460
      %v3462 = vpop.f32.mrb[0].mxu0
      %3463 = vmatprep.mubr.bf16.mxu0 0
      %3464 = vmatmul.mubr.bf16.gmra.mrb[0].mxu0 %v3295
      %v3465 = vpop.f32.mrb[0].mxu0
      %v3466 = vadd.f32 0.0, %v3465
      %v3467 = vpop.f32.mrb[0].mxu0
      %v3468 = vpop.f32.mrb[0].mxu0
      %v3469 = vadd.f32 0.0, %v3468
      %v3470 = vpop.f32.mrb[0].mxu0
      %3471 = vmatprep.mubr.bf16.mxu0 0
      %3472 = vmatmul.mubr.bf16.gmra.mrb[0].mxu0 %v3296
      %v3473 = vpop.f32.mrb[0].mxu0
      %v3474 = vadd.f32 0.0, %v3473
      %v3475 = vpop.f32.mrb[0].mxu0
      %v3476 = vpop.f32.mrb[0].mxu0
      %v3477 = vadd.f32 0.0, %v3476
      %v3478 = vpop.f32.mrb[0].mxu0
      %3479 = vmatprep.mubr.bf16.mxu0 0
      %3480 = vmatmul.mubr.bf16.gmra.mrb[0].mxu0 %v3297
      %v3481 = vpop.f32.mrb[0].mxu0
      %v3482 = vadd.f32 0.0, %v3481
      %v3483 = vpop.f32.mrb[0].mxu0
      %v3484 = vpop.f32.mrb[0].mxu0
      %v3485 = vadd.f32 0.0, %v3484
      %v3486 = vpop.f32.mrb[0].mxu0
      %3487 = vmatprep.mubr.bf16.mxu0 0
      %3488 = vmatmul.mubr.bf16.gmra.mrb[0].mxu0 %v3298
      %v3489 = vpop.f32.mrb[0].mxu0
      %v3490 = vadd.f32 0.0, %v3489
      %v3491 = vpop.f32.mrb[0].mxu0
      %v3492 = vpop.f32.mrb[0].mxu0
      %v3493 = vadd.f32 0.0, %v3492
      %v3494 = vpop.f32.mrb[0].mxu0
      %3495 = vmatprep.mubr.bf16.mxu0 0
      %3496 = vmatmul.mubr.bf16.gmra.mrb[0].mxu0 %v3299
      %v3497 = vpop.f32.mrb[0].mxu0
      %v3498 = vadd.f32 0.0, %v3497
      %v3499 = vpop.f32.mrb[0].mxu0
      %v3500 = vpop.f32.mrb[0].mxu0
      %v3501 = vadd.f32 0.0, %v3500
      %v3502 = vpop.f32.mrb[0].mxu0
      %3503 = vmatprep.mubr.bf16.mxu0 0
      %3504 = vmatmul.mubr.bf16.gmra.mrb[0].mxu0 %v3300
      %v3505 = vpop.f32.mrb[0].mxu0
      %v3506 = vadd.f32 0.0, %v3505
      %v3507 = vpop.f32.mrb[0].mxu0
      %v3508 = vpop.f32.mrb[0].mxu0
      %v3509 = vadd.f32 0.0, %v3508
      %v3510 = vpop.f32.mrb[0].mxu0
      %3511 = vmatprep.mubr.bf16.mxu0 0
      %3512 = vmatmul.mubr.bf16.gmra.mrb[0].mxu0 %v3301
      %v3513 = vpop.f32.mrb[0].mxu0
      %v3514 = vadd.f32 0.0, %v3513
      %v3515 = vpop.f32.mrb[0].mxu0
      %v3516 = vpop.f32.mrb[0].mxu0
      %v3517 = vadd.f32 0.0, %v3516
      %v3518 = vpop.f32.mrb[0].mxu0
      %3519 = vmatprep.mubr.bf16.mxu0 0
      %3520 = vmatmul.mubr.bf16.gmra.mrb[0].mxu0 %v3302
      %v3521 = vpop.f32.mrb[0].mxu0
      %v3522 = vadd.f32 0.0, %v3521
      %v3523 = vpop.f32.mrb[0].mxu0
      %v3524 = vpop.f32.mrb[0].mxu0
      %v3525 = vadd.f32 0.0, %v3524
      %v3526 = vpop.f32.mrb[0].mxu0
      %3527 = vdwg.mxu0
      %v3528 = vadd.f32 %v2774, %v3402
      %v3529 = vadd.f32 %v2775, %v3405
      %v3530 = vadd.f32 %v2776, %v3410
      %v3531 = vadd.f32 %v2777, %v3413
      %v3532 = vadd.f32 %v2778, %v3418
      %v3533 = vadd.f32 %v2779, %v3421
      %v3534 = vadd.f32 %v2780, %v3426
      %v3535 = vadd.f32 %v2781, %v3429
      %v3536 = vadd.f32 %v2782, %v3434
      %v3537 = vadd.f32 %v2783, %v3437
      %v3538 = vadd.f32 %v2784, %v3442
      %v3539 = vadd.f32 %v2785, %v3445
      %v3540 = vadd.f32 %v2786, %v3450
      %v3541 = vadd.f32 %v2787, %v3453
      %v3542 = vadd.f32 %v2788, %v3458
      %v3543 = vadd.f32 %v2789, %v3461
      %v3544 = vadd.f32 %v2790, %v3466
      %v3545 = vadd.f32 %v2791, %v3469
      %v3546 = vadd.f32 %v2792, %v3474
      %v3547 = vadd.f32 %v2793, %v3477
      %v3548 = vadd.f32 %v2794, %v3482
      %v3549 = vadd.f32 %v2795, %v3485
      %v3550 = vadd.f32 %v2796, %v3490
      %v3551 = vadd.f32 %v2797, %v3493
      %v3552 = vadd.f32 %v2798, %v3498
      %v3553 = vadd.f32 %v2799, %v3501
      %v3554 = vadd.f32 %v2800, %v3506
      %v3555 = vadd.f32 %v2801, %v3509
      %v3556 = vadd.f32 %v2802, %v3514
      %v3557 = vadd.f32 %v2803, %v3517
      %v3558 = vadd.f32 %v2804, %v3522
      %v3559 = vadd.f32 %v2805, %v3525
      %v3560 = vld [vmem:[%s271] sm:$0xe]
      %v3561 = vld [vmem:[%s271 + $0xc] sm:$0xe]
      %v3562 = vld [vmem:[%s271 + $0x18] sm:$0xe]
      %v3563 = vld [vmem:[%s271 + $0x24] sm:$0xe]
      %v3564 = vld [vmem:[%s271 + $0x30] sm:$0xe]
      %v3565 = vld [vmem:[%s271 + $0x3c] sm:$0xe]
      %v3566 = vld [vmem:[%s271 + $0x48] sm:$0xe]
      %v3567 = vld [vmem:[%s271 + $0x54] sm:$0xe]
      %v3568 = vld [vmem:[%s271 + $0x60] sm:$0xe]
      %v3569 = vld [vmem:[%s271 + $0x6c] sm:$0xe]
      %v3570 = vld [vmem:[%s271 + $0x78] sm:$0xe]
      %v3571 = vld [vmem:[%s271 + $0x84] sm:$0xe]
      %v3572 = vld [vmem:[%s271 + $0x90] sm:$0xe]
      %v3573 = vld [vmem:[%s271 + $0x9c] sm:$0xe]
      %v3574 = vld [vmem:[%s271 + $0xa8] sm:$0xe]
      %v3575 = vld [vmem:[%s271 + $0xb4] sm:$0xe]
      %v3624 = vrot.slane %v3560, 5
      %v3625 = vrot.slane %v3624, 4
      %v3626 = vrot.slane %v2807, 5
      %v3627 = vsel %vm1985, %v3625, %v3626
      %v3628 = vrot.slane %v3626, 4
      %v3629 = vrot.slane %v2808, 5
      %v3630 = vsel %vm1985, %v3628, %v3629
      %v3631 = vrot.slane %v3561, 5
      %v3632 = vrot.slane %v3631, 4
      %v3633 = vrot.slane %v2810, 5
      %v3634 = vsel %vm1985, %v3632, %v3633
      %v3635 = vrot.slane %v3633, 4
      %v3636 = vrot.slane %v2811, 5
      %v3637 = vsel %vm1985, %v3635, %v3636
      %v3638 = vrot.slane %v3562, 5
      %v3639 = vrot.slane %v3638, 4
      %v3640 = vrot.slane %v2813, 5
      %v3641 = vsel %vm1985, %v3639, %v3640
      %v3642 = vrot.slane %v3640, 4
      %v3643 = vrot.slane %v2814, 5
      %v3644 = vsel %vm1985, %v3642, %v3643
      %v3645 = vrot.slane %v3563, 5
      %v3646 = vrot.slane %v3645, 4
      %v3647 = vrot.slane %v2816, 5
      %v3648 = vsel %vm1985, %v3646, %v3647
      %v3649 = vrot.slane %v3647, 4
      %v3650 = vrot.slane %v2817, 5
      %v3651 = vsel %vm1985, %v3649, %v3650
      %v3652 = vrot.slane %v3564, 5
      %v3653 = vrot.slane %v3652, 4
      %v3654 = vrot.slane %v2819, 5
      %v3655 = vsel %vm1985, %v3653, %v3654
      %v3656 = vrot.slane %v3654, 4
      %v3657 = vrot.slane %v2820, 5
      %v3658 = vsel %vm1985, %v3656, %v3657
      %v3659 = vrot.slane %v3565, 5
      %v3660 = vrot.slane %v3659, 4
      %v3661 = vrot.slane %v2822, 5
      %v3662 = vsel %vm1985, %v3660, %v3661
      %v3663 = vrot.slane %v3661, 4
      %v3664 = vrot.slane %v2823, 5
      %v3665 = vsel %vm1985, %v3663, %v3664
      %v3666 = vrot.slane %v3566, 5
      %v3667 = vrot.slane %v3666, 4
      %v3668 = vrot.slane %v2825, 5
      %v3669 = vsel %vm1985, %v3667, %v3668
      %v3670 = vrot.slane %v3668, 4
      %v3671 = vrot.slane %v2826, 5
      %v3672 = vsel %vm1985, %v3670, %v3671
      %v3673 = vrot.slane %v3567, 5
      %v3674 = vrot.slane %v3673, 4
      %v3675 = vrot.slane %v2828, 5
      %v3676 = vsel %vm1985, %v3674, %v3675
      %v3677 = vrot.slane %v3675, 4
      %v3678 = vrot.slane %v2829, 5
      %v3679 = vsel %vm1985, %v3677, %v3678
      %v3680 = vrot.slane %v3568, 5
      %v3681 = vrot.slane %v3680, 4
      %v3682 = vrot.slane %v2831, 5
      %v3683 = vsel %vm1985, %v3681, %v3682
      %v3684 = vrot.slane %v3682, 4
      %v3685 = vrot.slane %v2832, 5
      %v3686 = vsel %vm1985, %v3684, %v3685
      %v3687 = vrot.slane %v3569, 5
      %v3688 = vrot.slane %v3687, 4
      %v3689 = vrot.slane %v2834, 5
      %v3690 = vsel %vm1985, %v3688, %v3689
      %v3691 = vrot.slane %v3689, 4
      %v3692 = vrot.slane %v2835, 5
      %v3693 = vsel %vm1985, %v3691, %v3692
      %v3694 = vrot.slane %v3570, 5
      %v3695 = vrot.slane %v3694, 4
      %v3696 = vrot.slane %v2837, 5
      %v3697 = vsel %vm1985, %v3695, %v3696
      %v3698 = vrot.slane %v3696, 4
      %v3699 = vrot.slane %v2838, 5
      %v3700 = vsel %vm1985, %v3698, %v3699
      %v3701 = vrot.slane %v3571, 5
      %v3702 = vrot.slane %v3701, 4
      %v3703 = vrot.slane %v2840, 5
      %v3704 = vsel %vm1985, %v3702, %v3703
      %v3705 = vrot.slane %v3703, 4
      %v3706 = vrot.slane %v2841, 5
      %v3707 = vsel %vm1985, %v3705, %v3706
      %v3708 = vrot.slane %v3572, 5
      %v3709 = vrot.slane %v3708, 4
      %v3710 = vrot.slane %v2843, 5
      %v3711 = vsel %vm1985, %v3709, %v3710
      %v3712 = vrot.slane %v3710, 4
      %v3713 = vrot.slane %v2844, 5
      %v3714 = vsel %vm1985, %v3712, %v3713
      %v3715 = vrot.slane %v3573, 5
      %v3716 = vrot.slane %v3715, 4
      %v3717 = vrot.slane %v2846, 5
      %v3718 = vsel %vm1985, %v3716, %v3717
      %v3719 = vrot.slane %v3717, 4
      %v3720 = vrot.slane %v2847, 5
      %v3721 = vsel %vm1985, %v3719, %v3720
      %v3722 = vrot.slane %v3574, 5
      %v3723 = vrot.slane %v3722, 4
      %v3724 = vrot.slane %v2849, 5
      %v3725 = vsel %vm1985, %v3723, %v3724
      %v3726 = vrot.slane %v3724, 4
      %v3727 = vrot.slane %v2850, 5
      %v3728 = vsel %vm1985, %v3726, %v3727
      %v3729 = vrot.slane %v3575, 5
      %v3730 = vrot.slane %v3729, 4
      %v3731 = vrot.slane %v2852, 5
      %v3732 = vsel %vm1985, %v3730, %v3731
      %v3733 = vrot.slane %v3731, 4
      %v3734 = vrot.slane %v2853, 5
      %v3735 = vsel %vm1985, %v3733, %v3734
      %s3736 = scalar_lea.vmem %s1, 320
      %v3737 = vld [vmem:[%s3736] sm:$0xf]
      %v3738 = vld [vmem:[%s3736 + $0x4] sm:$0xf]
      %v3739 = vld [vmem:[%s3736 + $0x8] sm:$0xf]
      %v3740 = vld [vmem:[%s3736 + $0xc] sm:$0xf]
      %v3741 = vld [vmem:[%s3736 + $0x10] sm:$0xf]
      %v3742 = vld [vmem:[%s3736 + $0x14] sm:$0xf]
      %v3743 = vld [vmem:[%s3736 + $0x18] sm:$0xf]
      %v3744 = vld [vmem:[%s3736 + $0x1c] sm:$0xf]
      %v3745 = vld [vmem:[%s3736 + $0x20] sm:$0xf]
      %v3746 = vld [vmem:[%s3736 + $0x24] sm:$0xf]
      %v3747 = vld [vmem:[%s3736 + $0x28] sm:$0xf]
      %v3748 = vld [vmem:[%s3736 + $0x2c] sm:$0xf]
      %v3749 = vld [vmem:[%s3736 + $0x30] sm:$0xf]
      %v3750 = vld [vmem:[%s3736 + $0x34] sm:$0xf]
      %v3751 = vld [vmem:[%s3736 + $0x38] sm:$0xf]
      %v3752 = vld [vmem:[%s3736 + $0x3c] sm:$0xf]
      %v3753 = vunpack.c.l.b16 %v3627
      %v3754 = vunpack.c.l.b16 %v3630
      %v3755 = vunpack.c.l.b16 %v3634
      %v3756 = vunpack.c.l.b16 %v3637
      %v3757 = vunpack.c.l.b16 %v3641
      %v3758 = vunpack.c.l.b16 %v3644
      %v3759 = vunpack.c.l.b16 %v3648
      %v3760 = vunpack.c.l.b16 %v3651
      %v3761 = vunpack.c.l.b16 %v3655
      %v3762 = vunpack.c.l.b16 %v3658
      %v3763 = vunpack.c.l.b16 %v3662
      %v3764 = vunpack.c.l.b16 %v3665
      %v3765 = vunpack.c.l.b16 %v3669
      %v3766 = vunpack.c.l.b16 %v3672
      %v3767 = vunpack.c.l.b16 %v3676
      %v3768 = vunpack.c.l.b16 %v3679
      %v3769 = vunpack.c.l.b16 %v3683
      %v3770 = vunpack.c.l.b16 %v3686
      %v3771 = vunpack.c.l.b16 %v3690
      %v3772 = vunpack.c.l.b16 %v3693
      %v3773 = vunpack.c.l.b16 %v3697
      %v3774 = vunpack.c.l.b16 %v3700
      %v3775 = vunpack.c.l.b16 %v3704
      %v3776 = vunpack.c.l.b16 %v3707
      %v3777 = vunpack.c.l.b16 %v3711
      %v3778 = vunpack.c.l.b16 %v3714
      %v3779 = vunpack.c.l.b16 %v3718
      %v3780 = vunpack.c.l.b16 %v3721
      %v3781 = vunpack.c.l.b16 %v3725
      %v3782 = vunpack.c.l.b16 %v3728
      %v3783 = vunpack.c.l.b16 %v3732
      %v3784 = vunpack.c.l.b16 %v3735
      %v3785 = vpack.c.b16 %v3754, %v3753
      %v3786 = vpack.c.b16 %v3756, %v3755
      %v3787 = vpack.c.b16 %v3758, %v3757
      %v3788 = vpack.c.b16 %v3760, %v3759
      %v3789 = vpack.c.b16 %v3762, %v3761
      %v3790 = vpack.c.b16 %v3764, %v3763
      %v3791 = vpack.c.b16 %v3766, %v3765
      %v3792 = vpack.c.b16 %v3768, %v3767
      %v3793 = vpack.c.b16 %v3770, %v3769
      %v3794 = vpack.c.b16 %v3772, %v3771
      %v3795 = vpack.c.b16 %v3774, %v3773
      %v3796 = vpack.c.b16 %v3776, %v3775
      %v3797 = vpack.c.b16 %v3778, %v3777
      %v3798 = vpack.c.b16 %v3780, %v3779
      %v3799 = vpack.c.b16 %v3782, %v3781
      %v3800 = vpack.c.b16 %v3784, %v3783
      %v3833 = vunpack.c.l.b16 %v3737
      %v3834 = vunpack.c.l.b16 %v3738
      %v3835 = vunpack.c.l.b16 %v3739
      %v3836 = vunpack.c.l.b16 %v3740
      %v3837 = vunpack.c.l.b16 %v3741
      %v3838 = vunpack.c.l.b16 %v3742
      %v3839 = vunpack.c.l.b16 %v3743
      %v3840 = vunpack.c.l.b16 %v3744
      %v3841 = vunpack.c.l.b16 %v3745
      %v3842 = vunpack.c.l.b16 %v3746
      %v3843 = vunpack.c.l.b16 %v3747
      %v3844 = vunpack.c.l.b16 %v3748
      %v3845 = vunpack.c.l.b16 %v3749
      %v3846 = vunpack.c.l.b16 %v3750
      %v3847 = vunpack.c.l.b16 %v3751
      %v3848 = vunpack.c.l.b16 %v3752
      %v3849 = vpack.c.b16 %v3834, %v3833
      %v3850 = vpack.c.b16 %v3836, %v3835
      %v3851 = vpack.c.b16 %v3838, %v3837
      %v3852 = vpack.c.b16 %v3840, %v3839
      %v3853 = vpack.c.b16 %v3842, %v3841
      %v3854 = vpack.c.b16 %v3844, %v3843
      %v3855 = vpack.c.b16 %v3846, %v3845
      %v3856 = vpack.c.b16 %v3848, %v3847
      %3865 = vmatprep.subr.bf16.mxu0 0
      %3866 = vmatpush1.bf16.msra.mxu0 %v3849
      %3867 = vmatprep.subr.bf16.mxu0 0
      %3868 = vmatpush1.bf16.msra.mxu0 %v3850
      %3869 = vmatprep.subr.bf16.mxu0 0
      %3870 = vmatpush1.bf16.msra.mxu0 %v3851
      %3871 = vmatprep.subr.bf16.mxu0 0
      %3872 = vmatpush1.bf16.msra.mxu0 %v3852
      %3873 = vmatprep.subr.bf16.mxu0 0
      %3874 = vmatpush1.bf16.msra.mxu0 %v3853
      %3875 = vmatprep.subr.bf16.mxu0 0
      %3876 = vmatpush1.bf16.msra.mxu0 %v3854
      %3877 = vmatprep.subr.bf16.mxu0 0
      %3878 = vmatpush1.bf16.msra.mxu0 %v3855
      %3879 = vmatprep.subr.bf16.mxu0 0
      %3880 = vmatpush1.bf16.msra.mxu0 %v3856
      %3881 = vmatprep.subr.bf16.mxu0 0
      %3882 = vmatpush1.bf16.msra.mxu0 0
      %3883 = vmatprep.subr.bf16.mxu0 0
      %3884 = vmatpush1.bf16.msra.mxu0 0
      %3885 = vmatprep.subr.bf16.mxu0 0
      %3886 = vmatpush1.bf16.msra.mxu0 0
      %3887 = vmatprep.subr.bf16.mxu0 0
      %3888 = vmatpush1.bf16.msra.mxu0 0
      %3889 = vmatprep.subr.bf16.mxu0 0
      %3890 = vmatpush1.bf16.msra.mxu0 0
      %3891 = vmatprep.subr.bf16.mxu0 0
      %3892 = vmatpush1.bf16.msra.mxu0 0
      %3893 = vmatprep.subr.bf16.mxu0 0
      %3894 = vmatpush1.bf16.msra.mxu0 0
      %3895 = vmatprep.subr.bf16.mxu0 0
      %3896 = vmatpush1.bf16.msra.mxu0 0
      %3897 = vmatprep.mubr.bf16.mxu0 0
      %3898 = vmatmul.mubr.bf16.gmra.mrb[0].mxu0 %v3785
      %v3899 = vpop.f32.mrb[0].mxu0
      %v3900 = vadd.f32 0.0, %v3899
      %v3901 = vpop.f32.mrb[0].mxu0
      %v3902 = vpop.f32.mrb[0].mxu0
      %v3903 = vadd.f32 0.0, %v3902
      %v3904 = vpop.f32.mrb[0].mxu0
      %3905 = vmatprep.mubr.bf16.mxu0 0
      %3906 = vmatmul.mubr.bf16.gmra.mrb[0].mxu0 %v3786
      %v3907 = vpop.f32.mrb[0].mxu0
      %v3908 = vadd.f32 0.0, %v3907
      %v3909 = vpop.f32.mrb[0].mxu0
      %v3910 = vpop.f32.mrb[0].mxu0
      %v3911 = vadd.f32 0.0, %v3910
      %v3912 = vpop.f32.mrb[0].mxu0
      %3913 = vmatprep.mubr.bf16.mxu0 0
      %3914 = vmatmul.mubr.bf16.gmra.mrb[0].mxu0 %v3787
      %v3915 = vpop.f32.mrb[0].mxu0
      %v3916 = vadd.f32 0.0, %v3915
      %v3917 = vpop.f32.mrb[0].mxu0
      %v3918 = vpop.f32.mrb[0].mxu0
      %v3919 = vadd.f32 0.0, %v3918
      %v3920 = vpop.f32.mrb[0].mxu0
      %3921 = vmatprep.mubr.bf16.mxu0 0
      %3922 = vmatmul.mubr.bf16.gmra.mrb[0].mxu0 %v3788
      %v3923 = vpop.f32.mrb[0].mxu0
      %v3924 = vadd.f32 0.0, %v3923
      %v3925 = vpop.f32.mrb[0].mxu0
      %v3926 = vpop.f32.mrb[0].mxu0
      %v3927 = vadd.f32 0.0, %v3926
      %v3928 = vpop.f32.mrb[0].mxu0
      %3929 = vmatprep.mubr.bf16.mxu0 0
      %3930 = vmatmul.mubr.bf16.gmra.mrb[0].mxu0 %v3789
      %v3931 = vpop.f32.mrb[0].mxu0
      %v3932 = vadd.f32 0.0, %v3931
      %v3933 = vpop.f32.mrb[0].mxu0
      %v3934 = vpop.f32.mrb[0].mxu0
      %v3935 = vadd.f32 0.0, %v3934
      %v3936 = vpop.f32.mrb[0].mxu0
      %3937 = vmatprep.mubr.bf16.mxu0 0
      %3938 = vmatmul.mubr.bf16.gmra.mrb[0].mxu0 %v3790
      %v3939 = vpop.f32.mrb[0].mxu0
      %v3940 = vadd.f32 0.0, %v3939
      %v3941 = vpop.f32.mrb[0].mxu0
      %v3942 = vpop.f32.mrb[0].mxu0
      %v3943 = vadd.f32 0.0, %v3942
      %v3944 = vpop.f32.mrb[0].mxu0
      %3945 = vmatprep.mubr.bf16.mxu0 0
      %3946 = vmatmul.mubr.bf16.gmra.mrb[0].mxu0 %v3791
      %v3947 = vpop.f32.mrb[0].mxu0
      %v3948 = vadd.f32 0.0, %v3947
      %v3949 = vpop.f32.mrb[0].mxu0
      %v3950 = vpop.f32.mrb[0].mxu0
      %v3951 = vadd.f32 0.0, %v3950
      %v3952 = vpop.f32.mrb[0].mxu0
      %3953 = vmatprep.mubr.bf16.mxu0 0
      %3954 = vmatmul.mubr.bf16.gmra.mrb[0].mxu0 %v3792
      %v3955 = vpop.f32.mrb[0].mxu0
      %v3956 = vadd.f32 0.0, %v3955
      %v3957 = vpop.f32.mrb[0].mxu0
      %v3958 = vpop.f32.mrb[0].mxu0
      %v3959 = vadd.f32 0.0, %v3958
      %v3960 = vpop.f32.mrb[0].mxu0
      %3961 = vmatprep.mubr.bf16.mxu0 0
      %3962 = vmatmul.mubr.bf16.gmra.mrb[0].mxu0 %v3793
      %v3963 = vpop.f32.mrb[0].mxu0
      %v3964 = vadd.f32 0.0, %v3963
      %v3965 = vpop.f32.mrb[0].mxu0
      %v3966 = vpop.f32.mrb[0].mxu0
      %v3967 = vadd.f32 0.0, %v3966
      %v3968 = vpop.f32.mrb[0].mxu0
      %3969 = vmatprep.mubr.bf16.mxu0 0
      %3970 = vmatmul.mubr.bf16.gmra.mrb[0].mxu0 %v3794
      %v3971 = vpop.f32.mrb[0].mxu0
      %v3972 = vadd.f32 0.0, %v3971
      %v3973 = vpop.f32.mrb[0].mxu0
      %v3974 = vpop.f32.mrb[0].mxu0
      %v3975 = vadd.f32 0.0, %v3974
      %v3976 = vpop.f32.mrb[0].mxu0
      %3977 = vmatprep.mubr.bf16.mxu0 0
      %3978 = vmatmul.mubr.bf16.gmra.mrb[0].mxu0 %v3795
      %v3979 = vpop.f32.mrb[0].mxu0
      %v3980 = vadd.f32 0.0, %v3979
      %v3981 = vpop.f32.mrb[0].mxu0
      %v3982 = vpop.f32.mrb[0].mxu0
      %v3983 = vadd.f32 0.0, %v3982
      %v3984 = vpop.f32.mrb[0].mxu0
      %3985 = vmatprep.mubr.bf16.mxu0 0
      %3986 = vmatmul.mubr.bf16.gmra.mrb[0].mxu0 %v3796
      %v3987 = vpop.f32.mrb[0].mxu0
      %v3988 = vadd.f32 0.0, %v3987
      %v3989 = vpop.f32.mrb[0].mxu0
      %v3990 = vpop.f32.mrb[0].mxu0
      %v3991 = vadd.f32 0.0, %v3990
      %v3992 = vpop.f32.mrb[0].mxu0
      %3993 = vmatprep.mubr.bf16.mxu0 0
      %3994 = vmatmul.mubr.bf16.gmra.mrb[0].mxu0 %v3797
      %v3995 = vpop.f32.mrb[0].mxu0
      %v3996 = vadd.f32 0.0, %v3995
      %v3997 = vpop.f32.mrb[0].mxu0
      %v3998 = vpop.f32.mrb[0].mxu0
      %v3999 = vadd.f32 0.0, %v3998
      %v4000 = vpop.f32.mrb[0].mxu0
      %4001 = vmatprep.mubr.bf16.mxu0 0
      %4002 = vmatmul.mubr.bf16.gmra.mrb[0].mxu0 %v3798
      %v4003 = vpop.f32.mrb[0].mxu0
      %v4004 = vadd.f32 0.0, %v4003
      %v4005 = vpop.f32.mrb[0].mxu0
      %v4006 = vpop.f32.mrb[0].mxu0
      %v4007 = vadd.f32 0.0, %v4006
      %v4008 = vpop.f32.mrb[0].mxu0
      %4009 = vmatprep.mubr.bf16.mxu0 0
      %4010 = vmatmul.mubr.bf16.gmra.mrb[0].mxu0 %v3799
      %v4011 = vpop.f32.mrb[0].mxu0
      %v4012 = vadd.f32 0.0, %v4011
      %v4013 = vpop.f32.mrb[0].mxu0
      %v4014 = vpop.f32.mrb[0].mxu0
      %v4015 = vadd.f32 0.0, %v4014
      %v4016 = vpop.f32.mrb[0].mxu0
      %4017 = vmatprep.mubr.bf16.mxu0 0
      %4018 = vmatmul.mubr.bf16.gmra.mrb[0].mxu0 %v3800
      %v4019 = vpop.f32.mrb[0].mxu0
      %v4020 = vadd.f32 0.0, %v4019
      %v4021 = vpop.f32.mrb[0].mxu0
      %v4022 = vpop.f32.mrb[0].mxu0
      %v4023 = vadd.f32 0.0, %v4022
      %v4024 = vpop.f32.mrb[0].mxu0
      %4025 = vdwg.mxu0
      %v4026 = vadd.f32 %v3528, %v3900
      %v4027 = vadd.f32 %v3529, %v3903
      %v4028 = vadd.f32 %v3530, %v3908
      %v4029 = vadd.f32 %v3531, %v3911
      %v4030 = vadd.f32 %v3532, %v3916
      %v4031 = vadd.f32 %v3533, %v3919
      %v4032 = vadd.f32 %v3534, %v3924
      %v4033 = vadd.f32 %v3535, %v3927
      %v4034 = vadd.f32 %v3536, %v3932
      %v4035 = vadd.f32 %v3537, %v3935
      %v4036 = vadd.f32 %v3538, %v3940
      %v4037 = vadd.f32 %v3539, %v3943
      %v4038 = vadd.f32 %v3540, %v3948
      %v4039 = vadd.f32 %v3541, %v3951
      %v4040 = vadd.f32 %v3542, %v3956
      %v4041 = vadd.f32 %v3543, %v3959
      %v4042 = vadd.f32 %v3544, %v3964
      %v4043 = vadd.f32 %v3545, %v3967
      %v4044 = vadd.f32 %v3546, %v3972
      %v4045 = vadd.f32 %v3547, %v3975
      %v4046 = vadd.f32 %v3548, %v3980
      %v4047 = vadd.f32 %v3549, %v3983
      %v4048 = vadd.f32 %v3550, %v3988
      %v4049 = vadd.f32 %v3551, %v3991
      %v4050 = vadd.f32 %v3552, %v3996
      %v4051 = vadd.f32 %v3553, %v3999
      %v4052 = vadd.f32 %v3554, %v4004
      %v4053 = vadd.f32 %v3555, %v4007
      %v4054 = vadd.f32 %v3556, %v4012
      %v4055 = vadd.f32 %v3557, %v4015
      %v4056 = vadd.f32 %v3558, %v4020
      %v4057 = vadd.f32 %v3559, %v4023
      %s4058 = scalar_lea.vmem [#allocation2], 24
      %v4059 = vld [vmem:[%s4058] sm:$0xf]
      %v4060 = vld [vmem:[%s4058 + $0x4] sm:$0xf]
      %v4061 = vld [vmem:[%s4058 + $0xc] sm:$0xf]
      %v4062 = vld [vmem:[%s4058 + $0x10] sm:$0xf]
      %v4063 = vld [vmem:[%s4058 + $0x18] sm:$0xf]
      %v4064 = vld [vmem:[%s4058 + $0x1c] sm:$0xf]
      %v4065 = vld [vmem:[%s4058 + $0x24] sm:$0xf]
      %v4066 = vld [vmem:[%s4058 + $0x28] sm:$0xf]
      %v4067 = vld [vmem:[%s4058 + $0x30] sm:$0xf]
      %v4068 = vld [vmem:[%s4058 + $0x34] sm:$0xf]
      %v4069 = vld [vmem:[%s4058 + $0x3c] sm:$0xf]
      %v4070 = vld [vmem:[%s4058 + $0x40] sm:$0xf]
      %v4071 = vld [vmem:[%s4058 + $0x48] sm:$0xf]
      %v4072 = vld [vmem:[%s4058 + $0x4c] sm:$0xf]
      %v4073 = vld [vmem:[%s4058 + $0x54] sm:$0xf]
      %v4074 = vld [vmem:[%s4058 + $0x58] sm:$0xf]
      %v4075 = vld [vmem:[%s4058 + $0x60] sm:$0xf]
      %v4076 = vld [vmem:[%s4058 + $0x64] sm:$0xf]
      %v4077 = vld [vmem:[%s4058 + $0x6c] sm:$0xf]
      %v4078 = vld [vmem:[%s4058 + $0x70] sm:$0xf]
      %v4079 = vld [vmem:[%s4058 + $0x78] sm:$0xf]
      %v4080 = vld [vmem:[%s4058 + $0x7c] sm:$0xf]
      %v4081 = vld [vmem:[%s4058 + $0x84] sm:$0xf]
      %v4082 = vld [vmem:[%s4058 + $0x88] sm:$0xf]
      %v4083 = vld [vmem:[%s4058 + $0x90] sm:$0xf]
      %v4084 = vld [vmem:[%s4058 + $0x94] sm:$0xf]
      %v4085 = vld [vmem:[%s4058 + $0x9c] sm:$0xf]
      %v4086 = vld [vmem:[%s4058 + $0xa0] sm:$0xf]
      %v4087 = vld [vmem:[%s4058 + $0xa8] sm:$0xf]
      %v4088 = vld [vmem:[%s4058 + $0xac] sm:$0xf]
      %v4089 = vld [vmem:[%s4058 + $0xb4] sm:$0xf]
      %v4090 = vld [vmem:[%s4058 + $0xb8] sm:$0xf]
      %s4091 = scalar_lea.vmem %s1, 384
      %v4092 = vld [vmem:[%s4091] sm:$0xf]
      %v4093 = vld [vmem:[%s4091 + $0x4] sm:$0xf]
      %v4094 = vld [vmem:[%s4091 + $0x8] sm:$0xf]
      %v4095 = vld [vmem:[%s4091 + $0xc] sm:$0xf]
      %v4096 = vld [vmem:[%s4091 + $0x10] sm:$0xf]
      %v4097 = vld [vmem:[%s4091 + $0x14] sm:$0xf]
      %v4098 = vld [vmem:[%s4091 + $0x18] sm:$0xf]
      %v4099 = vld [vmem:[%s4091 + $0x1c] sm:$0xf]
      %v4100 = vld [vmem:[%s4091 + $0x20] sm:$0xf]
      %v4101 = vld [vmem:[%s4091 + $0x24] sm:$0xf]
      %v4102 = vld [vmem:[%s4091 + $0x28] sm:$0xf]
      %v4103 = vld [vmem:[%s4091 + $0x2c] sm:$0xf]
      %v4104 = vld [vmem:[%s4091 + $0x30] sm:$0xf]
      %v4105 = vld [vmem:[%s4091 + $0x34] sm:$0xf]
      %v4106 = vld [vmem:[%s4091 + $0x38] sm:$0xf]
      %v4107 = vld [vmem:[%s4091 + $0x3c] sm:$0xf]
      %v4140 = vunpack.c.l.b16 %v4059
      %v4141 = vunpack.c.l.b16 %v4060
      %v4142 = vunpack.c.l.b16 %v4061
      %v4143 = vunpack.c.l.b16 %v4062
      %v4144 = vunpack.c.l.b16 %v4063
      %v4145 = vunpack.c.l.b16 %v4064
      %v4146 = vunpack.c.l.b16 %v4065
      %v4147 = vunpack.c.l.b16 %v4066
      %v4148 = vunpack.c.l.b16 %v4067
      %v4149 = vunpack.c.l.b16 %v4068
      %v4150 = vunpack.c.l.b16 %v4069
      %v4151 = vunpack.c.l.b16 %v4070
      %v4152 = vunpack.c.l.b16 %v4071
      %v4153 = vunpack.c.l.b16 %v4072
      %v4154 = vunpack.c.l.b16 %v4073
      %v4155 = vunpack.c.l.b16 %v4074
      %v4156 = vunpack.c.l.b16 %v4075
      %v4157 = vunpack.c.l.b16 %v4076
      %v4158 = vunpack.c.l.b16 %v4077
      %v4159 = vunpack.c.l.b16 %v4078
      %v4160 = vunpack.c.l.b16 %v4079
      %v4161 = vunpack.c.l.b16 %v4080
      %v4162 = vunpack.c.l.b16 %v4081
      %v4163 = vunpack.c.l.b16 %v4082
      %v4164 = vunpack.c.l.b16 %v4083
      %v4165 = vunpack.c.l.b16 %v4084
      %v4166 = vunpack.c.l.b16 %v4085
      %v4167 = vunpack.c.l.b16 %v4086
      %v4168 = vunpack.c.l.b16 %v4087
      %v4169 = vunpack.c.l.b16 %v4088
      %v4170 = vunpack.c.l.b16 %v4089
      %v4171 = vunpack.c.l.b16 %v4090
      %v4172 = vpack.c.b16 %v4141, %v4140
      %v4173 = vpack.c.b16 %v4143, %v4142
      %v4174 = vpack.c.b16 %v4145, %v4144
      %v4175 = vpack.c.b16 %v4147, %v4146
      %v4176 = vpack.c.b16 %v4149, %v4148
      %v4177 = vpack.c.b16 %v4151, %v4150
      %v4178 = vpack.c.b16 %v4153, %v4152
      %v4179 = vpack.c.b16 %v4155, %v4154
      %v4180 = vpack.c.b16 %v4157, %v4156
      %v4181 = vpack.c.b16 %v4159, %v4158
      %v4182 = vpack.c.b16 %v4161, %v4160
      %v4183 = vpack.c.b16 %v4163, %v4162
      %v4184 = vpack.c.b16 %v4165, %v4164
      %v4185 = vpack.c.b16 %v4167, %v4166
      %v4186 = vpack.c.b16 %v4169, %v4168
      %v4187 = vpack.c.b16 %v4171, %v4170
      %v4220 = vunpack.c.l.b16 %v4092
      %v4221 = vunpack.c.l.b16 %v4093
      %v4222 = vunpack.c.l.b16 %v4094
      %v4223 = vunpack.c.l.b16 %v4095
      %v4224 = vunpack.c.l.b16 %v4096
      %v4225 = vunpack.c.l.b16 %v4097
      %v4226 = vunpack.c.l.b16 %v4098
      %v4227 = vunpack.c.l.b16 %v4099
      %v4228 = vunpack.c.l.b16 %v4100
      %v4229 = vunpack.c.l.b16 %v4101
      %v4230 = vunpack.c.l.b16 %v4102
      %v4231 = vunpack.c.l.b16 %v4103
      %v4232 = vunpack.c.l.b16 %v4104
      %v4233 = vunpack.c.l.b16 %v4105
      %v4234 = vunpack.c.l.b16 %v4106
      %v4235 = vunpack.c.l.b16 %v4107
      %v4236 = vpack.c.b16 %v4221, %v4220
      %v4237 = vpack.c.b16 %v4223, %v4222
      %v4238 = vpack.c.b16 %v4225, %v4224
      %v4239 = vpack.c.b16 %v4227, %v4226
      %v4240 = vpack.c.b16 %v4229, %v4228
      %v4241 = vpack.c.b16 %v4231, %v4230
      %v4242 = vpack.c.b16 %v4233, %v4232
      %v4243 = vpack.c.b16 %v4235, %v4234
      %4252 = vmatprep.subr.bf16.mxu0 0
      %4253 = vmatpush1.bf16.msra.mxu0 %v4236
      %4254 = vmatprep.subr.bf16.mxu0 0
      %4255 = vmatpush1.bf16.msra.mxu0 %v4237
      %4256 = vmatprep.subr.bf16.mxu0 0
      %4257 = vmatpush1.bf16.msra.mxu0 %v4238
      %4258 = vmatprep.subr.bf16.mxu0 0
      %4259 = vmatpush1.bf16.msra.mxu0 %v4239
      %4260 = vmatprep.subr.bf16.mxu0 0
      %4261 = vmatpush1.bf16.msra.mxu0 %v4240
      %4262 = vmatprep.subr.bf16.mxu0 0
      %4263 = vmatpush1.bf16.msra.mxu0 %v4241
      %4264 = vmatprep.subr.bf16.mxu0 0
      %4265 = vmatpush1.bf16.msra.mxu0 %v4242
      %4266 = vmatprep.subr.bf16.mxu0 0
      %4267 = vmatpush1.bf16.msra.mxu0 %v4243
      %4268 = vmatprep.subr.bf16.mxu0 0
      %4269 = vmatpush1.bf16.msra.mxu0 0
      %4270 = vmatprep.subr.bf16.mxu0 0
      %4271 = vmatpush1.bf16.msra.mxu0 0
      %4272 = vmatprep.subr.bf16.mxu0 0
      %4273 = vmatpush1.bf16.msra.mxu0 0
      %4274 = vmatprep.subr.bf16.mxu0 0
      %4275 = vmatpush1.bf16.msra.mxu0 0
      %4276 = vmatprep.subr.bf16.mxu0 0
      %4277 = vmatpush1.bf16.msra.mxu0 0
      %4278 = vmatprep.subr.bf16.mxu0 0
      %4279 = vmatpush1.bf16.msra.mxu0 0
      %4280 = vmatprep.subr.bf16.mxu0 0
      %4281 = vmatpush1.bf16.msra.mxu0 0
      %4282 = vmatprep.subr.bf16.mxu0 0
      %4283 = vmatpush1.bf16.msra.mxu0 0
      %4284 = vmatprep.mubr.bf16.mxu0 0
      %4285 = vmatmul.mubr.bf16.gmra.mrb[0].mxu0 %v4172
      %v4286 = vpop.f32.mrb[0].mxu0
      %v4287 = vadd.f32 0.0, %v4286
      %v4288 = vpop.f32.mrb[0].mxu0
      %v4289 = vpop.f32.mrb[0].mxu0
      %v4290 = vadd.f32 0.0, %v4289
      %v4291 = vpop.f32.mrb[0].mxu0
      %4292 = vmatprep.mubr.bf16.mxu0 0
      %4293 = vmatmul.mubr.bf16.gmra.mrb[0].mxu0 %v4173
      %v4294 = vpop.f32.mrb[0].mxu0
      %v4295 = vadd.f32 0.0, %v4294
      %v4296 = vpop.f32.mrb[0].mxu0
      %v4297 = vpop.f32.mrb[0].mxu0
      %v4298 = vadd.f32 0.0, %v4297
      %v4299 = vpop.f32.mrb[0].mxu0
      %4300 = vmatprep.mubr.bf16.mxu0 0
      %4301 = vmatmul.mubr.bf16.gmra.mrb[0].mxu0 %v4174
      %v4302 = vpop.f32.mrb[0].mxu0
      %v4303 = vadd.f32 0.0, %v4302
      %v4304 = vpop.f32.mrb[0].mxu0
      %v4305 = vpop.f32.mrb[0].mxu0
      %v4306 = vadd.f32 0.0, %v4305
      %v4307 = vpop.f32.mrb[0].mxu0
      %4308 = vmatprep.mubr.bf16.mxu0 0
      %4309 = vmatmul.mubr.bf16.gmra.mrb[0].mxu0 %v4175
      %v4310 = vpop.f32.mrb[0].mxu0
      %v4311 = vadd.f32 0.0, %v4310
      %v4312 = vpop.f32.mrb[0].mxu0
      %v4313 = vpop.f32.mrb[0].mxu0
      %v4314 = vadd.f32 0.0, %v4313
      %v4315 = vpop.f32.mrb[0].mxu0
      %4316 = vmatprep.mubr.bf16.mxu0 0
      %4317 = vmatmul.mubr.bf16.gmra.mrb[0].mxu0 %v4176
      %v4318 = vpop.f32.mrb[0].mxu0
      %v4319 = vadd.f32 0.0, %v4318
      %v4320 = vpop.f32.mrb[0].mxu0
      %v4321 = vpop.f32.mrb[0].mxu0
      %v4322 = vadd.f32 0.0, %v4321
      %v4323 = vpop.f32.mrb[0].mxu0
      %4324 = vmatprep.mubr.bf16.mxu0 0
      %4325 = vmatmul.mubr.bf16.gmra.mrb[0].mxu0 %v4177
      %v4326 = vpop.f32.mrb[0].mxu0
      %v4327 = vadd.f32 0.0, %v4326
      %v4328 = vpop.f32.mrb[0].mxu0
      %v4329 = vpop.f32.mrb[0].mxu0
      %v4330 = vadd.f32 0.0, %v4329
      %v4331 = vpop.f32.mrb[0].mxu0
      %4332 = vmatprep.mubr.bf16.mxu0 0
      %4333 = vmatmul.mubr.bf16.gmra.mrb[0].mxu0 %v4178
      %v4334 = vpop.f32.mrb[0].mxu0
      %v4335 = vadd.f32 0.0, %v4334
      %v4336 = vpop.f32.mrb[0].mxu0
      %v4337 = vpop.f32.mrb[0].mxu0
      %v4338 = vadd.f32 0.0, %v4337
      %v4339 = vpop.f32.mrb[0].mxu0
      %4340 = vmatprep.mubr.bf16.mxu0 0
      %4341 = vmatmul.mubr.bf16.gmra.mrb[0].mxu0 %v4179
      %v4342 = vpop.f32.mrb[0].mxu0
      %v4343 = vadd.f32 0.0, %v4342
      %v4344 = vpop.f32.mrb[0].mxu0
      %v4345 = vpop.f32.mrb[0].mxu0
      %v4346 = vadd.f32 0.0, %v4345
      %v4347 = vpop.f32.mrb[0].mxu0
      %4348 = vmatprep.mubr.bf16.mxu0 0
      %4349 = vmatmul.mubr.bf16.gmra.mrb[0].mxu0 %v4180
      %v4350 = vpop.f32.mrb[0].mxu0
      %v4351 = vadd.f32 0.0, %v4350
      %v4352 = vpop.f32.mrb[0].mxu0
      %v4353 = vpop.f32.mrb[0].mxu0
      %v4354 = vadd.f32 0.0, %v4353
      %v4355 = vpop.f32.mrb[0].mxu0
      %4356 = vmatprep.mubr.bf16.mxu0 0
      %4357 = vmatmul.mubr.bf16.gmra.mrb[0].mxu0 %v4181
      %v4358 = vpop.f32.mrb[0].mxu0
      %v4359 = vadd.f32 0.0, %v4358
      %v4360 = vpop.f32.mrb[0].mxu0
      %v4361 = vpop.f32.mrb[0].mxu0
      %v4362 = vadd.f32 0.0, %v4361
      %v4363 = vpop.f32.mrb[0].mxu0
      %4364 = vmatprep.mubr.bf16.mxu0 0
      %4365 = vmatmul.mubr.bf16.gmra.mrb[0].mxu0 %v4182
      %v4366 = vpop.f32.mrb[0].mxu0
      %v4367 = vadd.f32 0.0, %v4366
      %v4368 = vpop.f32.mrb[0].mxu0
      %v4369 = vpop.f32.mrb[0].mxu0
      %v4370 = vadd.f32 0.0, %v4369
      %v4371 = vpop.f32.mrb[0].mxu0
      %4372 = vmatprep.mubr.bf16.mxu0 0
      %4373 = vmatmul.mubr.bf16.gmra.mrb[0].mxu0 %v4183
      %v4374 = vpop.f32.mrb[0].mxu0
      %v4375 = vadd.f32 0.0, %v4374
      %v4376 = vpop.f32.mrb[0].mxu0
      %v4377 = vpop.f32.mrb[0].mxu0
      %v4378 = vadd.f32 0.0, %v4377
      %v4379 = vpop.f32.mrb[0].mxu0
      %4380 = vmatprep.mubr.bf16.mxu0 0
      %4381 = vmatmul.mubr.bf16.gmra.mrb[0].mxu0 %v4184
      %v4382 = vpop.f32.mrb[0].mxu0
      %v4383 = vadd.f32 0.0, %v4382
      %v4384 = vpop.f32.mrb[0].mxu0
      %v4385 = vpop.f32.mrb[0].mxu0
      %v4386 = vadd.f32 0.0, %v4385
      %v4387 = vpop.f32.mrb[0].mxu0
      %4388 = vmatprep.mubr.bf16.mxu0 0
      %4389 = vmatmul.mubr.bf16.gmra.mrb[0].mxu0 %v4185
      %v4390 = vpop.f32.mrb[0].mxu0
      %v4391 = vadd.f32 0.0, %v4390
      %v4392 = vpop.f32.mrb[0].mxu0
      %v4393 = vpop.f32.mrb[0].mxu0
      %v4394 = vadd.f32 0.0, %v4393
      %v4395 = vpop.f32.mrb[0].mxu0
      %4396 = vmatprep.mubr.bf16.mxu0 0
      %4397 = vmatmul.mubr.bf16.gmra.mrb[0].mxu0 %v4186
      %v4398 = vpop.f32.mrb[0].mxu0
      %v4399 = vadd.f32 0.0, %v4398
      %v4400 = vpop.f32.mrb[0].mxu0
      %v4401 = vpop.f32.mrb[0].mxu0
      %v4402 = vadd.f32 0.0, %v4401
      %v4403 = vpop.f32.mrb[0].mxu0
      %4404 = vmatprep.mubr.bf16.mxu0 0
      %4405 = vmatmul.mubr.bf16.gmra.mrb[0].mxu0 %v4187
      %v4406 = vpop.f32.mrb[0].mxu0
      %v4407 = vadd.f32 0.0, %v4406
      %v4408 = vpop.f32.mrb[0].mxu0
      %v4409 = vpop.f32.mrb[0].mxu0
      %v4410 = vadd.f32 0.0, %v4409
      %v4411 = vpop.f32.mrb[0].mxu0
      %4412 = vdwg.mxu0
      %v4413 = vadd.f32 %v4026, %v4287
      %v4414 = vadd.f32 %v4027, %v4290
      %v4415 = vadd.f32 %v4028, %v4295
      %v4416 = vadd.f32 %v4029, %v4298
      %v4417 = vadd.f32 %v4030, %v4303
      %v4418 = vadd.f32 %v4031, %v4306
      %v4419 = vadd.f32 %v4032, %v4311
      %v4420 = vadd.f32 %v4033, %v4314
      %v4421 = vadd.f32 %v4034, %v4319
      %v4422 = vadd.f32 %v4035, %v4322
      %v4423 = vadd.f32 %v4036, %v4327
      %v4424 = vadd.f32 %v4037, %v4330
      %v4425 = vadd.f32 %v4038, %v4335
      %v4426 = vadd.f32 %v4039, %v4338
      %v4427 = vadd.f32 %v4040, %v4343
      %v4428 = vadd.f32 %v4041, %v4346
      %v4429 = vadd.f32 %v4042, %v4351
      %v4430 = vadd.f32 %v4043, %v4354
      %v4431 = vadd.f32 %v4044, %v4359
      %v4432 = vadd.f32 %v4045, %v4362
      %v4433 = vadd.f32 %v4046, %v4367
      %v4434 = vadd.f32 %v4047, %v4370
      %v4435 = vadd.f32 %v4048, %v4375
      %v4436 = vadd.f32 %v4049, %v4378
      %v4437 = vadd.f32 %v4050, %v4383
      %v4438 = vadd.f32 %v4051, %v4386
      %v4439 = vadd.f32 %v4052, %v4391
      %v4440 = vadd.f32 %v4053, %v4394
      %v4441 = vadd.f32 %v4054, %v4399
      %v4442 = vadd.f32 %v4055, %v4402
      %v4443 = vadd.f32 %v4056, %v4407
      %v4444 = vadd.f32 %v4057, %v4410
      %v4445 = vld [vmem:[%s4058] sm:$0xf]
      %v4446 = vld [vmem:[%s4058 + $0x4] sm:$0xf]
      %v4447 = vld [vmem:[%s4058 + $0x8] sm:$0x1]
      %v4448 = vld [vmem:[%s4058 + $0xc] sm:$0xf]
      %v4449 = vld [vmem:[%s4058 + $0x10] sm:$0xf]
      %v4450 = vld [vmem:[%s4058 + $0x14] sm:$0x1]
      %v4451 = vld [vmem:[%s4058 + $0x18] sm:$0xf]
      %v4452 = vld [vmem:[%s4058 + $0x1c] sm:$0xf]
      %v4453 = vld [vmem:[%s4058 + $0x20] sm:$0x1]
      %v4454 = vld [vmem:[%s4058 + $0x24] sm:$0xf]
      %v4455 = vld [vmem:[%s4058 + $0x28] sm:$0xf]
      %v4456 = vld [vmem:[%s4058 + $0x2c] sm:$0x1]
      %v4457 = vld [vmem:[%s4058 + $0x30] sm:$0xf]
      %v4458 = vld [vmem:[%s4058 + $0x34] sm:$0xf]
      %v4459 = vld [vmem:[%s4058 + $0x38] sm:$0x1]
      %v4460 = vld [vmem:[%s4058 + $0x3c] sm:$0xf]
      %v4461 = vld [vmem:[%s4058 + $0x40] sm:$0xf]
      %v4462 = vld [vmem:[%s4058 + $0x44] sm:$0x1]
      %v4463 = vld [vmem:[%s4058 + $0x48] sm:$0xf]
      %v4464 = vld [vmem:[%s4058 + $0x4c] sm:$0xf]
      %v4465 = vld [vmem:[%s4058 + $0x50] sm:$0x1]
      %v4466 = vld [vmem:[%s4058 + $0x54] sm:$0xf]
      %v4467 = vld [vmem:[%s4058 + $0x58] sm:$0xf]
      %v4468 = vld [vmem:[%s4058 + $0x5c] sm:$0x1]
      %v4469 = vld [vmem:[%s4058 + $0x60] sm:$0xf]
      %v4470 = vld [vmem:[%s4058 + $0x64] sm:$0xf]
      %v4471 = vld [vmem:[%s4058 + $0x68] sm:$0x1]
      %v4472 = vld [vmem:[%s4058 + $0x6c] sm:$0xf]
      %v4473 = vld [vmem:[%s4058 + $0x70] sm:$0xf]
      %v4474 = vld [vmem:[%s4058 + $0x74] sm:$0x1]
      %v4475 = vld [vmem:[%s4058 + $0x78] sm:$0xf]
      %v4476 = vld [vmem:[%s4058 + $0x7c] sm:$0xf]
      %v4477 = vld [vmem:[%s4058 + $0x80] sm:$0x1]
      %v4478 = vld [vmem:[%s4058 + $0x84] sm:$0xf]
      %v4479 = vld [vmem:[%s4058 + $0x88] sm:$0xf]
      %v4480 = vld [vmem:[%s4058 + $0x8c] sm:$0x1]
      %v4481 = vld [vmem:[%s4058 + $0x90] sm:$0xf]
      %v4482 = vld [vmem:[%s4058 + $0x94] sm:$0xf]
      %v4483 = vld [vmem:[%s4058 + $0x98] sm:$0x1]
      %v4484 = vld [vmem:[%s4058 + $0x9c] sm:$0xf]
      %v4485 = vld [vmem:[%s4058 + $0xa0] sm:$0xf]
      %v4486 = vld [vmem:[%s4058 + $0xa4] sm:$0x1]
      %v4487 = vld [vmem:[%s4058 + $0xa8] sm:$0xf]
      %v4488 = vld [vmem:[%s4058 + $0xac] sm:$0xf]
      %v4489 = vld [vmem:[%s4058 + $0xb0] sm:$0x1]
      %v4490 = vld [vmem:[%s4058 + $0xb4] sm:$0xf]
      %v4491 = vld [vmem:[%s4058 + $0xb8] sm:$0xf]
      %v4492 = vld [vmem:[%s4058 + $0xbc] sm:$0x1]
      %v4494 = vshrl.u32 %v4445, 16
      %v4496 = vrot.slane %v4494, 4
      %v4497 = vshll.u32 %v4445, 16
      %v4499 = vrot.slane %v4497, 5
      %v4500 = vor.u32 %v4496, %v4499
      %v4501 = vrot.slane %v4500, 4
      %v4503 = vshll.u32 %v4446, 16
      %v4505 = vrot.slane %v4503, 5
      %v4506 = vsel %vm955, %v4501, %v4505
      %v4507 = vshrl.u32 %v4446, 16
      %v4509 = vrot.slane %v4507, 4
      %v4510 = vor.u32 %v4509, %v4505
      %v4511 = vrot.slane %v4510, 4
      %v4513 = vshll.u32 %v4447, 16
      %v4515 = vrot.slane %v4513, 5
      %v4516 = vsel %vm955, %v4511, %v4515
      %v4518 = vshrl.u32 %v4448, 16
      %v4520 = vrot.slane %v4518, 4
      %v4521 = vshll.u32 %v4448, 16
      %v4523 = vrot.slane %v4521, 5
      %v4524 = vor.u32 %v4520, %v4523
      %v4525 = vrot.slane %v4524, 4
      %v4527 = vshll.u32 %v4449, 16
      %v4529 = vrot.slane %v4527, 5
      %v4530 = vsel %vm955, %v4525, %v4529
      %v4531 = vshrl.u32 %v4449, 16
      %v4533 = vrot.slane %v4531, 4
      %v4534 = vor.u32 %v4533, %v4529
      %v4535 = vrot.slane %v4534, 4
      %v4537 = vshll.u32 %v4450, 16
      %v4539 = vrot.slane %v4537, 5
      %v4540 = vsel %vm955, %v4535, %v4539
      %v4542 = vshrl.u32 %v4451, 16
      %v4544 = vrot.slane %v4542, 4
      %v4545 = vshll.u32 %v4451, 16
      %v4547 = vrot.slane %v4545, 5
      %v4548 = vor.u32 %v4544, %v4547
      %v4549 = vrot.slane %v4548, 4
      %v4551 = vshll.u32 %v4452, 16
      %v4553 = vrot.slane %v4551, 5
      %v4554 = vsel %vm955, %v4549, %v4553
      %v4555 = vshrl.u32 %v4452, 16
      %v4557 = vrot.slane %v4555, 4
      %v4558 = vor.u32 %v4557, %v4553
      %v4559 = vrot.slane %v4558, 4
      %v4561 = vshll.u32 %v4453, 16
      %v4563 = vrot.slane %v4561, 5
      %v4564 = vsel %vm955, %v4559, %v4563
      %v4566 = vshrl.u32 %v4454, 16
      %v4568 = vrot.slane %v4566, 4
      %v4569 = vshll.u32 %v4454, 16
      %v4571 = vrot.slane %v4569, 5
      %v4572 = vor.u32 %v4568, %v4571
      %v4573 = vrot.slane %v4572, 4
      %v4575 = vshll.u32 %v4455, 16
      %v4577 = vrot.slane %v4575, 5
      %v4578 = vsel %vm955, %v4573, %v4577
      %v4579 = vshrl.u32 %v4455, 16
      %v4581 = vrot.slane %v4579, 4
      %v4582 = vor.u32 %v4581, %v4577
      %v4583 = vrot.slane %v4582, 4
      %v4585 = vshll.u32 %v4456, 16
      %v4587 = vrot.slane %v4585, 5
      %v4588 = vsel %vm955, %v4583, %v4587
      %v4590 = vshrl.u32 %v4457, 16
      %v4592 = vrot.slane %v4590, 4
      %v4593 = vshll.u32 %v4457, 16
      %v4595 = vrot.slane %v4593, 5
      %v4596 = vor.u32 %v4592, %v4595
      %v4597 = vrot.slane %v4596, 4
      %v4599 = vshll.u32 %v4458, 16
      %v4601 = vrot.slane %v4599, 5
      %v4602 = vsel %vm955, %v4597, %v4601
      %v4603 = vshrl.u32 %v4458, 16
      %v4605 = vrot.slane %v4603, 4
      %v4606 = vor.u32 %v4605, %v4601
      %v4607 = vrot.slane %v4606, 4
      %v4609 = vshll.u32 %v4459, 16
      %v4611 = vrot.slane %v4609, 5
      %v4612 = vsel %vm955, %v4607, %v4611
      %v4614 = vshrl.u32 %v4460, 16
      %v4616 = vrot.slane %v4614, 4
      %v4617 = vshll.u32 %v4460, 16
      %v4619 = vrot.slane %v4617, 5
      %v4620 = vor.u32 %v4616, %v4619
      %v4621 = vrot.slane %v4620, 4
      %v4623 = vshll.u32 %v4461, 16
      %v4625 = vrot.slane %v4623, 5
      %v4626 = vsel %vm955, %v4621, %v4625
      %v4627 = vshrl.u32 %v4461, 16
      %v4629 = vrot.slane %v4627, 4
      %v4630 = vor.u32 %v4629, %v4625
      %v4631 = vrot.slane %v4630, 4
      %v4633 = vshll.u32 %v4462, 16
      %v4635 = vrot.slane %v4633, 5
      %v4636 = vsel %vm955, %v4631, %v4635
      %v4638 = vshrl.u32 %v4463, 16
      %v4640 = vrot.slane %v4638, 4
      %v4641 = vshll.u32 %v4463, 16
      %v4643 = vrot.slane %v4641, 5
      %v4644 = vor.u32 %v4640, %v4643
      %v4645 = vrot.slane %v4644, 4
      %v4647 = vshll.u32 %v4464, 16
      %v4649 = vrot.slane %v4647, 5
      %v4650 = vsel %vm955, %v4645, %v4649
      %v4651 = vshrl.u32 %v4464, 16
      %v4653 = vrot.slane %v4651, 4
      %v4654 = vor.u32 %v4653, %v4649
      %v4655 = vrot.slane %v4654, 4
      %v4657 = vshll.u32 %v4465, 16
      %v4659 = vrot.slane %v4657, 5
      %v4660 = vsel %vm955, %v4655, %v4659
      %v4662 = vshrl.u32 %v4466, 16
      %v4664 = vrot.slane %v4662, 4
      %v4665 = vshll.u32 %v4466, 16
      %v4667 = vrot.slane %v4665, 5
      %v4668 = vor.u32 %v4664, %v4667
      %v4669 = vrot.slane %v4668, 4
      %v4671 = vshll.u32 %v4467, 16
      %v4673 = vrot.slane %v4671, 5
      %v4674 = vsel %vm955, %v4669, %v4673
      %v4675 = vshrl.u32 %v4467, 16
      %v4677 = vrot.slane %v4675, 4
      %v4678 = vor.u32 %v4677, %v4673
      %v4679 = vrot.slane %v4678, 4
      %v4681 = vshll.u32 %v4468, 16
      %v4683 = vrot.slane %v4681, 5
      %v4684 = vsel %vm955, %v4679, %v4683
      %v4686 = vshrl.u32 %v4469, 16
      %v4688 = vrot.slane %v4686, 4
      %v4689 = vshll.u32 %v4469, 16
      %v4691 = vrot.slane %v4689, 5
      %v4692 = vor.u32 %v4688, %v4691
      %v4693 = vrot.slane %v4692, 4
      %v4695 = vshll.u32 %v4470, 16
      %v4697 = vrot.slane %v4695, 5
      %v4698 = vsel %vm955, %v4693, %v4697
      %v4699 = vshrl.u32 %v4470, 16
      %v4701 = vrot.slane %v4699, 4
      %v4702 = vor.u32 %v4701, %v4697
      %v4703 = vrot.slane %v4702, 4
      %v4705 = vshll.u32 %v4471, 16
      %v4707 = vrot.slane %v4705, 5
      %v4708 = vsel %vm955, %v4703, %v4707
      %v4710 = vshrl.u32 %v4472, 16
      %v4712 = vrot.slane %v4710, 4
      %v4713 = vshll.u32 %v4472, 16
      %v4715 = vrot.slane %v4713, 5
      %v4716 = vor.u32 %v4712, %v4715
      %v4717 = vrot.slane %v4716, 4
      %v4719 = vshll.u32 %v4473, 16
      %v4721 = vrot.slane %v4719, 5
      %v4722 = vsel %vm955, %v4717, %v4721
      %v4723 = vshrl.u32 %v4473, 16
      %v4725 = vrot.slane %v4723, 4
      %v4726 = vor.u32 %v4725, %v4721
      %v4727 = vrot.slane %v4726, 4
      %v4729 = vshll.u32 %v4474, 16
      %v4731 = vrot.slane %v4729, 5
      %v4732 = vsel %vm955, %v4727, %v4731
      %v4734 = vshrl.u32 %v4475, 16
      %v4736 = vrot.slane %v4734, 4
      %v4737 = vshll.u32 %v4475, 16
      %v4739 = vrot.slane %v4737, 5
      %v4740 = vor.u32 %v4736, %v4739
      %v4741 = vrot.slane %v4740, 4
      %v4743 = vshll.u32 %v4476, 16
      %v4745 = vrot.slane %v4743, 5
      %v4746 = vsel %vm955, %v4741, %v4745
      %v4747 = vshrl.u32 %v4476, 16
      %v4749 = vrot.slane %v4747, 4
      %v4750 = vor.u32 %v4749, %v4745
      %v4751 = vrot.slane %v4750, 4
      %v4753 = vshll.u32 %v4477, 16
      %v4755 = vrot.slane %v4753, 5
      %v4756 = vsel %vm955, %v4751, %v4755
      %v4758 = vshrl.u32 %v4478, 16
      %v4760 = vrot.slane %v4758, 4
      %v4761 = vshll.u32 %v4478, 16
      %v4763 = vrot.slane %v4761, 5
      %v4764 = vor.u32 %v4760, %v4763
      %v4765 = vrot.slane %v4764, 4
      %v4767 = vshll.u32 %v4479, 16
      %v4769 = vrot.slane %v4767, 5
      %v4770 = vsel %vm955, %v4765, %v4769
      %v4771 = vshrl.u32 %v4479, 16
      %v4773 = vrot.slane %v4771, 4
      %v4774 = vor.u32 %v4773, %v4769
      %v4775 = vrot.slane %v4774, 4
      %v4777 = vshll.u32 %v4480, 16
      %v4779 = vrot.slane %v4777, 5
      %v4780 = vsel %vm955, %v4775, %v4779
      %v4782 = vshrl.u32 %v4481, 16
      %v4784 = vrot.slane %v4782, 4
      %v4785 = vshll.u32 %v4481, 16
      %v4787 = vrot.slane %v4785, 5
      %v4788 = vor.u32 %v4784, %v4787
      %v4789 = vrot.slane %v4788, 4
      %v4791 = vshll.u32 %v4482, 16
      %v4793 = vrot.slane %v4791, 5
      %v4794 = vsel %vm955, %v4789, %v4793
      %v4795 = vshrl.u32 %v4482, 16
      %v4797 = vrot.slane %v4795, 4
      %v4798 = vor.u32 %v4797, %v4793
      %v4799 = vrot.slane %v4798, 4
      %v4801 = vshll.u32 %v4483, 16
      %v4803 = vrot.slane %v4801, 5
      %v4804 = vsel %vm955, %v4799, %v4803
      %v4806 = vshrl.u32 %v4484, 16
      %v4808 = vrot.slane %v4806, 4
      %v4809 = vshll.u32 %v4484, 16
      %v4811 = vrot.slane %v4809, 5
      %v4812 = vor.u32 %v4808, %v4811
      %v4813 = vrot.slane %v4812, 4
      %v4815 = vshll.u32 %v4485, 16
      %v4817 = vrot.slane %v4815, 5
      %v4818 = vsel %vm955, %v4813, %v4817
      %v4819 = vshrl.u32 %v4485, 16
      %v4821 = vrot.slane %v4819, 4
      %v4822 = vor.u32 %v4821, %v4817
      %v4823 = vrot.slane %v4822, 4
      %v4825 = vshll.u32 %v4486, 16
      %v4827 = vrot.slane %v4825, 5
      %v4828 = vsel %vm955, %v4823, %v4827
      %v4830 = vshrl.u32 %v4487, 16
      %v4832 = vrot.slane %v4830, 4
      %v4833 = vshll.u32 %v4487, 16
      %v4835 = vrot.slane %v4833, 5
      %v4836 = vor.u32 %v4832, %v4835
      %v4837 = vrot.slane %v4836, 4
      %v4839 = vshll.u32 %v4488, 16
      %v4841 = vrot.slane %v4839, 5
      %v4842 = vsel %vm955, %v4837, %v4841
      %v4843 = vshrl.u32 %v4488, 16
      %v4845 = vrot.slane %v4843, 4
      %v4846 = vor.u32 %v4845, %v4841
      %v4847 = vrot.slane %v4846, 4
      %v4849 = vshll.u32 %v4489, 16
      %v4851 = vrot.slane %v4849, 5
      %v4852 = vsel %vm955, %v4847, %v4851
      %v4854 = vshrl.u32 %v4490, 16
      %v4856 = vrot.slane %v4854, 4
      %v4857 = vshll.u32 %v4490, 16
      %v4859 = vrot.slane %v4857, 5
      %v4860 = vor.u32 %v4856, %v4859
      %v4861 = vrot.slane %v4860, 4
      %v4863 = vshll.u32 %v4491, 16
      %v4865 = vrot.slane %v4863, 5
      %v4866 = vsel %vm955, %v4861, %v4865
      %v4867 = vshrl.u32 %v4491, 16
      %v4869 = vrot.slane %v4867, 4
      %v4870 = vor.u32 %v4869, %v4865
      %v4871 = vrot.slane %v4870, 4
      %v4873 = vshll.u32 %v4492, 16
      %v4875 = vrot.slane %v4873, 5
      %v4876 = vsel %vm955, %v4871, %v4875
      %s4877 = scalar_lea.vmem %s1, 448
      %v4878 = vld [vmem:[%s4877] sm:$0xf]
      %v4879 = vld [vmem:[%s4877 + $0x4] sm:$0xf]
      %v4880 = vld [vmem:[%s4877 + $0x8] sm:$0xf]
      %v4881 = vld [vmem:[%s4877 + $0xc] sm:$0xf]
      %v4882 = vld [vmem:[%s4877 + $0x10] sm:$0xf]
      %v4883 = vld [vmem:[%s4877 + $0x14] sm:$0xf]
      %v4884 = vld [vmem:[%s4877 + $0x18] sm:$0xf]
      %v4885 = vld [vmem:[%s4877 + $0x1c] sm:$0xf]
      %v4886 = vld [vmem:[%s4877 + $0x20] sm:$0xf]
      %v4887 = vld [vmem:[%s4877 + $0x24] sm:$0xf]
      %v4888 = vld [vmem:[%s4877 + $0x28] sm:$0xf]
      %v4889 = vld [vmem:[%s4877 + $0x2c] sm:$0xf]
      %v4890 = vld [vmem:[%s4877 + $0x30] sm:$0xf]
      %v4891 = vld [vmem:[%s4877 + $0x34] sm:$0xf]
      %v4892 = vld [vmem:[%s4877 + $0x38] sm:$0xf]
      %v4893 = vld [vmem:[%s4877 + $0x3c] sm:$0xf]
      %v4894 = vunpack.c.l.b16 %v4506
      %v4895 = vunpack.c.l.b16 %v4516
      %v4896 = vunpack.c.l.b16 %v4530
      %v4897 = vunpack.c.l.b16 %v4540
      %v4898 = vunpack.c.l.b16 %v4554
      %v4899 = vunpack.c.l.b16 %v4564
      %v4900 = vunpack.c.l.b16 %v4578
      %v4901 = vunpack.c.l.b16 %v4588
      %v4902 = vunpack.c.l.b16 %v4602
      %v4903 = vunpack.c.l.b16 %v4612
      %v4904 = vunpack.c.l.b16 %v4626
      %v4905 = vunpack.c.l.b16 %v4636
      %v4906 = vunpack.c.l.b16 %v4650
      %v4907 = vunpack.c.l.b16 %v4660
      %v4908 = vunpack.c.l.b16 %v4674
      %v4909 = vunpack.c.l.b16 %v4684
      %v4910 = vunpack.c.l.b16 %v4698
      %v4911 = vunpack.c.l.b16 %v4708
      %v4912 = vunpack.c.l.b16 %v4722
      %v4913 = vunpack.c.l.b16 %v4732
      %v4914 = vunpack.c.l.b16 %v4746
      %v4915 = vunpack.c.l.b16 %v4756
      %v4916 = vunpack.c.l.b16 %v4770
      %v4917 = vunpack.c.l.b16 %v4780
      %v4918 = vunpack.c.l.b16 %v4794
      %v4919 = vunpack.c.l.b16 %v4804
      %v4920 = vunpack.c.l.b16 %v4818
      %v4921 = vunpack.c.l.b16 %v4828
      %v4922 = vunpack.c.l.b16 %v4842
      %v4923 = vunpack.c.l.b16 %v4852
      %v4924 = vunpack.c.l.b16 %v4866
      %v4925 = vunpack.c.l.b16 %v4876
      %v4926 = vpack.c.b16 %v4895, %v4894
      %v4927 = vpack.c.b16 %v4897, %v4896
      %v4928 = vpack.c.b16 %v4899, %v4898
      %v4929 = vpack.c.b16 %v4901, %v4900
      %v4930 = vpack.c.b16 %v4903, %v4902
      %v4931 = vpack.c.b16 %v4905, %v4904
      %v4932 = vpack.c.b16 %v4907, %v4906
      %v4933 = vpack.c.b16 %v4909, %v4908
      %v4934 = vpack.c.b16 %v4911, %v4910
      %v4935 = vpack.c.b16 %v4913, %v4912
      %v4936 = vpack.c.b16 %v4915, %v4914
      %v4937 = vpack.c.b16 %v4917, %v4916
      %v4938 = vpack.c.b16 %v4919, %v4918
      %v4939 = vpack.c.b16 %v4921, %v4920
      %v4940 = vpack.c.b16 %v4923, %v4922
      %v4941 = vpack.c.b16 %v4925, %v4924
      %v4974 = vunpack.c.l.b16 %v4878
      %v4975 = vunpack.c.l.b16 %v4879
      %v4976 = vunpack.c.l.b16 %v4880
      %v4977 = vunpack.c.l.b16 %v4881
      %v4978 = vunpack.c.l.b16 %v4882
      %v4979 = vunpack.c.l.b16 %v4883
      %v4980 = vunpack.c.l.b16 %v4884
      %v4981 = vunpack.c.l.b16 %v4885
      %v4982 = vunpack.c.l.b16 %v4886
      %v4983 = vunpack.c.l.b16 %v4887
      %v4984 = vunpack.c.l.b16 %v4888
      %v4985 = vunpack.c.l.b16 %v4889
      %v4986 = vunpack.c.l.b16 %v4890
      %v4987 = vunpack.c.l.b16 %v4891
      %v4988 = vunpack.c.l.b16 %v4892
      %v4989 = vunpack.c.l.b16 %v4893
      %v4990 = vpack.c.b16 %v4975, %v4974
      %v4991 = vpack.c.b16 %v4977, %v4976
      %v4992 = vpack.c.b16 %v4979, %v4978
      %v4993 = vpack.c.b16 %v4981, %v4980
      %v4994 = vpack.c.b16 %v4983, %v4982
      %v4995 = vpack.c.b16 %v4985, %v4984
      %v4996 = vpack.c.b16 %v4987, %v4986
      %v4997 = vpack.c.b16 %v4989, %v4988
      %5006 = vmatprep.subr.bf16.mxu0 0
      %5007 = vmatpush1.bf16.msra.mxu0 %v4990
      %5008 = vmatprep.subr.bf16.mxu0 0
      %5009 = vmatpush1.bf16.msra.mxu0 %v4991
      %5010 = vmatprep.subr.bf16.mxu0 0
      %5011 = vmatpush1.bf16.msra.mxu0 %v4992
      %5012 = vmatprep.subr.bf16.mxu0 0
      %5013 = vmatpush1.bf16.msra.mxu0 %v4993
      %5014 = vmatprep.subr.bf16.mxu0 0
      %5015 = vmatpush1.bf16.msra.mxu0 %v4994
      %5016 = vmatprep.subr.bf16.mxu0 0
      %5017 = vmatpush1.bf16.msra.mxu0 %v4995
      %5018 = vmatprep.subr.bf16.mxu0 0
      %5019 = vmatpush1.bf16.msra.mxu0 %v4996
      %5020 = vmatprep.subr.bf16.mxu0 0
      %5021 = vmatpush1.bf16.msra.mxu0 %v4997
      %5022 = vmatprep.subr.bf16.mxu0 0
      %5023 = vmatpush1.bf16.msra.mxu0 0
      %5024 = vmatprep.subr.bf16.mxu0 0
      %5025 = vmatpush1.bf16.msra.mxu0 0
      %5026 = vmatprep.subr.bf16.mxu0 0
      %5027 = vmatpush1.bf16.msra.mxu0 0
      %5028 = vmatprep.subr.bf16.mxu0 0
      %5029 = vmatpush1.bf16.msra.mxu0 0
      %5030 = vmatprep.subr.bf16.mxu0 0
      %5031 = vmatpush1.bf16.msra.mxu0 0
      %5032 = vmatprep.subr.bf16.mxu0 0
      %5033 = vmatpush1.bf16.msra.mxu0 0
      %5034 = vmatprep.subr.bf16.mxu0 0
      %5035 = vmatpush1.bf16.msra.mxu0 0
      %5036 = vmatprep.subr.bf16.mxu0 0
      %5037 = vmatpush1.bf16.msra.mxu0 0
      %5038 = vmatprep.mubr.bf16.mxu0 0
      %5039 = vmatmul.mubr.bf16.gmra.mrb[0].mxu0 %v4926
      %v5040 = vpop.f32.mrb[0].mxu0
      %v5041 = vadd.f32 0.0, %v5040
      %v5042 = vpop.f32.mrb[0].mxu0
      %v5043 = vpop.f32.mrb[0].mxu0
      %v5044 = vadd.f32 0.0, %v5043
      %v5045 = vpop.f32.mrb[0].mxu0
      %5046 = vmatprep.mubr.bf16.mxu0 0
      %5047 = vmatmul.mubr.bf16.gmra.mrb[0].mxu0 %v4927
      %v5048 = vpop.f32.mrb[0].mxu0
      %v5049 = vadd.f32 0.0, %v5048
      %v5050 = vpop.f32.mrb[0].mxu0
      %v5051 = vpop.f32.mrb[0].mxu0
      %v5052 = vadd.f32 0.0, %v5051
      %v5053 = vpop.f32.mrb[0].mxu0
      %5054 = vmatprep.mubr.bf16.mxu0 0
      %5055 = vmatmul.mubr.bf16.gmra.mrb[0].mxu0 %v4928
      %v5056 = vpop.f32.mrb[0].mxu0
      %v5057 = vadd.f32 0.0, %v5056
      %v5058 = vpop.f32.mrb[0].mxu0
      %v5059 = vpop.f32.mrb[0].mxu0
      %v5060 = vadd.f32 0.0, %v5059
      %v5061 = vpop.f32.mrb[0].mxu0
      %5062 = vmatprep.mubr.bf16.mxu0 0
      %5063 = vmatmul.mubr.bf16.gmra.mrb[0].mxu0 %v4929
      %v5064 = vpop.f32.mrb[0].mxu0
      %v5065 = vadd.f32 0.0, %v5064
      %v5066 = vpop.f32.mrb[0].mxu0
      %v5067 = vpop.f32.mrb[0].mxu0
      %v5068 = vadd.f32 0.0, %v5067
      %v5069 = vpop.f32.mrb[0].mxu0
      %5070 = vmatprep.mubr.bf16.mxu0 0
      %5071 = vmatmul.mubr.bf16.gmra.mrb[0].mxu0 %v4930
      %v5072 = vpop.f32.mrb[0].mxu0
      %v5073 = vadd.f32 0.0, %v5072
      %v5074 = vpop.f32.mrb[0].mxu0
      %v5075 = vpop.f32.mrb[0].mxu0
      %v5076 = vadd.f32 0.0, %v5075
      %v5077 = vpop.f32.mrb[0].mxu0
      %5078 = vmatprep.mubr.bf16.mxu0 0
      %5079 = vmatmul.mubr.bf16.gmra.mrb[0].mxu0 %v4931
      %v5080 = vpop.f32.mrb[0].mxu0
      %v5081 = vadd.f32 0.0, %v5080
      %v5082 = vpop.f32.mrb[0].mxu0
      %v5083 = vpop.f32.mrb[0].mxu0
      %v5084 = vadd.f32 0.0, %v5083
      %v5085 = vpop.f32.mrb[0].mxu0
      %5086 = vmatprep.mubr.bf16.mxu0 0
      %5087 = vmatmul.mubr.bf16.gmra.mrb[0].mxu0 %v4932
      %v5088 = vpop.f32.mrb[0].mxu0
      %v5089 = vadd.f32 0.0, %v5088
      %v5090 = vpop.f32.mrb[0].mxu0
      %v5091 = vpop.f32.mrb[0].mxu0
      %v5092 = vadd.f32 0.0, %v5091
      %v5093 = vpop.f32.mrb[0].mxu0
      %5094 = vmatprep.mubr.bf16.mxu0 0
      %5095 = vmatmul.mubr.bf16.gmra.mrb[0].mxu0 %v4933
      %v5096 = vpop.f32.mrb[0].mxu0
      %v5097 = vadd.f32 0.0, %v5096
      %v5098 = vpop.f32.mrb[0].mxu0
      %v5099 = vpop.f32.mrb[0].mxu0
      %v5100 = vadd.f32 0.0, %v5099
      %v5101 = vpop.f32.mrb[0].mxu0
      %5102 = vmatprep.mubr.bf16.mxu0 0
      %5103 = vmatmul.mubr.bf16.gmra.mrb[0].mxu0 %v4934
      %v5104 = vpop.f32.mrb[0].mxu0
      %v5105 = vadd.f32 0.0, %v5104
      %v5106 = vpop.f32.mrb[0].mxu0
      %v5107 = vpop.f32.mrb[0].mxu0
      %v5108 = vadd.f32 0.0, %v5107
      %v5109 = vpop.f32.mrb[0].mxu0
      %5110 = vmatprep.mubr.bf16.mxu0 0
      %5111 = vmatmul.mubr.bf16.gmra.mrb[0].mxu0 %v4935
      %v5112 = vpop.f32.mrb[0].mxu0
      %v5113 = vadd.f32 0.0, %v5112
      %v5114 = vpop.f32.mrb[0].mxu0
      %v5115 = vpop.f32.mrb[0].mxu0
      %v5116 = vadd.f32 0.0, %v5115
      %v5117 = vpop.f32.mrb[0].mxu0
      %5118 = vmatprep.mubr.bf16.mxu0 0
      %5119 = vmatmul.mubr.bf16.gmra.mrb[0].mxu0 %v4936
      %v5120 = vpop.f32.mrb[0].mxu0
      %v5121 = vadd.f32 0.0, %v5120
      %v5122 = vpop.f32.mrb[0].mxu0
      %v5123 = vpop.f32.mrb[0].mxu0
      %v5124 = vadd.f32 0.0, %v5123
      %v5125 = vpop.f32.mrb[0].mxu0
      %5126 = vmatprep.mubr.bf16.mxu0 0
      %5127 = vmatmul.mubr.bf16.gmra.mrb[0].mxu0 %v4937
      %v5128 = vpop.f32.mrb[0].mxu0
      %v5129 = vadd.f32 0.0, %v5128
      %v5130 = vpop.f32.mrb[0].mxu0
      %v5131 = vpop.f32.mrb[0].mxu0
      %v5132 = vadd.f32 0.0, %v5131
      %v5133 = vpop.f32.mrb[0].mxu0
      %5134 = vmatprep.mubr.bf16.mxu0 0
      %5135 = vmatmul.mubr.bf16.gmra.mrb[0].mxu0 %v4938
      %v5136 = vpop.f32.mrb[0].mxu0
      %v5137 = vadd.f32 0.0, %v5136
      %v5138 = vpop.f32.mrb[0].mxu0
      %v5139 = vpop.f32.mrb[0].mxu0
      %v5140 = vadd.f32 0.0, %v5139
      %v5141 = vpop.f32.mrb[0].mxu0
      %5142 = vmatprep.mubr.bf16.mxu0 0
      %5143 = vmatmul.mubr.bf16.gmra.mrb[0].mxu0 %v4939
      %v5144 = vpop.f32.mrb[0].mxu0
      %v5145 = vadd.f32 0.0, %v5144
      %v5146 = vpop.f32.mrb[0].mxu0
      %v5147 = vpop.f32.mrb[0].mxu0
      %v5148 = vadd.f32 0.0, %v5147
      %v5149 = vpop.f32.mrb[0].mxu0
      %5150 = vmatprep.mubr.bf16.mxu0 0
      %5151 = vmatmul.mubr.bf16.gmra.mrb[0].mxu0 %v4940
      %v5152 = vpop.f32.mrb[0].mxu0
      %v5153 = vadd.f32 0.0, %v5152
      %v5154 = vpop.f32.mrb[0].mxu0
      %v5155 = vpop.f32.mrb[0].mxu0
      %v5156 = vadd.f32 0.0, %v5155
      %v5157 = vpop.f32.mrb[0].mxu0
      %5158 = vmatprep.mubr.bf16.mxu0 0
      %5159 = vmatmul.mubr.bf16.gmra.mrb[0].mxu0 %v4941
      %v5160 = vpop.f32.mrb[0].mxu0
      %v5161 = vadd.f32 0.0, %v5160
      %v5162 = vpop.f32.mrb[0].mxu0
      %v5163 = vpop.f32.mrb[0].mxu0
      %v5164 = vadd.f32 0.0, %v5163
      %v5165 = vpop.f32.mrb[0].mxu0
      %5166 = vdwg.mxu0
      %v5167 = vadd.f32 %v4413, %v5041
      %v5168 = vadd.f32 %v4414, %v5044
      %v5169 = vadd.f32 %v4415, %v5049
      %v5170 = vadd.f32 %v4416, %v5052
      %v5171 = vadd.f32 %v4417, %v5057
      %v5172 = vadd.f32 %v4418, %v5060
      %v5173 = vadd.f32 %v4419, %v5065
      %v5174 = vadd.f32 %v4420, %v5068
      %v5175 = vadd.f32 %v4421, %v5073
      %v5176 = vadd.f32 %v4422, %v5076
      %v5177 = vadd.f32 %v4423, %v5081
      %v5178 = vadd.f32 %v4424, %v5084
      %v5179 = vadd.f32 %v4425, %v5089
      %v5180 = vadd.f32 %v4426, %v5092
      %v5181 = vadd.f32 %v4427, %v5097
      %v5182 = vadd.f32 %v4428, %v5100
      %v5183 = vadd.f32 %v4429, %v5105
      %v5184 = vadd.f32 %v4430, %v5108
      %v5185 = vadd.f32 %v4431, %v5113
      %v5186 = vadd.f32 %v4432, %v5116
      %v5187 = vadd.f32 %v4433, %v5121
      %v5188 = vadd.f32 %v4434, %v5124
      %v5189 = vadd.f32 %v4435, %v5129
      %v5190 = vadd.f32 %v4436, %v5132
      %v5191 = vadd.f32 %v4437, %v5137
      %v5192 = vadd.f32 %v4438, %v5140
      %v5193 = vadd.f32 %v4439, %v5145
      %v5194 = vadd.f32 %v4440, %v5148
      %v5195 = vadd.f32 %v4441, %v5153
      %v5196 = vadd.f32 %v4442, %v5156
      %v5197 = vadd.f32 %v4443, %v5161
      %v5198 = vadd.f32 %v4444, %v5164
      %v5199 = vld [vmem:[%s4058] sm:$0xe]
      %v5200 = vld [vmem:[%s4058 + $0xc] sm:$0xe]
      %v5201 = vld [vmem:[%s4058 + $0x18] sm:$0xe]
      %v5202 = vld [vmem:[%s4058 + $0x24] sm:$0xe]
      %v5203 = vld [vmem:[%s4058 + $0x30] sm:$0xe]
      %v5204 = vld [vmem:[%s4058 + $0x3c] sm:$0xe]
      %v5205 = vld [vmem:[%s4058 + $0x48] sm:$0xe]
      %v5206 = vld [vmem:[%s4058 + $0x54] sm:$0xe]
      %v5207 = vld [vmem:[%s4058 + $0x60] sm:$0xe]
      %v5208 = vld [vmem:[%s4058 + $0x6c] sm:$0xe]
      %v5209 = vld [vmem:[%s4058 + $0x78] sm:$0xe]
      %v5210 = vld [vmem:[%s4058 + $0x84] sm:$0xe]
      %v5211 = vld [vmem:[%s4058 + $0x90] sm:$0xe]
      %v5212 = vld [vmem:[%s4058 + $0x9c] sm:$0xe]
      %v5213 = vld [vmem:[%s4058 + $0xa8] sm:$0xe]
      %v5214 = vld [vmem:[%s4058 + $0xb4] sm:$0xe]
      %v5263 = vrot.slane %v5199, 5
      %v5264 = vrot.slane %v5263, 4
      %v5265 = vrot.slane %v4446, 5
      %v5266 = vsel %vm1985, %v5264, %v5265
      %v5267 = vrot.slane %v5265, 4
      %v5268 = vrot.slane %v4447, 5
      %v5269 = vsel %vm1985, %v5267, %v5268
      %v5270 = vrot.slane %v5200, 5
      %v5271 = vrot.slane %v5270, 4
      %v5272 = vrot.slane %v4449, 5
      %v5273 = vsel %vm1985, %v5271, %v5272
      %v5274 = vrot.slane %v5272, 4
      %v5275 = vrot.slane %v4450, 5
      %v5276 = vsel %vm1985, %v5274, %v5275
      %v5277 = vrot.slane %v5201, 5
      %v5278 = vrot.slane %v5277, 4
      %v5279 = vrot.slane %v4452, 5
      %v5280 = vsel %vm1985, %v5278, %v5279
      %v5281 = vrot.slane %v5279, 4
      %v5282 = vrot.slane %v4453, 5
      %v5283 = vsel %vm1985, %v5281, %v5282
      %v5284 = vrot.slane %v5202, 5
      %v5285 = vrot.slane %v5284, 4
      %v5286 = vrot.slane %v4455, 5
      %v5287 = vsel %vm1985, %v5285, %v5286
      %v5288 = vrot.slane %v5286, 4
      %v5289 = vrot.slane %v4456, 5
      %v5290 = vsel %vm1985, %v5288, %v5289
      %v5291 = vrot.slane %v5203, 5
      %v5292 = vrot.slane %v5291, 4
      %v5293 = vrot.slane %v4458, 5
      %v5294 = vsel %vm1985, %v5292, %v5293
      %v5295 = vrot.slane %v5293, 4
      %v5296 = vrot.slane %v4459, 5
      %v5297 = vsel %vm1985, %v5295, %v5296
      %v5298 = vrot.slane %v5204, 5
      %v5299 = vrot.slane %v5298, 4
      %v5300 = vrot.slane %v4461, 5
      %v5301 = vsel %vm1985, %v5299, %v5300
      %v5302 = vrot.slane %v5300, 4
      %v5303 = vrot.slane %v4462, 5
      %v5304 = vsel %vm1985, %v5302, %v5303
      %v5305 = vrot.slane %v5205, 5
      %v5306 = vrot.slane %v5305, 4
      %v5307 = vrot.slane %v4464, 5
      %v5308 = vsel %vm1985, %v5306, %v5307
      %v5309 = vrot.slane %v5307, 4
      %v5310 = vrot.slane %v4465, 5
      %v5311 = vsel %vm1985, %v5309, %v5310
      %v5312 = vrot.slane %v5206, 5
      %v5313 = vrot.slane %v5312, 4
      %v5314 = vrot.slane %v4467, 5
      %v5315 = vsel %vm1985, %v5313, %v5314
      %v5316 = vrot.slane %v5314, 4
      %v5317 = vrot.slane %v4468, 5
      %v5318 = vsel %vm1985, %v5316, %v5317
      %v5319 = vrot.slane %v5207, 5
      %v5320 = vrot.slane %v5319, 4
      %v5321 = vrot.slane %v4470, 5
      %v5322 = vsel %vm1985, %v5320, %v5321
      %v5323 = vrot.slane %v5321, 4
      %v5324 = vrot.slane %v4471, 5
      %v5325 = vsel %vm1985, %v5323, %v5324
      %v5326 = vrot.slane %v5208, 5
      %v5327 = vrot.slane %v5326, 4
      %v5328 = vrot.slane %v4473, 5
      %v5329 = vsel %vm1985, %v5327, %v5328
      %v5330 = vrot.slane %v5328, 4
      %v5331 = vrot.slane %v4474, 5
      %v5332 = vsel %vm1985, %v5330, %v5331
      %v5333 = vrot.slane %v5209, 5
      %v5334 = vrot.slane %v5333, 4
      %v5335 = vrot.slane %v4476, 5
      %v5336 = vsel %vm1985, %v5334, %v5335
      %v5337 = vrot.slane %v5335, 4
      %v5338 = vrot.slane %v4477, 5
      %v5339 = vsel %vm1985, %v5337, %v5338
      %v5340 = vrot.slane %v5210, 5
      %v5341 = vrot.slane %v5340, 4
      %v5342 = vrot.slane %v4479, 5
      %v5343 = vsel %vm1985, %v5341, %v5342
      %v5344 = vrot.slane %v5342, 4
      %v5345 = vrot.slane %v4480, 5
      %v5346 = vsel %vm1985, %v5344, %v5345
      %v5347 = vrot.slane %v5211, 5
      %v5348 = vrot.slane %v5347, 4
      %v5349 = vrot.slane %v4482, 5
      %v5350 = vsel %vm1985, %v5348, %v5349
      %v5351 = vrot.slane %v5349, 4
      %v5352 = vrot.slane %v4483, 5
      %v5353 = vsel %vm1985, %v5351, %v5352
      %v5354 = vrot.slane %v5212, 5
      %v5355 = vrot.slane %v5354, 4
      %v5356 = vrot.slane %v4485, 5
      %v5357 = vsel %vm1985, %v5355, %v5356
      %v5358 = vrot.slane %v5356, 4
      %v5359 = vrot.slane %v4486, 5
      %v5360 = vsel %vm1985, %v5358, %v5359
      %v5361 = vrot.slane %v5213, 5
      %v5362 = vrot.slane %v5361, 4
      %v5363 = vrot.slane %v4488, 5
      %v5364 = vsel %vm1985, %v5362, %v5363
      %v5365 = vrot.slane %v5363, 4
      %v5366 = vrot.slane %v4489, 5
      %v5367 = vsel %vm1985, %v5365, %v5366
      %v5368 = vrot.slane %v5214, 5
      %v5369 = vrot.slane %v5368, 4
      %v5370 = vrot.slane %v4491, 5
      %v5371 = vsel %vm1985, %v5369, %v5370
      %v5372 = vrot.slane %v5370, 4
      %v5373 = vrot.slane %v4492, 5
      %v5374 = vsel %vm1985, %v5372, %v5373
      %s5375 = scalar_lea.vmem %s1, 512
      %v5376 = vld [vmem:[%s5375] sm:$0xf]
      %v5377 = vld [vmem:[%s5375 + $0x4] sm:$0xf]
      %v5378 = vld [vmem:[%s5375 + $0x8] sm:$0xf]
      %v5379 = vld [vmem:[%s5375 + $0xc] sm:$0xf]
      %v5380 = vld [vmem:[%s5375 + $0x10] sm:$0xf]
      %v5381 = vld [vmem:[%s5375 + $0x14] sm:$0xf]
      %v5382 = vld [vmem:[%s5375 + $0x18] sm:$0xf]
      %v5383 = vld [vmem:[%s5375 + $0x1c] sm:$0xf]
      %v5384 = vld [vmem:[%s5375 + $0x20] sm:$0xf]
      %v5385 = vld [vmem:[%s5375 + $0x24] sm:$0xf]
      %v5386 = vld [vmem:[%s5375 + $0x28] sm:$0xf]
      %v5387 = vld [vmem:[%s5375 + $0x2c] sm:$0xf]
      %v5388 = vld [vmem:[%s5375 + $0x30] sm:$0xf]
      %v5389 = vld [vmem:[%s5375 + $0x34] sm:$0xf]
      %v5390 = vld [vmem:[%s5375 + $0x38] sm:$0xf]
      %v5391 = vld [vmem:[%s5375 + $0x3c] sm:$0xf]
      %v5392 = vunpack.c.l.b16 %v5266
      %v5393 = vunpack.c.l.b16 %v5269
      %v5394 = vunpack.c.l.b16 %v5273
      %v5395 = vunpack.c.l.b16 %v5276
      %v5396 = vunpack.c.l.b16 %v5280
      %v5397 = vunpack.c.l.b16 %v5283
      %v5398 = vunpack.c.l.b16 %v5287
      %v5399 = vunpack.c.l.b16 %v5290
      %v5400 = vunpack.c.l.b16 %v5294
      %v5401 = vunpack.c.l.b16 %v5297
      %v5402 = vunpack.c.l.b16 %v5301
      %v5403 = vunpack.c.l.b16 %v5304
      %v5404 = vunpack.c.l.b16 %v5308
      %v5405 = vunpack.c.l.b16 %v5311
      %v5406 = vunpack.c.l.b16 %v5315
      %v5407 = vunpack.c.l.b16 %v5318
      %v5408 = vunpack.c.l.b16 %v5322
      %v5409 = vunpack.c.l.b16 %v5325
      %v5410 = vunpack.c.l.b16 %v5329
      %v5411 = vunpack.c.l.b16 %v5332
      %v5412 = vunpack.c.l.b16 %v5336
      %v5413 = vunpack.c.l.b16 %v5339
      %v5414 = vunpack.c.l.b16 %v5343
      %v5415 = vunpack.c.l.b16 %v5346
      %v5416 = vunpack.c.l.b16 %v5350
      %v5417 = vunpack.c.l.b16 %v5353
      %v5418 = vunpack.c.l.b16 %v5357
      %v5419 = vunpack.c.l.b16 %v5360
      %v5420 = vunpack.c.l.b16 %v5364
      %v5421 = vunpack.c.l.b16 %v5367
      %v5422 = vunpack.c.l.b16 %v5371
      %v5423 = vunpack.c.l.b16 %v5374
      %v5424 = vpack.c.b16 %v5393, %v5392
      %v5425 = vpack.c.b16 %v5395, %v5394
      %v5426 = vpack.c.b16 %v5397, %v5396
      %v5427 = vpack.c.b16 %v5399, %v5398
      %v5428 = vpack.c.b16 %v5401, %v5400
      %v5429 = vpack.c.b16 %v5403, %v5402
      %v5430 = vpack.c.b16 %v5405, %v5404
      %v5431 = vpack.c.b16 %v5407, %v5406
      %v5432 = vpack.c.b16 %v5409, %v5408
      %v5433 = vpack.c.b16 %v5411, %v5410
      %v5434 = vpack.c.b16 %v5413, %v5412
      %v5435 = vpack.c.b16 %v5415, %v5414
      %v5436 = vpack.c.b16 %v5417, %v5416
      %v5437 = vpack.c.b16 %v5419, %v5418
      %v5438 = vpack.c.b16 %v5421, %v5420
      %v5439 = vpack.c.b16 %v5423, %v5422
      %v5472 = vunpack.c.l.b16 %v5376
      %v5473 = vunpack.c.l.b16 %v5377
      %v5474 = vunpack.c.l.b16 %v5378
      %v5475 = vunpack.c.l.b16 %v5379
      %v5476 = vunpack.c.l.b16 %v5380
      %v5477 = vunpack.c.l.b16 %v5381
      %v5478 = vunpack.c.l.b16 %v5382
      %v5479 = vunpack.c.l.b16 %v5383
      %v5480 = vunpack.c.l.b16 %v5384
      %v5481 = vunpack.c.l.b16 %v5385
      %v5482 = vunpack.c.l.b16 %v5386
      %v5483 = vunpack.c.l.b16 %v5387
      %v5484 = vunpack.c.l.b16 %v5388
      %v5485 = vunpack.c.l.b16 %v5389
      %v5486 = vunpack.c.l.b16 %v5390
      %v5487 = vunpack.c.l.b16 %v5391
      %v5488 = vpack.c.b16 %v5473, %v5472
      %v5489 = vpack.c.b16 %v5475, %v5474
      %v5490 = vpack.c.b16 %v5477, %v5476
      %v5491 = vpack.c.b16 %v5479, %v5478
      %v5492 = vpack.c.b16 %v5481, %v5480
      %v5493 = vpack.c.b16 %v5483, %v5482
      %v5494 = vpack.c.b16 %v5485, %v5484
      %v5495 = vpack.c.b16 %v5487, %v5486
      %5504 = vmatprep.subr.bf16.mxu0 0
      %5505 = vmatpush1.bf16.msra.mxu0 %v5488
      %5506 = vmatprep.subr.bf16.mxu0 0
      %5507 = vmatpush1.bf16.msra.mxu0 %v5489
      %5508 = vmatprep.subr.bf16.mxu0 0
      %5509 = vmatpush1.bf16.msra.mxu0 %v5490
      %5510 = vmatprep.subr.bf16.mxu0 0
      %5511 = vmatpush1.bf16.msra.mxu0 %v5491
      %5512 = vmatprep.subr.bf16.mxu0 0
      %5513 = vmatpush1.bf16.msra.mxu0 %v5492
      %5514 = vmatprep.subr.bf16.mxu0 0
      %5515 = vmatpush1.bf16.msra.mxu0 %v5493
      %5516 = vmatprep.subr.bf16.mxu0 0
      %5517 = vmatpush1.bf16.msra.mxu0 %v5494
      %5518 = vmatprep.subr.bf16.mxu0 0
      %5519 = vmatpush1.bf16.msra.mxu0 %v5495
      %5520 = vmatprep.subr.bf16.mxu0 0
      %5521 = vmatpush1.bf16.msra.mxu0 0
      %5522 = vmatprep.subr.bf16.mxu0 0
      %5523 = vmatpush1.bf16.msra.mxu0 0
      %5524 = vmatprep.subr.bf16.mxu0 0
      %5525 = vmatpush1.bf16.msra.mxu0 0
      %5526 = vmatprep.subr.bf16.mxu0 0
      %5527 = vmatpush1.bf16.msra.mxu0 0
      %5528 = vmatprep.subr.bf16.mxu0 0
      %5529 = vmatpush1.bf16.msra.mxu0 0
      %5530 = vmatprep.subr.bf16.mxu0 0
      %5531 = vmatpush1.bf16.msra.mxu0 0
      %5532 = vmatprep.subr.bf16.mxu0 0
      %5533 = vmatpush1.bf16.msra.mxu0 0
      %5534 = vmatprep.subr.bf16.mxu0 0
      %5535 = vmatpush1.bf16.msra.mxu0 0
      %5536 = vmatprep.mubr.bf16.mxu0 0
      %5537 = vmatmul.mubr.bf16.gmra.mrb[0].mxu0 %v5424
      %v5538 = vpop.f32.mrb[0].mxu0
      %v5539 = vadd.f32 0.0, %v5538
      %v5540 = vpop.f32.mrb[0].mxu0
      %v5541 = vpop.f32.mrb[0].mxu0
      %v5542 = vadd.f32 0.0, %v5541
      %v5543 = vpop.f32.mrb[0].mxu0
      %5544 = vmatprep.mubr.bf16.mxu0 0
      %5545 = vmatmul.mubr.bf16.gmra.mrb[0].mxu0 %v5425
      %v5546 = vpop.f32.mrb[0].mxu0
      %v5547 = vadd.f32 0.0, %v5546
      %v5548 = vpop.f32.mrb[0].mxu0
      %v5549 = vpop.f32.mrb[0].mxu0
      %v5550 = vadd.f32 0.0, %v5549
      %v5551 = vpop.f32.mrb[0].mxu0
      %5552 = vmatprep.mubr.bf16.mxu0 0
      %5553 = vmatmul.mubr.bf16.gmra.mrb[0].mxu0 %v5426
      %v5554 = vpop.f32.mrb[0].mxu0
      %v5555 = vadd.f32 0.0, %v5554
      %v5556 = vpop.f32.mrb[0].mxu0
      %v5557 = vpop.f32.mrb[0].mxu0
      %v5558 = vadd.f32 0.0, %v5557
      %v5559 = vpop.f32.mrb[0].mxu0
      %5560 = vmatprep.mubr.bf16.mxu0 0
      %5561 = vmatmul.mubr.bf16.gmra.mrb[0].mxu0 %v5427
      %v5562 = vpop.f32.mrb[0].mxu0
      %v5563 = vadd.f32 0.0, %v5562
      %v5564 = vpop.f32.mrb[0].mxu0
      %v5565 = vpop.f32.mrb[0].mxu0
      %v5566 = vadd.f32 0.0, %v5565
      %v5567 = vpop.f32.mrb[0].mxu0
      %5568 = vmatprep.mubr.bf16.mxu0 0
      %5569 = vmatmul.mubr.bf16.gmra.mrb[0].mxu0 %v5428
      %v5570 = vpop.f32.mrb[0].mxu0
      %v5571 = vadd.f32 0.0, %v5570
      %v5572 = vpop.f32.mrb[0].mxu0
      %v5573 = vpop.f32.mrb[0].mxu0
      %v5574 = vadd.f32 0.0, %v5573
      %v5575 = vpop.f32.mrb[0].mxu0
      %5576 = vmatprep.mubr.bf16.mxu0 0
      %5577 = vmatmul.mubr.bf16.gmra.mrb[0].mxu0 %v5429
      %v5578 = vpop.f32.mrb[0].mxu0
      %v5579 = vadd.f32 0.0, %v5578
      %v5580 = vpop.f32.mrb[0].mxu0
      %v5581 = vpop.f32.mrb[0].mxu0
      %v5582 = vadd.f32 0.0, %v5581
      %v5583 = vpop.f32.mrb[0].mxu0
      %5584 = vmatprep.mubr.bf16.mxu0 0
      %5585 = vmatmul.mubr.bf16.gmra.mrb[0].mxu0 %v5430
      %v5586 = vpop.f32.mrb[0].mxu0
      %v5587 = vadd.f32 0.0, %v5586
      %v5588 = vpop.f32.mrb[0].mxu0
      %v5589 = vpop.f32.mrb[0].mxu0
      %v5590 = vadd.f32 0.0, %v5589
      %v5591 = vpop.f32.mrb[0].mxu0
      %5592 = vmatprep.mubr.bf16.mxu0 0
      %5593 = vmatmul.mubr.bf16.gmra.mrb[0].mxu0 %v5431
      %v5594 = vpop.f32.mrb[0].mxu0
      %v5595 = vadd.f32 0.0, %v5594
      %v5596 = vpop.f32.mrb[0].mxu0
      %v5597 = vpop.f32.mrb[0].mxu0
      %v5598 = vadd.f32 0.0, %v5597
      %v5599 = vpop.f32.mrb[0].mxu0
      %5600 = vmatprep.mubr.bf16.mxu0 0
      %5601 = vmatmul.mubr.bf16.gmra.mrb[0].mxu0 %v5432
      %v5602 = vpop.f32.mrb[0].mxu0
      %v5603 = vadd.f32 0.0, %v5602
      %v5604 = vpop.f32.mrb[0].mxu0
      %v5605 = vpop.f32.mrb[0].mxu0
      %v5606 = vadd.f32 0.0, %v5605
      %v5607 = vpop.f32.mrb[0].mxu0
      %5608 = vmatprep.mubr.bf16.mxu0 0
      %5609 = vmatmul.mubr.bf16.gmra.mrb[0].mxu0 %v5433
      %v5610 = vpop.f32.mrb[0].mxu0
      %v5611 = vadd.f32 0.0, %v5610
      %v5612 = vpop.f32.mrb[0].mxu0
      %v5613 = vpop.f32.mrb[0].mxu0
      %v5614 = vadd.f32 0.0, %v5613
      %v5615 = vpop.f32.mrb[0].mxu0
      %5616 = vmatprep.mubr.bf16.mxu0 0
      %5617 = vmatmul.mubr.bf16.gmra.mrb[0].mxu0 %v5434
      %v5618 = vpop.f32.mrb[0].mxu0
      %v5619 = vadd.f32 0.0, %v5618
      %v5620 = vpop.f32.mrb[0].mxu0
      %v5621 = vpop.f32.mrb[0].mxu0
      %v5622 = vadd.f32 0.0, %v5621
      %v5623 = vpop.f32.mrb[0].mxu0
      %5624 = vmatprep.mubr.bf16.mxu0 0
      %5625 = vmatmul.mubr.bf16.gmra.mrb[0].mxu0 %v5435
      %v5626 = vpop.f32.mrb[0].mxu0
      %v5627 = vadd.f32 0.0, %v5626
      %v5628 = vpop.f32.mrb[0].mxu0
      %v5629 = vpop.f32.mrb[0].mxu0
      %v5630 = vadd.f32 0.0, %v5629
      %v5631 = vpop.f32.mrb[0].mxu0
      %5632 = vmatprep.mubr.bf16.mxu0 0
      %5633 = vmatmul.mubr.bf16.gmra.mrb[0].mxu0 %v5436
      %v5634 = vpop.f32.mrb[0].mxu0
      %v5635 = vadd.f32 0.0, %v5634
      %v5636 = vpop.f32.mrb[0].mxu0
      %v5637 = vpop.f32.mrb[0].mxu0
      %v5638 = vadd.f32 0.0, %v5637
      %v5639 = vpop.f32.mrb[0].mxu0
      %5640 = vmatprep.mubr.bf16.mxu0 0
      %5641 = vmatmul.mubr.bf16.gmra.mrb[0].mxu0 %v5437
      %v5642 = vpop.f32.mrb[0].mxu0
      %v5643 = vadd.f32 0.0, %v5642
      %v5644 = vpop.f32.mrb[0].mxu0
      %v5645 = vpop.f32.mrb[0].mxu0
      %v5646 = vadd.f32 0.0, %v5645
      %v5647 = vpop.f32.mrb[0].mxu0
      %5648 = vmatprep.mubr.bf16.mxu0 0
      %5649 = vmatmul.mubr.bf16.gmra.mrb[0].mxu0 %v5438
      %v5650 = vpop.f32.mrb[0].mxu0
      %v5651 = vadd.f32 0.0, %v5650
      %v5652 = vpop.f32.mrb[0].mxu0
      %v5653 = vpop.f32.mrb[0].mxu0
      %v5654 = vadd.f32 0.0, %v5653
      %v5655 = vpop.f32.mrb[0].mxu0
      %5656 = vmatprep.mubr.bf16.mxu0 0
      %5657 = vmatmul.mubr.bf16.gmra.mrb[0].mxu0 %v5439
      %v5658 = vpop.f32.mrb[0].mxu0
      %v5659 = vadd.f32 0.0, %v5658
      %v5660 = vpop.f32.mrb[0].mxu0
      %v5661 = vpop.f32.mrb[0].mxu0
      %v5662 = vadd.f32 0.0, %v5661
      %v5663 = vpop.f32.mrb[0].mxu0
      %5664 = vdwg.mxu0
      %v5665 = vadd.f32 %v5167, %v5539
      %v5666 = vadd.f32 %v5168, %v5542
      %v5667 = vadd.f32 %v5169, %v5547
      %v5668 = vadd.f32 %v5170, %v5550
      %v5669 = vadd.f32 %v5171, %v5555
      %v5670 = vadd.f32 %v5172, %v5558
      %v5671 = vadd.f32 %v5173, %v5563
      %v5672 = vadd.f32 %v5174, %v5566
      %v5673 = vadd.f32 %v5175, %v5571
      %v5674 = vadd.f32 %v5176, %v5574
      %v5675 = vadd.f32 %v5177, %v5579
      %v5676 = vadd.f32 %v5178, %v5582
      %v5677 = vadd.f32 %v5179, %v5587
      %v5678 = vadd.f32 %v5180, %v5590
      %v5679 = vadd.f32 %v5181, %v5595
      %v5680 = vadd.f32 %v5182, %v5598
      %v5681 = vadd.f32 %v5183, %v5603
      %v5682 = vadd.f32 %v5184, %v5606
      %v5683 = vadd.f32 %v5185, %v5611
      %v5684 = vadd.f32 %v5186, %v5614
      %v5685 = vadd.f32 %v5187, %v5619
      %v5686 = vadd.f32 %v5188, %v5622
      %v5687 = vadd.f32 %v5189, %v5627
      %v5688 = vadd.f32 %v5190, %v5630
      %v5689 = vadd.f32 %v5191, %v5635
      %v5690 = vadd.f32 %v5192, %v5638
      %v5691 = vadd.f32 %v5193, %v5643
      %v5692 = vadd.f32 %v5194, %v5646
      %v5693 = vadd.f32 %v5195, %v5651
      %v5694 = vadd.f32 %v5196, %v5654
      %v5695 = vadd.f32 %v5197, %v5659
      %v5696 = vadd.f32 %v5198, %v5662
      %v5697 = vadd.f32 %v5665, %v5666
      %v5698 = vadd.f32 %v5697, %v5667
      %v5699 = vadd.f32 %v5698, %v5668
      %v5700 = vadd.f32 %v5699, %v5669
      %v5701 = vadd.f32 %v5700, %v5670
      %v5702 = vadd.f32 %v5701, %v5671
      %v5703 = vadd.f32 %v5702, %v5672
      %v5704 = vadd.f32 %v5703, %v5673
      %v5705 = vadd.f32 %v5704, %v5674
      %v5706 = vadd.f32 %v5705, %v5675
      %v5707 = vadd.f32 %v5706, %v5676
      %v5708 = vadd.f32 %v5707, %v5677
      %v5709 = vadd.f32 %v5708, %v5678
      %v5710 = vadd.f32 %v5709, %v5679
      %v5711 = vadd.f32 %v5710, %v5680
      %v5712 = vadd.f32 %v5711, %v5681
      %v5713 = vadd.f32 %v5712, %v5682
      %v5714 = vadd.f32 %v5713, %v5683
      %v5715 = vadd.f32 %v5714, %v5684
      %v5716 = vadd.f32 %v5715, %v5685
      %v5717 = vadd.f32 %v5716, %v5686
      %v5718 = vadd.f32 %v5717, %v5687
      %v5719 = vadd.f32 %v5718, %v5688
      %v5720 = vadd.f32 %v5719, %v5689
      %v5721 = vadd.f32 %v5720, %v5690
      %v5722 = vadd.f32 %v5721, %v5691
      %v5723 = vadd.f32 %v5722, %v5692
      %v5724 = vadd.f32 %v5723, %v5693
      %v5725 = vadd.f32 %v5724, %v5694
      %v5726 = vadd.f32 %v5725, %v5695
      %v5727 = vadd.f32 %v5726, %v5696
      %v5728 = vrot.slane %v5727, 4
      %v5729 = vadd.f32 %v5727, %v5728
      %v5730 = vrot.slane %v5729, 2
      %v5731 = vadd.f32 %v5729, %v5730
      %v5732 = vrot.slane %v5731, 1
      %v5733 = vadd.f32 %v5731, %v5732
      %v5734 = vmul.f32 %v5733, 0.00390625
      %v5735 = vsub.f32 %v5665, %v5734
      %v5736 = vsub.f32 %v5666, %v5734
      %v5737 = vsub.f32 %v5667, %v5734
      %v5738 = vsub.f32 %v5668, %v5734
      %v5739 = vsub.f32 %v5669, %v5734
      %v5740 = vsub.f32 %v5670, %v5734
      %v5741 = vsub.f32 %v5671, %v5734
      %v5742 = vsub.f32 %v5672, %v5734
      %v5743 = vsub.f32 %v5673, %v5734
      %v5744 = vsub.f32 %v5674, %v5734
      %v5745 = vsub.f32 %v5675, %v5734
      %v5746 = vsub.f32 %v5676, %v5734
      %v5747 = vsub.f32 %v5677, %v5734
      %v5748 = vsub.f32 %v5678, %v5734
      %v5749 = vsub.f32 %v5679, %v5734
      %v5750 = vsub.f32 %v5680, %v5734
      %v5751 = vsub.f32 %v5681, %v5734
      %v5752 = vsub.f32 %v5682, %v5734
      %v5753 = vsub.f32 %v5683, %v5734
      %v5754 = vsub.f32 %v5684, %v5734
      %v5755 = vsub.f32 %v5685, %v5734
      %v5756 = vsub.f32 %v5686, %v5734
      %v5757 = vsub.f32 %v5687, %v5734
      %v5758 = vsub.f32 %v5688, %v5734
      %v5759 = vsub.f32 %v5689, %v5734
      %v5760 = vsub.f32 %v5690, %v5734
      %v5761 = vsub.f32 %v5691, %v5734
      %v5762 = vsub.f32 %v5692, %v5734
      %v5763 = vsub.f32 %v5693, %v5734
      %v5764 = vsub.f32 %v5694, %v5734
      %v5765 = vsub.f32 %v5695, %v5734
      %v5766 = vsub.f32 %v5696, %v5734
      %v5767 = vmul.f32 %v5735, %v5735
      %v5768 = vmul.f32 %v5736, %v5736
      %v5769 = vmul.f32 %v5737, %v5737
      %v5770 = vmul.f32 %v5738, %v5738
      %v5771 = vmul.f32 %v5739, %v5739
      %v5772 = vmul.f32 %v5740, %v5740
      %v5773 = vmul.f32 %v5741, %v5741
      %v5774 = vmul.f32 %v5742, %v5742
      %v5775 = vmul.f32 %v5743, %v5743
      %v5776 = vmul.f32 %v5744, %v5744
      %v5777 = vmul.f32 %v5745, %v5745
      %v5778 = vmul.f32 %v5746, %v5746
      %v5779 = vmul.f32 %v5747, %v5747
      %v5780 = vmul.f32 %v5748, %v5748
      %v5781 = vmul.f32 %v5749, %v5749
      %v5782 = vmul.f32 %v5750, %v5750
      %v5783 = vmul.f32 %v5751, %v5751
      %v5784 = vmul.f32 %v5752, %v5752
      %v5785 = vmul.f32 %v5753, %v5753
      %v5786 = vmul.f32 %v5754, %v5754
      %v5787 = vmul.f32 %v5755, %v5755
      %v5788 = vmul.f32 %v5756, %v5756
      %v5789 = vmul.f32 %v5757, %v5757
      %v5790 = vmul.f32 %v5758, %v5758
      %v5791 = vmul.f32 %v5759, %v5759
      %v5792 = vmul.f32 %v5760, %v5760
      %v5793 = vmul.f32 %v5761, %v5761
      %v5794 = vmul.f32 %v5762, %v5762
      %v5795 = vmul.f32 %v5763, %v5763
      %v5796 = vmul.f32 %v5764, %v5764
      %v5797 = vmul.f32 %v5765, %v5765
      %v5798 = vmul.f32 %v5766, %v5766
      %v5799 = vadd.f32 %v5767, %v5768
      %v5800 = vadd.f32 %v5799, %v5769
      %v5801 = vadd.f32 %v5800, %v5770
      %v5802 = vadd.f32 %v5801, %v5771
      %v5803 = vadd.f32 %v5802, %v5772
      %v5804 = vadd.f32 %v5803, %v5773
      %v5805 = vadd.f32 %v5804, %v5774
      %v5806 = vadd.f32 %v5805, %v5775
      %v5807 = vadd.f32 %v5806, %v5776
      %v5808 = vadd.f32 %v5807, %v5777
      %v5809 = vadd.f32 %v5808, %v5778
      %v5810 = vadd.f32 %v5809, %v5779
      %v5811 = vadd.f32 %v5810, %v5780
      %v5812 = vadd.f32 %v5811, %v5781
      %v5813 = vadd.f32 %v5812, %v5782
      %v5814 = vadd.f32 %v5813, %v5783
      %v5815 = vadd.f32 %v5814, %v5784
      %v5816 = vadd.f32 %v5815, %v5785
      %v5817 = vadd.f32 %v5816, %v5786
      %v5818 = vadd.f32 %v5817, %v5787
      %v5819 = vadd.f32 %v5818, %v5788
      %v5820 = vadd.f32 %v5819, %v5789
      %v5821 = vadd.f32 %v5820, %v5790
      %v5822 = vadd.f32 %v5821, %v5791
      %v5823 = vadd.f32 %v5822, %v5792
      %v5824 = vadd.f32 %v5823, %v5793
      %v5825 = vadd.f32 %v5824, %v5794
      %v5826 = vadd.f32 %v5825, %v5795
      %v5827 = vadd.f32 %v5826, %v5796
      %v5828 = vadd.f32 %v5827, %v5797
      %v5829 = vadd.f32 %v5828, %v5798
      %v5830 = vrot.slane %v5829, 4
      %v5831 = vadd.f32 %v5829, %v5830
      %v5832 = vrot.slane %v5831, 2
      %v5833 = vadd.f32 %v5831, %v5832
      %v5834 = vrot.slane %v5833, 1
      %v5835 = vadd.f32 %v5833, %v5834
      %5836 = vst [vmem:[%s208] sm:$0xff] %v5665
      %5837 = vst [vmem:[%s208 + $0x8] sm:$0xff] %v5666
      %5838 = vst [vmem:[%s208 + $0x10] sm:$0xff] %v5667
      %5839 = vst [vmem:[%s208 + $0x18] sm:$0xff] %v5668
      %5840 = vst [vmem:[%s208 + $0x20] sm:$0xff] %v5669
      %5841 = vst [vmem:[%s208 + $0x28] sm:$0xff] %v5670
      %5842 = vst [vmem:[%s208 + $0x30] sm:$0xff] %v5671
      %5843 = vst [vmem:[%s208 + $0x38] sm:$0xff] %v5672
      %5844 = vst [vmem:[%s208 + $0x40] sm:$0xff] %v5673
      %5845 = vst [vmem:[%s208 + $0x48] sm:$0xff] %v5674
      %5846 = vst [vmem:[%s208 + $0x50] sm:$0xff] %v5675
      %5847 = vst [vmem:[%s208 + $0x58] sm:$0xff] %v5676
      %5848 = vst [vmem:[%s208 + $0x60] sm:$0xff] %v5677
      %5849 = vst [vmem:[%s208 + $0x68] sm:$0xff] %v5678
      %5850 = vst [vmem:[%s208 + $0x70] sm:$0xff] %v5679
      %5851 = vst [vmem:[%s208 + $0x78] sm:$0xff] %v5680
      %5852 = vst [vmem:[%s208 + $0x80] sm:$0xff] %v5681
      %5853 = vst [vmem:[%s208 + $0x88] sm:$0xff] %v5682
      %5854 = vst [vmem:[%s208 + $0x90] sm:$0xff] %v5683
      %5855 = vst [vmem:[%s208 + $0x98] sm:$0xff] %v5684
      %5856 = vst [vmem:[%s208 + $0xa0] sm:$0xff] %v5685
      %5857 = vst [vmem:[%s208 + $0xa8] sm:$0xff] %v5686
      %5858 = vst [vmem:[%s208 + $0xb0] sm:$0xff] %v5687
      %5859 = vst [vmem:[%s208 + $0xb8] sm:$0xff] %v5688
      %5860 = vst [vmem:[%s208 + $0xc0] sm:$0xff] %v5689
      %5861 = vst [vmem:[%s208 + $0xc8] sm:$0xff] %v5690
      %5862 = vst [vmem:[%s208 + $0xd0] sm:$0xff] %v5691
      %5863 = vst [vmem:[%s208 + $0xd8] sm:$0xff] %v5692
      %5864 = vst [vmem:[%s208 + $0xe0] sm:$0xff] %v5693
      %5865 = vst [vmem:[%s208 + $0xe8] sm:$0xff] %v5694
      %5866 = vst [vmem:[%s208 + $0xf0] sm:$0xff] %v5695
      %5867 = vst [vmem:[%s208 + $0xf8] sm:$0xff] %v5696
      %5868 = vst [vmem:[%s211] sm:$0x1] %v5734
      %5869 = vst [vmem:[%s214] sm:$0x1] %v5835
      %p5870 = scmp.lt.s32.totalorder %s16, 1
      %s5871 = scalar_select %p5870, %s16, 1
      %s5872 = smul.addr %s5871, 32
      %s5873 = smul.addr %s5872, 8
      %s5874 = scalar_lea.vmem %s2, %s5873
      %p5875 = scmp.lt.s32.totalorder %s16, 1
      %s5876 = scalar_select %p5875, %s16, 1
      %s5877 = scalar_lea.vmem %s3, %s5876
      %p5878 = scmp.lt.s32.totalorder %s16, 1
      %s5879 = scalar_select %p5878, %s16, 1
      %s5880 = scalar_lea.vmem %s4, %s5879
      // Predicated region
      $region29: #{basic_block_forward.3} parent=27 // pred_check
        %p5881 = pneg %p81
      $region30: #{basic_block_forward.3} parent=27 // pred_check_branch
        %5883 = sbr.rel (%p5881) target = $region32
      $region31: #{basic_block_forward.3} parent=27 // pred_region
        _
      $region32: #{basic_block_forward.3} parent=27 // pred_fallthru
        _
      // Predicated region
      $region33: #{basic_block_forward.3} parent=27 // pred_check
        %p5884 = pneg %p107
      $region34: #{basic_block_forward.3} parent=27 // pred_check_branch
        %5886 = sbr.rel (%p5884) target = $region36
      $region35: #{basic_block_forward.3} parent=27 // pred_region
        _
      $region36: #{basic_block_forward.3} parent=27 // pred_fallthru
        _
      // Predicated region
      $region37: #{basic_block_forward.3} parent=27 // pred_check
        %p5887 = pneg %p133
      $region38: #{basic_block_forward.3} parent=27 // pred_check_branch
        %5889 = sbr.rel (%p5887) target = $region40
      $region39: #{basic_block_forward.3} parent=27 // pred_region
        _
      $region40: #{basic_block_forward.3} parent=27 // pred_fallthru
        _
    $region28: #{basic_block_forward.3} parent=5 // pred_fallthru
      _
    %p5890 = scmp.le.s32.totalorder 2, %s11
    // Predicated region
    $region41: #{basic_block_forward.3} parent=5 // pred_check
      %p5891 = pneg %p5890
    $region42: #{basic_block_forward.3} parent=5 // pred_check_branch
      %5893 = sbr.rel (%p5891) target = $region44
    $region43: #{basic_block_forward.3} parent=5 // pred_region
      %s5894 = ssub.s32 %s11, 2
      // Predicated region
      $region45: #{basic_block_forward.3} parent=43 // pred_check
        %p5895 = pneg %p87
      $region46: #{basic_block_forward.3} parent=43 // pred_check_branch
        %5897 = sbr.rel (%p5895) target = $region48
      $region47: #{basic_block_forward.3} parent=43 // pred_region
        %p5898 = scmp.lt.s32.totalorder %s17, 1
        %s5899 = scalar_select %p5898, %s17, 1
        %s5900 = smul.addr %s5899, 32
        %s5901 = smul.addr %s5900, 8
        %s5902 = scalar_lea.vmem %s2, %s5901
      $region48: #{basic_block_forward.3} parent=43 // pred_fallthru
        _
      // Predicated region
      $region49: #{basic_block_forward.3} parent=43 // pred_check
        %p5903 = pneg %p113
      $region50: #{basic_block_forward.3} parent=43 // pred_check_branch
        %5905 = sbr.rel (%p5903) target = $region52
      $region51: #{basic_block_forward.3} parent=43 // pred_region
        %p5906 = scmp.lt.s32.totalorder %s17, 1
        %s5907 = scalar_select %p5906, %s17, 1
        %s5908 = scalar_lea.vmem %s3, %s5907
      $region52: #{basic_block_forward.3} parent=43 // pred_fallthru
        _
      // Predicated region
      $region53: #{basic_block_forward.3} parent=43 // pred_check
        %p5909 = pneg %p139
      $region54: #{basic_block_forward.3} parent=43 // pred_check_branch
        %5911 = sbr.rel (%p5909) target = $region56
      $region55: #{basic_block_forward.3} parent=43 // pred_region
        %p5912 = scmp.lt.s32.totalorder %s17, 1
        %s5913 = scalar_select %p5912, %s17, 1
        %s5914 = scalar_lea.vmem %s4, %s5913
      $region56: #{basic_block_forward.3} parent=43 // pred_fallthru
        _
    $region44: #{basic_block_forward.3} parent=5 // pred_fallthru
      _
  $region6: #{basic_block_forward.3} parent=0 // loop_footer
    %s15 = sadd.s32 1, %s11
  $region7: #{basic_block_forward.3} parent=0 // loop_footer_branch
    %10 = sbr.rel target = $region3
  $region8: #{basic_block_forward.3} parent=0 // loop_exit
    _

// kernel: basic_block_forward.4
$region0: #{basic_block_forward.4}
  #allocation0 [shape = 'u32[]', space=smem, size = 0x4, offset = 0x4, fixed_abs, tag = 'smem constant byte address 0x4 - core index']
  #allocation1 [shape = 'u32[144,128]{1,0:T(1,128)}', space=vmem, size = 0x12000, scoped, tag = 'internal scratch']
  #allocation2 [shape = 'bf16[18,18,128]{2,1,0:T(8,128)(2,1)}', space=vmem, size = 0x1b000, scoped, tag = 'scratch operand']
  %s0 = inlined_call_operand.vmem [shape: f32[2,16,16,128], index: 0, kind: input, shape index: {}]
  %s1 = inlined_call_operand.vmem [shape: f32[1,128], index: 1, kind: input, shape index: {}]
  %s2 = inlined_call_operand.vmem [shape: f32[1,128], index: 2, kind: input, shape index: {}]
  %s3 = inlined_call_operand.vmem [shape: bf16[3,3,128,128], index: 3, kind: input, shape index: {}]
  %s4 = inlined_call_operand.vmem [shape: f32[2,16,16,128], index: 4, kind: output, shape index: {0}]
  %s5 = inlined_call_operand.vmem [shape: f32[2,1,128], index: 5, kind: output, shape index: {1}]
  %s6 = inlined_call_operand.vmem [shape: f32[2,1,128], index: 6, kind: output, shape index: {2}]
  %7 = xla_tuple %s4, %s5, %s6
  %s8 = sld [smem:[#allocation0]]
  $region65: #{basic_block_forward.4} parent=0
    _
  %s10 = ssub.s32 1, %s8
  %s11 = scalar_select 0, %s10, %s8
  loop: start=0, step=1, limit=4
  $region2: #{basic_block_forward.4} parent=0 // loop_pre_header
    _
  $region3: #{basic_block_forward.4} parent=0 // loop_header
    %s13 = sphi 0, %s17
    %p14 = scmp.ge.s32.totalorder %s13, 4
    %s23 = sphi 0, %s25
    %s26 = sphi 0, %s23
    %s27 = sphi 0, %s26
    %s43 = sphi 0, %s27
    %s47 = sphi 0, %s47
    %s49 = sphi 0, %s47
    %s50 = sphi 0, %s49
    %s64 = sphi 0, %s50
    %s68 = sphi 0, %s68
    %s70 = sphi 0, %s68
    %s71 = sphi 0, %s70
    %s85 = sphi 0, %s71
    %s89 = sphi 0, %s89
    %s91 = sphi 0, %s89
    %s92 = sphi 0, %s91
    %s106 = sphi 0, %s92
    %s112 = sphi 0, %s114
    %s115 = sphi 0, %s112
    %s116 = sphi 0, %s115
    %s132 = sphi 0, %s116
    %s138 = sphi 0, %s140
    %s141 = sphi 0, %s138
    %s142 = sphi 0, %s141
    %s158 = sphi 0, %s142
    %s164 = sphi 0, %s166
    %s167 = sphi 0, %s164
    %s168 = sphi 0, %s167
    %s184 = sphi 0, %s168
  $region4: #{basic_block_forward.4} parent=0 // loop_header_branch
    %16 = sbr.rel (%p14) target = $region8
  $region5: #{basic_block_forward.4} parent=0 // loop_body
    %s18 = ssub.s32 %s13, 1
    %s19 = ssub.s32 %s13, 2
    %s20 = sadd.s32 %s13, 1
    %s21 = ssub.s32 %s13, %s20
    %p22 = scmp.eq.s32.totalorder %s21, 0
    %s24 = sadd.s32 %s23, 1
    %s25 = scalar_select %p22, %s23, %s24
    %p28 = pneg %p22
    %p29 = scmp.eq.s32.totalorder %s13, 1
    %p30 = por %p28, %p29
    %p31 = scmp.ne.s32.totalorder %s23, %s26
    %p32 = scmp.eq.s32.totalorder %s13, 0
    %p33 = por %p31, %p32
    %p34 = scmp.ne.s32.totalorder %s23, %s26
    %p35 = scmp.eq.s32.totalorder %s18, 1
    %p36 = por %p34, %p35
    %p37 = scmp.ne.s32.totalorder %s26, %s27
    %p38 = scmp.eq.s32.totalorder %s18, 0
    %p39 = por %p37, %p38
    %p40 = scmp.ne.s32.totalorder %s26, %s27
    %p41 = scmp.eq.s32.totalorder %s19, 1
    %p42 = por %p40, %p41
    %p44 = scmp.ne.s32.totalorder %s27, %s43
    %p45 = scmp.eq.s32.totalorder %s19, 0
    %p46 = por %p44, %p45
    %s48 = sadd.s32 %s47, 1
    %p51 = scmp.eq.s32.totalorder %s13, 1
    %p52 = scmp.ne.s32.totalorder %s47, %s49
    %p53 = scmp.eq.s32.totalorder %s13, 0
    %p54 = por %p52, %p53
    %p55 = scmp.ne.s32.totalorder %s47, %s49
    %p56 = scmp.eq.s32.totalorder %s18, 1
    %p57 = por %p55, %p56
    %p58 = scmp.ne.s32.totalorder %s49, %s50
    %p59 = scmp.eq.s32.totalorder %s18, 0
    %p60 = por %p58, %p59
    %p61 = scmp.ne.s32.totalorder %s49, %s50
    %p62 = scmp.eq.s32.totalorder %s19, 1
    %p63 = por %p61, %p62
    %p65 = scmp.ne.s32.totalorder %s50, %s64
    %p66 = scmp.eq.s32.totalorder %s19, 0
    %p67 = por %p65, %p66
    %s69 = sadd.s32 %s68, 1
    %p72 = scmp.eq.s32.totalorder %s13, 1
    %p73 = scmp.ne.s32.totalorder %s68, %s70
    %p74 = scmp.eq.s32.totalorder %s13, 0
    %p75 = por %p73, %p74
    %p76 = scmp.ne.s32.totalorder %s68, %s70
    %p77 = scmp.eq.s32.totalorder %s18, 1
    %p78 = por %p76, %p77
    %p79 = scmp.ne.s32.totalorder %s70, %s71
    %p80 = scmp.eq.s32.totalorder %s18, 0
    %p81 = por %p79, %p80
    %p82 = scmp.ne.s32.totalorder %s70, %s71
    %p83 = scmp.eq.s32.totalorder %s19, 1
    %p84 = por %p82, %p83
    %p86 = scmp.ne.s32.totalorder %s71, %s85
    %p87 = scmp.eq.s32.totalorder %s19, 0
    %p88 = por %p86, %p87
    %s90 = sadd.s32 %s89, 1
    %p93 = scmp.eq.s32.totalorder %s13, 1
    %p94 = scmp.ne.s32.totalorder %s89, %s91
    %p95 = scmp.eq.s32.totalorder %s13, 0
    %p96 = por %p94, %p95
    %p97 = scmp.ne.s32.totalorder %s89, %s91
    %p98 = scmp.eq.s32.totalorder %s18, 1
    %p99 = por %p97, %p98
    %p100 = scmp.ne.s32.totalorder %s91, %s92
    %p101 = scmp.eq.s32.totalorder %s18, 0
    %p102 = por %p100, %p101
    %p103 = scmp.ne.s32.totalorder %s91, %s92
    %p104 = scmp.eq.s32.totalorder %s19, 1
    %p105 = por %p103, %p104
    %p107 = scmp.ne.s32.totalorder %s92, %s106
    %p108 = scmp.eq.s32.totalorder %s19, 0
    %p109 = por %p107, %p108
    %s110 = ssub.s32 %s13, %s20
    %p111 = scmp.eq.s32.totalorder %s110, 0
    %s113 = sadd.s32 %s112, 1
    %s114 = scalar_select %p111, %s112, %s113
    %p117 = pneg %p111
    %p118 = scmp.eq.s32.totalorder %s13, 1
    %p119 = por %p117, %p118
    %p120 = scmp.ne.s32.totalorder %s112, %s115
    %p121 = scmp.eq.s32.totalorder %s13, 0
    %p122 = por %p120, %p121
    %p123 = scmp.ne.s32.totalorder %s112, %s115
    %p124 = scmp.eq.s32.totalorder %s18, 1
    %p125 = por %p123, %p124
    %p126 = scmp.ne.s32.totalorder %s115, %s116
    %p127 = scmp.eq.s32.totalorder %s18, 0
    %p128 = por %p126, %p127
    %p129 = scmp.ne.s32.totalorder %s115, %s116
    %p130 = scmp.eq.s32.totalorder %s19, 1
    %p131 = por %p129, %p130
    %p133 = scmp.ne.s32.totalorder %s116, %s132
    %p134 = scmp.eq.s32.totalorder %s19, 0
    %p135 = por %p133, %p134
    %s136 = ssub.s32 %s13, %s20
    %p137 = scmp.eq.s32.totalorder %s136, 0
    %s139 = sadd.s32 %s138, 1
    %s140 = scalar_select %p137, %s138, %s139
    %p143 = pneg %p137
    %p144 = scmp.eq.s32.totalorder %s13, 1
    %p145 = por %p143, %p144
    %p146 = scmp.ne.s32.totalorder %s138, %s141
    %p147 = scmp.eq.s32.totalorder %s13, 0
    %p148 = por %p146, %p147
    %p149 = scmp.ne.s32.totalorder %s138, %s141
    %p150 = scmp.eq.s32.totalorder %s18, 1
    %p151 = por %p149, %p150
    %p152 = scmp.ne.s32.totalorder %s141, %s142
    %p153 = scmp.eq.s32.totalorder %s18, 0
    %p154 = por %p152, %p153
    %p155 = scmp.ne.s32.totalorder %s141, %s142
    %p156 = scmp.eq.s32.totalorder %s19, 1
    %p157 = por %p155, %p156
    %p159 = scmp.ne.s32.totalorder %s142, %s158
    %p160 = scmp.eq.s32.totalorder %s19, 0
    %p161 = por %p159, %p160
    %s162 = ssub.s32 %s13, %s20
    %p163 = scmp.eq.s32.totalorder %s162, 0
    %s165 = sadd.s32 %s164, 1
    %s166 = scalar_select %p163, %s164, %s165
    %p169 = pneg %p163
    %p170 = scmp.eq.s32.totalorder %s13, 1
    %p171 = por %p169, %p170
    %p172 = scmp.ne.s32.totalorder %s164, %s167
    %p173 = scmp.eq.s32.totalorder %s13, 0
    %p174 = por %p172, %p173
    %p175 = scmp.ne.s32.totalorder %s164, %s167
    %p176 = scmp.eq.s32.totalorder %s18, 1
    %p177 = por %p175, %p176
    %p178 = scmp.ne.s32.totalorder %s167, %s168
    %p179 = scmp.eq.s32.totalorder %s18, 0
    %p180 = por %p178, %p179
    %p181 = scmp.ne.s32.totalorder %s167, %s168
    %p182 = scmp.eq.s32.totalorder %s19, 1
    %p183 = por %p181, %p182
    %p185 = scmp.ne.s32.totalorder %s168, %s184
    %p186 = scmp.eq.s32.totalorder %s19, 0
    %p187 = por %p185, %p186
    %p188 = scmp.le.s32.totalorder 1, %s13
    %p189 = scmp.lt.s32.totalorder %s13, 3
    %p190 = pnand %p188, %p189
    %p191 = pneg %p190
    // Predicated region
    $region9: #{basic_block_forward.4} parent=5 // pred_check
      _
    $region10: #{basic_block_forward.4} parent=5 // pred_check_branch
      %193 = sbr.rel (%p190) target = $region12
    $region11: #{basic_block_forward.4} parent=5 // pred_region
      %s194 = ssub.s32 %s13, 1
      // Predicated region
      $region13: #{basic_block_forward.4} parent=11 // pred_check
        %p195 = pneg %p60
      $region14: #{basic_block_forward.4} parent=11 // pred_check_branch
        %197 = sbr.rel (%p195) target = $region16
      $region15: #{basic_block_forward.4} parent=11 // pred_region
        _
      $region16: #{basic_block_forward.4} parent=11 // pred_fallthru
        _
      // Predicated region
      $region17: #{basic_block_forward.4} parent=11 // pred_check
        %p198 = pneg %p81
      $region18: #{basic_block_forward.4} parent=11 // pred_check_branch
        %200 = sbr.rel (%p198) target = $region20
      $region19: #{basic_block_forward.4} parent=11 // pred_region
        _
      $region20: #{basic_block_forward.4} parent=11 // pred_fallthru
        _
      // Predicated region
      $region21: #{basic_block_forward.4} parent=11 // pred_check
        %p201 = pneg %p102
      $region22: #{basic_block_forward.4} parent=11 // pred_check_branch
        %203 = sbr.rel (%p201) target = $region24
      $region23: #{basic_block_forward.4} parent=11 // pred_region
        _
      $region24: #{basic_block_forward.4} parent=11 // pred_fallthru
        _
    $region12: #{basic_block_forward.4} parent=5 // pred_fallthru
      _
    %p204 = scmp.lt.s32.totalorder %s13, 2
    // Predicated region
    $region25: #{basic_block_forward.4} parent=5 // pred_check
      %p205 = pneg %p204
    $region26: #{basic_block_forward.4} parent=5 // pred_check_branch
      %207 = sbr.rel (%p205) target = $region28
    $region27: #{basic_block_forward.4} parent=5 // pred_region
      // Predicated region
      $region29: #{basic_block_forward.4} parent=27 // pred_check
        %p208 = pneg %p33
      $region30: #{basic_block_forward.4} parent=27 // pred_check_branch
        %210 = sbr.rel (%p208) target = $region32
      $region31: #{basic_block_forward.4} parent=27 // pred_region
        %p211 = scmp.lt.s32.totalorder %s13, 1
        %s212 = scalar_select %p211, %s13, 1
        %s213 = smul.addr %s212, 32
        %s214 = smul.addr %s213, 8
        %s215 = scalar_lea.vmem %s0, %s214
      $region32: #{basic_block_forward.4} parent=27 // pred_fallthru
        _
    $region28: #{basic_block_forward.4} parent=5 // pred_fallthru
      _
    %p216 = scmp.le.s32.totalorder 1, %s13
    %p217 = scmp.lt.s32.totalorder %s13, 3
    %p218 = pnand %p216, %p217
    %p219 = pneg %p218
    // Predicated region
    $region33: #{basic_block_forward.4} parent=5 // pred_check
      _
    $region34: #{basic_block_forward.4} parent=5 // pred_check_branch
      %221 = sbr.rel (%p218) target = $region36
    $region35: #{basic_block_forward.4} parent=5 // pred_region
      %s222 = ssub.s32 %s13, 1
      %p223 = scmp.lt.s32.totalorder %s18, 1
      %s224 = scalar_select %p223, %s18, 1
      %s225 = smul.addr %s224, 32
      %s226 = smul.addr %s225, 8
      %s227 = scalar_lea.vmem %s0, %s226
      %p228 = pneg %p39
      %p229 = pneg %p36
      %p230 = pneg %p60
      %p231 = pneg %p57
      %p232 = pneg %p81
      %p233 = pneg %p78
      %p234 = pneg %p102
      %p235 = pneg %p99
      %p236 = pneg %p128
      %p237 = pneg %p125
      %p238 = scmp.lt.s32.totalorder %s18, 1
      %s239 = scalar_select %p238, %s18, 1
      %s240 = smul.addr %s239, 32
      %s241 = smul.addr %s240, 8
      %s242 = scalar_lea.vmem %s4, %s241
      %p243 = pneg %p154
      %p244 = pneg %p151
      %p245 = scmp.lt.s32.totalorder %s18, 1
      %s246 = scalar_select %p245, %s18, 1
      %s247 = scalar_lea.vmem %s5, %s246
      %p248 = pneg %p180
      %p249 = pneg %p177
      %p250 = scmp.lt.s32.totalorder %s18, 1
      %s251 = scalar_select %p250, %s18, 1
      %s252 = scalar_lea.vmem %s6, %s251
      %p253 = scmp.lt.s32.totalorder %s18, 1
      %s254 = scalar_select %p253, %s18, 1
      %s255 = smul.addr %s254, 32
      %s256 = smul.addr %s255, 8
      %s257 = scalar_lea.vmem %s0, %s256
      %p258 = scmp.lt.s32.totalorder %s18, 1
      %s259 = scalar_select %p258, %s18, 1
      %s260 = smul.addr %s259, 32
      %s261 = smul.addr %s260, 8
      %s262 = scalar_lea.vmem %s4, %s261
      %p263 = scmp.lt.s32.totalorder %s18, 1
      %s264 = scalar_select %p263, %s18, 1
      %s265 = scalar_lea.vmem %s5, %s264
      %p266 = scmp.lt.s32.totalorder %s18, 1
      %s267 = scalar_select %p266, %s18, 1
      %s268 = scalar_lea.vmem %s6, %s267
      %v270 = vld [vmem:[%s257] sm:$0xff]
      %v271 = vld [vmem:[%s257 + $0x8] sm:$0xff]
      %v272 = vld [vmem:[%s257 + $0x10] sm:$0xff]
      %v273 = vld [vmem:[%s257 + $0x18] sm:$0xff]
      %v274 = vld [vmem:[%s257 + $0x20] sm:$0xff]
      %v275 = vld [vmem:[%s257 + $0x28] sm:$0xff]
      %v276 = vld [vmem:[%s257 + $0x30] sm:$0xff]
      %v277 = vld [vmem:[%s257 + $0x38] sm:$0xff]
      %v278 = vld [vmem:[%s257 + $0x40] sm:$0xff]
      %v279 = vld [vmem:[%s257 + $0x48] sm:$0xff]
      %v280 = vld [vmem:[%s257 + $0x50] sm:$0xff]
      %v281 = vld [vmem:[%s257 + $0x58] sm:$0xff]
      %v282 = vld [vmem:[%s257 + $0x60] sm:$0xff]
      %v283 = vld [vmem:[%s257 + $0x68] sm:$0xff]
      %v284 = vld [vmem:[%s257 + $0x70] sm:$0xff]
      %v285 = vld [vmem:[%s257 + $0x78] sm:$0xff]
      %v286 = vld [vmem:[%s257 + $0x80] sm:$0xff]
      %v287 = vld [vmem:[%s257 + $0x88] sm:$0xff]
      %v288 = vld [vmem:[%s257 + $0x90] sm:$0xff]
      %v289 = vld [vmem:[%s257 + $0x98] sm:$0xff]
      %v290 = vld [vmem:[%s257 + $0xa0] sm:$0xff]
      %v291 = vld [vmem:[%s257 + $0xa8] sm:$0xff]
      %v292 = vld [vmem:[%s257 + $0xb0] sm:$0xff]
      %v293 = vld [vmem:[%s257 + $0xb8] sm:$0xff]
      %v294 = vld [vmem:[%s257 + $0xc0] sm:$0xff]
      %v295 = vld [vmem:[%s257 + $0xc8] sm:$0xff]
      %v296 = vld [vmem:[%s257 + $0xd0] sm:$0xff]
      %v297 = vld [vmem:[%s257 + $0xd8] sm:$0xff]
      %v298 = vld [vmem:[%s257 + $0xe0] sm:$0xff]
      %v299 = vld [vmem:[%s257 + $0xe8] sm:$0xff]
      %v300 = vld [vmem:[%s257 + $0xf0] sm:$0xff]
      %v301 = vld [vmem:[%s257 + $0xf8] sm:$0xff]
      %v302 = vld [vmem:[%s1] sm:$0x1]
      %v304 = vlaneseq
      %v305 = vshrl.u32 %v304, 7
      %v306 = vsub.s32 0, %v305
      %v307 = vrot.slane %v302, %v306
      %v309 = vmul.f32 %v270, %v307
      %v310 = vmul.f32 %v271, %v307
      %v311 = vmul.f32 %v272, %v307
      %v312 = vmul.f32 %v273, %v307
      %v313 = vmul.f32 %v274, %v307
      %v314 = vmul.f32 %v275, %v307
      %v315 = vmul.f32 %v276, %v307
      %v316 = vmul.f32 %v277, %v307
      %v317 = vmul.f32 %v278, %v307
      %v318 = vmul.f32 %v279, %v307
      %v319 = vmul.f32 %v280, %v307
      %v320 = vmul.f32 %v281, %v307
      %v321 = vmul.f32 %v282, %v307
      %v322 = vmul.f32 %v283, %v307
      %v323 = vmul.f32 %v284, %v307
      %v324 = vmul.f32 %v285, %v307
      %v325 = vmul.f32 %v286, %v307
      %v326 = vmul.f32 %v287, %v307
      %v327 = vmul.f32 %v288, %v307
      %v328 = vmul.f32 %v289, %v307
      %v329 = vmul.f32 %v290, %v307
      %v330 = vmul.f32 %v291, %v307
      %v331 = vmul.f32 %v292, %v307
      %v332 = vmul.f32 %v293, %v307
      %v333 = vmul.f32 %v294, %v307
      %v334 = vmul.f32 %v295, %v307
      %v335 = vmul.f32 %v296, %v307
      %v336 = vmul.f32 %v297, %v307
      %v337 = vmul.f32 %v298, %v307
      %v338 = vmul.f32 %v299, %v307
      %v339 = vmul.f32 %v300, %v307
      %v340 = vmul.f32 %v301, %v307
      %v341 = vld [vmem:[%s2] sm:$0x1]
      %v343 = vlaneseq
      %v344 = vshrl.u32 %v343, 7
      %v345 = vsub.s32 0, %v344
      %v346 = vrot.slane %v341, %v345
      %v348 = vadd.f32 %v309, %v346
      %v349 = vadd.f32 %v310, %v346
      %v350 = vadd.f32 %v311, %v346
      %v351 = vadd.f32 %v312, %v346
      %v352 = vadd.f32 %v313, %v346
      %v353 = vadd.f32 %v314, %v346
      %v354 = vadd.f32 %v315, %v346
      %v355 = vadd.f32 %v316, %v346
      %v356 = vadd.f32 %v317, %v346
      %v357 = vadd.f32 %v318, %v346
      %v358 = vadd.f32 %v319, %v346
      %v359 = vadd.f32 %v320, %v346
      %v360 = vadd.f32 %v321, %v346
      %v361 = vadd.f32 %v322, %v346
      %v362 = vadd.f32 %v323, %v346
      %v363 = vadd.f32 %v324, %v346
      %v364 = vadd.f32 %v325, %v346
      %v365 = vadd.f32 %v326, %v346
      %v366 = vadd.f32 %v327, %v346
      %v367 = vadd.f32 %v328, %v346
      %v368 = vadd.f32 %v329, %v346
      %v369 = vadd.f32 %v330, %v346
      %v370 = vadd.f32 %v331, %v346
      %v371 = vadd.f32 %v332, %v346
      %v372 = vadd.f32 %v333, %v346
      %v373 = vadd.f32 %v334, %v346
      %v374 = vadd.f32 %v335, %v346
      %v375 = vadd.f32 %v336, %v346
      %v376 = vadd.f32 %v337, %v346
      %v377 = vadd.f32 %v338, %v346
      %v378 = vadd.f32 %v339, %v346
      %v379 = vadd.f32 %v340, %v346
      %v380 = vmax.f32 %v348, 0.0
      %v381 = vmax.f32 %v349, 0.0
      %v382 = vmax.f32 %v350, 0.0
      %v383 = vmax.f32 %v351, 0.0
      %v384 = vmax.f32 %v352, 0.0
      %v385 = vmax.f32 %v353, 0.0
      %v386 = vmax.f32 %v354, 0.0
      %v387 = vmax.f32 %v355, 0.0
      %v388 = vmax.f32 %v356, 0.0
      %v389 = vmax.f32 %v357, 0.0
      %v390 = vmax.f32 %v358, 0.0
      %v391 = vmax.f32 %v359, 0.0
      %v392 = vmax.f32 %v360, 0.0
      %v393 = vmax.f32 %v361, 0.0
      %v394 = vmax.f32 %v362, 0.0
      %v395 = vmax.f32 %v363, 0.0
      %v396 = vmax.f32 %v364, 0.0
      %v397 = vmax.f32 %v365, 0.0
      %v398 = vmax.f32 %v366, 0.0
      %v399 = vmax.f32 %v367, 0.0
      %v400 = vmax.f32 %v368, 0.0
      %v401 = vmax.f32 %v369, 0.0
      %v402 = vmax.f32 %v370, 0.0
      %v403 = vmax.f32 %v371, 0.0
      %v404 = vmax.f32 %v372, 0.0
      %v405 = vmax.f32 %v373, 0.0
      %v406 = vmax.f32 %v374, 0.0
      %v407 = vmax.f32 %v375, 0.0
      %v408 = vmax.f32 %v376, 0.0
      %v409 = vmax.f32 %v377, 0.0
      %v410 = vmax.f32 %v378, 0.0
      %v411 = vmax.f32 %v379, 0.0
      %v412 = vpack.c.bf16 %v381, %v380
      %v413 = vpack.c.bf16 %v383, %v382
      %v414 = vpack.c.bf16 %v385, %v384
      %v415 = vpack.c.bf16 %v387, %v386
      %v416 = vpack.c.bf16 %v389, %v388
      %v417 = vpack.c.bf16 %v391, %v390
      %v418 = vpack.c.bf16 %v393, %v392
      %v419 = vpack.c.bf16 %v395, %v394
      %v420 = vpack.c.bf16 %v397, %v396
      %v421 = vpack.c.bf16 %v399, %v398
      %v422 = vpack.c.bf16 %v401, %v400
      %v423 = vpack.c.bf16 %v403, %v402
      %v424 = vpack.c.bf16 %v405, %v404
      %v425 = vpack.c.bf16 %v407, %v406
      %v426 = vpack.c.bf16 %v409, %v408
      %v427 = vpack.c.bf16 %v411, %v410
      %428 = vst [vmem:[#allocation2] sm:$0xf] 0
      %429 = vst [vmem:[#allocation2 + $0x4] sm:$0xf] 0
      %430 = vst [vmem:[#allocation2 + $0x8] sm:$0x1] 0
      %s431 = scalar_lea.vmem [#allocation2], 204
      %432 = vst [vmem:[%s431] sm:$0xf] 0
      %433 = vst [vmem:[%s431 + $0x4] sm:$0xf] 0
      %434 = vst [vmem:[%s431 + $0x8] sm:$0x1] 0
      %s435 = scalar_lea.vmem [#allocation2], 12
      %vm436 = vcmask 1040384
      %vm437 = vsmask.f32 256
      %vm438 = vmand %vm436, %vm437
      %v439 = vld [vmem:[%s435] sm:$0x1]
      %v440 = vsel %vm438, 0, %v439
      %441 = vst [vmem:[%s435] sm:$0x1] %v440
      %v442 = vld [vmem:[%s435 + $0xc] sm:$0x1]
      %v443 = vsel %vm438, 0, %v442
      %444 = vst [vmem:[%s435 + $0xc] sm:$0x1] %v443
      %v445 = vld [vmem:[%s435 + $0x18] sm:$0x1]
      %v446 = vsel %vm438, 0, %v445
      %447 = vst [vmem:[%s435 + $0x18] sm:$0x1] %v446
      %v448 = vld [vmem:[%s435 + $0x24] sm:$0x1]
      %v449 = vsel %vm438, 0, %v448
      %450 = vst [vmem:[%s435 + $0x24] sm:$0x1] %v449
      %v451 = vld [vmem:[%s435 + $0x30] sm:$0x1]
      %v452 = vsel %vm438, 0, %v451
      %453 = vst [vmem:[%s435 + $0x30] sm:$0x1] %v452
      %v454 = vld [vmem:[%s435 + $0x3c] sm:$0x1]
      %v455 = vsel %vm438, 0, %v454
      %456 = vst [vmem:[%s435 + $0x3c] sm:$0x1] %v455
      %v457 = vld [vmem:[%s435 + $0x48] sm:$0x1]
      %v458 = vsel %vm438, 0, %v457
      %459 = vst [vmem:[%s435 + $0x48] sm:$0x1] %v458
      %v460 = vld [vmem:[%s435 + $0x54] sm:$0x1]
      %v461 = vsel %vm438, 0, %v460
      %462 = vst [vmem:[%s435 + $0x54] sm:$0x1] %v461
      %v463 = vld [vmem:[%s435 + $0x60] sm:$0x1]
      %v464 = vsel %vm438, 0, %v463
      %465 = vst [vmem:[%s435 + $0x60] sm:$0x1] %v464
      %v466 = vld [vmem:[%s435 + $0x6c] sm:$0x1]
      %v467 = vsel %vm438, 0, %v466
      %468 = vst [vmem:[%s435 + $0x6c] sm:$0x1] %v467
      %v469 = vld [vmem:[%s435 + $0x78] sm:$0x1]
      %v470 = vsel %vm438, 0, %v469
      %471 = vst [vmem:[%s435 + $0x78] sm:$0x1] %v470
      %v472 = vld [vmem:[%s435 + $0x84] sm:$0x1]
      %v473 = vsel %vm438, 0, %v472
      %474 = vst [vmem:[%s435 + $0x84] sm:$0x1] %v473
      %v475 = vld [vmem:[%s435 + $0x90] sm:$0x1]
      %v476 = vsel %vm438, 0, %v475
      %477 = vst [vmem:[%s435 + $0x90] sm:$0x1] %v476
      %v478 = vld [vmem:[%s435 + $0x9c] sm:$0x1]
      %v479 = vsel %vm438, 0, %v478
      %480 = vst [vmem:[%s435 + $0x9c] sm:$0x1] %v479
      %v481 = vld [vmem:[%s435 + $0xa8] sm:$0x1]
      %v482 = vsel %vm438, 0, %v481
      %483 = vst [vmem:[%s435 + $0xa8] sm:$0x1] %v482
      %v484 = vld [vmem:[%s435 + $0xb4] sm:$0x1]
      %v485 = vsel %vm438, 0, %v484
      %486 = vst [vmem:[%s435 + $0xb4] sm:$0x1] %v485
      %vm487 = vsmask.f32 7938
      %vm488 = vmand %vm436, %vm487
      %v489 = vld [vmem:[%s435 + $0x8] sm:$0x1]
      %v490 = vsel %vm488, 0, %v489
      %491 = vst [vmem:[%s435 + $0x8] sm:$0x1] %v490
      %v492 = vld [vmem:[%s435 + $0x14] sm:$0x1]
      %v493 = vsel %vm488, 0, %v492
      %494 = vst [vmem:[%s435 + $0x14] sm:$0x1] %v493
      %v495 = vld [vmem:[%s435 + $0x20] sm:$0x1]
      %v496 = vsel %vm488, 0, %v495
      %497 = vst [vmem:[%s435 + $0x20] sm:$0x1] %v496
      %v498 = vld [vmem:[%s435 + $0x2c] sm:$0x1]
      %v499 = vsel %vm488, 0, %v498
      %500 = vst [vmem:[%s435 + $0x2c] sm:$0x1] %v499
      %v501 = vld [vmem:[%s435 + $0x38] sm:$0x1]
      %v502 = vsel %vm488, 0, %v501
      %503 = vst [vmem:[%s435 + $0x38] sm:$0x1] %v502
      %v504 = vld [vmem:[%s435 + $0x44] sm:$0x1]
      %v505 = vsel %vm488, 0, %v504
      %506 = vst [vmem:[%s435 + $0x44] sm:$0x1] %v505
      %v507 = vld [vmem:[%s435 + $0x50] sm:$0x1]
      %v508 = vsel %vm488, 0, %v507
      %509 = vst [vmem:[%s435 + $0x50] sm:$0x1] %v508
      %v510 = vld [vmem:[%s435 + $0x5c] sm:$0x1]
      %v511 = vsel %vm488, 0, %v510
      %512 = vst [vmem:[%s435 + $0x5c] sm:$0x1] %v511
      %v513 = vld [vmem:[%s435 + $0x68] sm:$0x1]
      %v514 = vsel %vm488, 0, %v513
      %515 = vst [vmem:[%s435 + $0x68] sm:$0x1] %v514
      %v516 = vld [vmem:[%s435 + $0x74] sm:$0x1]
      %v517 = vsel %vm488, 0, %v516
      %518 = vst [vmem:[%s435 + $0x74] sm:$0x1] %v517
      %v519 = vld [vmem:[%s435 + $0x80] sm:$0x1]
      %v520 = vsel %vm488, 0, %v519
      %521 = vst [vmem:[%s435 + $0x80] sm:$0x1] %v520
      %v522 = vld [vmem:[%s435 + $0x8c] sm:$0x1]
      %v523 = vsel %vm488, 0, %v522
      %524 = vst [vmem:[%s435 + $0x8c] sm:$0x1] %v523
      %v525 = vld [vmem:[%s435 + $0x98] sm:$0x1]
      %v526 = vsel %vm488, 0, %v525
      %527 = vst [vmem:[%s435 + $0x98] sm:$0x1] %v526
      %v528 = vld [vmem:[%s435 + $0xa4] sm:$0x1]
      %v529 = vsel %vm488, 0, %v528
      %530 = vst [vmem:[%s435 + $0xa4] sm:$0x1] %v529
      %v531 = vld [vmem:[%s435 + $0xb0] sm:$0x1]
      %v532 = vsel %vm488, 0, %v531
      %533 = vst [vmem:[%s435 + $0xb0] sm:$0x1] %v532
      %v534 = vld [vmem:[%s435 + $0xbc] sm:$0x1]
      %v535 = vsel %vm488, 0, %v534
      %536 = vst [vmem:[%s435 + $0xbc] sm:$0x1] %v535
      %v553 = vunpack.c.l.b16 %v412
      %v554 = vunpack.c.h.b16 %v412
      %v555 = vunpack.c.l.b16 %v413
      %v556 = vunpack.c.h.b16 %v413
      %v557 = vunpack.c.l.b16 %v414
      %v558 = vunpack.c.h.b16 %v414
      %v559 = vunpack.c.l.b16 %v415
      %v560 = vunpack.c.h.b16 %v415
      %v561 = vunpack.c.l.b16 %v416
      %v562 = vunpack.c.h.b16 %v416
      %v563 = vunpack.c.l.b16 %v417
      %v564 = vunpack.c.h.b16 %v417
      %v565 = vunpack.c.l.b16 %v418
      %v566 = vunpack.c.h.b16 %v418
      %v567 = vunpack.c.l.b16 %v419
      %v568 = vunpack.c.h.b16 %v419
      %v569 = vunpack.c.l.b16 %v420
      %v570 = vunpack.c.h.b16 %v420
      %v571 = vunpack.c.l.b16 %v421
      %v572 = vunpack.c.h.b16 %v421
      %v573 = vunpack.c.l.b16 %v422
      %v574 = vunpack.c.h.b16 %v422
      %v575 = vunpack.c.l.b16 %v423
      %v576 = vunpack.c.h.b16 %v423
      %v577 = vunpack.c.l.b16 %v424
      %v578 = vunpack.c.h.b16 %v424
      %v579 = vunpack.c.l.b16 %v425
      %v580 = vunpack.c.h.b16 %v425
      %v581 = vunpack.c.l.b16 %v426
      %v582 = vunpack.c.h.b16 %v426
      %v583 = vunpack.c.l.b16 %v427
      %v584 = vunpack.c.h.b16 %v427
      %v585 = vpack.c.b16 %v553, %v553
      %v586 = vpack.c.b16 %v554, %v554
      %v587 = vpack.c.b16 %v555, %v555
      %v588 = vpack.c.b16 %v556, %v556
      %v589 = vpack.c.b16 %v557, %v557
      %v590 = vpack.c.b16 %v558, %v558
      %v591 = vpack.c.b16 %v559, %v559
      %v592 = vpack.c.b16 %v560, %v560
      %v593 = vpack.c.b16 %v561, %v561
      %v594 = vpack.c.b16 %v562, %v562
      %v595 = vpack.c.b16 %v563, %v563
      %v596 = vpack.c.b16 %v564, %v564
      %v597 = vpack.c.b16 %v565, %v565
      %v598 = vpack.c.b16 %v566, %v566
      %v599 = vpack.c.b16 %v567, %v567
      %v600 = vpack.c.b16 %v568, %v568
      %v601 = vpack.c.b16 %v569, %v569
      %v602 = vpack.c.b16 %v570, %v570
      %v603 = vpack.c.b16 %v571, %v571
      %v604 = vpack.c.b16 %v572, %v572
      %v605 = vpack.c.b16 %v573, %v573
      %v606 = vpack.c.b16 %v574, %v574
      %v607 = vpack.c.b16 %v575, %v575
      %v608 = vpack.c.b16 %v576, %v576
      %v609 = vpack.c.b16 %v577, %v577
      %v610 = vpack.c.b16 %v578, %v578
      %v611 = vpack.c.b16 %v579, %v579
      %v612 = vpack.c.b16 %v580, %v580
      %v613 = vpack.c.b16 %v581, %v581
      %v614 = vpack.c.b16 %v582, %v582
      %v615 = vpack.c.b16 %v583, %v583
      %v616 = vpack.c.b16 %v584, %v584
      %vm617 = vsmask.f32 4368
      %vm618 = vmor %vm437, %vm617
      %v620 = vshrl.u32 %v585, 16
      %v622 = vrot.slane %v620, 7
      %v623 = vshll.u32 %v585, 16
      %v625 = vor.u32 %v622, %v623
      %v626 = vrot.slane %v622, 4
      %v628 = vshrl.u32 %v586, 16
      %v630 = vrot.slane %v628, 7
      %v631 = vshll.u32 %v586, 16
      %v633 = vor.u32 %v630, %v631
      %v634 = vsel %vm618, %v626, %v633
      %v635 = vrot.slane %v630, 4
      %v637 = vshrl.u32 %v587, 16
      %v639 = vrot.slane %v637, 7
      %v640 = vshll.u32 %v587, 16
      %v642 = vor.u32 %v639, %v640
      %v643 = vrot.slane %v639, 4
      %v645 = vshrl.u32 %v588, 16
      %v647 = vrot.slane %v645, 7
      %v648 = vshll.u32 %v588, 16
      %v650 = vor.u32 %v647, %v648
      %v651 = vsel %vm618, %v643, %v650
      %v652 = vrot.slane %v647, 4
      %v654 = vshrl.u32 %v589, 16
      %v656 = vrot.slane %v654, 7
      %v657 = vshll.u32 %v589, 16
      %v659 = vor.u32 %v656, %v657
      %v660 = vrot.slane %v656, 4
      %v662 = vshrl.u32 %v590, 16
      %v664 = vrot.slane %v662, 7
      %v665 = vshll.u32 %v590, 16
      %v667 = vor.u32 %v664, %v665
      %v668 = vsel %vm618, %v660, %v667
      %v669 = vrot.slane %v664, 4
      %v671 = vshrl.u32 %v591, 16
      %v673 = vrot.slane %v671, 7
      %v674 = vshll.u32 %v591, 16
      %v676 = vor.u32 %v673, %v674
      %v677 = vrot.slane %v673, 4
      %v679 = vshrl.u32 %v592, 16
      %v681 = vrot.slane %v679, 7
      %v682 = vshll.u32 %v592, 16
      %v684 = vor.u32 %v681, %v682
      %v685 = vsel %vm618, %v677, %v684
      %v686 = vrot.slane %v681, 4
      %v688 = vshrl.u32 %v593, 16
      %v690 = vrot.slane %v688, 7
      %v691 = vshll.u32 %v593, 16
      %v693 = vor.u32 %v690, %v691
      %v694 = vrot.slane %v690, 4
      %v696 = vshrl.u32 %v594, 16
      %v698 = vrot.slane %v696, 7
      %v699 = vshll.u32 %v594, 16
      %v701 = vor.u32 %v698, %v699
      %v702 = vsel %vm618, %v694, %v701
      %v703 = vrot.slane %v698, 4
      %v705 = vshrl.u32 %v595, 16
      %v707 = vrot.slane %v705, 7
      %v708 = vshll.u32 %v595, 16
      %v710 = vor.u32 %v707, %v708
      %v711 = vrot.slane %v707, 4
      %v713 = vshrl.u32 %v596, 16
      %v715 = vrot.slane %v713, 7
      %v716 = vshll.u32 %v596, 16
      %v718 = vor.u32 %v715, %v716
      %v719 = vsel %vm618, %v711, %v718
      %v720 = vrot.slane %v715, 4
      %v722 = vshrl.u32 %v597, 16
      %v724 = vrot.slane %v722, 7
      %v725 = vshll.u32 %v597, 16
      %v727 = vor.u32 %v724, %v725
      %v728 = vrot.slane %v724, 4
      %v730 = vshrl.u32 %v598, 16
      %v732 = vrot.slane %v730, 7
      %v733 = vshll.u32 %v598, 16
      %v735 = vor.u32 %v732, %v733
      %v736 = vsel %vm618, %v728, %v735
      %v737 = vrot.slane %v732, 4
      %v739 = vshrl.u32 %v599, 16
      %v741 = vrot.slane %v739, 7
      %v742 = vshll.u32 %v599, 16
      %v744 = vor.u32 %v741, %v742
      %v745 = vrot.slane %v741, 4
      %v747 = vshrl.u32 %v600, 16
      %v749 = vrot.slane %v747, 7
      %v750 = vshll.u32 %v600, 16
      %v752 = vor.u32 %v749, %v750
      %v753 = vsel %vm618, %v745, %v752
      %v754 = vrot.slane %v749, 4
      %v756 = vshrl.u32 %v601, 16
      %v758 = vrot.slane %v756, 7
      %v759 = vshll.u32 %v601, 16
      %v761 = vor.u32 %v758, %v759
      %v762 = vrot.slane %v758, 4
      %v764 = vshrl.u32 %v602, 16
      %v766 = vrot.slane %v764, 7
      %v767 = vshll.u32 %v602, 16
      %v769 = vor.u32 %v766, %v767
      %v770 = vsel %vm618, %v762, %v769
      %v771 = vrot.slane %v766, 4
      %v773 = vshrl.u32 %v603, 16
      %v775 = vrot.slane %v773, 7
      %v776 = vshll.u32 %v603, 16
      %v778 = vor.u32 %v775, %v776
      %v779 = vrot.slane %v775, 4
      %v781 = vshrl.u32 %v604, 16
      %v783 = vrot.slane %v781, 7
      %v784 = vshll.u32 %v604, 16
      %v786 = vor.u32 %v783, %v784
      %v787 = vsel %vm618, %v779, %v786
      %v788 = vrot.slane %v783, 4
      %v790 = vshrl.u32 %v605, 16
      %v792 = vrot.slane %v790, 7
      %v793 = vshll.u32 %v605, 16
      %v795 = vor.u32 %v792, %v793
      %v796 = vrot.slane %v792, 4
      %v798 = vshrl.u32 %v606, 16
      %v800 = vrot.slane %v798, 7
      %v801 = vshll.u32 %v606, 16
      %v803 = vor.u32 %v800, %v801
      %v804 = vsel %vm618, %v796, %v803
      %v805 = vrot.slane %v800, 4
      %v807 = vshrl.u32 %v607, 16
      %v809 = vrot.slane %v807, 7
      %v810 = vshll.u32 %v607, 16
      %v812 = vor.u32 %v809, %v810
      %v813 = vrot.slane %v809, 4
      %v815 = vshrl.u32 %v608, 16
      %v817 = vrot.slane %v815, 7
      %v818 = vshll.u32 %v608, 16
      %v820 = vor.u32 %v817, %v818
      %v821 = vsel %vm618, %v813, %v820
      %v822 = vrot.slane %v817, 4
      %v824 = vshrl.u32 %v609, 16
      %v826 = vrot.slane %v824, 7
      %v827 = vshll.u32 %v609, 16
      %v829 = vor.u32 %v826, %v827
      %v830 = vrot.slane %v826, 4
      %v832 = vshrl.u32 %v610, 16
      %v834 = vrot.slane %v832, 7
      %v835 = vshll.u32 %v610, 16
      %v837 = vor.u32 %v834, %v835
      %v838 = vsel %vm618, %v830, %v837
      %v839 = vrot.slane %v834, 4
      %v841 = vshrl.u32 %v611, 16
      %v843 = vrot.slane %v841, 7
      %v844 = vshll.u32 %v611, 16
      %v846 = vor.u32 %v843, %v844
      %v847 = vrot.slane %v843, 4
      %v849 = vshrl.u32 %v612, 16
      %v851 = vrot.slane %v849, 7
      %v852 = vshll.u32 %v612, 16
      %v854 = vor.u32 %v851, %v852
      %v855 = vsel %vm618, %v847, %v854
      %v856 = vrot.slane %v851, 4
      %v858 = vshrl.u32 %v613, 16
      %v860 = vrot.slane %v858, 7
      %v861 = vshll.u32 %v613, 16
      %v863 = vor.u32 %v860, %v861
      %v864 = vrot.slane %v860, 4
      %v866 = vshrl.u32 %v614, 16
      %v868 = vrot.slane %v866, 7
      %v869 = vshll.u32 %v614, 16
      %v871 = vor.u32 %v868, %v869
      %v872 = vsel %vm618, %v864, %v871
      %v873 = vrot.slane %v868, 4
      %v875 = vshrl.u32 %v615, 16
      %v877 = vrot.slane %v875, 7
      %v878 = vshll.u32 %v615, 16
      %v880 = vor.u32 %v877, %v878
      %v881 = vrot.slane %v877, 4
      %v883 = vshrl.u32 %v616, 16
      %v885 = vrot.slane %v883, 7
      %v886 = vshll.u32 %v616, 16
      %v888 = vor.u32 %v885, %v886
      %v889 = vsel %vm618, %v881, %v888
      %v890 = vrot.slane %v885, 4
      %vm939 = vcmask 1043456
      %vm940 = vmand %vm939, %vm487
      %v941 = vld [vmem:[%s435] sm:$0xf]
      %v942 = vsel %vm940, %v625, %v941
      %943 = vst [vmem:[%s435] sm:$0xf] %v942
      %944 = vst [vmem:[%s435 + $0x4] sm:$0xf] %v634
      %v945 = vld [vmem:[%s435 + $0x8] sm:$0x1]
      %v946 = vsel %vm438, %v635, %v945
      %947 = vst [vmem:[%s435 + $0x8] sm:$0x1] %v946
      %v948 = vld [vmem:[%s435 + $0xc] sm:$0xf]
      %v949 = vsel %vm940, %v642, %v948
      %950 = vst [vmem:[%s435 + $0xc] sm:$0xf] %v949
      %951 = vst [vmem:[%s435 + $0x10] sm:$0xf] %v651
      %v952 = vld [vmem:[%s435 + $0x14] sm:$0x1]
      %v953 = vsel %vm438, %v652, %v952
      %954 = vst [vmem:[%s435 + $0x14] sm:$0x1] %v953
      %v955 = vld [vmem:[%s435 + $0x18] sm:$0xf]
      %v956 = vsel %vm940, %v659, %v955
      %957 = vst [vmem:[%s435 + $0x18] sm:$0xf] %v956
      %958 = vst [vmem:[%s435 + $0x1c] sm:$0xf] %v668
      %v959 = vld [vmem:[%s435 + $0x20] sm:$0x1]
      %v960 = vsel %vm438, %v669, %v959
      %961 = vst [vmem:[%s435 + $0x20] sm:$0x1] %v960
      %v962 = vld [vmem:[%s435 + $0x24] sm:$0xf]
      %v963 = vsel %vm940, %v676, %v962
      %964 = vst [vmem:[%s435 + $0x24] sm:$0xf] %v963
      %965 = vst [vmem:[%s435 + $0x28] sm:$0xf] %v685
      %v966 = vld [vmem:[%s435 + $0x2c] sm:$0x1]
      %v967 = vsel %vm438, %v686, %v966
      %968 = vst [vmem:[%s435 + $0x2c] sm:$0x1] %v967
      %v969 = vld [vmem:[%s435 + $0x30] sm:$0xf]
      %v970 = vsel %vm940, %v693, %v969
      %971 = vst [vmem:[%s435 + $0x30] sm:$0xf] %v970
      %972 = vst [vmem:[%s435 + $0x34] sm:$0xf] %v702
      %v973 = vld [vmem:[%s435 + $0x38] sm:$0x1]
      %v974 = vsel %vm438, %v703, %v973
      %975 = vst [vmem:[%s435 + $0x38] sm:$0x1] %v974
      %v976 = vld [vmem:[%s435 + $0x3c] sm:$0xf]
      %v977 = vsel %vm940, %v710, %v976
      %978 = vst [vmem:[%s435 + $0x3c] sm:$0xf] %v977
      %979 = vst [vmem:[%s435 + $0x40] sm:$0xf] %v719
      %v980 = vld [vmem:[%s435 + $0x44] sm:$0x1]
      %v981 = vsel %vm438, %v720, %v980
      %982 = vst [vmem:[%s435 + $0x44] sm:$0x1] %v981
      %v983 = vld [vmem:[%s435 + $0x48] sm:$0xf]
      %v984 = vsel %vm940, %v727, %v983
      %985 = vst [vmem:[%s435 + $0x48] sm:$0xf] %v984
      %986 = vst [vmem:[%s435 + $0x4c] sm:$0xf] %v736
      %v987 = vld [vmem:[%s435 + $0x50] sm:$0x1]
      %v988 = vsel %vm438, %v737, %v987
      %989 = vst [vmem:[%s435 + $0x50] sm:$0x1] %v988
      %v990 = vld [vmem:[%s435 + $0x54] sm:$0xf]
      %v991 = vsel %vm940, %v744, %v990
      %992 = vst [vmem:[%s435 + $0x54] sm:$0xf] %v991
      %993 = vst [vmem:[%s435 + $0x58] sm:$0xf] %v753
      %v994 = vld [vmem:[%s435 + $0x5c] sm:$0x1]
      %v995 = vsel %vm438, %v754, %v994
      %996 = vst [vmem:[%s435 + $0x5c] sm:$0x1] %v995
      %v997 = vld [vmem:[%s435 + $0x60] sm:$0xf]
      %v998 = vsel %vm940, %v761, %v997
      %999 = vst [vmem:[%s435 + $0x60] sm:$0xf] %v998
      %1000 = vst [vmem:[%s435 + $0x64] sm:$0xf] %v770
      %v1001 = vld [vmem:[%s435 + $0x68] sm:$0x1]
      %v1002 = vsel %vm438, %v771, %v1001
      %1003 = vst [vmem:[%s435 + $0x68] sm:$0x1] %v1002
      %v1004 = vld [vmem:[%s435 + $0x6c] sm:$0xf]
      %v1005 = vsel %vm940, %v778, %v1004
      %1006 = vst [vmem:[%s435 + $0x6c] sm:$0xf] %v1005
      %1007 = vst [vmem:[%s435 + $0x70] sm:$0xf] %v787
      %v1008 = vld [vmem:[%s435 + $0x74] sm:$0x1]
      %v1009 = vsel %vm438, %v788, %v1008
      %1010 = vst [vmem:[%s435 + $0x74] sm:$0x1] %v1009
      %v1011 = vld [vmem:[%s435 + $0x78] sm:$0xf]
      %v1012 = vsel %vm940, %v795, %v1011
      %1013 = vst [vmem:[%s435 + $0x78] sm:$0xf] %v1012
      %1014 = vst [vmem:[%s435 + $0x7c] sm:$0xf] %v804
      %v1015 = vld [vmem:[%s435 + $0x80] sm:$0x1]
      %v1016 = vsel %vm438, %v805, %v1015
      %1017 = vst [vmem:[%s435 + $0x80] sm:$0x1] %v1016
      %v1018 = vld [vmem:[%s435 + $0x84] sm:$0xf]
      %v1019 = vsel %vm940, %v812, %v1018
      %1020 = vst [vmem:[%s435 + $0x84] sm:$0xf] %v1019
      %1021 = vst [vmem:[%s435 + $0x88] sm:$0xf] %v821
      %v1022 = vld [vmem:[%s435 + $0x8c] sm:$0x1]
      %v1023 = vsel %vm438, %v822, %v1022
      %1024 = vst [vmem:[%s435 + $0x8c] sm:$0x1] %v1023
      %v1025 = vld [vmem:[%s435 + $0x90] sm:$0xf]
      %v1026 = vsel %vm940, %v829, %v1025
      %1027 = vst [vmem:[%s435 + $0x90] sm:$0xf] %v1026
      %1028 = vst [vmem:[%s435 + $0x94] sm:$0xf] %v838
      %v1029 = vld [vmem:[%s435 + $0x98] sm:$0x1]
      %v1030 = vsel %vm438, %v839, %v1029
      %1031 = vst [vmem:[%s435 + $0x98] sm:$0x1] %v1030
      %v1032 = vld [vmem:[%s435 + $0x9c] sm:$0xf]
      %v1033 = vsel %vm940, %v846, %v1032
      %1034 = vst [vmem:[%s435 + $0x9c] sm:$0xf] %v1033
      %1035 = vst [vmem:[%s435 + $0xa0] sm:$0xf] %v855
      %v1036 = vld [vmem:[%s435 + $0xa4] sm:$0x1]
      %v1037 = vsel %vm438, %v856, %v1036
      %1038 = vst [vmem:[%s435 + $0xa4] sm:$0x1] %v1037
      %v1039 = vld [vmem:[%s435 + $0xa8] sm:$0xf]
      %v1040 = vsel %vm940, %v863, %v1039
      %1041 = vst [vmem:[%s435 + $0xa8] sm:$0xf] %v1040
      %1042 = vst [vmem:[%s435 + $0xac] sm:$0xf] %v872
      %v1043 = vld [vmem:[%s435 + $0xb0] sm:$0x1]
      %v1044 = vsel %vm438, %v873, %v1043
      %1045 = vst [vmem:[%s435 + $0xb0] sm:$0x1] %v1044
      %v1046 = vld [vmem:[%s435 + $0xb4] sm:$0xf]
      %v1047 = vsel %vm940, %v880, %v1046
      %1048 = vst [vmem:[%s435 + $0xb4] sm:$0xf] %v1047
      %1049 = vst [vmem:[%s435 + $0xb8] sm:$0xf] %v889
      %v1050 = vld [vmem:[%s435 + $0xbc] sm:$0x1]
      %v1051 = vsel %vm438, %v890, %v1050
      %1052 = vst [vmem:[%s435 + $0xbc] sm:$0x1] %v1051
      %v1053 = vld [vmem:[#allocation2] sm:$0xf]
      %v1054 = vld [vmem:[#allocation2 + $0x4] sm:$0xf]
      %v1055 = vld [vmem:[#allocation2 + $0xc] sm:$0xf]
      %v1056 = vld [vmem:[#allocation2 + $0x10] sm:$0xf]
      %v1057 = vld [vmem:[#allocation2 + $0x18] sm:$0xf]
      %v1058 = vld [vmem:[#allocation2 + $0x1c] sm:$0xf]
      %v1059 = vld [vmem:[#allocation2 + $0x24] sm:$0xf]
      %v1060 = vld [vmem:[#allocation2 + $0x28] sm:$0xf]
      %v1061 = vld [vmem:[#allocation2 + $0x30] sm:$0xf]
      %v1062 = vld [vmem:[#allocation2 + $0x34] sm:$0xf]
      %v1063 = vld [vmem:[#allocation2 + $0x3c] sm:$0xf]
      %v1064 = vld [vmem:[#allocation2 + $0x40] sm:$0xf]
      %v1065 = vld [vmem:[#allocation2 + $0x48] sm:$0xf]
      %v1066 = vld [vmem:[#allocation2 + $0x4c] sm:$0xf]
      %v1067 = vld [vmem:[#allocation2 + $0x54] sm:$0xf]
      %v1068 = vld [vmem:[#allocation2 + $0x58] sm:$0xf]
      %v1069 = vld [vmem:[#allocation2 + $0x60] sm:$0xf]
      %v1070 = vld [vmem:[#allocation2 + $0x64] sm:$0xf]
      %v1071 = vld [vmem:[#allocation2 + $0x6c] sm:$0xf]
      %v1072 = vld [vmem:[#allocation2 + $0x70] sm:$0xf]
      %v1073 = vld [vmem:[#allocation2 + $0x78] sm:$0xf]
      %v1074 = vld [vmem:[#allocation2 + $0x7c] sm:$0xf]
      %v1075 = vld [vmem:[#allocation2 + $0x84] sm:$0xf]
      %v1076 = vld [vmem:[#allocation2 + $0x88] sm:$0xf]
      %v1077 = vld [vmem:[#allocation2 + $0x90] sm:$0xf]
      %v1078 = vld [vmem:[#allocation2 + $0x94] sm:$0xf]
      %v1079 = vld [vmem:[#allocation2 + $0x9c] sm:$0xf]
      %v1080 = vld [vmem:[#allocation2 + $0xa0] sm:$0xf]
      %v1081 = vld [vmem:[#allocation2 + $0xa8] sm:$0xf]
      %v1082 = vld [vmem:[#allocation2 + $0xac] sm:$0xf]
      %v1083 = vld [vmem:[#allocation2 + $0xb4] sm:$0xf]
      %v1084 = vld [vmem:[#allocation2 + $0xb8] sm:$0xf]
      %v1085 = vld [vmem:[%s3] sm:$0xf]
      %v1086 = vld [vmem:[%s3 + $0x4] sm:$0xf]
      %v1087 = vld [vmem:[%s3 + $0x8] sm:$0xf]
      %v1088 = vld [vmem:[%s3 + $0xc] sm:$0xf]
      %v1089 = vld [vmem:[%s3 + $0x10] sm:$0xf]
      %v1090 = vld [vmem:[%s3 + $0x14] sm:$0xf]
      %v1091 = vld [vmem:[%s3 + $0x18] sm:$0xf]
      %v1092 = vld [vmem:[%s3 + $0x1c] sm:$0xf]
      %v1093 = vld [vmem:[%s3 + $0x20] sm:$0xf]
      %v1094 = vld [vmem:[%s3 + $0x24] sm:$0xf]
      %v1095 = vld [vmem:[%s3 + $0x28] sm:$0xf]
      %v1096 = vld [vmem:[%s3 + $0x2c] sm:$0xf]
      %v1097 = vld [vmem:[%s3 + $0x30] sm:$0xf]
      %v1098 = vld [vmem:[%s3 + $0x34] sm:$0xf]
      %v1099 = vld [vmem:[%s3 + $0x38] sm:$0xf]
      %v1100 = vld [vmem:[%s3 + $0x3c] sm:$0xf]
      %v1101 = vld [vmem:[#allocation2 + $0x8] sm:$0x1]
      %v1102 = vld [vmem:[#allocation2 + $0x14] sm:$0x1]
      %v1103 = vld [vmem:[#allocation2 + $0x20] sm:$0x1]
      %v1104 = vld [vmem:[#allocation2 + $0x2c] sm:$0x1]
      %v1105 = vld [vmem:[#allocation2 + $0x38] sm:$0x1]
      %v1106 = vld [vmem:[#allocation2 + $0x44] sm:$0x1]
      %v1107 = vld [vmem:[#allocation2 + $0x50] sm:$0x1]
      %v1108 = vld [vmem:[#allocation2 + $0x5c] sm:$0x1]
      %v1109 = vld [vmem:[#allocation2 + $0x68] sm:$0x1]
      %v1110 = vld [vmem:[#allocation2 + $0x74] sm:$0x1]
      %v1111 = vld [vmem:[#allocation2 + $0x80] sm:$0x1]
      %v1112 = vld [vmem:[#allocation2 + $0x8c] sm:$0x1]
      %v1113 = vld [vmem:[#allocation2 + $0x98] sm:$0x1]
      %v1114 = vld [vmem:[#allocation2 + $0xa4] sm:$0x1]
      %v1115 = vld [vmem:[#allocation2 + $0xb0] sm:$0x1]
      %v1116 = vld [vmem:[#allocation2 + $0xbc] sm:$0x1]
      %vm1117 = vsmask.f32 3328
      %vm1118 = vsmask.f32 7440
      %vm1119 = vmor %vm1117, %vm1118
      %v1121 = vshrl.u32 %v1053, 16
      %v1123 = vrot.slane %v1121, 4
      %v1124 = vshll.u32 %v1053, 16
      %v1126 = vrot.slane %v1124, 5
      %v1127 = vor.u32 %v1123, %v1126
      %v1128 = vrot.slane %v1127, 4
      %v1130 = vshll.u32 %v1054, 16
      %v1132 = vrot.slane %v1130, 5
      %v1133 = vsel %vm1119, %v1128, %v1132
      %v1134 = vshrl.u32 %v1054, 16
      %v1136 = vrot.slane %v1134, 4
      %v1137 = vor.u32 %v1136, %v1132
      %v1138 = vrot.slane %v1137, 4
      %v1140 = vshll.u32 %v1101, 16
      %v1142 = vrot.slane %v1140, 5
      %v1143 = vsel %vm1119, %v1138, %v1142
      %v1145 = vshrl.u32 %v1055, 16
      %v1147 = vrot.slane %v1145, 4
      %v1148 = vshll.u32 %v1055, 16
      %v1150 = vrot.slane %v1148, 5
      %v1151 = vor.u32 %v1147, %v1150
      %v1152 = vrot.slane %v1151, 4
      %v1154 = vshll.u32 %v1056, 16
      %v1156 = vrot.slane %v1154, 5
      %v1157 = vsel %vm1119, %v1152, %v1156
      %v1158 = vshrl.u32 %v1056, 16
      %v1160 = vrot.slane %v1158, 4
      %v1161 = vor.u32 %v1160, %v1156
      %v1162 = vrot.slane %v1161, 4
      %v1164 = vshll.u32 %v1102, 16
      %v1166 = vrot.slane %v1164, 5
      %v1167 = vsel %vm1119, %v1162, %v1166
      %v1169 = vshrl.u32 %v1057, 16
      %v1171 = vrot.slane %v1169, 4
      %v1172 = vshll.u32 %v1057, 16
      %v1174 = vrot.slane %v1172, 5
      %v1175 = vor.u32 %v1171, %v1174
      %v1176 = vrot.slane %v1175, 4
      %v1178 = vshll.u32 %v1058, 16
      %v1180 = vrot.slane %v1178, 5
      %v1181 = vsel %vm1119, %v1176, %v1180
      %v1182 = vshrl.u32 %v1058, 16
      %v1184 = vrot.slane %v1182, 4
      %v1185 = vor.u32 %v1184, %v1180
      %v1186 = vrot.slane %v1185, 4
      %v1188 = vshll.u32 %v1103, 16
      %v1190 = vrot.slane %v1188, 5
      %v1191 = vsel %vm1119, %v1186, %v1190
      %v1193 = vshrl.u32 %v1059, 16
      %v1195 = vrot.slane %v1193, 4
      %v1196 = vshll.u32 %v1059, 16
      %v1198 = vrot.slane %v1196, 5
      %v1199 = vor.u32 %v1195, %v1198
      %v1200 = vrot.slane %v1199, 4
      %v1202 = vshll.u32 %v1060, 16
      %v1204 = vrot.slane %v1202, 5
      %v1205 = vsel %vm1119, %v1200, %v1204
      %v1206 = vshrl.u32 %v1060, 16
      %v1208 = vrot.slane %v1206, 4
      %v1209 = vor.u32 %v1208, %v1204
      %v1210 = vrot.slane %v1209, 4
      %v1212 = vshll.u32 %v1104, 16
      %v1214 = vrot.slane %v1212, 5
      %v1215 = vsel %vm1119, %v1210, %v1214
      %v1217 = vshrl.u32 %v1061, 16
      %v1219 = vrot.slane %v1217, 4
      %v1220 = vshll.u32 %v1061, 16
      %v1222 = vrot.slane %v1220, 5
      %v1223 = vor.u32 %v1219, %v1222
      %v1224 = vrot.slane %v1223, 4
      %v1226 = vshll.u32 %v1062, 16
      %v1228 = vrot.slane %v1226, 5
      %v1229 = vsel %vm1119, %v1224, %v1228
      %v1230 = vshrl.u32 %v1062, 16
      %v1232 = vrot.slane %v1230, 4
      %v1233 = vor.u32 %v1232, %v1228
      %v1234 = vrot.slane %v1233, 4
      %v1236 = vshll.u32 %v1105, 16
      %v1238 = vrot.slane %v1236, 5
      %v1239 = vsel %vm1119, %v1234, %v1238
      %v1241 = vshrl.u32 %v1063, 16
      %v1243 = vrot.slane %v1241, 4
      %v1244 = vshll.u32 %v1063, 16
      %v1246 = vrot.slane %v1244, 5
      %v1247 = vor.u32 %v1243, %v1246
      %v1248 = vrot.slane %v1247, 4
      %v1250 = vshll.u32 %v1064, 16
      %v1252 = vrot.slane %v1250, 5
      %v1253 = vsel %vm1119, %v1248, %v1252
      %v1254 = vshrl.u32 %v1064, 16
      %v1256 = vrot.slane %v1254, 4
      %v1257 = vor.u32 %v1256, %v1252
      %v1258 = vrot.slane %v1257, 4
      %v1260 = vshll.u32 %v1106, 16
      %v1262 = vrot.slane %v1260, 5
      %v1263 = vsel %vm1119, %v1258, %v1262
      %v1265 = vshrl.u32 %v1065, 16
      %v1267 = vrot.slane %v1265, 4
      %v1268 = vshll.u32 %v1065, 16
      %v1270 = vrot.slane %v1268, 5
      %v1271 = vor.u32 %v1267, %v1270
      %v1272 = vrot.slane %v1271, 4
      %v1274 = vshll.u32 %v1066, 16
      %v1276 = vrot.slane %v1274, 5
      %v1277 = vsel %vm1119, %v1272, %v1276
      %v1278 = vshrl.u32 %v1066, 16
      %v1280 = vrot.slane %v1278, 4
      %v1281 = vor.u32 %v1280, %v1276
      %v1282 = vrot.slane %v1281, 4
      %v1284 = vshll.u32 %v1107, 16
      %v1286 = vrot.slane %v1284, 5
      %v1287 = vsel %vm1119, %v1282, %v1286
      %v1289 = vshrl.u32 %v1067, 16
      %v1291 = vrot.slane %v1289, 4
      %v1292 = vshll.u32 %v1067, 16
      %v1294 = vrot.slane %v1292, 5
      %v1295 = vor.u32 %v1291, %v1294
      %v1296 = vrot.slane %v1295, 4
      %v1298 = vshll.u32 %v1068, 16
      %v1300 = vrot.slane %v1298, 5
      %v1301 = vsel %vm1119, %v1296, %v1300
      %v1302 = vshrl.u32 %v1068, 16
      %v1304 = vrot.slane %v1302, 4
      %v1305 = vor.u32 %v1304, %v1300
      %v1306 = vrot.slane %v1305, 4
      %v1308 = vshll.u32 %v1108, 16
      %v1310 = vrot.slane %v1308, 5
      %v1311 = vsel %vm1119, %v1306, %v1310
      %v1313 = vshrl.u32 %v1069, 16
      %v1315 = vrot.slane %v1313, 4
      %v1316 = vshll.u32 %v1069, 16
      %v1318 = vrot.slane %v1316, 5
      %v1319 = vor.u32 %v1315, %v1318
      %v1320 = vrot.slane %v1319, 4
      %v1322 = vshll.u32 %v1070, 16
      %v1324 = vrot.slane %v1322, 5
      %v1325 = vsel %vm1119, %v1320, %v1324
      %v1326 = vshrl.u32 %v1070, 16
      %v1328 = vrot.slane %v1326, 4
      %v1329 = vor.u32 %v1328, %v1324
      %v1330 = vrot.slane %v1329, 4
      %v1332 = vshll.u32 %v1109, 16
      %v1334 = vrot.slane %v1332, 5
      %v1335 = vsel %vm1119, %v1330, %v1334
      %v1337 = vshrl.u32 %v1071, 16
      %v1339 = vrot.slane %v1337, 4
      %v1340 = vshll.u32 %v1071, 16
      %v1342 = vrot.slane %v1340, 5
      %v1343 = vor.u32 %v1339, %v1342
      %v1344 = vrot.slane %v1343, 4
      %v1346 = vshll.u32 %v1072, 16
      %v1348 = vrot.slane %v1346, 5
      %v1349 = vsel %vm1119, %v1344, %v1348
      %v1350 = vshrl.u32 %v1072, 16
      %v1352 = vrot.slane %v1350, 4
      %v1353 = vor.u32 %v1352, %v1348
      %v1354 = vrot.slane %v1353, 4
      %v1356 = vshll.u32 %v1110, 16
      %v1358 = vrot.slane %v1356, 5
      %v1359 = vsel %vm1119, %v1354, %v1358
      %v1361 = vshrl.u32 %v1073, 16
      %v1363 = vrot.slane %v1361, 4
      %v1364 = vshll.u32 %v1073, 16
      %v1366 = vrot.slane %v1364, 5
      %v1367 = vor.u32 %v1363, %v1366
      %v1368 = vrot.slane %v1367, 4
      %v1370 = vshll.u32 %v1074, 16
      %v1372 = vrot.slane %v1370, 5
      %v1373 = vsel %vm1119, %v1368, %v1372
      %v1374 = vshrl.u32 %v1074, 16
      %v1376 = vrot.slane %v1374, 4
      %v1377 = vor.u32 %v1376, %v1372
      %v1378 = vrot.slane %v1377, 4
      %v1380 = vshll.u32 %v1111, 16
      %v1382 = vrot.slane %v1380, 5
      %v1383 = vsel %vm1119, %v1378, %v1382
      %v1385 = vshrl.u32 %v1075, 16
      %v1387 = vrot.slane %v1385, 4
      %v1388 = vshll.u32 %v1075, 16
      %v1390 = vrot.slane %v1388, 5
      %v1391 = vor.u32 %v1387, %v1390
      %v1392 = vrot.slane %v1391, 4
      %v1394 = vshll.u32 %v1076, 16
      %v1396 = vrot.slane %v1394, 5
      %v1397 = vsel %vm1119, %v1392, %v1396
      %v1398 = vshrl.u32 %v1076, 16
      %v1400 = vrot.slane %v1398, 4
      %v1401 = vor.u32 %v1400, %v1396
      %v1402 = vrot.slane %v1401, 4
      %v1404 = vshll.u32 %v1112, 16
      %v1406 = vrot.slane %v1404, 5
      %v1407 = vsel %vm1119, %v1402, %v1406
      %v1409 = vshrl.u32 %v1077, 16
      %v1411 = vrot.slane %v1409, 4
      %v1412 = vshll.u32 %v1077, 16
      %v1414 = vrot.slane %v1412, 5
      %v1415 = vor.u32 %v1411, %v1414
      %v1416 = vrot.slane %v1415, 4
      %v1418 = vshll.u32 %v1078, 16
      %v1420 = vrot.slane %v1418, 5
      %v1421 = vsel %vm1119, %v1416, %v1420
      %v1422 = vshrl.u32 %v1078, 16
      %v1424 = vrot.slane %v1422, 4
      %v1425 = vor.u32 %v1424, %v1420
      %v1426 = vrot.slane %v1425, 4
      %v1428 = vshll.u32 %v1113, 16
      %v1430 = vrot.slane %v1428, 5
      %v1431 = vsel %vm1119, %v1426, %v1430
      %v1433 = vshrl.u32 %v1079, 16
      %v1435 = vrot.slane %v1433, 4
      %v1436 = vshll.u32 %v1079, 16
      %v1438 = vrot.slane %v1436, 5
      %v1439 = vor.u32 %v1435, %v1438
      %v1440 = vrot.slane %v1439, 4
      %v1442 = vshll.u32 %v1080, 16
      %v1444 = vrot.slane %v1442, 5
      %v1445 = vsel %vm1119, %v1440, %v1444
      %v1446 = vshrl.u32 %v1080, 16
      %v1448 = vrot.slane %v1446, 4
      %v1449 = vor.u32 %v1448, %v1444
      %v1450 = vrot.slane %v1449, 4
      %v1452 = vshll.u32 %v1114, 16
      %v1454 = vrot.slane %v1452, 5
      %v1455 = vsel %vm1119, %v1450, %v1454
      %v1457 = vshrl.u32 %v1081, 16
      %v1459 = vrot.slane %v1457, 4
      %v1460 = vshll.u32 %v1081, 16
      %v1462 = vrot.slane %v1460, 5
      %v1463 = vor.u32 %v1459, %v1462
      %v1464 = vrot.slane %v1463, 4
      %v1466 = vshll.u32 %v1082, 16
      %v1468 = vrot.slane %v1466, 5
      %v1469 = vsel %vm1119, %v1464, %v1468
      %v1470 = vshrl.u32 %v1082, 16
      %v1472 = vrot.slane %v1470, 4
      %v1473 = vor.u32 %v1472, %v1468
      %v1474 = vrot.slane %v1473, 4
      %v1476 = vshll.u32 %v1115, 16
      %v1478 = vrot.slane %v1476, 5
      %v1479 = vsel %vm1119, %v1474, %v1478
      %v1481 = vshrl.u32 %v1083, 16
      %v1483 = vrot.slane %v1481, 4
      %v1484 = vshll.u32 %v1083, 16
      %v1486 = vrot.slane %v1484, 5
      %v1487 = vor.u32 %v1483, %v1486
      %v1488 = vrot.slane %v1487, 4
      %v1490 = vshll.u32 %v1084, 16
      %v1492 = vrot.slane %v1490, 5
      %v1493 = vsel %vm1119, %v1488, %v1492
      %v1494 = vshrl.u32 %v1084, 16
      %v1496 = vrot.slane %v1494, 4
      %v1497 = vor.u32 %v1496, %v1492
      %v1498 = vrot.slane %v1497, 4
      %v1500 = vshll.u32 %v1116, 16
      %v1502 = vrot.slane %v1500, 5
      %v1503 = vsel %vm1119, %v1498, %v1502
      %s1504 = scalar_lea.vmem %s3, 64
      %v1505 = vld [vmem:[%s1504] sm:$0xf]
      %v1506 = vld [vmem:[%s1504 + $0x4] sm:$0xf]
      %v1507 = vld [vmem:[%s1504 + $0x8] sm:$0xf]
      %v1508 = vld [vmem:[%s1504 + $0xc] sm:$0xf]
      %v1509 = vld [vmem:[%s1504 + $0x10] sm:$0xf]
      %v1510 = vld [vmem:[%s1504 + $0x14] sm:$0xf]
      %v1511 = vld [vmem:[%s1504 + $0x18] sm:$0xf]
      %v1512 = vld [vmem:[%s1504 + $0x1c] sm:$0xf]
      %v1513 = vld [vmem:[%s1504 + $0x20] sm:$0xf]
      %v1514 = vld [vmem:[%s1504 + $0x24] sm:$0xf]
      %v1515 = vld [vmem:[%s1504 + $0x28] sm:$0xf]
      %v1516 = vld [vmem:[%s1504 + $0x2c] sm:$0xf]
      %v1517 = vld [vmem:[%s1504 + $0x30] sm:$0xf]
      %v1518 = vld [vmem:[%s1504 + $0x34] sm:$0xf]
      %v1519 = vld [vmem:[%s1504 + $0x38] sm:$0xf]
      %v1520 = vld [vmem:[%s1504 + $0x3c] sm:$0xf]
      %v1521 = vunpack.c.l.b16 %v1133
      %v1522 = vunpack.c.l.b16 %v1143
      %v1523 = vunpack.c.l.b16 %v1157
      %v1524 = vunpack.c.l.b16 %v1167
      %v1525 = vunpack.c.l.b16 %v1181
      %v1526 = vunpack.c.l.b16 %v1191
      %v1527 = vunpack.c.l.b16 %v1205
      %v1528 = vunpack.c.l.b16 %v1215
      %v1529 = vunpack.c.l.b16 %v1229
      %v1530 = vunpack.c.l.b16 %v1239
      %v1531 = vunpack.c.l.b16 %v1253
      %v1532 = vunpack.c.l.b16 %v1263
      %v1533 = vunpack.c.l.b16 %v1277
      %v1534 = vunpack.c.l.b16 %v1287
      %v1535 = vunpack.c.l.b16 %v1301
      %v1536 = vunpack.c.l.b16 %v1311
      %v1537 = vunpack.c.l.b16 %v1325
      %v1538 = vunpack.c.l.b16 %v1335
      %v1539 = vunpack.c.l.b16 %v1349
      %v1540 = vunpack.c.l.b16 %v1359
      %v1541 = vunpack.c.l.b16 %v1373
      %v1542 = vunpack.c.l.b16 %v1383
      %v1543 = vunpack.c.l.b16 %v1397
      %v1544 = vunpack.c.l.b16 %v1407
      %v1545 = vunpack.c.l.b16 %v1421
      %v1546 = vunpack.c.l.b16 %v1431
      %v1547 = vunpack.c.l.b16 %v1445
      %v1548 = vunpack.c.l.b16 %v1455
      %v1549 = vunpack.c.l.b16 %v1469
      %v1550 = vunpack.c.l.b16 %v1479
      %v1551 = vunpack.c.l.b16 %v1493
      %v1552 = vunpack.c.l.b16 %v1503
      %v1553 = vpack.c.b16 %v1522, %v1521
      %v1554 = vpack.c.b16 %v1524, %v1523
      %v1555 = vpack.c.b16 %v1526, %v1525
      %v1556 = vpack.c.b16 %v1528, %v1527
      %v1557 = vpack.c.b16 %v1530, %v1529
      %v1558 = vpack.c.b16 %v1532, %v1531
      %v1559 = vpack.c.b16 %v1534, %v1533
      %v1560 = vpack.c.b16 %v1536, %v1535
      %v1561 = vpack.c.b16 %v1538, %v1537
      %v1562 = vpack.c.b16 %v1540, %v1539
      %v1563 = vpack.c.b16 %v1542, %v1541
      %v1564 = vpack.c.b16 %v1544, %v1543
      %v1565 = vpack.c.b16 %v1546, %v1545
      %v1566 = vpack.c.b16 %v1548, %v1547
      %v1567 = vpack.c.b16 %v1550, %v1549
      %v1568 = vpack.c.b16 %v1552, %v1551
      %v1601 = vunpack.c.l.b16 %v1505
      %v1602 = vunpack.c.l.b16 %v1506
      %v1603 = vunpack.c.l.b16 %v1507
      %v1604 = vunpack.c.l.b16 %v1508
      %v1605 = vunpack.c.l.b16 %v1509
      %v1606 = vunpack.c.l.b16 %v1510
      %v1607 = vunpack.c.l.b16 %v1511
      %v1608 = vunpack.c.l.b16 %v1512
      %v1609 = vunpack.c.l.b16 %v1513
      %v1610 = vunpack.c.l.b16 %v1514
      %v1611 = vunpack.c.l.b16 %v1515
      %v1612 = vunpack.c.l.b16 %v1516
      %v1613 = vunpack.c.l.b16 %v1517
      %v1614 = vunpack.c.l.b16 %v1518
      %v1615 = vunpack.c.l.b16 %v1519
      %v1616 = vunpack.c.l.b16 %v1520
      %v1617 = vpack.c.b16 %v1602, %v1601
      %v1618 = vpack.c.b16 %v1604, %v1603
      %v1619 = vpack.c.b16 %v1606, %v1605
      %v1620 = vpack.c.b16 %v1608, %v1607
      %v1621 = vpack.c.b16 %v1610, %v1609
      %v1622 = vpack.c.b16 %v1612, %v1611
      %v1623 = vpack.c.b16 %v1614, %v1613
      %v1624 = vpack.c.b16 %v1616, %v1615
      %1633 = vmatprep.subr.bf16.mxu0 0
      %1634 = vmatpush1.bf16.msra.mxu0 %v1617
      %1635 = vmatprep.subr.bf16.mxu0 0
      %1636 = vmatpush1.bf16.msra.mxu0 %v1618
      %1637 = vmatprep.subr.bf16.mxu0 0
      %1638 = vmatpush1.bf16.msra.mxu0 %v1619
      %1639 = vmatprep.subr.bf16.mxu0 0
      %1640 = vmatpush1.bf16.msra.mxu0 %v1620
      %1641 = vmatprep.subr.bf16.mxu0 0
      %1642 = vmatpush1.bf16.msra.mxu0 %v1621
      %1643 = vmatprep.subr.bf16.mxu0 0
      %1644 = vmatpush1.bf16.msra.mxu0 %v1622
      %1645 = vmatprep.subr.bf16.mxu0 0
      %1646 = vmatpush1.bf16.msra.mxu0 %v1623
      %1647 = vmatprep.subr.bf16.mxu0 0
      %1648 = vmatpush1.bf16.msra.mxu0 %v1624
      %1649 = vmatprep.subr.bf16.mxu0 0
      %1650 = vmatpush1.bf16.msra.mxu0 0
      %1651 = vmatprep.subr.bf16.mxu0 0
      %1652 = vmatpush1.bf16.msra.mxu0 0
      %1653 = vmatprep.subr.bf16.mxu0 0
      %1654 = vmatpush1.bf16.msra.mxu0 0
      %1655 = vmatprep.subr.bf16.mxu0 0
      %1656 = vmatpush1.bf16.msra.mxu0 0
      %1657 = vmatprep.subr.bf16.mxu0 0
      %1658 = vmatpush1.bf16.msra.mxu0 0
      %1659 = vmatprep.subr.bf16.mxu0 0
      %1660 = vmatpush1.bf16.msra.mxu0 0
      %1661 = vmatprep.subr.bf16.mxu0 0
      %1662 = vmatpush1.bf16.msra.mxu0 0
      %1663 = vmatprep.subr.bf16.mxu0 0
      %1664 = vmatpush1.bf16.msra.mxu0 0
      %1665 = vmatprep.mubr.bf16.mxu0 0
      %1666 = vmatmul.mubr.bf16.gmra.mrb[0].mxu0 %v1553
      %v1667 = vpop.f32.mrb[0].mxu0
      %v1668 = vadd.f32 0.0, %v1667
      %v1669 = vpop.f32.mrb[0].mxu0
      %v1670 = vpop.f32.mrb[0].mxu0
      %v1671 = vadd.f32 0.0, %v1670
      %v1672 = vpop.f32.mrb[0].mxu0
      %1673 = vmatprep.mubr.bf16.mxu0 0
      %1674 = vmatmul.mubr.bf16.gmra.mrb[0].mxu0 %v1554
      %v1675 = vpop.f32.mrb[0].mxu0
      %v1676 = vadd.f32 0.0, %v1675
      %v1677 = vpop.f32.mrb[0].mxu0
      %v1678 = vpop.f32.mrb[0].mxu0
      %v1679 = vadd.f32 0.0, %v1678
      %v1680 = vpop.f32.mrb[0].mxu0
      %1681 = vmatprep.mubr.bf16.mxu0 0
      %1682 = vmatmul.mubr.bf16.gmra.mrb[0].mxu0 %v1555
      %v1683 = vpop.f32.mrb[0].mxu0
      %v1684 = vadd.f32 0.0, %v1683
      %v1685 = vpop.f32.mrb[0].mxu0
      %v1686 = vpop.f32.mrb[0].mxu0
      %v1687 = vadd.f32 0.0, %v1686
      %v1688 = vpop.f32.mrb[0].mxu0
      %1689 = vmatprep.mubr.bf16.mxu0 0
      %1690 = vmatmul.mubr.bf16.gmra.mrb[0].mxu0 %v1556
      %v1691 = vpop.f32.mrb[0].mxu0
      %v1692 = vadd.f32 0.0, %v1691
      %v1693 = vpop.f32.mrb[0].mxu0
      %v1694 = vpop.f32.mrb[0].mxu0
      %v1695 = vadd.f32 0.0, %v1694
      %v1696 = vpop.f32.mrb[0].mxu0
      %1697 = vmatprep.mubr.bf16.mxu0 0
      %1698 = vmatmul.mubr.bf16.gmra.mrb[0].mxu0 %v1557
      %v1699 = vpop.f32.mrb[0].mxu0
      %v1700 = vadd.f32 0.0, %v1699
      %v1701 = vpop.f32.mrb[0].mxu0
      %v1702 = vpop.f32.mrb[0].mxu0
      %v1703 = vadd.f32 0.0, %v1702
      %v1704 = vpop.f32.mrb[0].mxu0
      %1705 = vmatprep.mubr.bf16.mxu0 0
      %1706 = vmatmul.mubr.bf16.gmra.mrb[0].mxu0 %v1558
      %v1707 = vpop.f32.mrb[0].mxu0
      %v1708 = vadd.f32 0.0, %v1707
      %v1709 = vpop.f32.mrb[0].mxu0
      %v1710 = vpop.f32.mrb[0].mxu0
      %v1711 = vadd.f32 0.0, %v1710
      %v1712 = vpop.f32.mrb[0].mxu0
      %1713 = vmatprep.mubr.bf16.mxu0 0
      %1714 = vmatmul.mubr.bf16.gmra.mrb[0].mxu0 %v1559
      %v1715 = vpop.f32.mrb[0].mxu0
      %v1716 = vadd.f32 0.0, %v1715
      %v1717 = vpop.f32.mrb[0].mxu0
      %v1718 = vpop.f32.mrb[0].mxu0
      %v1719 = vadd.f32 0.0, %v1718
      %v1720 = vpop.f32.mrb[0].mxu0
      %1721 = vmatprep.mubr.bf16.mxu0 0
      %1722 = vmatmul.mubr.bf16.gmra.mrb[0].mxu0 %v1560
      %v1723 = vpop.f32.mrb[0].mxu0
      %v1724 = vadd.f32 0.0, %v1723
      %v1725 = vpop.f32.mrb[0].mxu0
      %v1726 = vpop.f32.mrb[0].mxu0
      %v1727 = vadd.f32 0.0, %v1726
      %v1728 = vpop.f32.mrb[0].mxu0
      %1729 = vmatprep.mubr.bf16.mxu0 0
      %1730 = vmatmul.mubr.bf16.gmra.mrb[0].mxu0 %v1561
      %v1731 = vpop.f32.mrb[0].mxu0
      %v1732 = vadd.f32 0.0, %v1731
      %v1733 = vpop.f32.mrb[0].mxu0
      %v1734 = vpop.f32.mrb[0].mxu0
      %v1735 = vadd.f32 0.0, %v1734
      %v1736 = vpop.f32.mrb[0].mxu0
      %1737 = vmatprep.mubr.bf16.mxu0 0
      %1738 = vmatmul.mubr.bf16.gmra.mrb[0].mxu0 %v1562
      %v1739 = vpop.f32.mrb[0].mxu0
      %v1740 = vadd.f32 0.0, %v1739
      %v1741 = vpop.f32.mrb[0].mxu0
      %v1742 = vpop.f32.mrb[0].mxu0
      %v1743 = vadd.f32 0.0, %v1742
      %v1744 = vpop.f32.mrb[0].mxu0
      %1745 = vmatprep.mubr.bf16.mxu0 0
      %1746 = vmatmul.mubr.bf16.gmra.mrb[0].mxu0 %v1563
      %v1747 = vpop.f32.mrb[0].mxu0
      %v1748 = vadd.f32 0.0, %v1747
      %v1749 = vpop.f32.mrb[0].mxu0
      %v1750 = vpop.f32.mrb[0].mxu0
      %v1751 = vadd.f32 0.0, %v1750
      %v1752 = vpop.f32.mrb[0].mxu0
      %1753 = vmatprep.mubr.bf16.mxu0 0
      %1754 = vmatmul.mubr.bf16.gmra.mrb[0].mxu0 %v1564
      %v1755 = vpop.f32.mrb[0].mxu0
      %v1756 = vadd.f32 0.0, %v1755
      %v1757 = vpop.f32.mrb[0].mxu0
      %v1758 = vpop.f32.mrb[0].mxu0
      %v1759 = vadd.f32 0.0, %v1758
      %v1760 = vpop.f32.mrb[0].mxu0
      %1761 = vmatprep.mubr.bf16.mxu0 0
      %1762 = vmatmul.mubr.bf16.gmra.mrb[0].mxu0 %v1565
      %v1763 = vpop.f32.mrb[0].mxu0
      %v1764 = vadd.f32 0.0, %v1763
      %v1765 = vpop.f32.mrb[0].mxu0
      %v1766 = vpop.f32.mrb[0].mxu0
      %v1767 = vadd.f32 0.0, %v1766
      %v1768 = vpop.f32.mrb[0].mxu0
      %1769 = vmatprep.mubr.bf16.mxu0 0
      %1770 = vmatmul.mubr.bf16.gmra.mrb[0].mxu0 %v1566
      %v1771 = vpop.f32.mrb[0].mxu0
      %v1772 = vadd.f32 0.0, %v1771
      %v1773 = vpop.f32.mrb[0].mxu0
      %v1774 = vpop.f32.mrb[0].mxu0
      %v1775 = vadd.f32 0.0, %v1774
      %v1776 = vpop.f32.mrb[0].mxu0
      %1777 = vmatprep.mubr.bf16.mxu0 0
      %1778 = vmatmul.mubr.bf16.gmra.mrb[0].mxu0 %v1567
      %v1779 = vpop.f32.mrb[0].mxu0
      %v1780 = vadd.f32 0.0, %v1779
      %v1781 = vpop.f32.mrb[0].mxu0
      %v1782 = vpop.f32.mrb[0].mxu0
      %v1783 = vadd.f32 0.0, %v1782
      %v1784 = vpop.f32.mrb[0].mxu0
      %1785 = vmatprep.mubr.bf16.mxu0 0
      %1786 = vmatmul.mubr.bf16.gmra.mrb[0].mxu0 %v1568
      %v1787 = vpop.f32.mrb[0].mxu0
      %v1788 = vadd.f32 0.0, %v1787
      %v1789 = vpop.f32.mrb[0].mxu0
      %v1790 = vpop.f32.mrb[0].mxu0
      %v1791 = vadd.f32 0.0, %v1790
      %v1792 = vpop.f32.mrb[0].mxu0
      %1793 = vdwg.mxu0
      %v1826 = vunpack.c.l.b16 %v1053
      %v1827 = vunpack.c.l.b16 %v1054
      %v1828 = vunpack.c.l.b16 %v1055
      %v1829 = vunpack.c.l.b16 %v1056
      %v1830 = vunpack.c.l.b16 %v1057
      %v1831 = vunpack.c.l.b16 %v1058
      %v1832 = vunpack.c.l.b16 %v1059
      %v1833 = vunpack.c.l.b16 %v1060
      %v1834 = vunpack.c.l.b16 %v1061
      %v1835 = vunpack.c.l.b16 %v1062
      %v1836 = vunpack.c.l.b16 %v1063
      %v1837 = vunpack.c.l.b16 %v1064
      %v1838 = vunpack.c.l.b16 %v1065
      %v1839 = vunpack.c.l.b16 %v1066
      %v1840 = vunpack.c.l.b16 %v1067
      %v1841 = vunpack.c.l.b16 %v1068
      %v1842 = vunpack.c.l.b16 %v1069
      %v1843 = vunpack.c.l.b16 %v1070
      %v1844 = vunpack.c.l.b16 %v1071
      %v1845 = vunpack.c.l.b16 %v1072
      %v1846 = vunpack.c.l.b16 %v1073
      %v1847 = vunpack.c.l.b16 %v1074
      %v1848 = vunpack.c.l.b16 %v1075
      %v1849 = vunpack.c.l.b16 %v1076
      %v1850 = vunpack.c.l.b16 %v1077
      %v1851 = vunpack.c.l.b16 %v1078
      %v1852 = vunpack.c.l.b16 %v1079
      %v1853 = vunpack.c.l.b16 %v1080
      %v1854 = vunpack.c.l.b16 %v1081
      %v1855 = vunpack.c.l.b16 %v1082
      %v1856 = vunpack.c.l.b16 %v1083
      %v1857 = vunpack.c.l.b16 %v1084
      %v1858 = vpack.c.b16 %v1827, %v1826
      %v1859 = vpack.c.b16 %v1829, %v1828
      %v1860 = vpack.c.b16 %v1831, %v1830
      %v1861 = vpack.c.b16 %v1833, %v1832
      %v1862 = vpack.c.b16 %v1835, %v1834
      %v1863 = vpack.c.b16 %v1837, %v1836
      %v1864 = vpack.c.b16 %v1839, %v1838
      %v1865 = vpack.c.b16 %v1841, %v1840
      %v1866 = vpack.c.b16 %v1843, %v1842
      %v1867 = vpack.c.b16 %v1845, %v1844
      %v1868 = vpack.c.b16 %v1847, %v1846
      %v1869 = vpack.c.b16 %v1849, %v1848
      %v1870 = vpack.c.b16 %v1851, %v1850
      %v1871 = vpack.c.b16 %v1853, %v1852
      %v1872 = vpack.c.b16 %v1855, %v1854
      %v1873 = vpack.c.b16 %v1857, %v1856
      %v1906 = vunpack.c.l.b16 %v1085
      %v1907 = vunpack.c.l.b16 %v1086
      %v1908 = vunpack.c.l.b16 %v1087
      %v1909 = vunpack.c.l.b16 %v1088
      %v1910 = vunpack.c.l.b16 %v1089
      %v1911 = vunpack.c.l.b16 %v1090
      %v1912 = vunpack.c.l.b16 %v1091
      %v1913 = vunpack.c.l.b16 %v1092
      %v1914 = vunpack.c.l.b16 %v1093
      %v1915 = vunpack.c.l.b16 %v1094
      %v1916 = vunpack.c.l.b16 %v1095
      %v1917 = vunpack.c.l.b16 %v1096
      %v1918 = vunpack.c.l.b16 %v1097
      %v1919 = vunpack.c.l.b16 %v1098
      %v1920 = vunpack.c.l.b16 %v1099
      %v1921 = vunpack.c.l.b16 %v1100
      %v1922 = vpack.c.b16 %v1907, %v1906
      %v1923 = vpack.c.b16 %v1909, %v1908
      %v1924 = vpack.c.b16 %v1911, %v1910
      %v1925 = vpack.c.b16 %v1913, %v1912
      %v1926 = vpack.c.b16 %v1915, %v1914
      %v1927 = vpack.c.b16 %v1917, %v1916
      %v1928 = vpack.c.b16 %v1919, %v1918
      %v1929 = vpack.c.b16 %v1921, %v1920
      %1938 = vmatprep.subr.bf16.mxu0 0
      %1939 = vmatpush1.bf16.msra.mxu0 %v1922
      %1940 = vmatprep.subr.bf16.mxu0 0
      %1941 = vmatpush1.bf16.msra.mxu0 %v1923
      %1942 = vmatprep.subr.bf16.mxu0 0
      %1943 = vmatpush1.bf16.msra.mxu0 %v1924
      %1944 = vmatprep.subr.bf16.mxu0 0
      %1945 = vmatpush1.bf16.msra.mxu0 %v1925
      %1946 = vmatprep.subr.bf16.mxu0 0
      %1947 = vmatpush1.bf16.msra.mxu0 %v1926
      %1948 = vmatprep.subr.bf16.mxu0 0
      %1949 = vmatpush1.bf16.msra.mxu0 %v1927
      %1950 = vmatprep.subr.bf16.mxu0 0
      %1951 = vmatpush1.bf16.msra.mxu0 %v1928
      %1952 = vmatprep.subr.bf16.mxu0 0
      %1953 = vmatpush1.bf16.msra.mxu0 %v1929
      %1954 = vmatprep.subr.bf16.mxu0 0
      %1955 = vmatpush1.bf16.msra.mxu0 0
      %1956 = vmatprep.subr.bf16.mxu0 0
      %1957 = vmatpush1.bf16.msra.mxu0 0
      %1958 = vmatprep.subr.bf16.mxu0 0
      %1959 = vmatpush1.bf16.msra.mxu0 0
      %1960 = vmatprep.subr.bf16.mxu0 0
      %1961 = vmatpush1.bf16.msra.mxu0 0
      %1962 = vmatprep.subr.bf16.mxu0 0
      %1963 = vmatpush1.bf16.msra.mxu0 0
      %1964 = vmatprep.subr.bf16.mxu0 0
      %1965 = vmatpush1.bf16.msra.mxu0 0
      %1966 = vmatprep.subr.bf16.mxu0 0
      %1967 = vmatpush1.bf16.msra.mxu0 0
      %1968 = vmatprep.subr.bf16.mxu0 0
      %1969 = vmatpush1.bf16.msra.mxu0 0
      %1970 = vmatprep.mubr.bf16.mxu0 0
      %1971 = vmatmul.mubr.bf16.gmra.mrb[0].mxu0 %v1858
      %v1972 = vpop.f32.mrb[0].mxu0
      %v1973 = vadd.f32 %v1668, %v1972
      %v1974 = vpop.f32.mrb[0].mxu0
      %v1975 = vpop.f32.mrb[0].mxu0
      %v1976 = vadd.f32 %v1671, %v1975
      %v1977 = vpop.f32.mrb[0].mxu0
      %1978 = vmatprep.mubr.bf16.mxu0 0
      %1979 = vmatmul.mubr.bf16.gmra.mrb[0].mxu0 %v1859
      %v1980 = vpop.f32.mrb[0].mxu0
      %v1981 = vadd.f32 %v1676, %v1980
      %v1982 = vpop.f32.mrb[0].mxu0
      %v1983 = vpop.f32.mrb[0].mxu0
      %v1984 = vadd.f32 %v1679, %v1983
      %v1985 = vpop.f32.mrb[0].mxu0
      %1986 = vmatprep.mubr.bf16.mxu0 0
      %1987 = vmatmul.mubr.bf16.gmra.mrb[0].mxu0 %v1860
      %v1988 = vpop.f32.mrb[0].mxu0
      %v1989 = vadd.f32 %v1684, %v1988
      %v1990 = vpop.f32.mrb[0].mxu0
      %v1991 = vpop.f32.mrb[0].mxu0
      %v1992 = vadd.f32 %v1687, %v1991
      %v1993 = vpop.f32.mrb[0].mxu0
      %1994 = vmatprep.mubr.bf16.mxu0 0
      %1995 = vmatmul.mubr.bf16.gmra.mrb[0].mxu0 %v1861
      %v1996 = vpop.f32.mrb[0].mxu0
      %v1997 = vadd.f32 %v1692, %v1996
      %v1998 = vpop.f32.mrb[0].mxu0
      %v1999 = vpop.f32.mrb[0].mxu0
      %v2000 = vadd.f32 %v1695, %v1999
      %v2001 = vpop.f32.mrb[0].mxu0
      %2002 = vmatprep.mubr.bf16.mxu0 0
      %2003 = vmatmul.mubr.bf16.gmra.mrb[0].mxu0 %v1862
      %v2004 = vpop.f32.mrb[0].mxu0
      %v2005 = vadd.f32 %v1700, %v2004
      %v2006 = vpop.f32.mrb[0].mxu0
      %v2007 = vpop.f32.mrb[0].mxu0
      %v2008 = vadd.f32 %v1703, %v2007
      %v2009 = vpop.f32.mrb[0].mxu0
      %2010 = vmatprep.mubr.bf16.mxu0 0
      %2011 = vmatmul.mubr.bf16.gmra.mrb[0].mxu0 %v1863
      %v2012 = vpop.f32.mrb[0].mxu0
      %v2013 = vadd.f32 %v1708, %v2012
      %v2014 = vpop.f32.mrb[0].mxu0
      %v2015 = vpop.f32.mrb[0].mxu0
      %v2016 = vadd.f32 %v1711, %v2015
      %v2017 = vpop.f32.mrb[0].mxu0
      %2018 = vmatprep.mubr.bf16.mxu0 0
      %2019 = vmatmul.mubr.bf16.gmra.mrb[0].mxu0 %v1864
      %v2020 = vpop.f32.mrb[0].mxu0
      %v2021 = vadd.f32 %v1716, %v2020
      %v2022 = vpop.f32.mrb[0].mxu0
      %v2023 = vpop.f32.mrb[0].mxu0
      %v2024 = vadd.f32 %v1719, %v2023
      %v2025 = vpop.f32.mrb[0].mxu0
      %2026 = vmatprep.mubr.bf16.mxu0 0
      %2027 = vmatmul.mubr.bf16.gmra.mrb[0].mxu0 %v1865
      %v2028 = vpop.f32.mrb[0].mxu0
      %v2029 = vadd.f32 %v1724, %v2028
      %v2030 = vpop.f32.mrb[0].mxu0
      %v2031 = vpop.f32.mrb[0].mxu0
      %v2032 = vadd.f32 %v1727, %v2031
      %v2033 = vpop.f32.mrb[0].mxu0
      %2034 = vmatprep.mubr.bf16.mxu0 0
      %2035 = vmatmul.mubr.bf16.gmra.mrb[0].mxu0 %v1866
      %v2036 = vpop.f32.mrb[0].mxu0
      %v2037 = vadd.f32 %v1732, %v2036
      %v2038 = vpop.f32.mrb[0].mxu0
      %v2039 = vpop.f32.mrb[0].mxu0
      %v2040 = vadd.f32 %v1735, %v2039
      %v2041 = vpop.f32.mrb[0].mxu0
      %2042 = vmatprep.mubr.bf16.mxu0 0
      %2043 = vmatmul.mubr.bf16.gmra.mrb[0].mxu0 %v1867
      %v2044 = vpop.f32.mrb[0].mxu0
      %v2045 = vadd.f32 %v1740, %v2044
      %v2046 = vpop.f32.mrb[0].mxu0
      %v2047 = vpop.f32.mrb[0].mxu0
      %v2048 = vadd.f32 %v1743, %v2047
      %v2049 = vpop.f32.mrb[0].mxu0
      %2050 = vmatprep.mubr.bf16.mxu0 0
      %2051 = vmatmul.mubr.bf16.gmra.mrb[0].mxu0 %v1868
      %v2052 = vpop.f32.mrb[0].mxu0
      %v2053 = vadd.f32 %v1748, %v2052
      %v2054 = vpop.f32.mrb[0].mxu0
      %v2055 = vpop.f32.mrb[0].mxu0
      %v2056 = vadd.f32 %v1751, %v2055
      %v2057 = vpop.f32.mrb[0].mxu0
      %2058 = vmatprep.mubr.bf16.mxu0 0
      %2059 = vmatmul.mubr.bf16.gmra.mrb[0].mxu0 %v1869
      %v2060 = vpop.f32.mrb[0].mxu0
      %v2061 = vadd.f32 %v1756, %v2060
      %v2062 = vpop.f32.mrb[0].mxu0
      %v2063 = vpop.f32.mrb[0].mxu0
      %v2064 = vadd.f32 %v1759, %v2063
      %v2065 = vpop.f32.mrb[0].mxu0
      %2066 = vmatprep.mubr.bf16.mxu0 0
      %2067 = vmatmul.mubr.bf16.gmra.mrb[0].mxu0 %v1870
      %v2068 = vpop.f32.mrb[0].mxu0
      %v2069 = vadd.f32 %v1764, %v2068
      %v2070 = vpop.f32.mrb[0].mxu0
      %v2071 = vpop.f32.mrb[0].mxu0
      %v2072 = vadd.f32 %v1767, %v2071
      %v2073 = vpop.f32.mrb[0].mxu0
      %2074 = vmatprep.mubr.bf16.mxu0 0
      %2075 = vmatmul.mubr.bf16.gmra.mrb[0].mxu0 %v1871
      %v2076 = vpop.f32.mrb[0].mxu0
      %v2077 = vadd.f32 %v1772, %v2076
      %v2078 = vpop.f32.mrb[0].mxu0
      %v2079 = vpop.f32.mrb[0].mxu0
      %v2080 = vadd.f32 %v1775, %v2079
      %v2081 = vpop.f32.mrb[0].mxu0
      %2082 = vmatprep.mubr.bf16.mxu0 0
      %2083 = vmatmul.mubr.bf16.gmra.mrb[0].mxu0 %v1872
      %v2084 = vpop.f32.mrb[0].mxu0
      %v2085 = vadd.f32 %v1780, %v2084
      %v2086 = vpop.f32.mrb[0].mxu0
      %v2087 = vpop.f32.mrb[0].mxu0
      %v2088 = vadd.f32 %v1783, %v2087
      %v2089 = vpop.f32.mrb[0].mxu0
      %2090 = vmatprep.mubr.bf16.mxu0 0
      %2091 = vmatmul.mubr.bf16.gmra.mrb[0].mxu0 %v1873
      %v2092 = vpop.f32.mrb[0].mxu0
      %v2093 = vadd.f32 %v1788, %v2092
      %v2094 = vpop.f32.mrb[0].mxu0
      %v2095 = vpop.f32.mrb[0].mxu0
      %v2096 = vadd.f32 %v1791, %v2095
      %v2097 = vpop.f32.mrb[0].mxu0
      %2098 = vdwg.mxu0
      %v2099 = vld [vmem:[#allocation2] sm:$0xe]
      %v2100 = vld [vmem:[#allocation2 + $0xc] sm:$0xe]
      %v2101 = vld [vmem:[#allocation2 + $0x18] sm:$0xe]
      %v2102 = vld [vmem:[#allocation2 + $0x24] sm:$0xe]
      %v2103 = vld [vmem:[#allocation2 + $0x30] sm:$0xe]
      %v2104 = vld [vmem:[#allocation2 + $0x3c] sm:$0xe]
      %v2105 = vld [vmem:[#allocation2 + $0x48] sm:$0xe]
      %v2106 = vld [vmem:[#allocation2 + $0x54] sm:$0xe]
      %v2107 = vld [vmem:[#allocation2 + $0x60] sm:$0xe]
      %v2108 = vld [vmem:[#allocation2 + $0x6c] sm:$0xe]
      %v2109 = vld [vmem:[#allocation2 + $0x78] sm:$0xe]
      %v2110 = vld [vmem:[#allocation2 + $0x84] sm:$0xe]
      %v2111 = vld [vmem:[#allocation2 + $0x90] sm:$0xe]
      %v2112 = vld [vmem:[#allocation2 + $0x9c] sm:$0xe]
      %v2113 = vld [vmem:[#allocation2 + $0xa8] sm:$0xe]
      %v2114 = vld [vmem:[#allocation2 + $0xb4] sm:$0xe]
      %vm2147 = vcmask 1042432
      %vm2148 = vcmask 1046532
      %vm2149 = vmor %vm2147, %vm2148
      %v2150 = vrot.slane %v2099, 5
      %v2151 = vrot.slane %v2150, 4
      %v2152 = vrot.slane %v1054, 5
      %v2153 = vsel %vm2149, %v2151, %v2152
      %v2154 = vrot.slane %v2152, 4
      %v2155 = vrot.slane %v1101, 5
      %v2156 = vsel %vm2149, %v2154, %v2155
      %v2157 = vrot.slane %v2100, 5
      %v2158 = vrot.slane %v2157, 4
      %v2159 = vrot.slane %v1056, 5
      %v2160 = vsel %vm2149, %v2158, %v2159
      %v2161 = vrot.slane %v2159, 4
      %v2162 = vrot.slane %v1102, 5
      %v2163 = vsel %vm2149, %v2161, %v2162
      %v2164 = vrot.slane %v2101, 5
      %v2165 = vrot.slane %v2164, 4
      %v2166 = vrot.slane %v1058, 5
      %v2167 = vsel %vm2149, %v2165, %v2166
      %v2168 = vrot.slane %v2166, 4
      %v2169 = vrot.slane %v1103, 5
      %v2170 = vsel %vm2149, %v2168, %v2169
      %v2171 = vrot.slane %v2102, 5
      %v2172 = vrot.slane %v2171, 4
      %v2173 = vrot.slane %v1060, 5
      %v2174 = vsel %vm2149, %v2172, %v2173
      %v2175 = vrot.slane %v2173, 4
      %v2176 = vrot.slane %v1104, 5
      %v2177 = vsel %vm2149, %v2175, %v2176
      %v2178 = vrot.slane %v2103, 5
      %v2179 = vrot.slane %v2178, 4
      %v2180 = vrot.slane %v1062, 5
      %v2181 = vsel %vm2149, %v2179, %v2180
      %v2182 = vrot.slane %v2180, 4
      %v2183 = vrot.slane %v1105, 5
      %v2184 = vsel %vm2149, %v2182, %v2183
      %v2185 = vrot.slane %v2104, 5
      %v2186 = vrot.slane %v2185, 4
      %v2187 = vrot.slane %v1064, 5
      %v2188 = vsel %vm2149, %v2186, %v2187
      %v2189 = vrot.slane %v2187, 4
      %v2190 = vrot.slane %v1106, 5
      %v2191 = vsel %vm2149, %v2189, %v2190
      %v2192 = vrot.slane %v2105, 5
      %v2193 = vrot.slane %v2192, 4
      %v2194 = vrot.slane %v1066, 5
      %v2195 = vsel %vm2149, %v2193, %v2194
      %v2196 = vrot.slane %v2194, 4
      %v2197 = vrot.slane %v1107, 5
      %v2198 = vsel %vm2149, %v2196, %v2197
      %v2199 = vrot.slane %v2106, 5
      %v2200 = vrot.slane %v2199, 4
      %v2201 = vrot.slane %v1068, 5
      %v2202 = vsel %vm2149, %v2200, %v2201
      %v2203 = vrot.slane %v2201, 4
      %v2204 = vrot.slane %v1108, 5
      %v2205 = vsel %vm2149, %v2203, %v2204
      %v2206 = vrot.slane %v2107, 5
      %v2207 = vrot.slane %v2206, 4
      %v2208 = vrot.slane %v1070, 5
      %v2209 = vsel %vm2149, %v2207, %v2208
      %v2210 = vrot.slane %v2208, 4
      %v2211 = vrot.slane %v1109, 5
      %v2212 = vsel %vm2149, %v2210, %v2211
      %v2213 = vrot.slane %v2108, 5
      %v2214 = vrot.slane %v2213, 4
      %v2215 = vrot.slane %v1072, 5
      %v2216 = vsel %vm2149, %v2214, %v2215
      %v2217 = vrot.slane %v2215, 4
      %v2218 = vrot.slane %v1110, 5
      %v2219 = vsel %vm2149, %v2217, %v2218
      %v2220 = vrot.slane %v2109, 5
      %v2221 = vrot.slane %v2220, 4
      %v2222 = vrot.slane %v1074, 5
      %v2223 = vsel %vm2149, %v2221, %v2222
      %v2224 = vrot.slane %v2222, 4
      %v2225 = vrot.slane %v1111, 5
      %v2226 = vsel %vm2149, %v2224, %v2225
      %v2227 = vrot.slane %v2110, 5
      %v2228 = vrot.slane %v2227, 4
      %v2229 = vrot.slane %v1076, 5
      %v2230 = vsel %vm2149, %v2228, %v2229
      %v2231 = vrot.slane %v2229, 4
      %v2232 = vrot.slane %v1112, 5
      %v2233 = vsel %vm2149, %v2231, %v2232
      %v2234 = vrot.slane %v2111, 5
      %v2235 = vrot.slane %v2234, 4
      %v2236 = vrot.slane %v1078, 5
      %v2237 = vsel %vm2149, %v2235, %v2236
      %v2238 = vrot.slane %v2236, 4
      %v2239 = vrot.slane %v1113, 5
      %v2240 = vsel %vm2149, %v2238, %v2239
      %v2241 = vrot.slane %v2112, 5
      %v2242 = vrot.slane %v2241, 4
      %v2243 = vrot.slane %v1080, 5
      %v2244 = vsel %vm2149, %v2242, %v2243
      %v2245 = vrot.slane %v2243, 4
      %v2246 = vrot.slane %v1114, 5
      %v2247 = vsel %vm2149, %v2245, %v2246
      %v2248 = vrot.slane %v2113, 5
      %v2249 = vrot.slane %v2248, 4
      %v2250 = vrot.slane %v1082, 5
      %v2251 = vsel %vm2149, %v2249, %v2250
      %v2252 = vrot.slane %v2250, 4
      %v2253 = vrot.slane %v1115, 5
      %v2254 = vsel %vm2149, %v2252, %v2253
      %v2255 = vrot.slane %v2114, 5
      %v2256 = vrot.slane %v2255, 4
      %v2257 = vrot.slane %v1084, 5
      %v2258 = vsel %vm2149, %v2256, %v2257
      %v2259 = vrot.slane %v2257, 4
      %v2260 = vrot.slane %v1116, 5
      %v2261 = vsel %vm2149, %v2259, %v2260
      %s2262 = scalar_lea.vmem %s3, 128
      %v2263 = vld [vmem:[%s2262] sm:$0xf]
      %v2264 = vld [vmem:[%s2262 + $0x4] sm:$0xf]
      %v2265 = vld [vmem:[%s2262 + $0x8] sm:$0xf]
      %v2266 = vld [vmem:[%s2262 + $0xc] sm:$0xf]
      %v2267 = vld [vmem:[%s2262 + $0x10] sm:$0xf]
      %v2268 = vld [vmem:[%s2262 + $0x14] sm:$0xf]
      %v2269 = vld [vmem:[%s2262 + $0x18] sm:$0xf]
      %v2270 = vld [vmem:[%s2262 + $0x1c] sm:$0xf]
      %v2271 = vld [vmem:[%s2262 + $0x20] sm:$0xf]
      %v2272 = vld [vmem:[%s2262 + $0x24] sm:$0xf]
      %v2273 = vld [vmem:[%s2262 + $0x28] sm:$0xf]
      %v2274 = vld [vmem:[%s2262 + $0x2c] sm:$0xf]
      %v2275 = vld [vmem:[%s2262 + $0x30] sm:$0xf]
      %v2276 = vld [vmem:[%s2262 + $0x34] sm:$0xf]
      %v2277 = vld [vmem:[%s2262 + $0x38] sm:$0xf]
      %v2278 = vld [vmem:[%s2262 + $0x3c] sm:$0xf]
      %v2279 = vunpack.c.l.b16 %v2153
      %v2280 = vunpack.c.l.b16 %v2156
      %v2281 = vunpack.c.l.b16 %v2160
      %v2282 = vunpack.c.l.b16 %v2163
      %v2283 = vunpack.c.l.b16 %v2167
      %v2284 = vunpack.c.l.b16 %v2170
      %v2285 = vunpack.c.l.b16 %v2174
      %v2286 = vunpack.c.l.b16 %v2177
      %v2287 = vunpack.c.l.b16 %v2181
      %v2288 = vunpack.c.l.b16 %v2184
      %v2289 = vunpack.c.l.b16 %v2188
      %v2290 = vunpack.c.l.b16 %v2191
      %v2291 = vunpack.c.l.b16 %v2195
      %v2292 = vunpack.c.l.b16 %v2198
      %v2293 = vunpack.c.l.b16 %v2202
      %v2294 = vunpack.c.l.b16 %v2205
      %v2295 = vunpack.c.l.b16 %v2209
      %v2296 = vunpack.c.l.b16 %v2212
      %v2297 = vunpack.c.l.b16 %v2216
      %v2298 = vunpack.c.l.b16 %v2219
      %v2299 = vunpack.c.l.b16 %v2223
      %v2300 = vunpack.c.l.b16 %v2226
      %v2301 = vunpack.c.l.b16 %v2230
      %v2302 = vunpack.c.l.b16 %v2233
      %v2303 = vunpack.c.l.b16 %v2237
      %v2304 = vunpack.c.l.b16 %v2240
      %v2305 = vunpack.c.l.b16 %v2244
      %v2306 = vunpack.c.l.b16 %v2247
      %v2307 = vunpack.c.l.b16 %v2251
      %v2308 = vunpack.c.l.b16 %v2254
      %v2309 = vunpack.c.l.b16 %v2258
      %v2310 = vunpack.c.l.b16 %v2261
      %v2311 = vpack.c.b16 %v2280, %v2279
      %v2312 = vpack.c.b16 %v2282, %v2281
      %v2313 = vpack.c.b16 %v2284, %v2283
      %v2314 = vpack.c.b16 %v2286, %v2285
      %v2315 = vpack.c.b16 %v2288, %v2287
      %v2316 = vpack.c.b16 %v2290, %v2289
      %v2317 = vpack.c.b16 %v2292, %v2291
      %v2318 = vpack.c.b16 %v2294, %v2293
      %v2319 = vpack.c.b16 %v2296, %v2295
      %v2320 = vpack.c.b16 %v2298, %v2297
      %v2321 = vpack.c.b16 %v2300, %v2299
      %v2322 = vpack.c.b16 %v2302, %v2301
      %v2323 = vpack.c.b16 %v2304, %v2303
      %v2324 = vpack.c.b16 %v2306, %v2305
      %v2325 = vpack.c.b16 %v2308, %v2307
      %v2326 = vpack.c.b16 %v2310, %v2309
      %v2359 = vunpack.c.l.b16 %v2263
      %v2360 = vunpack.c.l.b16 %v2264
      %v2361 = vunpack.c.l.b16 %v2265
      %v2362 = vunpack.c.l.b16 %v2266
      %v2363 = vunpack.c.l.b16 %v2267
      %v2364 = vunpack.c.l.b16 %v2268
      %v2365 = vunpack.c.l.b16 %v2269
      %v2366 = vunpack.c.l.b16 %v2270
      %v2367 = vunpack.c.l.b16 %v2271
      %v2368 = vunpack.c.l.b16 %v2272
      %v2369 = vunpack.c.l.b16 %v2273
      %v2370 = vunpack.c.l.b16 %v2274
      %v2371 = vunpack.c.l.b16 %v2275
      %v2372 = vunpack.c.l.b16 %v2276
      %v2373 = vunpack.c.l.b16 %v2277
      %v2374 = vunpack.c.l.b16 %v2278
      %v2375 = vpack.c.b16 %v2360, %v2359
      %v2376 = vpack.c.b16 %v2362, %v2361
      %v2377 = vpack.c.b16 %v2364, %v2363
      %v2378 = vpack.c.b16 %v2366, %v2365
      %v2379 = vpack.c.b16 %v2368, %v2367
      %v2380 = vpack.c.b16 %v2370, %v2369
      %v2381 = vpack.c.b16 %v2372, %v2371
      %v2382 = vpack.c.b16 %v2374, %v2373
      %2391 = vmatprep.subr.bf16.mxu0 0
      %2392 = vmatpush1.bf16.msra.mxu0 %v2375
      %2393 = vmatprep.subr.bf16.mxu0 0
      %2394 = vmatpush1.bf16.msra.mxu0 %v2376
      %2395 = vmatprep.subr.bf16.mxu0 0
      %2396 = vmatpush1.bf16.msra.mxu0 %v2377
      %2397 = vmatprep.subr.bf16.mxu0 0
      %2398 = vmatpush1.bf16.msra.mxu0 %v2378
      %2399 = vmatprep.subr.bf16.mxu0 0
      %2400 = vmatpush1.bf16.msra.mxu0 %v2379
      %2401 = vmatprep.subr.bf16.mxu0 0
      %2402 = vmatpush1.bf16.msra.mxu0 %v2380
      %2403 = vmatprep.subr.bf16.mxu0 0
      %2404 = vmatpush1.bf16.msra.mxu0 %v2381
      %2405 = vmatprep.subr.bf16.mxu0 0
      %2406 = vmatpush1.bf16.msra.mxu0 %v2382
      %2407 = vmatprep.subr.bf16.mxu0 0
      %2408 = vmatpush1.bf16.msra.mxu0 0
      %2409 = vmatprep.subr.bf16.mxu0 0
      %2410 = vmatpush1.bf16.msra.mxu0 0
      %2411 = vmatprep.subr.bf16.mxu0 0
      %2412 = vmatpush1.bf16.msra.mxu0 0
      %2413 = vmatprep.subr.bf16.mxu0 0
      %2414 = vmatpush1.bf16.msra.mxu0 0
      %2415 = vmatprep.subr.bf16.mxu0 0
      %2416 = vmatpush1.bf16.msra.mxu0 0
      %2417 = vmatprep.subr.bf16.mxu0 0
      %2418 = vmatpush1.bf16.msra.mxu0 0
      %2419 = vmatprep.subr.bf16.mxu0 0
      %2420 = vmatpush1.bf16.msra.mxu0 0
      %2421 = vmatprep.subr.bf16.mxu0 0
      %2422 = vmatpush1.bf16.msra.mxu0 0
      %2423 = vmatprep.mubr.bf16.mxu0 0
      %2424 = vmatmul.mubr.bf16.gmra.mrb[0].mxu0 %v2311
      %v2425 = vpop.f32.mrb[0].mxu0
      %v2426 = vadd.f32 0.0, %v2425
      %v2427 = vpop.f32.mrb[0].mxu0
      %v2428 = vpop.f32.mrb[0].mxu0
      %v2429 = vadd.f32 0.0, %v2428
      %v2430 = vpop.f32.mrb[0].mxu0
      %2431 = vmatprep.mubr.bf16.mxu0 0
      %2432 = vmatmul.mubr.bf16.gmra.mrb[0].mxu0 %v2312
      %v2433 = vpop.f32.mrb[0].mxu0
      %v2434 = vadd.f32 0.0, %v2433
      %v2435 = vpop.f32.mrb[0].mxu0
      %v2436 = vpop.f32.mrb[0].mxu0
      %v2437 = vadd.f32 0.0, %v2436
      %v2438 = vpop.f32.mrb[0].mxu0
      %2439 = vmatprep.mubr.bf16.mxu0 0
      %2440 = vmatmul.mubr.bf16.gmra.mrb[0].mxu0 %v2313
      %v2441 = vpop.f32.mrb[0].mxu0
      %v2442 = vadd.f32 0.0, %v2441
      %v2443 = vpop.f32.mrb[0].mxu0
      %v2444 = vpop.f32.mrb[0].mxu0
      %v2445 = vadd.f32 0.0, %v2444
      %v2446 = vpop.f32.mrb[0].mxu0
      %2447 = vmatprep.mubr.bf16.mxu0 0
      %2448 = vmatmul.mubr.bf16.gmra.mrb[0].mxu0 %v2314
      %v2449 = vpop.f32.mrb[0].mxu0
      %v2450 = vadd.f32 0.0, %v2449
      %v2451 = vpop.f32.mrb[0].mxu0
      %v2452 = vpop.f32.mrb[0].mxu0
      %v2453 = vadd.f32 0.0, %v2452
      %v2454 = vpop.f32.mrb[0].mxu0
      %2455 = vmatprep.mubr.bf16.mxu0 0
      %2456 = vmatmul.mubr.bf16.gmra.mrb[0].mxu0 %v2315
      %v2457 = vpop.f32.mrb[0].mxu0
      %v2458 = vadd.f32 0.0, %v2457
      %v2459 = vpop.f32.mrb[0].mxu0
      %v2460 = vpop.f32.mrb[0].mxu0
      %v2461 = vadd.f32 0.0, %v2460
      %v2462 = vpop.f32.mrb[0].mxu0
      %2463 = vmatprep.mubr.bf16.mxu0 0
      %2464 = vmatmul.mubr.bf16.gmra.mrb[0].mxu0 %v2316
      %v2465 = vpop.f32.mrb[0].mxu0
      %v2466 = vadd.f32 0.0, %v2465
      %v2467 = vpop.f32.mrb[0].mxu0
      %v2468 = vpop.f32.mrb[0].mxu0
      %v2469 = vadd.f32 0.0, %v2468
      %v2470 = vpop.f32.mrb[0].mxu0
      %2471 = vmatprep.mubr.bf16.mxu0 0
      %2472 = vmatmul.mubr.bf16.gmra.mrb[0].mxu0 %v2317
      %v2473 = vpop.f32.mrb[0].mxu0
      %v2474 = vadd.f32 0.0, %v2473
      %v2475 = vpop.f32.mrb[0].mxu0
      %v2476 = vpop.f32.mrb[0].mxu0
      %v2477 = vadd.f32 0.0, %v2476
      %v2478 = vpop.f32.mrb[0].mxu0
      %2479 = vmatprep.mubr.bf16.mxu0 0
      %2480 = vmatmul.mubr.bf16.gmra.mrb[0].mxu0 %v2318
      %v2481 = vpop.f32.mrb[0].mxu0
      %v2482 = vadd.f32 0.0, %v2481
      %v2483 = vpop.f32.mrb[0].mxu0
      %v2484 = vpop.f32.mrb[0].mxu0
      %v2485 = vadd.f32 0.0, %v2484
      %v2486 = vpop.f32.mrb[0].mxu0
      %2487 = vmatprep.mubr.bf16.mxu0 0
      %2488 = vmatmul.mubr.bf16.gmra.mrb[0].mxu0 %v2319
      %v2489 = vpop.f32.mrb[0].mxu0
      %v2490 = vadd.f32 0.0, %v2489
      %v2491 = vpop.f32.mrb[0].mxu0
      %v2492 = vpop.f32.mrb[0].mxu0
      %v2493 = vadd.f32 0.0, %v2492
      %v2494 = vpop.f32.mrb[0].mxu0
      %2495 = vmatprep.mubr.bf16.mxu0 0
      %2496 = vmatmul.mubr.bf16.gmra.mrb[0].mxu0 %v2320
      %v2497 = vpop.f32.mrb[0].mxu0
      %v2498 = vadd.f32 0.0, %v2497
      %v2499 = vpop.f32.mrb[0].mxu0
      %v2500 = vpop.f32.mrb[0].mxu0
      %v2501 = vadd.f32 0.0, %v2500
      %v2502 = vpop.f32.mrb[0].mxu0
      %2503 = vmatprep.mubr.bf16.mxu0 0
      %2504 = vmatmul.mubr.bf16.gmra.mrb[0].mxu0 %v2321
      %v2505 = vpop.f32.mrb[0].mxu0
      %v2506 = vadd.f32 0.0, %v2505
      %v2507 = vpop.f32.mrb[0].mxu0
      %v2508 = vpop.f32.mrb[0].mxu0
      %v2509 = vadd.f32 0.0, %v2508
      %v2510 = vpop.f32.mrb[0].mxu0
      %2511 = vmatprep.mubr.bf16.mxu0 0
      %2512 = vmatmul.mubr.bf16.gmra.mrb[0].mxu0 %v2322
      %v2513 = vpop.f32.mrb[0].mxu0
      %v2514 = vadd.f32 0.0, %v2513
      %v2515 = vpop.f32.mrb[0].mxu0
      %v2516 = vpop.f32.mrb[0].mxu0
      %v2517 = vadd.f32 0.0, %v2516
      %v2518 = vpop.f32.mrb[0].mxu0
      %2519 = vmatprep.mubr.bf16.mxu0 0
      %2520 = vmatmul.mubr.bf16.gmra.mrb[0].mxu0 %v2323
      %v2521 = vpop.f32.mrb[0].mxu0
      %v2522 = vadd.f32 0.0, %v2521
      %v2523 = vpop.f32.mrb[0].mxu0
      %v2524 = vpop.f32.mrb[0].mxu0
      %v2525 = vadd.f32 0.0, %v2524
      %v2526 = vpop.f32.mrb[0].mxu0
      %2527 = vmatprep.mubr.bf16.mxu0 0
      %2528 = vmatmul.mubr.bf16.gmra.mrb[0].mxu0 %v2324
      %v2529 = vpop.f32.mrb[0].mxu0
      %v2530 = vadd.f32 0.0, %v2529
      %v2531 = vpop.f32.mrb[0].mxu0
      %v2532 = vpop.f32.mrb[0].mxu0
      %v2533 = vadd.f32 0.0, %v2532
      %v2534 = vpop.f32.mrb[0].mxu0
      %2535 = vmatprep.mubr.bf16.mxu0 0
      %2536 = vmatmul.mubr.bf16.gmra.mrb[0].mxu0 %v2325
      %v2537 = vpop.f32.mrb[0].mxu0
      %v2538 = vadd.f32 0.0, %v2537
      %v2539 = vpop.f32.mrb[0].mxu0
      %v2540 = vpop.f32.mrb[0].mxu0
      %v2541 = vadd.f32 0.0, %v2540
      %v2542 = vpop.f32.mrb[0].mxu0
      %2543 = vmatprep.mubr.bf16.mxu0 0
      %2544 = vmatmul.mubr.bf16.gmra.mrb[0].mxu0 %v2326
      %v2545 = vpop.f32.mrb[0].mxu0
      %v2546 = vadd.f32 0.0, %v2545
      %v2547 = vpop.f32.mrb[0].mxu0
      %v2548 = vpop.f32.mrb[0].mxu0
      %v2549 = vadd.f32 0.0, %v2548
      %v2550 = vpop.f32.mrb[0].mxu0
      %2551 = vdwg.mxu0
      %v2552 = vadd.f32 %v1973, %v2426
      %v2553 = vadd.f32 %v1976, %v2429
      %v2554 = vadd.f32 %v1981, %v2434
      %v2555 = vadd.f32 %v1984, %v2437
      %v2556 = vadd.f32 %v1989, %v2442
      %v2557 = vadd.f32 %v1992, %v2445
      %v2558 = vadd.f32 %v1997, %v2450
      %v2559 = vadd.f32 %v2000, %v2453
      %v2560 = vadd.f32 %v2005, %v2458
      %v2561 = vadd.f32 %v2008, %v2461
      %v2562 = vadd.f32 %v2013, %v2466
      %v2563 = vadd.f32 %v2016, %v2469
      %v2564 = vadd.f32 %v2021, %v2474
      %v2565 = vadd.f32 %v2024, %v2477
      %v2566 = vadd.f32 %v2029, %v2482
      %v2567 = vadd.f32 %v2032, %v2485
      %v2568 = vadd.f32 %v2037, %v2490
      %v2569 = vadd.f32 %v2040, %v2493
      %v2570 = vadd.f32 %v2045, %v2498
      %v2571 = vadd.f32 %v2048, %v2501
      %v2572 = vadd.f32 %v2053, %v2506
      %v2573 = vadd.f32 %v2056, %v2509
      %v2574 = vadd.f32 %v2061, %v2514
      %v2575 = vadd.f32 %v2064, %v2517
      %v2576 = vadd.f32 %v2069, %v2522
      %v2577 = vadd.f32 %v2072, %v2525
      %v2578 = vadd.f32 %v2077, %v2530
      %v2579 = vadd.f32 %v2080, %v2533
      %v2580 = vadd.f32 %v2085, %v2538
      %v2581 = vadd.f32 %v2088, %v2541
      %v2582 = vadd.f32 %v2093, %v2546
      %v2583 = vadd.f32 %v2096, %v2549
      %v2584 = vld [vmem:[%s435] sm:$0xf]
      %v2585 = vld [vmem:[%s435 + $0x4] sm:$0xf]
      %v2586 = vld [vmem:[%s435 + $0xc] sm:$0xf]
      %v2587 = vld [vmem:[%s435 + $0x10] sm:$0xf]
      %v2588 = vld [vmem:[%s435 + $0x18] sm:$0xf]
      %v2589 = vld [vmem:[%s435 + $0x1c] sm:$0xf]
      %v2590 = vld [vmem:[%s435 + $0x24] sm:$0xf]
      %v2591 = vld [vmem:[%s435 + $0x28] sm:$0xf]
      %v2592 = vld [vmem:[%s435 + $0x30] sm:$0xf]
      %v2593 = vld [vmem:[%s435 + $0x34] sm:$0xf]
      %v2594 = vld [vmem:[%s435 + $0x3c] sm:$0xf]
      %v2595 = vld [vmem:[%s435 + $0x40] sm:$0xf]
      %v2596 = vld [vmem:[%s435 + $0x48] sm:$0xf]
      %v2597 = vld [vmem:[%s435 + $0x4c] sm:$0xf]
      %v2598 = vld [vmem:[%s435 + $0x54] sm:$0xf]
      %v2599 = vld [vmem:[%s435 + $0x58] sm:$0xf]
      %v2600 = vld [vmem:[%s435 + $0x60] sm:$0xf]
      %v2601 = vld [vmem:[%s435 + $0x64] sm:$0xf]
      %v2602 = vld [vmem:[%s435 + $0x6c] sm:$0xf]
      %v2603 = vld [vmem:[%s435 + $0x70] sm:$0xf]
      %v2604 = vld [vmem:[%s435 + $0x78] sm:$0xf]
      %v2605 = vld [vmem:[%s435 + $0x7c] sm:$0xf]
      %v2606 = vld [vmem:[%s435 + $0x84] sm:$0xf]
      %v2607 = vld [vmem:[%s435 + $0x88] sm:$0xf]
      %v2608 = vld [vmem:[%s435 + $0x90] sm:$0xf]
      %v2609 = vld [vmem:[%s435 + $0x94] sm:$0xf]
      %v2610 = vld [vmem:[%s435 + $0x9c] sm:$0xf]
      %v2611 = vld [vmem:[%s435 + $0xa0] sm:$0xf]
      %v2612 = vld [vmem:[%s435 + $0xa8] sm:$0xf]
      %v2613 = vld [vmem:[%s435 + $0xac] sm:$0xf]
      %v2614 = vld [vmem:[%s435 + $0xb4] sm:$0xf]
      %v2615 = vld [vmem:[%s435 + $0xb8] sm:$0xf]
      %s2616 = scalar_lea.vmem %s3, 192
      %v2617 = vld [vmem:[%s2616] sm:$0xf]
      %v2618 = vld [vmem:[%s2616 + $0x4] sm:$0xf]
      %v2619 = vld [vmem:[%s2616 + $0x8] sm:$0xf]
      %v2620 = vld [vmem:[%s2616 + $0xc] sm:$0xf]
      %v2621 = vld [vmem:[%s2616 + $0x10] sm:$0xf]
      %v2622 = vld [vmem:[%s2616 + $0x14] sm:$0xf]
      %v2623 = vld [vmem:[%s2616 + $0x18] sm:$0xf]
      %v2624 = vld [vmem:[%s2616 + $0x1c] sm:$0xf]
      %v2625 = vld [vmem:[%s2616 + $0x20] sm:$0xf]
      %v2626 = vld [vmem:[%s2616 + $0x24] sm:$0xf]
      %v2627 = vld [vmem:[%s2616 + $0x28] sm:$0xf]
      %v2628 = vld [vmem:[%s2616 + $0x2c] sm:$0xf]
      %v2629 = vld [vmem:[%s2616 + $0x30] sm:$0xf]
      %v2630 = vld [vmem:[%s2616 + $0x34] sm:$0xf]
      %v2631 = vld [vmem:[%s2616 + $0x38] sm:$0xf]
      %v2632 = vld [vmem:[%s2616 + $0x3c] sm:$0xf]
      %v2665 = vunpack.c.l.b16 %v2584
      %v2666 = vunpack.c.l.b16 %v2585
      %v2667 = vunpack.c.l.b16 %v2586
      %v2668 = vunpack.c.l.b16 %v2587
      %v2669 = vunpack.c.l.b16 %v2588
      %v2670 = vunpack.c.l.b16 %v2589
      %v2671 = vunpack.c.l.b16 %v2590
      %v2672 = vunpack.c.l.b16 %v2591
      %v2673 = vunpack.c.l.b16 %v2592
      %v2674 = vunpack.c.l.b16 %v2593
      %v2675 = vunpack.c.l.b16 %v2594
      %v2676 = vunpack.c.l.b16 %v2595
      %v2677 = vunpack.c.l.b16 %v2596
      %v2678 = vunpack.c.l.b16 %v2597
      %v2679 = vunpack.c.l.b16 %v2598
      %v2680 = vunpack.c.l.b16 %v2599
      %v2681 = vunpack.c.l.b16 %v2600
      %v2682 = vunpack.c.l.b16 %v2601
      %v2683 = vunpack.c.l.b16 %v2602
      %v2684 = vunpack.c.l.b16 %v2603
      %v2685 = vunpack.c.l.b16 %v2604
      %v2686 = vunpack.c.l.b16 %v2605
      %v2687 = vunpack.c.l.b16 %v2606
      %v2688 = vunpack.c.l.b16 %v2607
      %v2689 = vunpack.c.l.b16 %v2608
      %v2690 = vunpack.c.l.b16 %v2609
      %v2691 = vunpack.c.l.b16 %v2610
      %v2692 = vunpack.c.l.b16 %v2611
      %v2693 = vunpack.c.l.b16 %v2612
      %v2694 = vunpack.c.l.b16 %v2613
      %v2695 = vunpack.c.l.b16 %v2614
      %v2696 = vunpack.c.l.b16 %v2615
      %v2697 = vpack.c.b16 %v2666, %v2665
      %v2698 = vpack.c.b16 %v2668, %v2667
      %v2699 = vpack.c.b16 %v2670, %v2669
      %v2700 = vpack.c.b16 %v2672, %v2671
      %v2701 = vpack.c.b16 %v2674, %v2673
      %v2702 = vpack.c.b16 %v2676, %v2675
      %v2703 = vpack.c.b16 %v2678, %v2677
      %v2704 = vpack.c.b16 %v2680, %v2679
      %v2705 = vpack.c.b16 %v2682, %v2681
      %v2706 = vpack.c.b16 %v2684, %v2683
      %v2707 = vpack.c.b16 %v2686, %v2685
      %v2708 = vpack.c.b16 %v2688, %v2687
      %v2709 = vpack.c.b16 %v2690, %v2689
      %v2710 = vpack.c.b16 %v2692, %v2691
      %v2711 = vpack.c.b16 %v2694, %v2693
      %v2712 = vpack.c.b16 %v2696, %v2695
      %v2745 = vunpack.c.l.b16 %v2617
      %v2746 = vunpack.c.l.b16 %v2618
      %v2747 = vunpack.c.l.b16 %v2619
      %v2748 = vunpack.c.l.b16 %v2620
      %v2749 = vunpack.c.l.b16 %v2621
      %v2750 = vunpack.c.l.b16 %v2622
      %v2751 = vunpack.c.l.b16 %v2623
      %v2752 = vunpack.c.l.b16 %v2624
      %v2753 = vunpack.c.l.b16 %v2625
      %v2754 = vunpack.c.l.b16 %v2626
      %v2755 = vunpack.c.l.b16 %v2627
      %v2756 = vunpack.c.l.b16 %v2628
      %v2757 = vunpack.c.l.b16 %v2629
      %v2758 = vunpack.c.l.b16 %v2630
      %v2759 = vunpack.c.l.b16 %v2631
      %v2760 = vunpack.c.l.b16 %v2632
      %v2761 = vpack.c.b16 %v2746, %v2745
      %v2762 = vpack.c.b16 %v2748, %v2747
      %v2763 = vpack.c.b16 %v2750, %v2749
      %v2764 = vpack.c.b16 %v2752, %v2751
      %v2765 = vpack.c.b16 %v2754, %v2753
      %v2766 = vpack.c.b16 %v2756, %v2755
      %v2767 = vpack.c.b16 %v2758, %v2757
      %v2768 = vpack.c.b16 %v2760, %v2759
      %2777 = vmatprep.subr.bf16.mxu0 0
      %2778 = vmatpush1.bf16.msra.mxu0 %v2761
      %2779 = vmatprep.subr.bf16.mxu0 0
      %2780 = vmatpush1.bf16.msra.mxu0 %v2762
      %2781 = vmatprep.subr.bf16.mxu0 0
      %2782 = vmatpush1.bf16.msra.mxu0 %v2763
      %2783 = vmatprep.subr.bf16.mxu0 0
      %2784 = vmatpush1.bf16.msra.mxu0 %v2764
      %2785 = vmatprep.subr.bf16.mxu0 0
      %2786 = vmatpush1.bf16.msra.mxu0 %v2765
      %2787 = vmatprep.subr.bf16.mxu0 0
      %2788 = vmatpush1.bf16.msra.mxu0 %v2766
      %2789 = vmatprep.subr.bf16.mxu0 0
      %2790 = vmatpush1.bf16.msra.mxu0 %v2767
      %2791 = vmatprep.subr.bf16.mxu0 0
      %2792 = vmatpush1.bf16.msra.mxu0 %v2768
      %2793 = vmatprep.subr.bf16.mxu0 0
      %2794 = vmatpush1.bf16.msra.mxu0 0
      %2795 = vmatprep.subr.bf16.mxu0 0
      %2796 = vmatpush1.bf16.msra.mxu0 0
      %2797 = vmatprep.subr.bf16.mxu0 0
      %2798 = vmatpush1.bf16.msra.mxu0 0
      %2799 = vmatprep.subr.bf16.mxu0 0
      %2800 = vmatpush1.bf16.msra.mxu0 0
      %2801 = vmatprep.subr.bf16.mxu0 0
      %2802 = vmatpush1.bf16.msra.mxu0 0
      %2803 = vmatprep.subr.bf16.mxu0 0
      %2804 = vmatpush1.bf16.msra.mxu0 0
      %2805 = vmatprep.subr.bf16.mxu0 0
      %2806 = vmatpush1.bf16.msra.mxu0 0
      %2807 = vmatprep.subr.bf16.mxu0 0
      %2808 = vmatpush1.bf16.msra.mxu0 0
      %2809 = vmatprep.mubr.bf16.mxu0 0
      %2810 = vmatmul.mubr.bf16.gmra.mrb[0].mxu0 %v2697
      %v2811 = vpop.f32.mrb[0].mxu0
      %v2812 = vadd.f32 0.0, %v2811
      %v2813 = vpop.f32.mrb[0].mxu0
      %v2814 = vpop.f32.mrb[0].mxu0
      %v2815 = vadd.f32 0.0, %v2814
      %v2816 = vpop.f32.mrb[0].mxu0
      %2817 = vmatprep.mubr.bf16.mxu0 0
      %2818 = vmatmul.mubr.bf16.gmra.mrb[0].mxu0 %v2698
      %v2819 = vpop.f32.mrb[0].mxu0
      %v2820 = vadd.f32 0.0, %v2819
      %v2821 = vpop.f32.mrb[0].mxu0
      %v2822 = vpop.f32.mrb[0].mxu0
      %v2823 = vadd.f32 0.0, %v2822
      %v2824 = vpop.f32.mrb[0].mxu0
      %2825 = vmatprep.mubr.bf16.mxu0 0
      %2826 = vmatmul.mubr.bf16.gmra.mrb[0].mxu0 %v2699
      %v2827 = vpop.f32.mrb[0].mxu0
      %v2828 = vadd.f32 0.0, %v2827
      %v2829 = vpop.f32.mrb[0].mxu0
      %v2830 = vpop.f32.mrb[0].mxu0
      %v2831 = vadd.f32 0.0, %v2830
      %v2832 = vpop.f32.mrb[0].mxu0
      %2833 = vmatprep.mubr.bf16.mxu0 0
      %2834 = vmatmul.mubr.bf16.gmra.mrb[0].mxu0 %v2700
      %v2835 = vpop.f32.mrb[0].mxu0
      %v2836 = vadd.f32 0.0, %v2835
      %v2837 = vpop.f32.mrb[0].mxu0
      %v2838 = vpop.f32.mrb[0].mxu0
      %v2839 = vadd.f32 0.0, %v2838
      %v2840 = vpop.f32.mrb[0].mxu0
      %2841 = vmatprep.mubr.bf16.mxu0 0
      %2842 = vmatmul.mubr.bf16.gmra.mrb[0].mxu0 %v2701
      %v2843 = vpop.f32.mrb[0].mxu0
      %v2844 = vadd.f32 0.0, %v2843
      %v2845 = vpop.f32.mrb[0].mxu0
      %v2846 = vpop.f32.mrb[0].mxu0
      %v2847 = vadd.f32 0.0, %v2846
      %v2848 = vpop.f32.mrb[0].mxu0
      %2849 = vmatprep.mubr.bf16.mxu0 0
      %2850 = vmatmul.mubr.bf16.gmra.mrb[0].mxu0 %v2702
      %v2851 = vpop.f32.mrb[0].mxu0
      %v2852 = vadd.f32 0.0, %v2851
      %v2853 = vpop.f32.mrb[0].mxu0
      %v2854 = vpop.f32.mrb[0].mxu0
      %v2855 = vadd.f32 0.0, %v2854
      %v2856 = vpop.f32.mrb[0].mxu0
      %2857 = vmatprep.mubr.bf16.mxu0 0
      %2858 = vmatmul.mubr.bf16.gmra.mrb[0].mxu0 %v2703
      %v2859 = vpop.f32.mrb[0].mxu0
      %v2860 = vadd.f32 0.0, %v2859
      %v2861 = vpop.f32.mrb[0].mxu0
      %v2862 = vpop.f32.mrb[0].mxu0
      %v2863 = vadd.f32 0.0, %v2862
      %v2864 = vpop.f32.mrb[0].mxu0
      %2865 = vmatprep.mubr.bf16.mxu0 0
      %2866 = vmatmul.mubr.bf16.gmra.mrb[0].mxu0 %v2704
      %v2867 = vpop.f32.mrb[0].mxu0
      %v2868 = vadd.f32 0.0, %v2867
      %v2869 = vpop.f32.mrb[0].mxu0
      %v2870 = vpop.f32.mrb[0].mxu0
      %v2871 = vadd.f32 0.0, %v2870
      %v2872 = vpop.f32.mrb[0].mxu0
      %2873 = vmatprep.mubr.bf16.mxu0 0
      %2874 = vmatmul.mubr.bf16.gmra.mrb[0].mxu0 %v2705
      %v2875 = vpop.f32.mrb[0].mxu0
      %v2876 = vadd.f32 0.0, %v2875
      %v2877 = vpop.f32.mrb[0].mxu0
      %v2878 = vpop.f32.mrb[0].mxu0
      %v2879 = vadd.f32 0.0, %v2878
      %v2880 = vpop.f32.mrb[0].mxu0
      %2881 = vmatprep.mubr.bf16.mxu0 0
      %2882 = vmatmul.mubr.bf16.gmra.mrb[0].mxu0 %v2706
      %v2883 = vpop.f32.mrb[0].mxu0
      %v2884 = vadd.f32 0.0, %v2883
      %v2885 = vpop.f32.mrb[0].mxu0
      %v2886 = vpop.f32.mrb[0].mxu0
      %v2887 = vadd.f32 0.0, %v2886
      %v2888 = vpop.f32.mrb[0].mxu0
      %2889 = vmatprep.mubr.bf16.mxu0 0
      %2890 = vmatmul.mubr.bf16.gmra.mrb[0].mxu0 %v2707
      %v2891 = vpop.f32.mrb[0].mxu0
      %v2892 = vadd.f32 0.0, %v2891
      %v2893 = vpop.f32.mrb[0].mxu0
      %v2894 = vpop.f32.mrb[0].mxu0
      %v2895 = vadd.f32 0.0, %v2894
      %v2896 = vpop.f32.mrb[0].mxu0
      %2897 = vmatprep.mubr.bf16.mxu0 0
      %2898 = vmatmul.mubr.bf16.gmra.mrb[0].mxu0 %v2708
      %v2899 = vpop.f32.mrb[0].mxu0
      %v2900 = vadd.f32 0.0, %v2899
      %v2901 = vpop.f32.mrb[0].mxu0
      %v2902 = vpop.f32.mrb[0].mxu0
      %v2903 = vadd.f32 0.0, %v2902
      %v2904 = vpop.f32.mrb[0].mxu0
      %2905 = vmatprep.mubr.bf16.mxu0 0
      %2906 = vmatmul.mubr.bf16.gmra.mrb[0].mxu0 %v2709
      %v2907 = vpop.f32.mrb[0].mxu0
      %v2908 = vadd.f32 0.0, %v2907
      %v2909 = vpop.f32.mrb[0].mxu0
      %v2910 = vpop.f32.mrb[0].mxu0
      %v2911 = vadd.f32 0.0, %v2910
      %v2912 = vpop.f32.mrb[0].mxu0
      %2913 = vmatprep.mubr.bf16.mxu0 0
      %2914 = vmatmul.mubr.bf16.gmra.mrb[0].mxu0 %v2710
      %v2915 = vpop.f32.mrb[0].mxu0
      %v2916 = vadd.f32 0.0, %v2915
      %v2917 = vpop.f32.mrb[0].mxu0
      %v2918 = vpop.f32.mrb[0].mxu0
      %v2919 = vadd.f32 0.0, %v2918
      %v2920 = vpop.f32.mrb[0].mxu0
      %2921 = vmatprep.mubr.bf16.mxu0 0
      %2922 = vmatmul.mubr.bf16.gmra.mrb[0].mxu0 %v2711
      %v2923 = vpop.f32.mrb[0].mxu0
      %v2924 = vadd.f32 0.0, %v2923
      %v2925 = vpop.f32.mrb[0].mxu0
      %v2926 = vpop.f32.mrb[0].mxu0
      %v2927 = vadd.f32 0.0, %v2926
      %v2928 = vpop.f32.mrb[0].mxu0
      %2929 = vmatprep.mubr.bf16.mxu0 0
      %2930 = vmatmul.mubr.bf16.gmra.mrb[0].mxu0 %v2712
      %v2931 = vpop.f32.mrb[0].mxu0
      %v2932 = vadd.f32 0.0, %v2931
      %v2933 = vpop.f32.mrb[0].mxu0
      %v2934 = vpop.f32.mrb[0].mxu0
      %v2935 = vadd.f32 0.0, %v2934
      %v2936 = vpop.f32.mrb[0].mxu0
      %2937 = vdwg.mxu0
      %v2938 = vadd.f32 %v2552, %v2812
      %v2939 = vadd.f32 %v2553, %v2815
      %v2940 = vadd.f32 %v2554, %v2820
      %v2941 = vadd.f32 %v2555, %v2823
      %v2942 = vadd.f32 %v2556, %v2828
      %v2943 = vadd.f32 %v2557, %v2831
      %v2944 = vadd.f32 %v2558, %v2836
      %v2945 = vadd.f32 %v2559, %v2839
      %v2946 = vadd.f32 %v2560, %v2844
      %v2947 = vadd.f32 %v2561, %v2847
      %v2948 = vadd.f32 %v2562, %v2852
      %v2949 = vadd.f32 %v2563, %v2855
      %v2950 = vadd.f32 %v2564, %v2860
      %v2951 = vadd.f32 %v2565, %v2863
      %v2952 = vadd.f32 %v2566, %v2868
      %v2953 = vadd.f32 %v2567, %v2871
      %v2954 = vadd.f32 %v2568, %v2876
      %v2955 = vadd.f32 %v2569, %v2879
      %v2956 = vadd.f32 %v2570, %v2884
      %v2957 = vadd.f32 %v2571, %v2887
      %v2958 = vadd.f32 %v2572, %v2892
      %v2959 = vadd.f32 %v2573, %v2895
      %v2960 = vadd.f32 %v2574, %v2900
      %v2961 = vadd.f32 %v2575, %v2903
      %v2962 = vadd.f32 %v2576, %v2908
      %v2963 = vadd.f32 %v2577, %v2911
      %v2964 = vadd.f32 %v2578, %v2916
      %v2965 = vadd.f32 %v2579, %v2919
      %v2966 = vadd.f32 %v2580, %v2924
      %v2967 = vadd.f32 %v2581, %v2927
      %v2968 = vadd.f32 %v2582, %v2932
      %v2969 = vadd.f32 %v2583, %v2935
      %v2970 = vld [vmem:[%s435] sm:$0xf]
      %v2971 = vld [vmem:[%s435 + $0x4] sm:$0xf]
      %v2972 = vld [vmem:[%s435 + $0x8] sm:$0x1]
      %v2973 = vld [vmem:[%s435 + $0xc] sm:$0xf]
      %v2974 = vld [vmem:[%s435 + $0x10] sm:$0xf]
      %v2975 = vld [vmem:[%s435 + $0x14] sm:$0x1]
      %v2976 = vld [vmem:[%s435 + $0x18] sm:$0xf]
      %v2977 = vld [vmem:[%s435 + $0x1c] sm:$0xf]
      %v2978 = vld [vmem:[%s435 + $0x20] sm:$0x1]
      %v2979 = vld [vmem:[%s435 + $0x24] sm:$0xf]
      %v2980 = vld [vmem:[%s435 + $0x28] sm:$0xf]
      %v2981 = vld [vmem:[%s435 + $0x2c] sm:$0x1]
      %v2982 = vld [vmem:[%s435 + $0x30] sm:$0xf]
      %v2983 = vld [vmem:[%s435 + $0x34] sm:$0xf]
      %v2984 = vld [vmem:[%s435 + $0x38] sm:$0x1]
      %v2985 = vld [vmem:[%s435 + $0x3c] sm:$0xf]
      %v2986 = vld [vmem:[%s435 + $0x40] sm:$0xf]
      %v2987 = vld [vmem:[%s435 + $0x44] sm:$0x1]
      %v2988 = vld [vmem:[%s435 + $0x48] sm:$0xf]
      %v2989 = vld [vmem:[%s435 + $0x4c] sm:$0xf]
      %v2990 = vld [vmem:[%s435 + $0x50] sm:$0x1]
      %v2991 = vld [vmem:[%s435 + $0x54] sm:$0xf]
      %v2992 = vld [vmem:[%s435 + $0x58] sm:$0xf]
      %v2993 = vld [vmem:[%s435 + $0x5c] sm:$0x1]
      %v2994 = vld [vmem:[%s435 + $0x60] sm:$0xf]
      %v2995 = vld [vmem:[%s435 + $0x64] sm:$0xf]
      %v2996 = vld [vmem:[%s435 + $0x68] sm:$0x1]
      %v2997 = vld [vmem:[%s435 + $0x6c] sm:$0xf]
      %v2998 = vld [vmem:[%s435 + $0x70] sm:$0xf]
      %v2999 = vld [vmem:[%s435 + $0x74] sm:$0x1]
      %v3000 = vld [vmem:[%s435 + $0x78] sm:$0xf]
      %v3001 = vld [vmem:[%s435 + $0x7c] sm:$0xf]
      %v3002 = vld [vmem:[%s435 + $0x80] sm:$0x1]
      %v3003 = vld [vmem:[%s435 + $0x84] sm:$0xf]
      %v3004 = vld [vmem:[%s435 + $0x88] sm:$0xf]
      %v3005 = vld [vmem:[%s435 + $0x8c] sm:$0x1]
      %v3006 = vld [vmem:[%s435 + $0x90] sm:$0xf]
      %v3007 = vld [vmem:[%s435 + $0x94] sm:$0xf]
      %v3008 = vld [vmem:[%s435 + $0x98] sm:$0x1]
      %v3009 = vld [vmem:[%s435 + $0x9c] sm:$0xf]
      %v3010 = vld [vmem:[%s435 + $0xa0] sm:$0xf]
      %v3011 = vld [vmem:[%s435 + $0xa4] sm:$0x1]
      %v3012 = vld [vmem:[%s435 + $0xa8] sm:$0xf]
      %v3013 = vld [vmem:[%s435 + $0xac] sm:$0xf]
      %v3014 = vld [vmem:[%s435 + $0xb0] sm:$0x1]
      %v3015 = vld [vmem:[%s435 + $0xb4] sm:$0xf]
      %v3016 = vld [vmem:[%s435 + $0xb8] sm:$0xf]
      %v3017 = vld [vmem:[%s435 + $0xbc] sm:$0x1]
      %v3019 = vshrl.u32 %v2970, 16
      %v3021 = vrot.slane %v3019, 4
      %v3022 = vshll.u32 %v2970, 16
      %v3024 = vrot.slane %v3022, 5
      %v3025 = vor.u32 %v3021, %v3024
      %v3026 = vrot.slane %v3025, 4
      %v3028 = vshll.u32 %v2971, 16
      %v3030 = vrot.slane %v3028, 5
      %v3031 = vsel %vm1119, %v3026, %v3030
      %v3032 = vshrl.u32 %v2971, 16
      %v3034 = vrot.slane %v3032, 4
      %v3035 = vor.u32 %v3034, %v3030
      %v3036 = vrot.slane %v3035, 4
      %v3038 = vshll.u32 %v2972, 16
      %v3040 = vrot.slane %v3038, 5
      %v3041 = vsel %vm1119, %v3036, %v3040
      %v3043 = vshrl.u32 %v2973, 16
      %v3045 = vrot.slane %v3043, 4
      %v3046 = vshll.u32 %v2973, 16
      %v3048 = vrot.slane %v3046, 5
      %v3049 = vor.u32 %v3045, %v3048
      %v3050 = vrot.slane %v3049, 4
      %v3052 = vshll.u32 %v2974, 16
      %v3054 = vrot.slane %v3052, 5
      %v3055 = vsel %vm1119, %v3050, %v3054
      %v3056 = vshrl.u32 %v2974, 16
      %v3058 = vrot.slane %v3056, 4
      %v3059 = vor.u32 %v3058, %v3054
      %v3060 = vrot.slane %v3059, 4
      %v3062 = vshll.u32 %v2975, 16
      %v3064 = vrot.slane %v3062, 5
      %v3065 = vsel %vm1119, %v3060, %v3064
      %v3067 = vshrl.u32 %v2976, 16
      %v3069 = vrot.slane %v3067, 4
      %v3070 = vshll.u32 %v2976, 16
      %v3072 = vrot.slane %v3070, 5
      %v3073 = vor.u32 %v3069, %v3072
      %v3074 = vrot.slane %v3073, 4
      %v3076 = vshll.u32 %v2977, 16
      %v3078 = vrot.slane %v3076, 5
      %v3079 = vsel %vm1119, %v3074, %v3078
      %v3080 = vshrl.u32 %v2977, 16
      %v3082 = vrot.slane %v3080, 4
      %v3083 = vor.u32 %v3082, %v3078
      %v3084 = vrot.slane %v3083, 4
      %v3086 = vshll.u32 %v2978, 16
      %v3088 = vrot.slane %v3086, 5
      %v3089 = vsel %vm1119, %v3084, %v3088
      %v3091 = vshrl.u32 %v2979, 16
      %v3093 = vrot.slane %v3091, 4
      %v3094 = vshll.u32 %v2979, 16
      %v3096 = vrot.slane %v3094, 5
      %v3097 = vor.u32 %v3093, %v3096
      %v3098 = vrot.slane %v3097, 4
      %v3100 = vshll.u32 %v2980, 16
      %v3102 = vrot.slane %v3100, 5
      %v3103 = vsel %vm1119, %v3098, %v3102
      %v3104 = vshrl.u32 %v2980, 16
      %v3106 = vrot.slane %v3104, 4
      %v3107 = vor.u32 %v3106, %v3102
      %v3108 = vrot.slane %v3107, 4
      %v3110 = vshll.u32 %v2981, 16
      %v3112 = vrot.slane %v3110, 5
      %v3113 = vsel %vm1119, %v3108, %v3112
      %v3115 = vshrl.u32 %v2982, 16
      %v3117 = vrot.slane %v3115, 4
      %v3118 = vshll.u32 %v2982, 16
      %v3120 = vrot.slane %v3118, 5
      %v3121 = vor.u32 %v3117, %v3120
      %v3122 = vrot.slane %v3121, 4
      %v3124 = vshll.u32 %v2983, 16
      %v3126 = vrot.slane %v3124, 5
      %v3127 = vsel %vm1119, %v3122, %v3126
      %v3128 = vshrl.u32 %v2983, 16
      %v3130 = vrot.slane %v3128, 4
      %v3131 = vor.u32 %v3130, %v3126
      %v3132 = vrot.slane %v3131, 4
      %v3134 = vshll.u32 %v2984, 16
      %v3136 = vrot.slane %v3134, 5
      %v3137 = vsel %vm1119, %v3132, %v3136
      %v3139 = vshrl.u32 %v2985, 16
      %v3141 = vrot.slane %v3139, 4
      %v3142 = vshll.u32 %v2985, 16
      %v3144 = vrot.slane %v3142, 5
      %v3145 = vor.u32 %v3141, %v3144
      %v3146 = vrot.slane %v3145, 4
      %v3148 = vshll.u32 %v2986, 16
      %v3150 = vrot.slane %v3148, 5
      %v3151 = vsel %vm1119, %v3146, %v3150
      %v3152 = vshrl.u32 %v2986, 16
      %v3154 = vrot.slane %v3152, 4
      %v3155 = vor.u32 %v3154, %v3150
      %v3156 = vrot.slane %v3155, 4
      %v3158 = vshll.u32 %v2987, 16
      %v3160 = vrot.slane %v3158, 5
      %v3161 = vsel %vm1119, %v3156, %v3160
      %v3163 = vshrl.u32 %v2988, 16
      %v3165 = vrot.slane %v3163, 4
      %v3166 = vshll.u32 %v2988, 16
      %v3168 = vrot.slane %v3166, 5
      %v3169 = vor.u32 %v3165, %v3168
      %v3170 = vrot.slane %v3169, 4
      %v3172 = vshll.u32 %v2989, 16
      %v3174 = vrot.slane %v3172, 5
      %v3175 = vsel %vm1119, %v3170, %v3174
      %v3176 = vshrl.u32 %v2989, 16
      %v3178 = vrot.slane %v3176, 4
      %v3179 = vor.u32 %v3178, %v3174
      %v3180 = vrot.slane %v3179, 4
      %v3182 = vshll.u32 %v2990, 16
      %v3184 = vrot.slane %v3182, 5
      %v3185 = vsel %vm1119, %v3180, %v3184
      %v3187 = vshrl.u32 %v2991, 16
      %v3189 = vrot.slane %v3187, 4
      %v3190 = vshll.u32 %v2991, 16
      %v3192 = vrot.slane %v3190, 5
      %v3193 = vor.u32 %v3189, %v3192
      %v3194 = vrot.slane %v3193, 4
      %v3196 = vshll.u32 %v2992, 16
      %v3198 = vrot.slane %v3196, 5
      %v3199 = vsel %vm1119, %v3194, %v3198
      %v3200 = vshrl.u32 %v2992, 16
      %v3202 = vrot.slane %v3200, 4
      %v3203 = vor.u32 %v3202, %v3198
      %v3204 = vrot.slane %v3203, 4
      %v3206 = vshll.u32 %v2993, 16
      %v3208 = vrot.slane %v3206, 5
      %v3209 = vsel %vm1119, %v3204, %v3208
      %v3211 = vshrl.u32 %v2994, 16
      %v3213 = vrot.slane %v3211, 4
      %v3214 = vshll.u32 %v2994, 16
      %v3216 = vrot.slane %v3214, 5
      %v3217 = vor.u32 %v3213, %v3216
      %v3218 = vrot.slane %v3217, 4
      %v3220 = vshll.u32 %v2995, 16
      %v3222 = vrot.slane %v3220, 5
      %v3223 = vsel %vm1119, %v3218, %v3222
      %v3224 = vshrl.u32 %v2995, 16
      %v3226 = vrot.slane %v3224, 4
      %v3227 = vor.u32 %v3226, %v3222
      %v3228 = vrot.slane %v3227, 4
      %v3230 = vshll.u32 %v2996, 16
      %v3232 = vrot.slane %v3230, 5
      %v3233 = vsel %vm1119, %v3228, %v3232
      %v3235 = vshrl.u32 %v2997, 16
      %v3237 = vrot.slane %v3235, 4
      %v3238 = vshll.u32 %v2997, 16
      %v3240 = vrot.slane %v3238, 5
      %v3241 = vor.u32 %v3237, %v3240
      %v3242 = vrot.slane %v3241, 4
      %v3244 = vshll.u32 %v2998, 16
      %v3246 = vrot.slane %v3244, 5
      %v3247 = vsel %vm1119, %v3242, %v3246
      %v3248 = vshrl.u32 %v2998, 16
      %v3250 = vrot.slane %v3248, 4
      %v3251 = vor.u32 %v3250, %v3246
      %v3252 = vrot.slane %v3251, 4
      %v3254 = vshll.u32 %v2999, 16
      %v3256 = vrot.slane %v3254, 5
      %v3257 = vsel %vm1119, %v3252, %v3256
      %v3259 = vshrl.u32 %v3000, 16
      %v3261 = vrot.slane %v3259, 4
      %v3262 = vshll.u32 %v3000, 16
      %v3264 = vrot.slane %v3262, 5
      %v3265 = vor.u32 %v3261, %v3264
      %v3266 = vrot.slane %v3265, 4
      %v3268 = vshll.u32 %v3001, 16
      %v3270 = vrot.slane %v3268, 5
      %v3271 = vsel %vm1119, %v3266, %v3270
      %v3272 = vshrl.u32 %v3001, 16
      %v3274 = vrot.slane %v3272, 4
      %v3275 = vor.u32 %v3274, %v3270
      %v3276 = vrot.slane %v3275, 4
      %v3278 = vshll.u32 %v3002, 16
      %v3280 = vrot.slane %v3278, 5
      %v3281 = vsel %vm1119, %v3276, %v3280
      %v3283 = vshrl.u32 %v3003, 16
      %v3285 = vrot.slane %v3283, 4
      %v3286 = vshll.u32 %v3003, 16
      %v3288 = vrot.slane %v3286, 5
      %v3289 = vor.u32 %v3285, %v3288
      %v3290 = vrot.slane %v3289, 4
      %v3292 = vshll.u32 %v3004, 16
      %v3294 = vrot.slane %v3292, 5
      %v3295 = vsel %vm1119, %v3290, %v3294
      %v3296 = vshrl.u32 %v3004, 16
      %v3298 = vrot.slane %v3296, 4
      %v3299 = vor.u32 %v3298, %v3294
      %v3300 = vrot.slane %v3299, 4
      %v3302 = vshll.u32 %v3005, 16
      %v3304 = vrot.slane %v3302, 5
      %v3305 = vsel %vm1119, %v3300, %v3304
      %v3307 = vshrl.u32 %v3006, 16
      %v3309 = vrot.slane %v3307, 4
      %v3310 = vshll.u32 %v3006, 16
      %v3312 = vrot.slane %v3310, 5
      %v3313 = vor.u32 %v3309, %v3312
      %v3314 = vrot.slane %v3313, 4
      %v3316 = vshll.u32 %v3007, 16
      %v3318 = vrot.slane %v3316, 5
      %v3319 = vsel %vm1119, %v3314, %v3318
      %v3320 = vshrl.u32 %v3007, 16
      %v3322 = vrot.slane %v3320, 4
      %v3323 = vor.u32 %v3322, %v3318
      %v3324 = vrot.slane %v3323, 4
      %v3326 = vshll.u32 %v3008, 16
      %v3328 = vrot.slane %v3326, 5
      %v3329 = vsel %vm1119, %v3324, %v3328
      %v3331 = vshrl.u32 %v3009, 16
      %v3333 = vrot.slane %v3331, 4
      %v3334 = vshll.u32 %v3009, 16
      %v3336 = vrot.slane %v3334, 5
      %v3337 = vor.u32 %v3333, %v3336
      %v3338 = vrot.slane %v3337, 4
      %v3340 = vshll.u32 %v3010, 16
      %v3342 = vrot.slane %v3340, 5
      %v3343 = vsel %vm1119, %v3338, %v3342
      %v3344 = vshrl.u32 %v3010, 16
      %v3346 = vrot.slane %v3344, 4
      %v3347 = vor.u32 %v3346, %v3342
      %v3348 = vrot.slane %v3347, 4
      %v3350 = vshll.u32 %v3011, 16
      %v3352 = vrot.slane %v3350, 5
      %v3353 = vsel %vm1119, %v3348, %v3352
      %v3355 = vshrl.u32 %v3012, 16
      %v3357 = vrot.slane %v3355, 4
      %v3358 = vshll.u32 %v3012, 16
      %v3360 = vrot.slane %v3358, 5
      %v3361 = vor.u32 %v3357, %v3360
      %v3362 = vrot.slane %v3361, 4
      %v3364 = vshll.u32 %v3013, 16
      %v3366 = vrot.slane %v3364, 5
      %v3367 = vsel %vm1119, %v3362, %v3366
      %v3368 = vshrl.u32 %v3013, 16
      %v3370 = vrot.slane %v3368, 4
      %v3371 = vor.u32 %v3370, %v3366
      %v3372 = vrot.slane %v3371, 4
      %v3374 = vshll.u32 %v3014, 16
      %v3376 = vrot.slane %v3374, 5
      %v3377 = vsel %vm1119, %v3372, %v3376
      %v3379 = vshrl.u32 %v3015, 16
      %v3381 = vrot.slane %v3379, 4
      %v3382 = vshll.u32 %v3015, 16
      %v3384 = vrot.slane %v3382, 5
      %v3385 = vor.u32 %v3381, %v3384
      %v3386 = vrot.slane %v3385, 4
      %v3388 = vshll.u32 %v3016, 16
      %v3390 = vrot.slane %v3388, 5
      %v3391 = vsel %vm1119, %v3386, %v3390
      %v3392 = vshrl.u32 %v3016, 16
      %v3394 = vrot.slane %v3392, 4
      %v3395 = vor.u32 %v3394, %v3390
      %v3396 = vrot.slane %v3395, 4
      %v3398 = vshll.u32 %v3017, 16
      %v3400 = vrot.slane %v3398, 5
      %v3401 = vsel %vm1119, %v3396, %v3400
      %s3402 = scalar_lea.vmem %s3, 256
      %v3403 = vld [vmem:[%s3402] sm:$0xf]
      %v3404 = vld [vmem:[%s3402 + $0x4] sm:$0xf]
      %v3405 = vld [vmem:[%s3402 + $0x8] sm:$0xf]
      %v3406 = vld [vmem:[%s3402 + $0xc] sm:$0xf]
      %v3407 = vld [vmem:[%s3402 + $0x10] sm:$0xf]
      %v3408 = vld [vmem:[%s3402 + $0x14] sm:$0xf]
      %v3409 = vld [vmem:[%s3402 + $0x18] sm:$0xf]
      %v3410 = vld [vmem:[%s3402 + $0x1c] sm:$0xf]
      %v3411 = vld [vmem:[%s3402 + $0x20] sm:$0xf]
      %v3412 = vld [vmem:[%s3402 + $0x24] sm:$0xf]
      %v3413 = vld [vmem:[%s3402 + $0x28] sm:$0xf]
      %v3414 = vld [vmem:[%s3402 + $0x2c] sm:$0xf]
      %v3415 = vld [vmem:[%s3402 + $0x30] sm:$0xf]
      %v3416 = vld [vmem:[%s3402 + $0x34] sm:$0xf]
      %v3417 = vld [vmem:[%s3402 + $0x38] sm:$0xf]
      %v3418 = vld [vmem:[%s3402 + $0x3c] sm:$0xf]
      %v3419 = vunpack.c.l.b16 %v3031
      %v3420 = vunpack.c.l.b16 %v3041
      %v3421 = vunpack.c.l.b16 %v3055
      %v3422 = vunpack.c.l.b16 %v3065
      %v3423 = vunpack.c.l.b16 %v3079
      %v3424 = vunpack.c.l.b16 %v3089
      %v3425 = vunpack.c.l.b16 %v3103
      %v3426 = vunpack.c.l.b16 %v3113
      %v3427 = vunpack.c.l.b16 %v3127
      %v3428 = vunpack.c.l.b16 %v3137
      %v3429 = vunpack.c.l.b16 %v3151
      %v3430 = vunpack.c.l.b16 %v3161
      %v3431 = vunpack.c.l.b16 %v3175
      %v3432 = vunpack.c.l.b16 %v3185
      %v3433 = vunpack.c.l.b16 %v3199
      %v3434 = vunpack.c.l.b16 %v3209
      %v3435 = vunpack.c.l.b16 %v3223
      %v3436 = vunpack.c.l.b16 %v3233
      %v3437 = vunpack.c.l.b16 %v3247
      %v3438 = vunpack.c.l.b16 %v3257
      %v3439 = vunpack.c.l.b16 %v3271
      %v3440 = vunpack.c.l.b16 %v3281
      %v3441 = vunpack.c.l.b16 %v3295
      %v3442 = vunpack.c.l.b16 %v3305
      %v3443 = vunpack.c.l.b16 %v3319
      %v3444 = vunpack.c.l.b16 %v3329
      %v3445 = vunpack.c.l.b16 %v3343
      %v3446 = vunpack.c.l.b16 %v3353
      %v3447 = vunpack.c.l.b16 %v3367
      %v3448 = vunpack.c.l.b16 %v3377
      %v3449 = vunpack.c.l.b16 %v3391
      %v3450 = vunpack.c.l.b16 %v3401
      %v3451 = vpack.c.b16 %v3420, %v3419
      %v3452 = vpack.c.b16 %v3422, %v3421
      %v3453 = vpack.c.b16 %v3424, %v3423
      %v3454 = vpack.c.b16 %v3426, %v3425
      %v3455 = vpack.c.b16 %v3428, %v3427
      %v3456 = vpack.c.b16 %v3430, %v3429
      %v3457 = vpack.c.b16 %v3432, %v3431
      %v3458 = vpack.c.b16 %v3434, %v3433
      %v3459 = vpack.c.b16 %v3436, %v3435
      %v3460 = vpack.c.b16 %v3438, %v3437
      %v3461 = vpack.c.b16 %v3440, %v3439
      %v3462 = vpack.c.b16 %v3442, %v3441
      %v3463 = vpack.c.b16 %v3444, %v3443
      %v3464 = vpack.c.b16 %v3446, %v3445
      %v3465 = vpack.c.b16 %v3448, %v3447
      %v3466 = vpack.c.b16 %v3450, %v3449
      %v3499 = vunpack.c.l.b16 %v3403
      %v3500 = vunpack.c.l.b16 %v3404
      %v3501 = vunpack.c.l.b16 %v3405
      %v3502 = vunpack.c.l.b16 %v3406
      %v3503 = vunpack.c.l.b16 %v3407
      %v3504 = vunpack.c.l.b16 %v3408
      %v3505 = vunpack.c.l.b16 %v3409
      %v3506 = vunpack.c.l.b16 %v3410
      %v3507 = vunpack.c.l.b16 %v3411
      %v3508 = vunpack.c.l.b16 %v3412
      %v3509 = vunpack.c.l.b16 %v3413
      %v3510 = vunpack.c.l.b16 %v3414
      %v3511 = vunpack.c.l.b16 %v3415
      %v3512 = vunpack.c.l.b16 %v3416
      %v3513 = vunpack.c.l.b16 %v3417
      %v3514 = vunpack.c.l.b16 %v3418
      %v3515 = vpack.c.b16 %v3500, %v3499
      %v3516 = vpack.c.b16 %v3502, %v3501
      %v3517 = vpack.c.b16 %v3504, %v3503
      %v3518 = vpack.c.b16 %v3506, %v3505
      %v3519 = vpack.c.b16 %v3508, %v3507
      %v3520 = vpack.c.b16 %v3510, %v3509
      %v3521 = vpack.c.b16 %v3512, %v3511
      %v3522 = vpack.c.b16 %v3514, %v3513
      %3531 = vmatprep.subr.bf16.mxu0 0
      %3532 = vmatpush1.bf16.msra.mxu0 %v3515
      %3533 = vmatprep.subr.bf16.mxu0 0
      %3534 = vmatpush1.bf16.msra.mxu0 %v3516
      %3535 = vmatprep.subr.bf16.mxu0 0
      %3536 = vmatpush1.bf16.msra.mxu0 %v3517
      %3537 = vmatprep.subr.bf16.mxu0 0
      %3538 = vmatpush1.bf16.msra.mxu0 %v3518
      %3539 = vmatprep.subr.bf16.mxu0 0
      %3540 = vmatpush1.bf16.msra.mxu0 %v3519
      %3541 = vmatprep.subr.bf16.mxu0 0
      %3542 = vmatpush1.bf16.msra.mxu0 %v3520
      %3543 = vmatprep.subr.bf16.mxu0 0
      %3544 = vmatpush1.bf16.msra.mxu0 %v3521
      %3545 = vmatprep.subr.bf16.mxu0 0
      %3546 = vmatpush1.bf16.msra.mxu0 %v3522
      %3547 = vmatprep.subr.bf16.mxu0 0
      %3548 = vmatpush1.bf16.msra.mxu0 0
      %3549 = vmatprep.subr.bf16.mxu0 0
      %3550 = vmatpush1.bf16.msra.mxu0 0
      %3551 = vmatprep.subr.bf16.mxu0 0
      %3552 = vmatpush1.bf16.msra.mxu0 0
      %3553 = vmatprep.subr.bf16.mxu0 0
      %3554 = vmatpush1.bf16.msra.mxu0 0
      %3555 = vmatprep.subr.bf16.mxu0 0
      %3556 = vmatpush1.bf16.msra.mxu0 0
      %3557 = vmatprep.subr.bf16.mxu0 0
      %3558 = vmatpush1.bf16.msra.mxu0 0
      %3559 = vmatprep.subr.bf16.mxu0 0
      %3560 = vmatpush1.bf16.msra.mxu0 0
      %3561 = vmatprep.subr.bf16.mxu0 0
      %3562 = vmatpush1.bf16.msra.mxu0 0
      %3563 = vmatprep.mubr.bf16.mxu0 0
      %3564 = vmatmul.mubr.bf16.gmra.mrb[0].mxu0 %v3451
      %v3565 = vpop.f32.mrb[0].mxu0
      %v3566 = vadd.f32 0.0, %v3565
      %v3567 = vpop.f32.mrb[0].mxu0
      %v3568 = vpop.f32.mrb[0].mxu0
      %v3569 = vadd.f32 0.0, %v3568
      %v3570 = vpop.f32.mrb[0].mxu0
      %3571 = vmatprep.mubr.bf16.mxu0 0
      %3572 = vmatmul.mubr.bf16.gmra.mrb[0].mxu0 %v3452
      %v3573 = vpop.f32.mrb[0].mxu0
      %v3574 = vadd.f32 0.0, %v3573
      %v3575 = vpop.f32.mrb[0].mxu0
      %v3576 = vpop.f32.mrb[0].mxu0
      %v3577 = vadd.f32 0.0, %v3576
      %v3578 = vpop.f32.mrb[0].mxu0
      %3579 = vmatprep.mubr.bf16.mxu0 0
      %3580 = vmatmul.mubr.bf16.gmra.mrb[0].mxu0 %v3453
      %v3581 = vpop.f32.mrb[0].mxu0
      %v3582 = vadd.f32 0.0, %v3581
      %v3583 = vpop.f32.mrb[0].mxu0
      %v3584 = vpop.f32.mrb[0].mxu0
      %v3585 = vadd.f32 0.0, %v3584
      %v3586 = vpop.f32.mrb[0].mxu0
      %3587 = vmatprep.mubr.bf16.mxu0 0
      %3588 = vmatmul.mubr.bf16.gmra.mrb[0].mxu0 %v3454
      %v3589 = vpop.f32.mrb[0].mxu0
      %v3590 = vadd.f32 0.0, %v3589
      %v3591 = vpop.f32.mrb[0].mxu0
      %v3592 = vpop.f32.mrb[0].mxu0
      %v3593 = vadd.f32 0.0, %v3592
      %v3594 = vpop.f32.mrb[0].mxu0
      %3595 = vmatprep.mubr.bf16.mxu0 0
      %3596 = vmatmul.mubr.bf16.gmra.mrb[0].mxu0 %v3455
      %v3597 = vpop.f32.mrb[0].mxu0
      %v3598 = vadd.f32 0.0, %v3597
      %v3599 = vpop.f32.mrb[0].mxu0
      %v3600 = vpop.f32.mrb[0].mxu0
      %v3601 = vadd.f32 0.0, %v3600
      %v3602 = vpop.f32.mrb[0].mxu0
      %3603 = vmatprep.mubr.bf16.mxu0 0
      %3604 = vmatmul.mubr.bf16.gmra.mrb[0].mxu0 %v3456
      %v3605 = vpop.f32.mrb[0].mxu0
      %v3606 = vadd.f32 0.0, %v3605
      %v3607 = vpop.f32.mrb[0].mxu0
      %v3608 = vpop.f32.mrb[0].mxu0
      %v3609 = vadd.f32 0.0, %v3608
      %v3610 = vpop.f32.mrb[0].mxu0
      %3611 = vmatprep.mubr.bf16.mxu0 0
      %3612 = vmatmul.mubr.bf16.gmra.mrb[0].mxu0 %v3457
      %v3613 = vpop.f32.mrb[0].mxu0
      %v3614 = vadd.f32 0.0, %v3613
      %v3615 = vpop.f32.mrb[0].mxu0
      %v3616 = vpop.f32.mrb[0].mxu0
      %v3617 = vadd.f32 0.0, %v3616
      %v3618 = vpop.f32.mrb[0].mxu0
      %3619 = vmatprep.mubr.bf16.mxu0 0
      %3620 = vmatmul.mubr.bf16.gmra.mrb[0].mxu0 %v3458
      %v3621 = vpop.f32.mrb[0].mxu0
      %v3622 = vadd.f32 0.0, %v3621
      %v3623 = vpop.f32.mrb[0].mxu0
      %v3624 = vpop.f32.mrb[0].mxu0
      %v3625 = vadd.f32 0.0, %v3624
      %v3626 = vpop.f32.mrb[0].mxu0
      %3627 = vmatprep.mubr.bf16.mxu0 0
      %3628 = vmatmul.mubr.bf16.gmra.mrb[0].mxu0 %v3459
      %v3629 = vpop.f32.mrb[0].mxu0
      %v3630 = vadd.f32 0.0, %v3629
      %v3631 = vpop.f32.mrb[0].mxu0
      %v3632 = vpop.f32.mrb[0].mxu0
      %v3633 = vadd.f32 0.0, %v3632
      %v3634 = vpop.f32.mrb[0].mxu0
      %3635 = vmatprep.mubr.bf16.mxu0 0
      %3636 = vmatmul.mubr.bf16.gmra.mrb[0].mxu0 %v3460
      %v3637 = vpop.f32.mrb[0].mxu0
      %v3638 = vadd.f32 0.0, %v3637
      %v3639 = vpop.f32.mrb[0].mxu0
      %v3640 = vpop.f32.mrb[0].mxu0
      %v3641 = vadd.f32 0.0, %v3640
      %v3642 = vpop.f32.mrb[0].mxu0
      %3643 = vmatprep.mubr.bf16.mxu0 0
      %3644 = vmatmul.mubr.bf16.gmra.mrb[0].mxu0 %v3461
      %v3645 = vpop.f32.mrb[0].mxu0
      %v3646 = vadd.f32 0.0, %v3645
      %v3647 = vpop.f32.mrb[0].mxu0
      %v3648 = vpop.f32.mrb[0].mxu0
      %v3649 = vadd.f32 0.0, %v3648
      %v3650 = vpop.f32.mrb[0].mxu0
      %3651 = vmatprep.mubr.bf16.mxu0 0
      %3652 = vmatmul.mubr.bf16.gmra.mrb[0].mxu0 %v3462
      %v3653 = vpop.f32.mrb[0].mxu0
      %v3654 = vadd.f32 0.0, %v3653
      %v3655 = vpop.f32.mrb[0].mxu0
      %v3656 = vpop.f32.mrb[0].mxu0
      %v3657 = vadd.f32 0.0, %v3656
      %v3658 = vpop.f32.mrb[0].mxu0
      %3659 = vmatprep.mubr.bf16.mxu0 0
      %3660 = vmatmul.mubr.bf16.gmra.mrb[0].mxu0 %v3463
      %v3661 = vpop.f32.mrb[0].mxu0
      %v3662 = vadd.f32 0.0, %v3661
      %v3663 = vpop.f32.mrb[0].mxu0
      %v3664 = vpop.f32.mrb[0].mxu0
      %v3665 = vadd.f32 0.0, %v3664
      %v3666 = vpop.f32.mrb[0].mxu0
      %3667 = vmatprep.mubr.bf16.mxu0 0
      %3668 = vmatmul.mubr.bf16.gmra.mrb[0].mxu0 %v3464
      %v3669 = vpop.f32.mrb[0].mxu0
      %v3670 = vadd.f32 0.0, %v3669
      %v3671 = vpop.f32.mrb[0].mxu0
      %v3672 = vpop.f32.mrb[0].mxu0
      %v3673 = vadd.f32 0.0, %v3672
      %v3674 = vpop.f32.mrb[0].mxu0
      %3675 = vmatprep.mubr.bf16.mxu0 0
      %3676 = vmatmul.mubr.bf16.gmra.mrb[0].mxu0 %v3465
      %v3677 = vpop.f32.mrb[0].mxu0
      %v3678 = vadd.f32 0.0, %v3677
      %v3679 = vpop.f32.mrb[0].mxu0
      %v3680 = vpop.f32.mrb[0].mxu0
      %v3681 = vadd.f32 0.0, %v3680
      %v3682 = vpop.f32.mrb[0].mxu0
      %3683 = vmatprep.mubr.bf16.mxu0 0
      %3684 = vmatmul.mubr.bf16.gmra.mrb[0].mxu0 %v3466
      %v3685 = vpop.f32.mrb[0].mxu0
      %v3686 = vadd.f32 0.0, %v3685
      %v3687 = vpop.f32.mrb[0].mxu0
      %v3688 = vpop.f32.mrb[0].mxu0
      %v3689 = vadd.f32 0.0, %v3688
      %v3690 = vpop.f32.mrb[0].mxu0
      %3691 = vdwg.mxu0
      %v3692 = vadd.f32 %v2938, %v3566
      %v3693 = vadd.f32 %v2939, %v3569
      %v3694 = vadd.f32 %v2940, %v3574
      %v3695 = vadd.f32 %v2941, %v3577
      %v3696 = vadd.f32 %v2942, %v3582
      %v3697 = vadd.f32 %v2943, %v3585
      %v3698 = vadd.f32 %v2944, %v3590
      %v3699 = vadd.f32 %v2945, %v3593
      %v3700 = vadd.f32 %v2946, %v3598
      %v3701 = vadd.f32 %v2947, %v3601
      %v3702 = vadd.f32 %v2948, %v3606
      %v3703 = vadd.f32 %v2949, %v3609
      %v3704 = vadd.f32 %v2950, %v3614
      %v3705 = vadd.f32 %v2951, %v3617
      %v3706 = vadd.f32 %v2952, %v3622
      %v3707 = vadd.f32 %v2953, %v3625
      %v3708 = vadd.f32 %v2954, %v3630
      %v3709 = vadd.f32 %v2955, %v3633
      %v3710 = vadd.f32 %v2956, %v3638
      %v3711 = vadd.f32 %v2957, %v3641
      %v3712 = vadd.f32 %v2958, %v3646
      %v3713 = vadd.f32 %v2959, %v3649
      %v3714 = vadd.f32 %v2960, %v3654
      %v3715 = vadd.f32 %v2961, %v3657
      %v3716 = vadd.f32 %v2962, %v3662
      %v3717 = vadd.f32 %v2963, %v3665
      %v3718 = vadd.f32 %v2964, %v3670
      %v3719 = vadd.f32 %v2965, %v3673
      %v3720 = vadd.f32 %v2966, %v3678
      %v3721 = vadd.f32 %v2967, %v3681
      %v3722 = vadd.f32 %v2968, %v3686
      %v3723 = vadd.f32 %v2969, %v3689
      %v3724 = vld [vmem:[%s435] sm:$0xe]
      %v3725 = vld [vmem:[%s435 + $0xc] sm:$0xe]
      %v3726 = vld [vmem:[%s435 + $0x18] sm:$0xe]
      %v3727 = vld [vmem:[%s435 + $0x24] sm:$0xe]
      %v3728 = vld [vmem:[%s435 + $0x30] sm:$0xe]
      %v3729 = vld [vmem:[%s435 + $0x3c] sm:$0xe]
      %v3730 = vld [vmem:[%s435 + $0x48] sm:$0xe]
      %v3731 = vld [vmem:[%s435 + $0x54] sm:$0xe]
      %v3732 = vld [vmem:[%s435 + $0x60] sm:$0xe]
      %v3733 = vld [vmem:[%s435 + $0x6c] sm:$0xe]
      %v3734 = vld [vmem:[%s435 + $0x78] sm:$0xe]
      %v3735 = vld [vmem:[%s435 + $0x84] sm:$0xe]
      %v3736 = vld [vmem:[%s435 + $0x90] sm:$0xe]
      %v3737 = vld [vmem:[%s435 + $0x9c] sm:$0xe]
      %v3738 = vld [vmem:[%s435 + $0xa8] sm:$0xe]
      %v3739 = vld [vmem:[%s435 + $0xb4] sm:$0xe]
      %v3788 = vrot.slane %v3724, 5
      %v3789 = vrot.slane %v3788, 4
      %v3790 = vrot.slane %v2971, 5
      %v3791 = vsel %vm2149, %v3789, %v3790
      %v3792 = vrot.slane %v3790, 4
      %v3793 = vrot.slane %v2972, 5
      %v3794 = vsel %vm2149, %v3792, %v3793
      %v3795 = vrot.slane %v3725, 5
      %v3796 = vrot.slane %v3795, 4
      %v3797 = vrot.slane %v2974, 5
      %v3798 = vsel %vm2149, %v3796, %v3797
      %v3799 = vrot.slane %v3797, 4
      %v3800 = vrot.slane %v2975, 5
      %v3801 = vsel %vm2149, %v3799, %v3800
      %v3802 = vrot.slane %v3726, 5
      %v3803 = vrot.slane %v3802, 4
      %v3804 = vrot.slane %v2977, 5
      %v3805 = vsel %vm2149, %v3803, %v3804
      %v3806 = vrot.slane %v3804, 4
      %v3807 = vrot.slane %v2978, 5
      %v3808 = vsel %vm2149, %v3806, %v3807
      %v3809 = vrot.slane %v3727, 5
      %v3810 = vrot.slane %v3809, 4
      %v3811 = vrot.slane %v2980, 5
      %v3812 = vsel %vm2149, %v3810, %v3811
      %v3813 = vrot.slane %v3811, 4
      %v3814 = vrot.slane %v2981, 5
      %v3815 = vsel %vm2149, %v3813, %v3814
      %v3816 = vrot.slane %v3728, 5
      %v3817 = vrot.slane %v3816, 4
      %v3818 = vrot.slane %v2983, 5
      %v3819 = vsel %vm2149, %v3817, %v3818
      %v3820 = vrot.slane %v3818, 4
      %v3821 = vrot.slane %v2984, 5
      %v3822 = vsel %vm2149, %v3820, %v3821
      %v3823 = vrot.slane %v3729, 5
      %v3824 = vrot.slane %v3823, 4
      %v3825 = vrot.slane %v2986, 5
      %v3826 = vsel %vm2149, %v3824, %v3825
      %v3827 = vrot.slane %v3825, 4
      %v3828 = vrot.slane %v2987, 5
      %v3829 = vsel %vm2149, %v3827, %v3828
      %v3830 = vrot.slane %v3730, 5
      %v3831 = vrot.slane %v3830, 4
      %v3832 = vrot.slane %v2989, 5
      %v3833 = vsel %vm2149, %v3831, %v3832
      %v3834 = vrot.slane %v3832, 4
      %v3835 = vrot.slane %v2990, 5
      %v3836 = vsel %vm2149, %v3834, %v3835
      %v3837 = vrot.slane %v3731, 5
      %v3838 = vrot.slane %v3837, 4
      %v3839 = vrot.slane %v2992, 5
      %v3840 = vsel %vm2149, %v3838, %v3839
      %v3841 = vrot.slane %v3839, 4
      %v3842 = vrot.slane %v2993, 5
      %v3843 = vsel %vm2149, %v3841, %v3842
      %v3844 = vrot.slane %v3732, 5
      %v3845 = vrot.slane %v3844, 4
      %v3846 = vrot.slane %v2995, 5
      %v3847 = vsel %vm2149, %v3845, %v3846
      %v3848 = vrot.slane %v3846, 4
      %v3849 = vrot.slane %v2996, 5
      %v3850 = vsel %vm2149, %v3848, %v3849
      %v3851 = vrot.slane %v3733, 5
      %v3852 = vrot.slane %v3851, 4
      %v3853 = vrot.slane %v2998, 5
      %v3854 = vsel %vm2149, %v3852, %v3853
      %v3855 = vrot.slane %v3853, 4
      %v3856 = vrot.slane %v2999, 5
      %v3857 = vsel %vm2149, %v3855, %v3856
      %v3858 = vrot.slane %v3734, 5
      %v3859 = vrot.slane %v3858, 4
      %v3860 = vrot.slane %v3001, 5
      %v3861 = vsel %vm2149, %v3859, %v3860
      %v3862 = vrot.slane %v3860, 4
      %v3863 = vrot.slane %v3002, 5
      %v3864 = vsel %vm2149, %v3862, %v3863
      %v3865 = vrot.slane %v3735, 5
      %v3866 = vrot.slane %v3865, 4
      %v3867 = vrot.slane %v3004, 5
      %v3868 = vsel %vm2149, %v3866, %v3867
      %v3869 = vrot.slane %v3867, 4
      %v3870 = vrot.slane %v3005, 5
      %v3871 = vsel %vm2149, %v3869, %v3870
      %v3872 = vrot.slane %v3736, 5
      %v3873 = vrot.slane %v3872, 4
      %v3874 = vrot.slane %v3007, 5
      %v3875 = vsel %vm2149, %v3873, %v3874
      %v3876 = vrot.slane %v3874, 4
      %v3877 = vrot.slane %v3008, 5
      %v3878 = vsel %vm2149, %v3876, %v3877
      %v3879 = vrot.slane %v3737, 5
      %v3880 = vrot.slane %v3879, 4
      %v3881 = vrot.slane %v3010, 5
      %v3882 = vsel %vm2149, %v3880, %v3881
      %v3883 = vrot.slane %v3881, 4
      %v3884 = vrot.slane %v3011, 5
      %v3885 = vsel %vm2149, %v3883, %v3884
      %v3886 = vrot.slane %v3738, 5
      %v3887 = vrot.slane %v3886, 4
      %v3888 = vrot.slane %v3013, 5
      %v3889 = vsel %vm2149, %v3887, %v3888
      %v3890 = vrot.slane %v3888, 4
      %v3891 = vrot.slane %v3014, 5
      %v3892 = vsel %vm2149, %v3890, %v3891
      %v3893 = vrot.slane %v3739, 5
      %v3894 = vrot.slane %v3893, 4
      %v3895 = vrot.slane %v3016, 5
      %v3896 = vsel %vm2149, %v3894, %v3895
      %v3897 = vrot.slane %v3895, 4
      %v3898 = vrot.slane %v3017, 5
      %v3899 = vsel %vm2149, %v3897, %v3898
      %s3900 = scalar_lea.vmem %s3, 320
      %v3901 = vld [vmem:[%s3900] sm:$0xf]
      %v3902 = vld [vmem:[%s3900 + $0x4] sm:$0xf]
      %v3903 = vld [vmem:[%s3900 + $0x8] sm:$0xf]
      %v3904 = vld [vmem:[%s3900 + $0xc] sm:$0xf]
      %v3905 = vld [vmem:[%s3900 + $0x10] sm:$0xf]
      %v3906 = vld [vmem:[%s3900 + $0x14] sm:$0xf]
      %v3907 = vld [vmem:[%s3900 + $0x18] sm:$0xf]
      %v3908 = vld [vmem:[%s3900 + $0x1c] sm:$0xf]
      %v3909 = vld [vmem:[%s3900 + $0x20] sm:$0xf]
      %v3910 = vld [vmem:[%s3900 + $0x24] sm:$0xf]
      %v3911 = vld [vmem:[%s3900 + $0x28] sm:$0xf]
      %v3912 = vld [vmem:[%s3900 + $0x2c] sm:$0xf]
      %v3913 = vld [vmem:[%s3900 + $0x30] sm:$0xf]
      %v3914 = vld [vmem:[%s3900 + $0x34] sm:$0xf]
      %v3915 = vld [vmem:[%s3900 + $0x38] sm:$0xf]
      %v3916 = vld [vmem:[%s3900 + $0x3c] sm:$0xf]
      %v3917 = vunpack.c.l.b16 %v3791
      %v3918 = vunpack.c.l.b16 %v3794
      %v3919 = vunpack.c.l.b16 %v3798
      %v3920 = vunpack.c.l.b16 %v3801
      %v3921 = vunpack.c.l.b16 %v3805
      %v3922 = vunpack.c.l.b16 %v3808
      %v3923 = vunpack.c.l.b16 %v3812
      %v3924 = vunpack.c.l.b16 %v3815
      %v3925 = vunpack.c.l.b16 %v3819
      %v3926 = vunpack.c.l.b16 %v3822
      %v3927 = vunpack.c.l.b16 %v3826
      %v3928 = vunpack.c.l.b16 %v3829
      %v3929 = vunpack.c.l.b16 %v3833
      %v3930 = vunpack.c.l.b16 %v3836
      %v3931 = vunpack.c.l.b16 %v3840
      %v3932 = vunpack.c.l.b16 %v3843
      %v3933 = vunpack.c.l.b16 %v3847
      %v3934 = vunpack.c.l.b16 %v3850
      %v3935 = vunpack.c.l.b16 %v3854
      %v3936 = vunpack.c.l.b16 %v3857
      %v3937 = vunpack.c.l.b16 %v3861
      %v3938 = vunpack.c.l.b16 %v3864
      %v3939 = vunpack.c.l.b16 %v3868
      %v3940 = vunpack.c.l.b16 %v3871
      %v3941 = vunpack.c.l.b16 %v3875
      %v3942 = vunpack.c.l.b16 %v3878
      %v3943 = vunpack.c.l.b16 %v3882
      %v3944 = vunpack.c.l.b16 %v3885
      %v3945 = vunpack.c.l.b16 %v3889
      %v3946 = vunpack.c.l.b16 %v3892
      %v3947 = vunpack.c.l.b16 %v3896
      %v3948 = vunpack.c.l.b16 %v3899
      %v3949 = vpack.c.b16 %v3918, %v3917
      %v3950 = vpack.c.b16 %v3920, %v3919
      %v3951 = vpack.c.b16 %v3922, %v3921
      %v3952 = vpack.c.b16 %v3924, %v3923
      %v3953 = vpack.c.b16 %v3926, %v3925
      %v3954 = vpack.c.b16 %v3928, %v3927
      %v3955 = vpack.c.b16 %v3930, %v3929
      %v3956 = vpack.c.b16 %v3932, %v3931
      %v3957 = vpack.c.b16 %v3934, %v3933
      %v3958 = vpack.c.b16 %v3936, %v3935
      %v3959 = vpack.c.b16 %v3938, %v3937
      %v3960 = vpack.c.b16 %v3940, %v3939
      %v3961 = vpack.c.b16 %v3942, %v3941
      %v3962 = vpack.c.b16 %v3944, %v3943
      %v3963 = vpack.c.b16 %v3946, %v3945
      %v3964 = vpack.c.b16 %v3948, %v3947
      %v3997 = vunpack.c.l.b16 %v3901
      %v3998 = vunpack.c.l.b16 %v3902
      %v3999 = vunpack.c.l.b16 %v3903
      %v4000 = vunpack.c.l.b16 %v3904
      %v4001 = vunpack.c.l.b16 %v3905
      %v4002 = vunpack.c.l.b16 %v3906
      %v4003 = vunpack.c.l.b16 %v3907
      %v4004 = vunpack.c.l.b16 %v3908
      %v4005 = vunpack.c.l.b16 %v3909
      %v4006 = vunpack.c.l.b16 %v3910
      %v4007 = vunpack.c.l.b16 %v3911
      %v4008 = vunpack.c.l.b16 %v3912
      %v4009 = vunpack.c.l.b16 %v3913
      %v4010 = vunpack.c.l.b16 %v3914
      %v4011 = vunpack.c.l.b16 %v3915
      %v4012 = vunpack.c.l.b16 %v3916
      %v4013 = vpack.c.b16 %v3998, %v3997
      %v4014 = vpack.c.b16 %v4000, %v3999
      %v4015 = vpack.c.b16 %v4002, %v4001
      %v4016 = vpack.c.b16 %v4004, %v4003
      %v4017 = vpack.c.b16 %v4006, %v4005
      %v4018 = vpack.c.b16 %v4008, %v4007
      %v4019 = vpack.c.b16 %v4010, %v4009
      %v4020 = vpack.c.b16 %v4012, %v4011
      %4029 = vmatprep.subr.bf16.mxu0 0
      %4030 = vmatpush1.bf16.msra.mxu0 %v4013
      %4031 = vmatprep.subr.bf16.mxu0 0
      %4032 = vmatpush1.bf16.msra.mxu0 %v4014
      %4033 = vmatprep.subr.bf16.mxu0 0
      %4034 = vmatpush1.bf16.msra.mxu0 %v4015
      %4035 = vmatprep.subr.bf16.mxu0 0
      %4036 = vmatpush1.bf16.msra.mxu0 %v4016
      %4037 = vmatprep.subr.bf16.mxu0 0
      %4038 = vmatpush1.bf16.msra.mxu0 %v4017
      %4039 = vmatprep.subr.bf16.mxu0 0
      %4040 = vmatpush1.bf16.msra.mxu0 %v4018
      %4041 = vmatprep.subr.bf16.mxu0 0
      %4042 = vmatpush1.bf16.msra.mxu0 %v4019
      %4043 = vmatprep.subr.bf16.mxu0 0
      %4044 = vmatpush1.bf16.msra.mxu0 %v4020
      %4045 = vmatprep.subr.bf16.mxu0 0
      %4046 = vmatpush1.bf16.msra.mxu0 0
      %4047 = vmatprep.subr.bf16.mxu0 0
      %4048 = vmatpush1.bf16.msra.mxu0 0
      %4049 = vmatprep.subr.bf16.mxu0 0
      %4050 = vmatpush1.bf16.msra.mxu0 0
      %4051 = vmatprep.subr.bf16.mxu0 0
      %4052 = vmatpush1.bf16.msra.mxu0 0
      %4053 = vmatprep.subr.bf16.mxu0 0
      %4054 = vmatpush1.bf16.msra.mxu0 0
      %4055 = vmatprep.subr.bf16.mxu0 0
      %4056 = vmatpush1.bf16.msra.mxu0 0
      %4057 = vmatprep.subr.bf16.mxu0 0
      %4058 = vmatpush1.bf16.msra.mxu0 0
      %4059 = vmatprep.subr.bf16.mxu0 0
      %4060 = vmatpush1.bf16.msra.mxu0 0
      %4061 = vmatprep.mubr.bf16.mxu0 0
      %4062 = vmatmul.mubr.bf16.gmra.mrb[0].mxu0 %v3949
      %v4063 = vpop.f32.mrb[0].mxu0
      %v4064 = vadd.f32 0.0, %v4063
      %v4065 = vpop.f32.mrb[0].mxu0
      %v4066 = vpop.f32.mrb[0].mxu0
      %v4067 = vadd.f32 0.0, %v4066
      %v4068 = vpop.f32.mrb[0].mxu0
      %4069 = vmatprep.mubr.bf16.mxu0 0
      %4070 = vmatmul.mubr.bf16.gmra.mrb[0].mxu0 %v3950
      %v4071 = vpop.f32.mrb[0].mxu0
      %v4072 = vadd.f32 0.0, %v4071
      %v4073 = vpop.f32.mrb[0].mxu0
      %v4074 = vpop.f32.mrb[0].mxu0
      %v4075 = vadd.f32 0.0, %v4074
      %v4076 = vpop.f32.mrb[0].mxu0
      %4077 = vmatprep.mubr.bf16.mxu0 0
      %4078 = vmatmul.mubr.bf16.gmra.mrb[0].mxu0 %v3951
      %v4079 = vpop.f32.mrb[0].mxu0
      %v4080 = vadd.f32 0.0, %v4079
      %v4081 = vpop.f32.mrb[0].mxu0
      %v4082 = vpop.f32.mrb[0].mxu0
      %v4083 = vadd.f32 0.0, %v4082
      %v4084 = vpop.f32.mrb[0].mxu0
      %4085 = vmatprep.mubr.bf16.mxu0 0
      %4086 = vmatmul.mubr.bf16.gmra.mrb[0].mxu0 %v3952
      %v4087 = vpop.f32.mrb[0].mxu0
      %v4088 = vadd.f32 0.0, %v4087
      %v4089 = vpop.f32.mrb[0].mxu0
      %v4090 = vpop.f32.mrb[0].mxu0
      %v4091 = vadd.f32 0.0, %v4090
      %v4092 = vpop.f32.mrb[0].mxu0
      %4093 = vmatprep.mubr.bf16.mxu0 0
      %4094 = vmatmul.mubr.bf16.gmra.mrb[0].mxu0 %v3953
      %v4095 = vpop.f32.mrb[0].mxu0
      %v4096 = vadd.f32 0.0, %v4095
      %v4097 = vpop.f32.mrb[0].mxu0
      %v4098 = vpop.f32.mrb[0].mxu0
      %v4099 = vadd.f32 0.0, %v4098
      %v4100 = vpop.f32.mrb[0].mxu0
      %4101 = vmatprep.mubr.bf16.mxu0 0
      %4102 = vmatmul.mubr.bf16.gmra.mrb[0].mxu0 %v3954
      %v4103 = vpop.f32.mrb[0].mxu0
      %v4104 = vadd.f32 0.0, %v4103
      %v4105 = vpop.f32.mrb[0].mxu0
      %v4106 = vpop.f32.mrb[0].mxu0
      %v4107 = vadd.f32 0.0, %v4106
      %v4108 = vpop.f32.mrb[0].mxu0
      %4109 = vmatprep.mubr.bf16.mxu0 0
      %4110 = vmatmul.mubr.bf16.gmra.mrb[0].mxu0 %v3955
      %v4111 = vpop.f32.mrb[0].mxu0
      %v4112 = vadd.f32 0.0, %v4111
      %v4113 = vpop.f32.mrb[0].mxu0
      %v4114 = vpop.f32.mrb[0].mxu0
      %v4115 = vadd.f32 0.0, %v4114
      %v4116 = vpop.f32.mrb[0].mxu0
      %4117 = vmatprep.mubr.bf16.mxu0 0
      %4118 = vmatmul.mubr.bf16.gmra.mrb[0].mxu0 %v3956
      %v4119 = vpop.f32.mrb[0].mxu0
      %v4120 = vadd.f32 0.0, %v4119
      %v4121 = vpop.f32.mrb[0].mxu0
      %v4122 = vpop.f32.mrb[0].mxu0
      %v4123 = vadd.f32 0.0, %v4122
      %v4124 = vpop.f32.mrb[0].mxu0
      %4125 = vmatprep.mubr.bf16.mxu0 0
      %4126 = vmatmul.mubr.bf16.gmra.mrb[0].mxu0 %v3957
      %v4127 = vpop.f32.mrb[0].mxu0
      %v4128 = vadd.f32 0.0, %v4127
      %v4129 = vpop.f32.mrb[0].mxu0
      %v4130 = vpop.f32.mrb[0].mxu0
      %v4131 = vadd.f32 0.0, %v4130
      %v4132 = vpop.f32.mrb[0].mxu0
      %4133 = vmatprep.mubr.bf16.mxu0 0
      %4134 = vmatmul.mubr.bf16.gmra.mrb[0].mxu0 %v3958
      %v4135 = vpop.f32.mrb[0].mxu0
      %v4136 = vadd.f32 0.0, %v4135
      %v4137 = vpop.f32.mrb[0].mxu0
      %v4138 = vpop.f32.mrb[0].mxu0
      %v4139 = vadd.f32 0.0, %v4138
      %v4140 = vpop.f32.mrb[0].mxu0
      %4141 = vmatprep.mubr.bf16.mxu0 0
      %4142 = vmatmul.mubr.bf16.gmra.mrb[0].mxu0 %v3959
      %v4143 = vpop.f32.mrb[0].mxu0
      %v4144 = vadd.f32 0.0, %v4143
      %v4145 = vpop.f32.mrb[0].mxu0
      %v4146 = vpop.f32.mrb[0].mxu0
      %v4147 = vadd.f32 0.0, %v4146
      %v4148 = vpop.f32.mrb[0].mxu0
      %4149 = vmatprep.mubr.bf16.mxu0 0
      %4150 = vmatmul.mubr.bf16.gmra.mrb[0].mxu0 %v3960
      %v4151 = vpop.f32.mrb[0].mxu0
      %v4152 = vadd.f32 0.0, %v4151
      %v4153 = vpop.f32.mrb[0].mxu0
      %v4154 = vpop.f32.mrb[0].mxu0
      %v4155 = vadd.f32 0.0, %v4154
      %v4156 = vpop.f32.mrb[0].mxu0
      %4157 = vmatprep.mubr.bf16.mxu0 0
      %4158 = vmatmul.mubr.bf16.gmra.mrb[0].mxu0 %v3961
      %v4159 = vpop.f32.mrb[0].mxu0
      %v4160 = vadd.f32 0.0, %v4159
      %v4161 = vpop.f32.mrb[0].mxu0
      %v4162 = vpop.f32.mrb[0].mxu0
      %v4163 = vadd.f32 0.0, %v4162
      %v4164 = vpop.f32.mrb[0].mxu0
      %4165 = vmatprep.mubr.bf16.mxu0 0
      %4166 = vmatmul.mubr.bf16.gmra.mrb[0].mxu0 %v3962
      %v4167 = vpop.f32.mrb[0].mxu0
      %v4168 = vadd.f32 0.0, %v4167
      %v4169 = vpop.f32.mrb[0].mxu0
      %v4170 = vpop.f32.mrb[0].mxu0
      %v4171 = vadd.f32 0.0, %v4170
      %v4172 = vpop.f32.mrb[0].mxu0
      %4173 = vmatprep.mubr.bf16.mxu0 0
      %4174 = vmatmul.mubr.bf16.gmra.mrb[0].mxu0 %v3963
      %v4175 = vpop.f32.mrb[0].mxu0
      %v4176 = vadd.f32 0.0, %v4175
      %v4177 = vpop.f32.mrb[0].mxu0
      %v4178 = vpop.f32.mrb[0].mxu0
      %v4179 = vadd.f32 0.0, %v4178
      %v4180 = vpop.f32.mrb[0].mxu0
      %4181 = vmatprep.mubr.bf16.mxu0 0
      %4182 = vmatmul.mubr.bf16.gmra.mrb[0].mxu0 %v3964
      %v4183 = vpop.f32.mrb[0].mxu0
      %v4184 = vadd.f32 0.0, %v4183
      %v4185 = vpop.f32.mrb[0].mxu0
      %v4186 = vpop.f32.mrb[0].mxu0
      %v4187 = vadd.f32 0.0, %v4186
      %v4188 = vpop.f32.mrb[0].mxu0
      %4189 = vdwg.mxu0
      %v4190 = vadd.f32 %v3692, %v4064
      %v4191 = vadd.f32 %v3693, %v4067
      %v4192 = vadd.f32 %v3694, %v4072
      %v4193 = vadd.f32 %v3695, %v4075
      %v4194 = vadd.f32 %v3696, %v4080
      %v4195 = vadd.f32 %v3697, %v4083
      %v4196 = vadd.f32 %v3698, %v4088
      %v4197 = vadd.f32 %v3699, %v4091
      %v4198 = vadd.f32 %v3700, %v4096
      %v4199 = vadd.f32 %v3701, %v4099
      %v4200 = vadd.f32 %v3702, %v4104
      %v4201 = vadd.f32 %v3703, %v4107
      %v4202 = vadd.f32 %v3704, %v4112
      %v4203 = vadd.f32 %v3705, %v4115
      %v4204 = vadd.f32 %v3706, %v4120
      %v4205 = vadd.f32 %v3707, %v4123
      %v4206 = vadd.f32 %v3708, %v4128
      %v4207 = vadd.f32 %v3709, %v4131
      %v4208 = vadd.f32 %v3710, %v4136
      %v4209 = vadd.f32 %v3711, %v4139
      %v4210 = vadd.f32 %v3712, %v4144
      %v4211 = vadd.f32 %v3713, %v4147
      %v4212 = vadd.f32 %v3714, %v4152
      %v4213 = vadd.f32 %v3715, %v4155
      %v4214 = vadd.f32 %v3716, %v4160
      %v4215 = vadd.f32 %v3717, %v4163
      %v4216 = vadd.f32 %v3718, %v4168
      %v4217 = vadd.f32 %v3719, %v4171
      %v4218 = vadd.f32 %v3720, %v4176
      %v4219 = vadd.f32 %v3721, %v4179
      %v4220 = vadd.f32 %v3722, %v4184
      %v4221 = vadd.f32 %v3723, %v4187
      %s4222 = scalar_lea.vmem [#allocation2], 24
      %v4223 = vld [vmem:[%s4222] sm:$0xf]
      %v4224 = vld [vmem:[%s4222 + $0x4] sm:$0xf]
      %v4225 = vld [vmem:[%s4222 + $0xc] sm:$0xf]
      %v4226 = vld [vmem:[%s4222 + $0x10] sm:$0xf]
      %v4227 = vld [vmem:[%s4222 + $0x18] sm:$0xf]
      %v4228 = vld [vmem:[%s4222 + $0x1c] sm:$0xf]
      %v4229 = vld [vmem:[%s4222 + $0x24] sm:$0xf]
      %v4230 = vld [vmem:[%s4222 + $0x28] sm:$0xf]
      %v4231 = vld [vmem:[%s4222 + $0x30] sm:$0xf]
      %v4232 = vld [vmem:[%s4222 + $0x34] sm:$0xf]
      %v4233 = vld [vmem:[%s4222 + $0x3c] sm:$0xf]
      %v4234 = vld [vmem:[%s4222 + $0x40] sm:$0xf]
      %v4235 = vld [vmem:[%s4222 + $0x48] sm:$0xf]
      %v4236 = vld [vmem:[%s4222 + $0x4c] sm:$0xf]
      %v4237 = vld [vmem:[%s4222 + $0x54] sm:$0xf]
      %v4238 = vld [vmem:[%s4222 + $0x58] sm:$0xf]
      %v4239 = vld [vmem:[%s4222 + $0x60] sm:$0xf]
      %v4240 = vld [vmem:[%s4222 + $0x64] sm:$0xf]
      %v4241 = vld [vmem:[%s4222 + $0x6c] sm:$0xf]
      %v4242 = vld [vmem:[%s4222 + $0x70] sm:$0xf]
      %v4243 = vld [vmem:[%s4222 + $0x78] sm:$0xf]
      %v4244 = vld [vmem:[%s4222 + $0x7c] sm:$0xf]
      %v4245 = vld [vmem:[%s4222 + $0x84] sm:$0xf]
      %v4246 = vld [vmem:[%s4222 + $0x88] sm:$0xf]
      %v4247 = vld [vmem:[%s4222 + $0x90] sm:$0xf]
      %v4248 = vld [vmem:[%s4222 + $0x94] sm:$0xf]
      %v4249 = vld [vmem:[%s4222 + $0x9c] sm:$0xf]
      %v4250 = vld [vmem:[%s4222 + $0xa0] sm:$0xf]
      %v4251 = vld [vmem:[%s4222 + $0xa8] sm:$0xf]
      %v4252 = vld [vmem:[%s4222 + $0xac] sm:$0xf]
      %v4253 = vld [vmem:[%s4222 + $0xb4] sm:$0xf]
      %v4254 = vld [vmem:[%s4222 + $0xb8] sm:$0xf]
      %s4255 = scalar_lea.vmem %s3, 384
      %v4256 = vld [vmem:[%s4255] sm:$0xf]
      %v4257 = vld [vmem:[%s4255 + $0x4] sm:$0xf]
      %v4258 = vld [vmem:[%s4255 + $0x8] sm:$0xf]
      %v4259 = vld [vmem:[%s4255 + $0xc] sm:$0xf]
      %v4260 = vld [vmem:[%s4255 + $0x10] sm:$0xf]
      %v4261 = vld [vmem:[%s4255 + $0x14] sm:$0xf]
      %v4262 = vld [vmem:[%s4255 + $0x18] sm:$0xf]
      %v4263 = vld [vmem:[%s4255 + $0x1c] sm:$0xf]
      %v4264 = vld [vmem:[%s4255 + $0x20] sm:$0xf]
      %v4265 = vld [vmem:[%s4255 + $0x24] sm:$0xf]
      %v4266 = vld [vmem:[%s4255 + $0x28] sm:$0xf]
      %v4267 = vld [vmem:[%s4255 + $0x2c] sm:$0xf]
      %v4268 = vld [vmem:[%s4255 + $0x30] sm:$0xf]
      %v4269 = vld [vmem:[%s4255 + $0x34] sm:$0xf]
      %v4270 = vld [vmem:[%s4255 + $0x38] sm:$0xf]
      %v4271 = vld [vmem:[%s4255 + $0x3c] sm:$0xf]
      %v4304 = vunpack.c.l.b16 %v4223
      %v4305 = vunpack.c.l.b16 %v4224
      %v4306 = vunpack.c.l.b16 %v4225
      %v4307 = vunpack.c.l.b16 %v4226
      %v4308 = vunpack.c.l.b16 %v4227
      %v4309 = vunpack.c.l.b16 %v4228
      %v4310 = vunpack.c.l.b16 %v4229
      %v4311 = vunpack.c.l.b16 %v4230
      %v4312 = vunpack.c.l.b16 %v4231
      %v4313 = vunpack.c.l.b16 %v4232
      %v4314 = vunpack.c.l.b16 %v4233
      %v4315 = vunpack.c.l.b16 %v4234
      %v4316 = vunpack.c.l.b16 %v4235
      %v4317 = vunpack.c.l.b16 %v4236
      %v4318 = vunpack.c.l.b16 %v4237
      %v4319 = vunpack.c.l.b16 %v4238
      %v4320 = vunpack.c.l.b16 %v4239
      %v4321 = vunpack.c.l.b16 %v4240
      %v4322 = vunpack.c.l.b16 %v4241
      %v4323 = vunpack.c.l.b16 %v4242
      %v4324 = vunpack.c.l.b16 %v4243
      %v4325 = vunpack.c.l.b16 %v4244
      %v4326 = vunpack.c.l.b16 %v4245
      %v4327 = vunpack.c.l.b16 %v4246
      %v4328 = vunpack.c.l.b16 %v4247
      %v4329 = vunpack.c.l.b16 %v4248
      %v4330 = vunpack.c.l.b16 %v4249
      %v4331 = vunpack.c.l.b16 %v4250
      %v4332 = vunpack.c.l.b16 %v4251
      %v4333 = vunpack.c.l.b16 %v4252
      %v4334 = vunpack.c.l.b16 %v4253
      %v4335 = vunpack.c.l.b16 %v4254
      %v4336 = vpack.c.b16 %v4305, %v4304
      %v4337 = vpack.c.b16 %v4307, %v4306
      %v4338 = vpack.c.b16 %v4309, %v4308
      %v4339 = vpack.c.b16 %v4311, %v4310
      %v4340 = vpack.c.b16 %v4313, %v4312
      %v4341 = vpack.c.b16 %v4315, %v4314
      %v4342 = vpack.c.b16 %v4317, %v4316
      %v4343 = vpack.c.b16 %v4319, %v4318
      %v4344 = vpack.c.b16 %v4321, %v4320
      %v4345 = vpack.c.b16 %v4323, %v4322
      %v4346 = vpack.c.b16 %v4325, %v4324
      %v4347 = vpack.c.b16 %v4327, %v4326
      %v4348 = vpack.c.b16 %v4329, %v4328
      %v4349 = vpack.c.b16 %v4331, %v4330
      %v4350 = vpack.c.b16 %v4333, %v4332
      %v4351 = vpack.c.b16 %v4335, %v4334
      %v4384 = vunpack.c.l.b16 %v4256
      %v4385 = vunpack.c.l.b16 %v4257
      %v4386 = vunpack.c.l.b16 %v4258
      %v4387 = vunpack.c.l.b16 %v4259
      %v4388 = vunpack.c.l.b16 %v4260
      %v4389 = vunpack.c.l.b16 %v4261
      %v4390 = vunpack.c.l.b16 %v4262
      %v4391 = vunpack.c.l.b16 %v4263
      %v4392 = vunpack.c.l.b16 %v4264
      %v4393 = vunpack.c.l.b16 %v4265
      %v4394 = vunpack.c.l.b16 %v4266
      %v4395 = vunpack.c.l.b16 %v4267
      %v4396 = vunpack.c.l.b16 %v4268
      %v4397 = vunpack.c.l.b16 %v4269
      %v4398 = vunpack.c.l.b16 %v4270
      %v4399 = vunpack.c.l.b16 %v4271
      %v4400 = vpack.c.b16 %v4385, %v4384
      %v4401 = vpack.c.b16 %v4387, %v4386
      %v4402 = vpack.c.b16 %v4389, %v4388
      %v4403 = vpack.c.b16 %v4391, %v4390
      %v4404 = vpack.c.b16 %v4393, %v4392
      %v4405 = vpack.c.b16 %v4395, %v4394
      %v4406 = vpack.c.b16 %v4397, %v4396
      %v4407 = vpack.c.b16 %v4399, %v4398
      %4416 = vmatprep.subr.bf16.mxu0 0
      %4417 = vmatpush1.bf16.msra.mxu0 %v4400
      %4418 = vmatprep.subr.bf16.mxu0 0
      %4419 = vmatpush1.bf16.msra.mxu0 %v4401
      %4420 = vmatprep.subr.bf16.mxu0 0
      %4421 = vmatpush1.bf16.msra.mxu0 %v4402
      %4422 = vmatprep.subr.bf16.mxu0 0
      %4423 = vmatpush1.bf16.msra.mxu0 %v4403
      %4424 = vmatprep.subr.bf16.mxu0 0
      %4425 = vmatpush1.bf16.msra.mxu0 %v4404
      %4426 = vmatprep.subr.bf16.mxu0 0
      %4427 = vmatpush1.bf16.msra.mxu0 %v4405
      %4428 = vmatprep.subr.bf16.mxu0 0
      %4429 = vmatpush1.bf16.msra.mxu0 %v4406
      %4430 = vmatprep.subr.bf16.mxu0 0
      %4431 = vmatpush1.bf16.msra.mxu0 %v4407
      %4432 = vmatprep.subr.bf16.mxu0 0
      %4433 = vmatpush1.bf16.msra.mxu0 0
      %4434 = vmatprep.subr.bf16.mxu0 0
      %4435 = vmatpush1.bf16.msra.mxu0 0
      %4436 = vmatprep.subr.bf16.mxu0 0
      %4437 = vmatpush1.bf16.msra.mxu0 0
      %4438 = vmatprep.subr.bf16.mxu0 0
      %4439 = vmatpush1.bf16.msra.mxu0 0
      %4440 = vmatprep.subr.bf16.mxu0 0
      %4441 = vmatpush1.bf16.msra.mxu0 0
      %4442 = vmatprep.subr.bf16.mxu0 0
      %4443 = vmatpush1.bf16.msra.mxu0 0
      %4444 = vmatprep.subr.bf16.mxu0 0
      %4445 = vmatpush1.bf16.msra.mxu0 0
      %4446 = vmatprep.subr.bf16.mxu0 0
      %4447 = vmatpush1.bf16.msra.mxu0 0
      %4448 = vmatprep.mubr.bf16.mxu0 0
      %4449 = vmatmul.mubr.bf16.gmra.mrb[0].mxu0 %v4336
      %v4450 = vpop.f32.mrb[0].mxu0
      %v4451 = vadd.f32 0.0, %v4450
      %v4452 = vpop.f32.mrb[0].mxu0
      %v4453 = vpop.f32.mrb[0].mxu0
      %v4454 = vadd.f32 0.0, %v4453
      %v4455 = vpop.f32.mrb[0].mxu0
      %4456 = vmatprep.mubr.bf16.mxu0 0
      %4457 = vmatmul.mubr.bf16.gmra.mrb[0].mxu0 %v4337
      %v4458 = vpop.f32.mrb[0].mxu0
      %v4459 = vadd.f32 0.0, %v4458
      %v4460 = vpop.f32.mrb[0].mxu0
      %v4461 = vpop.f32.mrb[0].mxu0
      %v4462 = vadd.f32 0.0, %v4461
      %v4463 = vpop.f32.mrb[0].mxu0
      %4464 = vmatprep.mubr.bf16.mxu0 0
      %4465 = vmatmul.mubr.bf16.gmra.mrb[0].mxu0 %v4338
      %v4466 = vpop.f32.mrb[0].mxu0
      %v4467 = vadd.f32 0.0, %v4466
      %v4468 = vpop.f32.mrb[0].mxu0
      %v4469 = vpop.f32.mrb[0].mxu0
      %v4470 = vadd.f32 0.0, %v4469
      %v4471 = vpop.f32.mrb[0].mxu0
      %4472 = vmatprep.mubr.bf16.mxu0 0
      %4473 = vmatmul.mubr.bf16.gmra.mrb[0].mxu0 %v4339
      %v4474 = vpop.f32.mrb[0].mxu0
      %v4475 = vadd.f32 0.0, %v4474
      %v4476 = vpop.f32.mrb[0].mxu0
      %v4477 = vpop.f32.mrb[0].mxu0
      %v4478 = vadd.f32 0.0, %v4477
      %v4479 = vpop.f32.mrb[0].mxu0
      %4480 = vmatprep.mubr.bf16.mxu0 0
      %4481 = vmatmul.mubr.bf16.gmra.mrb[0].mxu0 %v4340
      %v4482 = vpop.f32.mrb[0].mxu0
      %v4483 = vadd.f32 0.0, %v4482
      %v4484 = vpop.f32.mrb[0].mxu0
      %v4485 = vpop.f32.mrb[0].mxu0
      %v4486 = vadd.f32 0.0, %v4485
      %v4487 = vpop.f32.mrb[0].mxu0
      %4488 = vmatprep.mubr.bf16.mxu0 0
      %4489 = vmatmul.mubr.bf16.gmra.mrb[0].mxu0 %v4341
      %v4490 = vpop.f32.mrb[0].mxu0
      %v4491 = vadd.f32 0.0, %v4490
      %v4492 = vpop.f32.mrb[0].mxu0
      %v4493 = vpop.f32.mrb[0].mxu0
      %v4494 = vadd.f32 0.0, %v4493
      %v4495 = vpop.f32.mrb[0].mxu0
      %4496 = vmatprep.mubr.bf16.mxu0 0
      %4497 = vmatmul.mubr.bf16.gmra.mrb[0].mxu0 %v4342
      %v4498 = vpop.f32.mrb[0].mxu0
      %v4499 = vadd.f32 0.0, %v4498
      %v4500 = vpop.f32.mrb[0].mxu0
      %v4501 = vpop.f32.mrb[0].mxu0
      %v4502 = vadd.f32 0.0, %v4501
      %v4503 = vpop.f32.mrb[0].mxu0
      %4504 = vmatprep.mubr.bf16.mxu0 0
      %4505 = vmatmul.mubr.bf16.gmra.mrb[0].mxu0 %v4343
      %v4506 = vpop.f32.mrb[0].mxu0
      %v4507 = vadd.f32 0.0, %v4506
      %v4508 = vpop.f32.mrb[0].mxu0
      %v4509 = vpop.f32.mrb[0].mxu0
      %v4510 = vadd.f32 0.0, %v4509
      %v4511 = vpop.f32.mrb[0].mxu0
      %4512 = vmatprep.mubr.bf16.mxu0 0
      %4513 = vmatmul.mubr.bf16.gmra.mrb[0].mxu0 %v4344
      %v4514 = vpop.f32.mrb[0].mxu0
      %v4515 = vadd.f32 0.0, %v4514
      %v4516 = vpop.f32.mrb[0].mxu0
      %v4517 = vpop.f32.mrb[0].mxu0
      %v4518 = vadd.f32 0.0, %v4517
      %v4519 = vpop.f32.mrb[0].mxu0
      %4520 = vmatprep.mubr.bf16.mxu0 0
      %4521 = vmatmul.mubr.bf16.gmra.mrb[0].mxu0 %v4345
      %v4522 = vpop.f32.mrb[0].mxu0
      %v4523 = vadd.f32 0.0, %v4522
      %v4524 = vpop.f32.mrb[0].mxu0
      %v4525 = vpop.f32.mrb[0].mxu0
      %v4526 = vadd.f32 0.0, %v4525
      %v4527 = vpop.f32.mrb[0].mxu0
      %4528 = vmatprep.mubr.bf16.mxu0 0
      %4529 = vmatmul.mubr.bf16.gmra.mrb[0].mxu0 %v4346
      %v4530 = vpop.f32.mrb[0].mxu0
      %v4531 = vadd.f32 0.0, %v4530
      %v4532 = vpop.f32.mrb[0].mxu0
      %v4533 = vpop.f32.mrb[0].mxu0
      %v4534 = vadd.f32 0.0, %v4533
      %v4535 = vpop.f32.mrb[0].mxu0
      %4536 = vmatprep.mubr.bf16.mxu0 0
      %4537 = vmatmul.mubr.bf16.gmra.mrb[0].mxu0 %v4347
      %v4538 = vpop.f32.mrb[0].mxu0
      %v4539 = vadd.f32 0.0, %v4538
      %v4540 = vpop.f32.mrb[0].mxu0
      %v4541 = vpop.f32.mrb[0].mxu0
      %v4542 = vadd.f32 0.0, %v4541
      %v4543 = vpop.f32.mrb[0].mxu0
      %4544 = vmatprep.mubr.bf16.mxu0 0
      %4545 = vmatmul.mubr.bf16.gmra.mrb[0].mxu0 %v4348
      %v4546 = vpop.f32.mrb[0].mxu0
      %v4547 = vadd.f32 0.0, %v4546
      %v4548 = vpop.f32.mrb[0].mxu0
      %v4549 = vpop.f32.mrb[0].mxu0
      %v4550 = vadd.f32 0.0, %v4549
      %v4551 = vpop.f32.mrb[0].mxu0
      %4552 = vmatprep.mubr.bf16.mxu0 0
      %4553 = vmatmul.mubr.bf16.gmra.mrb[0].mxu0 %v4349
      %v4554 = vpop.f32.mrb[0].mxu0
      %v4555 = vadd.f32 0.0, %v4554
      %v4556 = vpop.f32.mrb[0].mxu0
      %v4557 = vpop.f32.mrb[0].mxu0
      %v4558 = vadd.f32 0.0, %v4557
      %v4559 = vpop.f32.mrb[0].mxu0
      %4560 = vmatprep.mubr.bf16.mxu0 0
      %4561 = vmatmul.mubr.bf16.gmra.mrb[0].mxu0 %v4350
      %v4562 = vpop.f32.mrb[0].mxu0
      %v4563 = vadd.f32 0.0, %v4562
      %v4564 = vpop.f32.mrb[0].mxu0
      %v4565 = vpop.f32.mrb[0].mxu0
      %v4566 = vadd.f32 0.0, %v4565
      %v4567 = vpop.f32.mrb[0].mxu0
      %4568 = vmatprep.mubr.bf16.mxu0 0
      %4569 = vmatmul.mubr.bf16.gmra.mrb[0].mxu0 %v4351
      %v4570 = vpop.f32.mrb[0].mxu0
      %v4571 = vadd.f32 0.0, %v4570
      %v4572 = vpop.f32.mrb[0].mxu0
      %v4573 = vpop.f32.mrb[0].mxu0
      %v4574 = vadd.f32 0.0, %v4573
      %v4575 = vpop.f32.mrb[0].mxu0
      %4576 = vdwg.mxu0
      %v4577 = vadd.f32 %v4190, %v4451
      %v4578 = vadd.f32 %v4191, %v4454
      %v4579 = vadd.f32 %v4192, %v4459
      %v4580 = vadd.f32 %v4193, %v4462
      %v4581 = vadd.f32 %v4194, %v4467
      %v4582 = vadd.f32 %v4195, %v4470
      %v4583 = vadd.f32 %v4196, %v4475
      %v4584 = vadd.f32 %v4197, %v4478
      %v4585 = vadd.f32 %v4198, %v4483
      %v4586 = vadd.f32 %v4199, %v4486
      %v4587 = vadd.f32 %v4200, %v4491
      %v4588 = vadd.f32 %v4201, %v4494
      %v4589 = vadd.f32 %v4202, %v4499
      %v4590 = vadd.f32 %v4203, %v4502
      %v4591 = vadd.f32 %v4204, %v4507
      %v4592 = vadd.f32 %v4205, %v4510
      %v4593 = vadd.f32 %v4206, %v4515
      %v4594 = vadd.f32 %v4207, %v4518
      %v4595 = vadd.f32 %v4208, %v4523
      %v4596 = vadd.f32 %v4209, %v4526
      %v4597 = vadd.f32 %v4210, %v4531
      %v4598 = vadd.f32 %v4211, %v4534
      %v4599 = vadd.f32 %v4212, %v4539
      %v4600 = vadd.f32 %v4213, %v4542
      %v4601 = vadd.f32 %v4214, %v4547
      %v4602 = vadd.f32 %v4215, %v4550
      %v4603 = vadd.f32 %v4216, %v4555
      %v4604 = vadd.f32 %v4217, %v4558
      %v4605 = vadd.f32 %v4218, %v4563
      %v4606 = vadd.f32 %v4219, %v4566
      %v4607 = vadd.f32 %v4220, %v4571
      %v4608 = vadd.f32 %v4221, %v4574
      %v4609 = vld [vmem:[%s4222] sm:$0xf]
      %v4610 = vld [vmem:[%s4222 + $0x4] sm:$0xf]
      %v4611 = vld [vmem:[%s4222 + $0x8] sm:$0x1]
      %v4612 = vld [vmem:[%s4222 + $0xc] sm:$0xf]
      %v4613 = vld [vmem:[%s4222 + $0x10] sm:$0xf]
      %v4614 = vld [vmem:[%s4222 + $0x14] sm:$0x1]
      %v4615 = vld [vmem:[%s4222 + $0x18] sm:$0xf]
      %v4616 = vld [vmem:[%s4222 + $0x1c] sm:$0xf]
      %v4617 = vld [vmem:[%s4222 + $0x20] sm:$0x1]
      %v4618 = vld [vmem:[%s4222 + $0x24] sm:$0xf]
      %v4619 = vld [vmem:[%s4222 + $0x28] sm:$0xf]
      %v4620 = vld [vmem:[%s4222 + $0x2c] sm:$0x1]
      %v4621 = vld [vmem:[%s4222 + $0x30] sm:$0xf]
      %v4622 = vld [vmem:[%s4222 + $0x34] sm:$0xf]
      %v4623 = vld [vmem:[%s4222 + $0x38] sm:$0x1]
      %v4624 = vld [vmem:[%s4222 + $0x3c] sm:$0xf]
      %v4625 = vld [vmem:[%s4222 + $0x40] sm:$0xf]
      %v4626 = vld [vmem:[%s4222 + $0x44] sm:$0x1]
      %v4627 = vld [vmem:[%s4222 + $0x48] sm:$0xf]
      %v4628 = vld [vmem:[%s4222 + $0x4c] sm:$0xf]
      %v4629 = vld [vmem:[%s4222 + $0x50] sm:$0x1]
      %v4630 = vld [vmem:[%s4222 + $0x54] sm:$0xf]
      %v4631 = vld [vmem:[%s4222 + $0x58] sm:$0xf]
      %v4632 = vld [vmem:[%s4222 + $0x5c] sm:$0x1]
      %v4633 = vld [vmem:[%s4222 + $0x60] sm:$0xf]
      %v4634 = vld [vmem:[%s4222 + $0x64] sm:$0xf]
      %v4635 = vld [vmem:[%s4222 + $0x68] sm:$0x1]
      %v4636 = vld [vmem:[%s4222 + $0x6c] sm:$0xf]
      %v4637 = vld [vmem:[%s4222 + $0x70] sm:$0xf]
      %v4638 = vld [vmem:[%s4222 + $0x74] sm:$0x1]
      %v4639 = vld [vmem:[%s4222 + $0x78] sm:$0xf]
      %v4640 = vld [vmem:[%s4222 + $0x7c] sm:$0xf]
      %v4641 = vld [vmem:[%s4222 + $0x80] sm:$0x1]
      %v4642 = vld [vmem:[%s4222 + $0x84] sm:$0xf]
      %v4643 = vld [vmem:[%s4222 + $0x88] sm:$0xf]
      %v4644 = vld [vmem:[%s4222 + $0x8c] sm:$0x1]
      %v4645 = vld [vmem:[%s4222 + $0x90] sm:$0xf]
      %v4646 = vld [vmem:[%s4222 + $0x94] sm:$0xf]
      %v4647 = vld [vmem:[%s4222 + $0x98] sm:$0x1]
      %v4648 = vld [vmem:[%s4222 + $0x9c] sm:$0xf]
      %v4649 = vld [vmem:[%s4222 + $0xa0] sm:$0xf]
      %v4650 = vld [vmem:[%s4222 + $0xa4] sm:$0x1]
      %v4651 = vld [vmem:[%s4222 + $0xa8] sm:$0xf]
      %v4652 = vld [vmem:[%s4222 + $0xac] sm:$0xf]
      %v4653 = vld [vmem:[%s4222 + $0xb0] sm:$0x1]
      %v4654 = vld [vmem:[%s4222 + $0xb4] sm:$0xf]
      %v4655 = vld [vmem:[%s4222 + $0xb8] sm:$0xf]
      %v4656 = vld [vmem:[%s4222 + $0xbc] sm:$0x1]
      %v4658 = vshrl.u32 %v4609, 16
      %v4660 = vrot.slane %v4658, 4
      %v4661 = vshll.u32 %v4609, 16
      %v4663 = vrot.slane %v4661, 5
      %v4664 = vor.u32 %v4660, %v4663
      %v4665 = vrot.slane %v4664, 4
      %v4667 = vshll.u32 %v4610, 16
      %v4669 = vrot.slane %v4667, 5
      %v4670 = vsel %vm1119, %v4665, %v4669
      %v4671 = vshrl.u32 %v4610, 16
      %v4673 = vrot.slane %v4671, 4
      %v4674 = vor.u32 %v4673, %v4669
      %v4675 = vrot.slane %v4674, 4
      %v4677 = vshll.u32 %v4611, 16
      %v4679 = vrot.slane %v4677, 5
      %v4680 = vsel %vm1119, %v4675, %v4679
      %v4682 = vshrl.u32 %v4612, 16
      %v4684 = vrot.slane %v4682, 4
      %v4685 = vshll.u32 %v4612, 16
      %v4687 = vrot.slane %v4685, 5
      %v4688 = vor.u32 %v4684, %v4687
      %v4689 = vrot.slane %v4688, 4
      %v4691 = vshll.u32 %v4613, 16
      %v4693 = vrot.slane %v4691, 5
      %v4694 = vsel %vm1119, %v4689, %v4693
      %v4695 = vshrl.u32 %v4613, 16
      %v4697 = vrot.slane %v4695, 4
      %v4698 = vor.u32 %v4697, %v4693
      %v4699 = vrot.slane %v4698, 4
      %v4701 = vshll.u32 %v4614, 16
      %v4703 = vrot.slane %v4701, 5
      %v4704 = vsel %vm1119, %v4699, %v4703
      %v4706 = vshrl.u32 %v4615, 16
      %v4708 = vrot.slane %v4706, 4
      %v4709 = vshll.u32 %v4615, 16
      %v4711 = vrot.slane %v4709, 5
      %v4712 = vor.u32 %v4708, %v4711
      %v4713 = vrot.slane %v4712, 4
      %v4715 = vshll.u32 %v4616, 16
      %v4717 = vrot.slane %v4715, 5
      %v4718 = vsel %vm1119, %v4713, %v4717
      %v4719 = vshrl.u32 %v4616, 16
      %v4721 = vrot.slane %v4719, 4
      %v4722 = vor.u32 %v4721, %v4717
      %v4723 = vrot.slane %v4722, 4
      %v4725 = vshll.u32 %v4617, 16
      %v4727 = vrot.slane %v4725, 5
      %v4728 = vsel %vm1119, %v4723, %v4727
      %v4730 = vshrl.u32 %v4618, 16
      %v4732 = vrot.slane %v4730, 4
      %v4733 = vshll.u32 %v4618, 16
      %v4735 = vrot.slane %v4733, 5
      %v4736 = vor.u32 %v4732, %v4735
      %v4737 = vrot.slane %v4736, 4
      %v4739 = vshll.u32 %v4619, 16
      %v4741 = vrot.slane %v4739, 5
      %v4742 = vsel %vm1119, %v4737, %v4741
      %v4743 = vshrl.u32 %v4619, 16
      %v4745 = vrot.slane %v4743, 4
      %v4746 = vor.u32 %v4745, %v4741
      %v4747 = vrot.slane %v4746, 4
      %v4749 = vshll.u32 %v4620, 16
      %v4751 = vrot.slane %v4749, 5
      %v4752 = vsel %vm1119, %v4747, %v4751
      %v4754 = vshrl.u32 %v4621, 16
      %v4756 = vrot.slane %v4754, 4
      %v4757 = vshll.u32 %v4621, 16
      %v4759 = vrot.slane %v4757, 5
      %v4760 = vor.u32 %v4756, %v4759
      %v4761 = vrot.slane %v4760, 4
      %v4763 = vshll.u32 %v4622, 16
      %v4765 = vrot.slane %v4763, 5
      %v4766 = vsel %vm1119, %v4761, %v4765
      %v4767 = vshrl.u32 %v4622, 16
      %v4769 = vrot.slane %v4767, 4
      %v4770 = vor.u32 %v4769, %v4765
      %v4771 = vrot.slane %v4770, 4
      %v4773 = vshll.u32 %v4623, 16
      %v4775 = vrot.slane %v4773, 5
      %v4776 = vsel %vm1119, %v4771, %v4775
      %v4778 = vshrl.u32 %v4624, 16
      %v4780 = vrot.slane %v4778, 4
      %v4781 = vshll.u32 %v4624, 16
      %v4783 = vrot.slane %v4781, 5
      %v4784 = vor.u32 %v4780, %v4783
      %v4785 = vrot.slane %v4784, 4
      %v4787 = vshll.u32 %v4625, 16
      %v4789 = vrot.slane %v4787, 5
      %v4790 = vsel %vm1119, %v4785, %v4789
      %v4791 = vshrl.u32 %v4625, 16
      %v4793 = vrot.slane %v4791, 4
      %v4794 = vor.u32 %v4793, %v4789
      %v4795 = vrot.slane %v4794, 4
      %v4797 = vshll.u32 %v4626, 16
      %v4799 = vrot.slane %v4797, 5
      %v4800 = vsel %vm1119, %v4795, %v4799
      %v4802 = vshrl.u32 %v4627, 16
      %v4804 = vrot.slane %v4802, 4
      %v4805 = vshll.u32 %v4627, 16
      %v4807 = vrot.slane %v4805, 5
      %v4808 = vor.u32 %v4804, %v4807
      %v4809 = vrot.slane %v4808, 4
      %v4811 = vshll.u32 %v4628, 16
      %v4813 = vrot.slane %v4811, 5
      %v4814 = vsel %vm1119, %v4809, %v4813
      %v4815 = vshrl.u32 %v4628, 16
      %v4817 = vrot.slane %v4815, 4
      %v4818 = vor.u32 %v4817, %v4813
      %v4819 = vrot.slane %v4818, 4
      %v4821 = vshll.u32 %v4629, 16
      %v4823 = vrot.slane %v4821, 5
      %v4824 = vsel %vm1119, %v4819, %v4823
      %v4826 = vshrl.u32 %v4630, 16
      %v4828 = vrot.slane %v4826, 4
      %v4829 = vshll.u32 %v4630, 16
      %v4831 = vrot.slane %v4829, 5
      %v4832 = vor.u32 %v4828, %v4831
      %v4833 = vrot.slane %v4832, 4
      %v4835 = vshll.u32 %v4631, 16
      %v4837 = vrot.slane %v4835, 5
      %v4838 = vsel %vm1119, %v4833, %v4837
      %v4839 = vshrl.u32 %v4631, 16
      %v4841 = vrot.slane %v4839, 4
      %v4842 = vor.u32 %v4841, %v4837
      %v4843 = vrot.slane %v4842, 4
      %v4845 = vshll.u32 %v4632, 16
      %v4847 = vrot.slane %v4845, 5
      %v4848 = vsel %vm1119, %v4843, %v4847
      %v4850 = vshrl.u32 %v4633, 16
      %v4852 = vrot.slane %v4850, 4
      %v4853 = vshll.u32 %v4633, 16
      %v4855 = vrot.slane %v4853, 5
      %v4856 = vor.u32 %v4852, %v4855
      %v4857 = vrot.slane %v4856, 4
      %v4859 = vshll.u32 %v4634, 16
      %v4861 = vrot.slane %v4859, 5
      %v4862 = vsel %vm1119, %v4857, %v4861
      %v4863 = vshrl.u32 %v4634, 16
      %v4865 = vrot.slane %v4863, 4
      %v4866 = vor.u32 %v4865, %v4861
      %v4867 = vrot.slane %v4866, 4
      %v4869 = vshll.u32 %v4635, 16
      %v4871 = vrot.slane %v4869, 5
      %v4872 = vsel %vm1119, %v4867, %v4871
      %v4874 = vshrl.u32 %v4636, 16
      %v4876 = vrot.slane %v4874, 4
      %v4877 = vshll.u32 %v4636, 16
      %v4879 = vrot.slane %v4877, 5
      %v4880 = vor.u32 %v4876, %v4879
      %v4881 = vrot.slane %v4880, 4
      %v4883 = vshll.u32 %v4637, 16
      %v4885 = vrot.slane %v4883, 5
      %v4886 = vsel %vm1119, %v4881, %v4885
      %v4887 = vshrl.u32 %v4637, 16
      %v4889 = vrot.slane %v4887, 4
      %v4890 = vor.u32 %v4889, %v4885
      %v4891 = vrot.slane %v4890, 4
      %v4893 = vshll.u32 %v4638, 16
      %v4895 = vrot.slane %v4893, 5
      %v4896 = vsel %vm1119, %v4891, %v4895
      %v4898 = vshrl.u32 %v4639, 16
      %v4900 = vrot.slane %v4898, 4
      %v4901 = vshll.u32 %v4639, 16
      %v4903 = vrot.slane %v4901, 5
      %v4904 = vor.u32 %v4900, %v4903
      %v4905 = vrot.slane %v4904, 4
      %v4907 = vshll.u32 %v4640, 16
      %v4909 = vrot.slane %v4907, 5
      %v4910 = vsel %vm1119, %v4905, %v4909
      %v4911 = vshrl.u32 %v4640, 16
      %v4913 = vrot.slane %v4911, 4
      %v4914 = vor.u32 %v4913, %v4909
      %v4915 = vrot.slane %v4914, 4
      %v4917 = vshll.u32 %v4641, 16
      %v4919 = vrot.slane %v4917, 5
      %v4920 = vsel %vm1119, %v4915, %v4919
      %v4922 = vshrl.u32 %v4642, 16
      %v4924 = vrot.slane %v4922, 4
      %v4925 = vshll.u32 %v4642, 16
      %v4927 = vrot.slane %v4925, 5
      %v4928 = vor.u32 %v4924, %v4927
      %v4929 = vrot.slane %v4928, 4
      %v4931 = vshll.u32 %v4643, 16
      %v4933 = vrot.slane %v4931, 5
      %v4934 = vsel %vm1119, %v4929, %v4933
      %v4935 = vshrl.u32 %v4643, 16
      %v4937 = vrot.slane %v4935, 4
      %v4938 = vor.u32 %v4937, %v4933
      %v4939 = vrot.slane %v4938, 4
      %v4941 = vshll.u32 %v4644, 16
      %v4943 = vrot.slane %v4941, 5
      %v4944 = vsel %vm1119, %v4939, %v4943
      %v4946 = vshrl.u32 %v4645, 16
      %v4948 = vrot.slane %v4946, 4
      %v4949 = vshll.u32 %v4645, 16
      %v4951 = vrot.slane %v4949, 5
      %v4952 = vor.u32 %v4948, %v4951
      %v4953 = vrot.slane %v4952, 4
      %v4955 = vshll.u32 %v4646, 16
      %v4957 = vrot.slane %v4955, 5
      %v4958 = vsel %vm1119, %v4953, %v4957
      %v4959 = vshrl.u32 %v4646, 16
      %v4961 = vrot.slane %v4959, 4
      %v4962 = vor.u32 %v4961, %v4957
      %v4963 = vrot.slane %v4962, 4
      %v4965 = vshll.u32 %v4647, 16
      %v4967 = vrot.slane %v4965, 5
      %v4968 = vsel %vm1119, %v4963, %v4967
      %v4970 = vshrl.u32 %v4648, 16
      %v4972 = vrot.slane %v4970, 4
      %v4973 = vshll.u32 %v4648, 16
      %v4975 = vrot.slane %v4973, 5
      %v4976 = vor.u32 %v4972, %v4975
      %v4977 = vrot.slane %v4976, 4
      %v4979 = vshll.u32 %v4649, 16
      %v4981 = vrot.slane %v4979, 5
      %v4982 = vsel %vm1119, %v4977, %v4981
      %v4983 = vshrl.u32 %v4649, 16
      %v4985 = vrot.slane %v4983, 4
      %v4986 = vor.u32 %v4985, %v4981
      %v4987 = vrot.slane %v4986, 4
      %v4989 = vshll.u32 %v4650, 16
      %v4991 = vrot.slane %v4989, 5
      %v4992 = vsel %vm1119, %v4987, %v4991
      %v4994 = vshrl.u32 %v4651, 16
      %v4996 = vrot.slane %v4994, 4
      %v4997 = vshll.u32 %v4651, 16
      %v4999 = vrot.slane %v4997, 5
      %v5000 = vor.u32 %v4996, %v4999
      %v5001 = vrot.slane %v5000, 4
      %v5003 = vshll.u32 %v4652, 16
      %v5005 = vrot.slane %v5003, 5
      %v5006 = vsel %vm1119, %v5001, %v5005
      %v5007 = vshrl.u32 %v4652, 16
      %v5009 = vrot.slane %v5007, 4
      %v5010 = vor.u32 %v5009, %v5005
      %v5011 = vrot.slane %v5010, 4
      %v5013 = vshll.u32 %v4653, 16
      %v5015 = vrot.slane %v5013, 5
      %v5016 = vsel %vm1119, %v5011, %v5015
      %v5018 = vshrl.u32 %v4654, 16
      %v5020 = vrot.slane %v5018, 4
      %v5021 = vshll.u32 %v4654, 16
      %v5023 = vrot.slane %v5021, 5
      %v5024 = vor.u32 %v5020, %v5023
      %v5025 = vrot.slane %v5024, 4
      %v5027 = vshll.u32 %v4655, 16
      %v5029 = vrot.slane %v5027, 5
      %v5030 = vsel %vm1119, %v5025, %v5029
      %v5031 = vshrl.u32 %v4655, 16
      %v5033 = vrot.slane %v5031, 4
      %v5034 = vor.u32 %v5033, %v5029
      %v5035 = vrot.slane %v5034, 4
      %v5037 = vshll.u32 %v4656, 16
      %v5039 = vrot.slane %v5037, 5
      %v5040 = vsel %vm1119, %v5035, %v5039
      %s5041 = scalar_lea.vmem %s3, 448
      %v5042 = vld [vmem:[%s5041] sm:$0xf]
      %v5043 = vld [vmem:[%s5041 + $0x4] sm:$0xf]
      %v5044 = vld [vmem:[%s5041 + $0x8] sm:$0xf]
      %v5045 = vld [vmem:[%s5041 + $0xc] sm:$0xf]
      %v5046 = vld [vmem:[%s5041 + $0x10] sm:$0xf]
      %v5047 = vld [vmem:[%s5041 + $0x14] sm:$0xf]
      %v5048 = vld [vmem:[%s5041 + $0x18] sm:$0xf]
      %v5049 = vld [vmem:[%s5041 + $0x1c] sm:$0xf]
      %v5050 = vld [vmem:[%s5041 + $0x20] sm:$0xf]
      %v5051 = vld [vmem:[%s5041 + $0x24] sm:$0xf]
      %v5052 = vld [vmem:[%s5041 + $0x28] sm:$0xf]
      %v5053 = vld [vmem:[%s5041 + $0x2c] sm:$0xf]
      %v5054 = vld [vmem:[%s5041 + $0x30] sm:$0xf]
      %v5055 = vld [vmem:[%s5041 + $0x34] sm:$0xf]
      %v5056 = vld [vmem:[%s5041 + $0x38] sm:$0xf]
      %v5057 = vld [vmem:[%s5041 + $0x3c] sm:$0xf]
      %v5058 = vunpack.c.l.b16 %v4670
      %v5059 = vunpack.c.l.b16 %v4680
      %v5060 = vunpack.c.l.b16 %v4694
      %v5061 = vunpack.c.l.b16 %v4704
      %v5062 = vunpack.c.l.b16 %v4718
      %v5063 = vunpack.c.l.b16 %v4728
      %v5064 = vunpack.c.l.b16 %v4742
      %v5065 = vunpack.c.l.b16 %v4752
      %v5066 = vunpack.c.l.b16 %v4766
      %v5067 = vunpack.c.l.b16 %v4776
      %v5068 = vunpack.c.l.b16 %v4790
      %v5069 = vunpack.c.l.b16 %v4800
      %v5070 = vunpack.c.l.b16 %v4814
      %v5071 = vunpack.c.l.b16 %v4824
      %v5072 = vunpack.c.l.b16 %v4838
      %v5073 = vunpack.c.l.b16 %v4848
      %v5074 = vunpack.c.l.b16 %v4862
      %v5075 = vunpack.c.l.b16 %v4872
      %v5076 = vunpack.c.l.b16 %v4886
      %v5077 = vunpack.c.l.b16 %v4896
      %v5078 = vunpack.c.l.b16 %v4910
      %v5079 = vunpack.c.l.b16 %v4920
      %v5080 = vunpack.c.l.b16 %v4934
      %v5081 = vunpack.c.l.b16 %v4944
      %v5082 = vunpack.c.l.b16 %v4958
      %v5083 = vunpack.c.l.b16 %v4968
      %v5084 = vunpack.c.l.b16 %v4982
      %v5085 = vunpack.c.l.b16 %v4992
      %v5086 = vunpack.c.l.b16 %v5006
      %v5087 = vunpack.c.l.b16 %v5016
      %v5088 = vunpack.c.l.b16 %v5030
      %v5089 = vunpack.c.l.b16 %v5040
      %v5090 = vpack.c.b16 %v5059, %v5058
      %v5091 = vpack.c.b16 %v5061, %v5060
      %v5092 = vpack.c.b16 %v5063, %v5062
      %v5093 = vpack.c.b16 %v5065, %v5064
      %v5094 = vpack.c.b16 %v5067, %v5066
      %v5095 = vpack.c.b16 %v5069, %v5068
      %v5096 = vpack.c.b16 %v5071, %v5070
      %v5097 = vpack.c.b16 %v5073, %v5072
      %v5098 = vpack.c.b16 %v5075, %v5074
      %v5099 = vpack.c.b16 %v5077, %v5076
      %v5100 = vpack.c.b16 %v5079, %v5078
      %v5101 = vpack.c.b16 %v5081, %v5080
      %v5102 = vpack.c.b16 %v5083, %v5082
      %v5103 = vpack.c.b16 %v5085, %v5084
      %v5104 = vpack.c.b16 %v5087, %v5086
      %v5105 = vpack.c.b16 %v5089, %v5088
      %v5138 = vunpack.c.l.b16 %v5042
      %v5139 = vunpack.c.l.b16 %v5043
      %v5140 = vunpack.c.l.b16 %v5044
      %v5141 = vunpack.c.l.b16 %v5045
      %v5142 = vunpack.c.l.b16 %v5046
      %v5143 = vunpack.c.l.b16 %v5047
      %v5144 = vunpack.c.l.b16 %v5048
      %v5145 = vunpack.c.l.b16 %v5049
      %v5146 = vunpack.c.l.b16 %v5050
      %v5147 = vunpack.c.l.b16 %v5051
      %v5148 = vunpack.c.l.b16 %v5052
      %v5149 = vunpack.c.l.b16 %v5053
      %v5150 = vunpack.c.l.b16 %v5054
      %v5151 = vunpack.c.l.b16 %v5055
      %v5152 = vunpack.c.l.b16 %v5056
      %v5153 = vunpack.c.l.b16 %v5057
      %v5154 = vpack.c.b16 %v5139, %v5138
      %v5155 = vpack.c.b16 %v5141, %v5140
      %v5156 = vpack.c.b16 %v5143, %v5142
      %v5157 = vpack.c.b16 %v5145, %v5144
      %v5158 = vpack.c.b16 %v5147, %v5146
      %v5159 = vpack.c.b16 %v5149, %v5148
      %v5160 = vpack.c.b16 %v5151, %v5150
      %v5161 = vpack.c.b16 %v5153, %v5152
      %5170 = vmatprep.subr.bf16.mxu0 0
      %5171 = vmatpush1.bf16.msra.mxu0 %v5154
      %5172 = vmatprep.subr.bf16.mxu0 0
      %5173 = vmatpush1.bf16.msra.mxu0 %v5155
      %5174 = vmatprep.subr.bf16.mxu0 0
      %5175 = vmatpush1.bf16.msra.mxu0 %v5156
      %5176 = vmatprep.subr.bf16.mxu0 0
      %5177 = vmatpush1.bf16.msra.mxu0 %v5157
      %5178 = vmatprep.subr.bf16.mxu0 0
      %5179 = vmatpush1.bf16.msra.mxu0 %v5158
      %5180 = vmatprep.subr.bf16.mxu0 0
      %5181 = vmatpush1.bf16.msra.mxu0 %v5159
      %5182 = vmatprep.subr.bf16.mxu0 0
      %5183 = vmatpush1.bf16.msra.mxu0 %v5160
      %5184 = vmatprep.subr.bf16.mxu0 0
      %5185 = vmatpush1.bf16.msra.mxu0 %v5161
      %5186 = vmatprep.subr.bf16.mxu0 0
      %5187 = vmatpush1.bf16.msra.mxu0 0
      %5188 = vmatprep.subr.bf16.mxu0 0
      %5189 = vmatpush1.bf16.msra.mxu0 0
      %5190 = vmatprep.subr.bf16.mxu0 0
      %5191 = vmatpush1.bf16.msra.mxu0 0
      %5192 = vmatprep.subr.bf16.mxu0 0
      %5193 = vmatpush1.bf16.msra.mxu0 0
      %5194 = vmatprep.subr.bf16.mxu0 0
      %5195 = vmatpush1.bf16.msra.mxu0 0
      %5196 = vmatprep.subr.bf16.mxu0 0
      %5197 = vmatpush1.bf16.msra.mxu0 0
      %5198 = vmatprep.subr.bf16.mxu0 0
      %5199 = vmatpush1.bf16.msra.mxu0 0
      %5200 = vmatprep.subr.bf16.mxu0 0
      %5201 = vmatpush1.bf16.msra.mxu0 0
      %5202 = vmatprep.mubr.bf16.mxu0 0
      %5203 = vmatmul.mubr.bf16.gmra.mrb[0].mxu0 %v5090
      %v5204 = vpop.f32.mrb[0].mxu0
      %v5205 = vadd.f32 0.0, %v5204
      %v5206 = vpop.f32.mrb[0].mxu0
      %v5207 = vpop.f32.mrb[0].mxu0
      %v5208 = vadd.f32 0.0, %v5207
      %v5209 = vpop.f32.mrb[0].mxu0
      %5210 = vmatprep.mubr.bf16.mxu0 0
      %5211 = vmatmul.mubr.bf16.gmra.mrb[0].mxu0 %v5091
      %v5212 = vpop.f32.mrb[0].mxu0
      %v5213 = vadd.f32 0.0, %v5212
      %v5214 = vpop.f32.mrb[0].mxu0
      %v5215 = vpop.f32.mrb[0].mxu0
      %v5216 = vadd.f32 0.0, %v5215
      %v5217 = vpop.f32.mrb[0].mxu0
      %5218 = vmatprep.mubr.bf16.mxu0 0
      %5219 = vmatmul.mubr.bf16.gmra.mrb[0].mxu0 %v5092
      %v5220 = vpop.f32.mrb[0].mxu0
      %v5221 = vadd.f32 0.0, %v5220
      %v5222 = vpop.f32.mrb[0].mxu0
      %v5223 = vpop.f32.mrb[0].mxu0
      %v5224 = vadd.f32 0.0, %v5223
      %v5225 = vpop.f32.mrb[0].mxu0
      %5226 = vmatprep.mubr.bf16.mxu0 0
      %5227 = vmatmul.mubr.bf16.gmra.mrb[0].mxu0 %v5093
      %v5228 = vpop.f32.mrb[0].mxu0
      %v5229 = vadd.f32 0.0, %v5228
      %v5230 = vpop.f32.mrb[0].mxu0
      %v5231 = vpop.f32.mrb[0].mxu0
      %v5232 = vadd.f32 0.0, %v5231
      %v5233 = vpop.f32.mrb[0].mxu0
      %5234 = vmatprep.mubr.bf16.mxu0 0
      %5235 = vmatmul.mubr.bf16.gmra.mrb[0].mxu0 %v5094
      %v5236 = vpop.f32.mrb[0].mxu0
      %v5237 = vadd.f32 0.0, %v5236
      %v5238 = vpop.f32.mrb[0].mxu0
      %v5239 = vpop.f32.mrb[0].mxu0
      %v5240 = vadd.f32 0.0, %v5239
      %v5241 = vpop.f32.mrb[0].mxu0
      %5242 = vmatprep.mubr.bf16.mxu0 0
      %5243 = vmatmul.mubr.bf16.gmra.mrb[0].mxu0 %v5095
      %v5244 = vpop.f32.mrb[0].mxu0
      %v5245 = vadd.f32 0.0, %v5244
      %v5246 = vpop.f32.mrb[0].mxu0
      %v5247 = vpop.f32.mrb[0].mxu0
      %v5248 = vadd.f32 0.0, %v5247
      %v5249 = vpop.f32.mrb[0].mxu0
      %5250 = vmatprep.mubr.bf16.mxu0 0
      %5251 = vmatmul.mubr.bf16.gmra.mrb[0].mxu0 %v5096
      %v5252 = vpop.f32.mrb[0].mxu0
      %v5253 = vadd.f32 0.0, %v5252
      %v5254 = vpop.f32.mrb[0].mxu0
      %v5255 = vpop.f32.mrb[0].mxu0
      %v5256 = vadd.f32 0.0, %v5255
      %v5257 = vpop.f32.mrb[0].mxu0
      %5258 = vmatprep.mubr.bf16.mxu0 0
      %5259 = vmatmul.mubr.bf16.gmra.mrb[0].mxu0 %v5097
      %v5260 = vpop.f32.mrb[0].mxu0
      %v5261 = vadd.f32 0.0, %v5260
      %v5262 = vpop.f32.mrb[0].mxu0
      %v5263 = vpop.f32.mrb[0].mxu0
      %v5264 = vadd.f32 0.0, %v5263
      %v5265 = vpop.f32.mrb[0].mxu0
      %5266 = vmatprep.mubr.bf16.mxu0 0
      %5267 = vmatmul.mubr.bf16.gmra.mrb[0].mxu0 %v5098
      %v5268 = vpop.f32.mrb[0].mxu0
      %v5269 = vadd.f32 0.0, %v5268
      %v5270 = vpop.f32.mrb[0].mxu0
      %v5271 = vpop.f32.mrb[0].mxu0
      %v5272 = vadd.f32 0.0, %v5271
      %v5273 = vpop.f32.mrb[0].mxu0
      %5274 = vmatprep.mubr.bf16.mxu0 0
      %5275 = vmatmul.mubr.bf16.gmra.mrb[0].mxu0 %v5099
      %v5276 = vpop.f32.mrb[0].mxu0
      %v5277 = vadd.f32 0.0, %v5276
      %v5278 = vpop.f32.mrb[0].mxu0
      %v5279 = vpop.f32.mrb[0].mxu0
      %v5280 = vadd.f32 0.0, %v5279
      %v5281 = vpop.f32.mrb[0].mxu0
      %5282 = vmatprep.mubr.bf16.mxu0 0
      %5283 = vmatmul.mubr.bf16.gmra.mrb[0].mxu0 %v5100
      %v5284 = vpop.f32.mrb[0].mxu0
      %v5285 = vadd.f32 0.0, %v5284
      %v5286 = vpop.f32.mrb[0].mxu0
      %v5287 = vpop.f32.mrb[0].mxu0
      %v5288 = vadd.f32 0.0, %v5287
      %v5289 = vpop.f32.mrb[0].mxu0
      %5290 = vmatprep.mubr.bf16.mxu0 0
      %5291 = vmatmul.mubr.bf16.gmra.mrb[0].mxu0 %v5101
      %v5292 = vpop.f32.mrb[0].mxu0
      %v5293 = vadd.f32 0.0, %v5292
      %v5294 = vpop.f32.mrb[0].mxu0
      %v5295 = vpop.f32.mrb[0].mxu0
      %v5296 = vadd.f32 0.0, %v5295
      %v5297 = vpop.f32.mrb[0].mxu0
      %5298 = vmatprep.mubr.bf16.mxu0 0
      %5299 = vmatmul.mubr.bf16.gmra.mrb[0].mxu0 %v5102
      %v5300 = vpop.f32.mrb[0].mxu0
      %v5301 = vadd.f32 0.0, %v5300
      %v5302 = vpop.f32.mrb[0].mxu0
      %v5303 = vpop.f32.mrb[0].mxu0
      %v5304 = vadd.f32 0.0, %v5303
      %v5305 = vpop.f32.mrb[0].mxu0
      %5306 = vmatprep.mubr.bf16.mxu0 0
      %5307 = vmatmul.mubr.bf16.gmra.mrb[0].mxu0 %v5103
      %v5308 = vpop.f32.mrb[0].mxu0
      %v5309 = vadd.f32 0.0, %v5308
      %v5310 = vpop.f32.mrb[0].mxu0
      %v5311 = vpop.f32.mrb[0].mxu0
      %v5312 = vadd.f32 0.0, %v5311
      %v5313 = vpop.f32.mrb[0].mxu0
      %5314 = vmatprep.mubr.bf16.mxu0 0
      %5315 = vmatmul.mubr.bf16.gmra.mrb[0].mxu0 %v5104
      %v5316 = vpop.f32.mrb[0].mxu0
      %v5317 = vadd.f32 0.0, %v5316
      %v5318 = vpop.f32.mrb[0].mxu0
      %v5319 = vpop.f32.mrb[0].mxu0
      %v5320 = vadd.f32 0.0, %v5319
      %v5321 = vpop.f32.mrb[0].mxu0
      %5322 = vmatprep.mubr.bf16.mxu0 0
      %5323 = vmatmul.mubr.bf16.gmra.mrb[0].mxu0 %v5105
      %v5324 = vpop.f32.mrb[0].mxu0
      %v5325 = vadd.f32 0.0, %v5324
      %v5326 = vpop.f32.mrb[0].mxu0
      %v5327 = vpop.f32.mrb[0].mxu0
      %v5328 = vadd.f32 0.0, %v5327
      %v5329 = vpop.f32.mrb[0].mxu0
      %5330 = vdwg.mxu0
      %v5331 = vadd.f32 %v4577, %v5205
      %v5332 = vadd.f32 %v4578, %v5208
      %v5333 = vadd.f32 %v4579, %v5213
      %v5334 = vadd.f32 %v4580, %v5216
      %v5335 = vadd.f32 %v4581, %v5221
      %v5336 = vadd.f32 %v4582, %v5224
      %v5337 = vadd.f32 %v4583, %v5229
      %v5338 = vadd.f32 %v4584, %v5232
      %v5339 = vadd.f32 %v4585, %v5237
      %v5340 = vadd.f32 %v4586, %v5240
      %v5341 = vadd.f32 %v4587, %v5245
      %v5342 = vadd.f32 %v4588, %v5248
      %v5343 = vadd.f32 %v4589, %v5253
      %v5344 = vadd.f32 %v4590, %v5256
      %v5345 = vadd.f32 %v4591, %v5261
      %v5346 = vadd.f32 %v4592, %v5264
      %v5347 = vadd.f32 %v4593, %v5269
      %v5348 = vadd.f32 %v4594, %v5272
      %v5349 = vadd.f32 %v4595, %v5277
      %v5350 = vadd.f32 %v4596, %v5280
      %v5351 = vadd.f32 %v4597, %v5285
      %v5352 = vadd.f32 %v4598, %v5288
      %v5353 = vadd.f32 %v4599, %v5293
      %v5354 = vadd.f32 %v4600, %v5296
      %v5355 = vadd.f32 %v4601, %v5301
      %v5356 = vadd.f32 %v4602, %v5304
      %v5357 = vadd.f32 %v4603, %v5309
      %v5358 = vadd.f32 %v4604, %v5312
      %v5359 = vadd.f32 %v4605, %v5317
      %v5360 = vadd.f32 %v4606, %v5320
      %v5361 = vadd.f32 %v4607, %v5325
      %v5362 = vadd.f32 %v4608, %v5328
      %v5363 = vld [vmem:[%s4222] sm:$0xe]
      %v5364 = vld [vmem:[%s4222 + $0xc] sm:$0xe]
      %v5365 = vld [vmem:[%s4222 + $0x18] sm:$0xe]
      %v5366 = vld [vmem:[%s4222 + $0x24] sm:$0xe]
      %v5367 = vld [vmem:[%s4222 + $0x30] sm:$0xe]
      %v5368 = vld [vmem:[%s4222 + $0x3c] sm:$0xe]
      %v5369 = vld [vmem:[%s4222 + $0x48] sm:$0xe]
      %v5370 = vld [vmem:[%s4222 + $0x54] sm:$0xe]
      %v5371 = vld [vmem:[%s4222 + $0x60] sm:$0xe]
      %v5372 = vld [vmem:[%s4222 + $0x6c] sm:$0xe]
      %v5373 = vld [vmem:[%s4222 + $0x78] sm:$0xe]
      %v5374 = vld [vmem:[%s4222 + $0x84] sm:$0xe]
      %v5375 = vld [vmem:[%s4222 + $0x90] sm:$0xe]
      %v5376 = vld [vmem:[%s4222 + $0x9c] sm:$0xe]
      %v5377 = vld [vmem:[%s4222 + $0xa8] sm:$0xe]
      %v5378 = vld [vmem:[%s4222 + $0xb4] sm:$0xe]
      %v5427 = vrot.slane %v5363, 5
      %v5428 = vrot.slane %v5427, 4
      %v5429 = vrot.slane %v4610, 5
      %v5430 = vsel %vm2149, %v5428, %v5429
      %v5431 = vrot.slane %v5429, 4
      %v5432 = vrot.slane %v4611, 5
      %v5433 = vsel %vm2149, %v5431, %v5432
      %v5434 = vrot.slane %v5364, 5
      %v5435 = vrot.slane %v5434, 4
      %v5436 = vrot.slane %v4613, 5
      %v5437 = vsel %vm2149, %v5435, %v5436
      %v5438 = vrot.slane %v5436, 4
      %v5439 = vrot.slane %v4614, 5
      %v5440 = vsel %vm2149, %v5438, %v5439
      %v5441 = vrot.slane %v5365, 5
      %v5442 = vrot.slane %v5441, 4
      %v5443 = vrot.slane %v4616, 5
      %v5444 = vsel %vm2149, %v5442, %v5443
      %v5445 = vrot.slane %v5443, 4
      %v5446 = vrot.slane %v4617, 5
      %v5447 = vsel %vm2149, %v5445, %v5446
      %v5448 = vrot.slane %v5366, 5
      %v5449 = vrot.slane %v5448, 4
      %v5450 = vrot.slane %v4619, 5
      %v5451 = vsel %vm2149, %v5449, %v5450
      %v5452 = vrot.slane %v5450, 4
      %v5453 = vrot.slane %v4620, 5
      %v5454 = vsel %vm2149, %v5452, %v5453
      %v5455 = vrot.slane %v5367, 5
      %v5456 = vrot.slane %v5455, 4
      %v5457 = vrot.slane %v4622, 5
      %v5458 = vsel %vm2149, %v5456, %v5457
      %v5459 = vrot.slane %v5457, 4
      %v5460 = vrot.slane %v4623, 5
      %v5461 = vsel %vm2149, %v5459, %v5460
      %v5462 = vrot.slane %v5368, 5
      %v5463 = vrot.slane %v5462, 4
      %v5464 = vrot.slane %v4625, 5
      %v5465 = vsel %vm2149, %v5463, %v5464
      %v5466 = vrot.slane %v5464, 4
      %v5467 = vrot.slane %v4626, 5
      %v5468 = vsel %vm2149, %v5466, %v5467
      %v5469 = vrot.slane %v5369, 5
      %v5470 = vrot.slane %v5469, 4
      %v5471 = vrot.slane %v4628, 5
      %v5472 = vsel %vm2149, %v5470, %v5471
      %v5473 = vrot.slane %v5471, 4
      %v5474 = vrot.slane %v4629, 5
      %v5475 = vsel %vm2149, %v5473, %v5474
      %v5476 = vrot.slane %v5370, 5
      %v5477 = vrot.slane %v5476, 4
      %v5478 = vrot.slane %v4631, 5
      %v5479 = vsel %vm2149, %v5477, %v5478
      %v5480 = vrot.slane %v5478, 4
      %v5481 = vrot.slane %v4632, 5
      %v5482 = vsel %vm2149, %v5480, %v5481
      %v5483 = vrot.slane %v5371, 5
      %v5484 = vrot.slane %v5483, 4
      %v5485 = vrot.slane %v4634, 5
      %v5486 = vsel %vm2149, %v5484, %v5485
      %v5487 = vrot.slane %v5485, 4
      %v5488 = vrot.slane %v4635, 5
      %v5489 = vsel %vm2149, %v5487, %v5488
      %v5490 = vrot.slane %v5372, 5
      %v5491 = vrot.slane %v5490, 4
      %v5492 = vrot.slane %v4637, 5
      %v5493 = vsel %vm2149, %v5491, %v5492
      %v5494 = vrot.slane %v5492, 4
      %v5495 = vrot.slane %v4638, 5
      %v5496 = vsel %vm2149, %v5494, %v5495
      %v5497 = vrot.slane %v5373, 5
      %v5498 = vrot.slane %v5497, 4
      %v5499 = vrot.slane %v4640, 5
      %v5500 = vsel %vm2149, %v5498, %v5499
      %v5501 = vrot.slane %v5499, 4
      %v5502 = vrot.slane %v4641, 5
      %v5503 = vsel %vm2149, %v5501, %v5502
      %v5504 = vrot.slane %v5374, 5
      %v5505 = vrot.slane %v5504, 4
      %v5506 = vrot.slane %v4643, 5
      %v5507 = vsel %vm2149, %v5505, %v5506
      %v5508 = vrot.slane %v5506, 4
      %v5509 = vrot.slane %v4644, 5
      %v5510 = vsel %vm2149, %v5508, %v5509
      %v5511 = vrot.slane %v5375, 5
      %v5512 = vrot.slane %v5511, 4
      %v5513 = vrot.slane %v4646, 5
      %v5514 = vsel %vm2149, %v5512, %v5513
      %v5515 = vrot.slane %v5513, 4
      %v5516 = vrot.slane %v4647, 5
      %v5517 = vsel %vm2149, %v5515, %v5516
      %v5518 = vrot.slane %v5376, 5
      %v5519 = vrot.slane %v5518, 4
      %v5520 = vrot.slane %v4649, 5
      %v5521 = vsel %vm2149, %v5519, %v5520
      %v5522 = vrot.slane %v5520, 4
      %v5523 = vrot.slane %v4650, 5
      %v5524 = vsel %vm2149, %v5522, %v5523
      %v5525 = vrot.slane %v5377, 5
      %v5526 = vrot.slane %v5525, 4
      %v5527 = vrot.slane %v4652, 5
      %v5528 = vsel %vm2149, %v5526, %v5527
      %v5529 = vrot.slane %v5527, 4
      %v5530 = vrot.slane %v4653, 5
      %v5531 = vsel %vm2149, %v5529, %v5530
      %v5532 = vrot.slane %v5378, 5
      %v5533 = vrot.slane %v5532, 4
      %v5534 = vrot.slane %v4655, 5
      %v5535 = vsel %vm2149, %v5533, %v5534
      %v5536 = vrot.slane %v5534, 4
      %v5537 = vrot.slane %v4656, 5
      %v5538 = vsel %vm2149, %v5536, %v5537
      %s5539 = scalar_lea.vmem %s3, 512
      %v5540 = vld [vmem:[%s5539] sm:$0xf]
      %v5541 = vld [vmem:[%s5539 + $0x4] sm:$0xf]
      %v5542 = vld [vmem:[%s5539 + $0x8] sm:$0xf]
      %v5543 = vld [vmem:[%s5539 + $0xc] sm:$0xf]
      %v5544 = vld [vmem:[%s5539 + $0x10] sm:$0xf]
      %v5545 = vld [vmem:[%s5539 + $0x14] sm:$0xf]
      %v5546 = vld [vmem:[%s5539 + $0x18] sm:$0xf]
      %v5547 = vld [vmem:[%s5539 + $0x1c] sm:$0xf]
      %v5548 = vld [vmem:[%s5539 + $0x20] sm:$0xf]
      %v5549 = vld [vmem:[%s5539 + $0x24] sm:$0xf]
      %v5550 = vld [vmem:[%s5539 + $0x28] sm:$0xf]
      %v5551 = vld [vmem:[%s5539 + $0x2c] sm:$0xf]
      %v5552 = vld [vmem:[%s5539 + $0x30] sm:$0xf]
      %v5553 = vld [vmem:[%s5539 + $0x34] sm:$0xf]
      %v5554 = vld [vmem:[%s5539 + $0x38] sm:$0xf]
      %v5555 = vld [vmem:[%s5539 + $0x3c] sm:$0xf]
      %v5556 = vunpack.c.l.b16 %v5430
      %v5557 = vunpack.c.l.b16 %v5433
      %v5558 = vunpack.c.l.b16 %v5437
      %v5559 = vunpack.c.l.b16 %v5440
      %v5560 = vunpack.c.l.b16 %v5444
      %v5561 = vunpack.c.l.b16 %v5447
      %v5562 = vunpack.c.l.b16 %v5451
      %v5563 = vunpack.c.l.b16 %v5454
      %v5564 = vunpack.c.l.b16 %v5458
      %v5565 = vunpack.c.l.b16 %v5461
      %v5566 = vunpack.c.l.b16 %v5465
      %v5567 = vunpack.c.l.b16 %v5468
      %v5568 = vunpack.c.l.b16 %v5472
      %v5569 = vunpack.c.l.b16 %v5475
      %v5570 = vunpack.c.l.b16 %v5479
      %v5571 = vunpack.c.l.b16 %v5482
      %v5572 = vunpack.c.l.b16 %v5486
      %v5573 = vunpack.c.l.b16 %v5489
      %v5574 = vunpack.c.l.b16 %v5493
      %v5575 = vunpack.c.l.b16 %v5496
      %v5576 = vunpack.c.l.b16 %v5500
      %v5577 = vunpack.c.l.b16 %v5503
      %v5578 = vunpack.c.l.b16 %v5507
      %v5579 = vunpack.c.l.b16 %v5510
      %v5580 = vunpack.c.l.b16 %v5514
      %v5581 = vunpack.c.l.b16 %v5517
      %v5582 = vunpack.c.l.b16 %v5521
      %v5583 = vunpack.c.l.b16 %v5524
      %v5584 = vunpack.c.l.b16 %v5528
      %v5585 = vunpack.c.l.b16 %v5531
      %v5586 = vunpack.c.l.b16 %v5535
      %v5587 = vunpack.c.l.b16 %v5538
      %v5588 = vpack.c.b16 %v5557, %v5556
      %v5589 = vpack.c.b16 %v5559, %v5558
      %v5590 = vpack.c.b16 %v5561, %v5560
      %v5591 = vpack.c.b16 %v5563, %v5562
      %v5592 = vpack.c.b16 %v5565, %v5564
      %v5593 = vpack.c.b16 %v5567, %v5566
      %v5594 = vpack.c.b16 %v5569, %v5568
      %v5595 = vpack.c.b16 %v5571, %v5570
      %v5596 = vpack.c.b16 %v5573, %v5572
      %v5597 = vpack.c.b16 %v5575, %v5574
      %v5598 = vpack.c.b16 %v5577, %v5576
      %v5599 = vpack.c.b16 %v5579, %v5578
      %v5600 = vpack.c.b16 %v5581, %v5580
      %v5601 = vpack.c.b16 %v5583, %v5582
      %v5602 = vpack.c.b16 %v5585, %v5584
      %v5603 = vpack.c.b16 %v5587, %v5586
      %v5636 = vunpack.c.l.b16 %v5540
      %v5637 = vunpack.c.l.b16 %v5541
      %v5638 = vunpack.c.l.b16 %v5542
      %v5639 = vunpack.c.l.b16 %v5543
      %v5640 = vunpack.c.l.b16 %v5544
      %v5641 = vunpack.c.l.b16 %v5545
      %v5642 = vunpack.c.l.b16 %v5546
      %v5643 = vunpack.c.l.b16 %v5547
      %v5644 = vunpack.c.l.b16 %v5548
      %v5645 = vunpack.c.l.b16 %v5549
      %v5646 = vunpack.c.l.b16 %v5550
      %v5647 = vunpack.c.l.b16 %v5551
      %v5648 = vunpack.c.l.b16 %v5552
      %v5649 = vunpack.c.l.b16 %v5553
      %v5650 = vunpack.c.l.b16 %v5554
      %v5651 = vunpack.c.l.b16 %v5555
      %v5652 = vpack.c.b16 %v5637, %v5636
      %v5653 = vpack.c.b16 %v5639, %v5638
      %v5654 = vpack.c.b16 %v5641, %v5640
      %v5655 = vpack.c.b16 %v5643, %v5642
      %v5656 = vpack.c.b16 %v5645, %v5644
      %v5657 = vpack.c.b16 %v5647, %v5646
      %v5658 = vpack.c.b16 %v5649, %v5648
      %v5659 = vpack.c.b16 %v5651, %v5650
      %5668 = vmatprep.subr.bf16.mxu0 0
      %5669 = vmatpush1.bf16.msra.mxu0 %v5652
      %5670 = vmatprep.subr.bf16.mxu0 0
      %5671 = vmatpush1.bf16.msra.mxu0 %v5653
      %5672 = vmatprep.subr.bf16.mxu0 0
      %5673 = vmatpush1.bf16.msra.mxu0 %v5654
      %5674 = vmatprep.subr.bf16.mxu0 0
      %5675 = vmatpush1.bf16.msra.mxu0 %v5655
      %5676 = vmatprep.subr.bf16.mxu0 0
      %5677 = vmatpush1.bf16.msra.mxu0 %v5656
      %5678 = vmatprep.subr.bf16.mxu0 0
      %5679 = vmatpush1.bf16.msra.mxu0 %v5657
      %5680 = vmatprep.subr.bf16.mxu0 0
      %5681 = vmatpush1.bf16.msra.mxu0 %v5658
      %5682 = vmatprep.subr.bf16.mxu0 0
      %5683 = vmatpush1.bf16.msra.mxu0 %v5659
      %5684 = vmatprep.subr.bf16.mxu0 0
      %5685 = vmatpush1.bf16.msra.mxu0 0
      %5686 = vmatprep.subr.bf16.mxu0 0
      %5687 = vmatpush1.bf16.msra.mxu0 0
      %5688 = vmatprep.subr.bf16.mxu0 0
      %5689 = vmatpush1.bf16.msra.mxu0 0
      %5690 = vmatprep.subr.bf16.mxu0 0
      %5691 = vmatpush1.bf16.msra.mxu0 0
      %5692 = vmatprep.subr.bf16.mxu0 0
      %5693 = vmatpush1.bf16.msra.mxu0 0
      %5694 = vmatprep.subr.bf16.mxu0 0
      %5695 = vmatpush1.bf16.msra.mxu0 0
      %5696 = vmatprep.subr.bf16.mxu0 0
      %5697 = vmatpush1.bf16.msra.mxu0 0
      %5698 = vmatprep.subr.bf16.mxu0 0
      %5699 = vmatpush1.bf16.msra.mxu0 0
      %5700 = vmatprep.mubr.bf16.mxu0 0
      %5701 = vmatmul.mubr.bf16.gmra.mrb[0].mxu0 %v5588
      %v5702 = vpop.f32.mrb[0].mxu0
      %v5703 = vadd.f32 0.0, %v5702
      %v5704 = vpop.f32.mrb[0].mxu0
      %v5705 = vpop.f32.mrb[0].mxu0
      %v5706 = vadd.f32 0.0, %v5705
      %v5707 = vpop.f32.mrb[0].mxu0
      %5708 = vmatprep.mubr.bf16.mxu0 0
      %5709 = vmatmul.mubr.bf16.gmra.mrb[0].mxu0 %v5589
      %v5710 = vpop.f32.mrb[0].mxu0
      %v5711 = vadd.f32 0.0, %v5710
      %v5712 = vpop.f32.mrb[0].mxu0
      %v5713 = vpop.f32.mrb[0].mxu0
      %v5714 = vadd.f32 0.0, %v5713
      %v5715 = vpop.f32.mrb[0].mxu0
      %5716 = vmatprep.mubr.bf16.mxu0 0
      %5717 = vmatmul.mubr.bf16.gmra.mrb[0].mxu0 %v5590
      %v5718 = vpop.f32.mrb[0].mxu0
      %v5719 = vadd.f32 0.0, %v5718
      %v5720 = vpop.f32.mrb[0].mxu0
      %v5721 = vpop.f32.mrb[0].mxu0
      %v5722 = vadd.f32 0.0, %v5721
      %v5723 = vpop.f32.mrb[0].mxu0
      %5724 = vmatprep.mubr.bf16.mxu0 0
      %5725 = vmatmul.mubr.bf16.gmra.mrb[0].mxu0 %v5591
      %v5726 = vpop.f32.mrb[0].mxu0
      %v5727 = vadd.f32 0.0, %v5726
      %v5728 = vpop.f32.mrb[0].mxu0
      %v5729 = vpop.f32.mrb[0].mxu0
      %v5730 = vadd.f32 0.0, %v5729
      %v5731 = vpop.f32.mrb[0].mxu0
      %5732 = vmatprep.mubr.bf16.mxu0 0
      %5733 = vmatmul.mubr.bf16.gmra.mrb[0].mxu0 %v5592
      %v5734 = vpop.f32.mrb[0].mxu0
      %v5735 = vadd.f32 0.0, %v5734
      %v5736 = vpop.f32.mrb[0].mxu0
      %v5737 = vpop.f32.mrb[0].mxu0
      %v5738 = vadd.f32 0.0, %v5737
      %v5739 = vpop.f32.mrb[0].mxu0
      %5740 = vmatprep.mubr.bf16.mxu0 0
      %5741 = vmatmul.mubr.bf16.gmra.mrb[0].mxu0 %v5593
      %v5742 = vpop.f32.mrb[0].mxu0
      %v5743 = vadd.f32 0.0, %v5742
      %v5744 = vpop.f32.mrb[0].mxu0
      %v5745 = vpop.f32.mrb[0].mxu0
      %v5746 = vadd.f32 0.0, %v5745
      %v5747 = vpop.f32.mrb[0].mxu0
      %5748 = vmatprep.mubr.bf16.mxu0 0
      %5749 = vmatmul.mubr.bf16.gmra.mrb[0].mxu0 %v5594
      %v5750 = vpop.f32.mrb[0].mxu0
      %v5751 = vadd.f32 0.0, %v5750
      %v5752 = vpop.f32.mrb[0].mxu0
      %v5753 = vpop.f32.mrb[0].mxu0
      %v5754 = vadd.f32 0.0, %v5753
      %v5755 = vpop.f32.mrb[0].mxu0
      %5756 = vmatprep.mubr.bf16.mxu0 0
      %5757 = vmatmul.mubr.bf16.gmra.mrb[0].mxu0 %v5595
      %v5758 = vpop.f32.mrb[0].mxu0
      %v5759 = vadd.f32 0.0, %v5758
      %v5760 = vpop.f32.mrb[0].mxu0
      %v5761 = vpop.f32.mrb[0].mxu0
      %v5762 = vadd.f32 0.0, %v5761
      %v5763 = vpop.f32.mrb[0].mxu0
      %5764 = vmatprep.mubr.bf16.mxu0 0
      %5765 = vmatmul.mubr.bf16.gmra.mrb[0].mxu0 %v5596
      %v5766 = vpop.f32.mrb[0].mxu0
      %v5767 = vadd.f32 0.0, %v5766
      %v5768 = vpop.f32.mrb[0].mxu0
      %v5769 = vpop.f32.mrb[0].mxu0
      %v5770 = vadd.f32 0.0, %v5769
      %v5771 = vpop.f32.mrb[0].mxu0
      %5772 = vmatprep.mubr.bf16.mxu0 0
      %5773 = vmatmul.mubr.bf16.gmra.mrb[0].mxu0 %v5597
      %v5774 = vpop.f32.mrb[0].mxu0
      %v5775 = vadd.f32 0.0, %v5774
      %v5776 = vpop.f32.mrb[0].mxu0
      %v5777 = vpop.f32.mrb[0].mxu0
      %v5778 = vadd.f32 0.0, %v5777
      %v5779 = vpop.f32.mrb[0].mxu0
      %5780 = vmatprep.mubr.bf16.mxu0 0
      %5781 = vmatmul.mubr.bf16.gmra.mrb[0].mxu0 %v5598
      %v5782 = vpop.f32.mrb[0].mxu0
      %v5783 = vadd.f32 0.0, %v5782
      %v5784 = vpop.f32.mrb[0].mxu0
      %v5785 = vpop.f32.mrb[0].mxu0
      %v5786 = vadd.f32 0.0, %v5785
      %v5787 = vpop.f32.mrb[0].mxu0
      %5788 = vmatprep.mubr.bf16.mxu0 0
      %5789 = vmatmul.mubr.bf16.gmra.mrb[0].mxu0 %v5599
      %v5790 = vpop.f32.mrb[0].mxu0
      %v5791 = vadd.f32 0.0, %v5790
      %v5792 = vpop.f32.mrb[0].mxu0
      %v5793 = vpop.f32.mrb[0].mxu0
      %v5794 = vadd.f32 0.0, %v5793
      %v5795 = vpop.f32.mrb[0].mxu0
      %5796 = vmatprep.mubr.bf16.mxu0 0
      %5797 = vmatmul.mubr.bf16.gmra.mrb[0].mxu0 %v5600
      %v5798 = vpop.f32.mrb[0].mxu0
      %v5799 = vadd.f32 0.0, %v5798
      %v5800 = vpop.f32.mrb[0].mxu0
      %v5801 = vpop.f32.mrb[0].mxu0
      %v5802 = vadd.f32 0.0, %v5801
      %v5803 = vpop.f32.mrb[0].mxu0
      %5804 = vmatprep.mubr.bf16.mxu0 0
      %5805 = vmatmul.mubr.bf16.gmra.mrb[0].mxu0 %v5601
      %v5806 = vpop.f32.mrb[0].mxu0
      %v5807 = vadd.f32 0.0, %v5806
      %v5808 = vpop.f32.mrb[0].mxu0
      %v5809 = vpop.f32.mrb[0].mxu0
      %v5810 = vadd.f32 0.0, %v5809
      %v5811 = vpop.f32.mrb[0].mxu0
      %5812 = vmatprep.mubr.bf16.mxu0 0
      %5813 = vmatmul.mubr.bf16.gmra.mrb[0].mxu0 %v5602
      %v5814 = vpop.f32.mrb[0].mxu0
      %v5815 = vadd.f32 0.0, %v5814
      %v5816 = vpop.f32.mrb[0].mxu0
      %v5817 = vpop.f32.mrb[0].mxu0
      %v5818 = vadd.f32 0.0, %v5817
      %v5819 = vpop.f32.mrb[0].mxu0
      %5820 = vmatprep.mubr.bf16.mxu0 0
      %5821 = vmatmul.mubr.bf16.gmra.mrb[0].mxu0 %v5603
      %v5822 = vpop.f32.mrb[0].mxu0
      %v5823 = vadd.f32 0.0, %v5822
      %v5824 = vpop.f32.mrb[0].mxu0
      %v5825 = vpop.f32.mrb[0].mxu0
      %v5826 = vadd.f32 0.0, %v5825
      %v5827 = vpop.f32.mrb[0].mxu0
      %5828 = vdwg.mxu0
      %v5829 = vadd.f32 %v5331, %v5703
      %v5830 = vadd.f32 %v5332, %v5706
      %v5831 = vadd.f32 %v5333, %v5711
      %v5832 = vadd.f32 %v5334, %v5714
      %v5833 = vadd.f32 %v5335, %v5719
      %v5834 = vadd.f32 %v5336, %v5722
      %v5835 = vadd.f32 %v5337, %v5727
      %v5836 = vadd.f32 %v5338, %v5730
      %v5837 = vadd.f32 %v5339, %v5735
      %v5838 = vadd.f32 %v5340, %v5738
      %v5839 = vadd.f32 %v5341, %v5743
      %v5840 = vadd.f32 %v5342, %v5746
      %v5841 = vadd.f32 %v5343, %v5751
      %v5842 = vadd.f32 %v5344, %v5754
      %v5843 = vadd.f32 %v5345, %v5759
      %v5844 = vadd.f32 %v5346, %v5762
      %v5845 = vadd.f32 %v5347, %v5767
      %v5846 = vadd.f32 %v5348, %v5770
      %v5847 = vadd.f32 %v5349, %v5775
      %v5848 = vadd.f32 %v5350, %v5778
      %v5849 = vadd.f32 %v5351, %v5783
      %v5850 = vadd.f32 %v5352, %v5786
      %v5851 = vadd.f32 %v5353, %v5791
      %v5852 = vadd.f32 %v5354, %v5794
      %v5853 = vadd.f32 %v5355, %v5799
      %v5854 = vadd.f32 %v5356, %v5802
      %v5855 = vadd.f32 %v5357, %v5807
      %v5856 = vadd.f32 %v5358, %v5810
      %v5857 = vadd.f32 %v5359, %v5815
      %v5858 = vadd.f32 %v5360, %v5818
      %v5859 = vadd.f32 %v5361, %v5823
      %v5860 = vadd.f32 %v5362, %v5826
      %v5861 = vadd.f32 %v5829, %v5830
      %v5862 = vadd.f32 %v5861, %v5831
      %v5863 = vadd.f32 %v5862, %v5832
      %v5864 = vadd.f32 %v5863, %v5833
      %v5865 = vadd.f32 %v5864, %v5834
      %v5866 = vadd.f32 %v5865, %v5835
      %v5867 = vadd.f32 %v5866, %v5836
      %v5868 = vadd.f32 %v5867, %v5837
      %v5869 = vadd.f32 %v5868, %v5838
      %v5870 = vadd.f32 %v5869, %v5839
      %v5871 = vadd.f32 %v5870, %v5840
      %v5872 = vadd.f32 %v5871, %v5841
      %v5873 = vadd.f32 %v5872, %v5842
      %v5874 = vadd.f32 %v5873, %v5843
      %v5875 = vadd.f32 %v5874, %v5844
      %v5876 = vadd.f32 %v5875, %v5845
      %v5877 = vadd.f32 %v5876, %v5846
      %v5878 = vadd.f32 %v5877, %v5847
      %v5879 = vadd.f32 %v5878, %v5848
      %v5880 = vadd.f32 %v5879, %v5849
      %v5881 = vadd.f32 %v5880, %v5850
      %v5882 = vadd.f32 %v5881, %v5851
      %v5883 = vadd.f32 %v5882, %v5852
      %v5884 = vadd.f32 %v5883, %v5853
      %v5885 = vadd.f32 %v5884, %v5854
      %v5886 = vadd.f32 %v5885, %v5855
      %v5887 = vadd.f32 %v5886, %v5856
      %v5888 = vadd.f32 %v5887, %v5857
      %v5889 = vadd.f32 %v5888, %v5858
      %v5890 = vadd.f32 %v5889, %v5859
      %v5891 = vadd.f32 %v5890, %v5860
      %v5892 = vrot.slane %v5891, 4
      %v5893 = vadd.f32 %v5891, %v5892
      %v5894 = vrot.slane %v5893, 2
      %v5895 = vadd.f32 %v5893, %v5894
      %v5896 = vrot.slane %v5895, 1
      %v5897 = vadd.f32 %v5895, %v5896
      %v5898 = vmul.f32 %v5897, 0.00390625
      %v5899 = vsub.f32 %v5829, %v5898
      %v5900 = vsub.f32 %v5830, %v5898
      %v5901 = vsub.f32 %v5831, %v5898
      %v5902 = vsub.f32 %v5832, %v5898
      %v5903 = vsub.f32 %v5833, %v5898
      %v5904 = vsub.f32 %v5834, %v5898
      %v5905 = vsub.f32 %v5835, %v5898
      %v5906 = vsub.f32 %v5836, %v5898
      %v5907 = vsub.f32 %v5837, %v5898
      %v5908 = vsub.f32 %v5838, %v5898
      %v5909 = vsub.f32 %v5839, %v5898
      %v5910 = vsub.f32 %v5840, %v5898
      %v5911 = vsub.f32 %v5841, %v5898
      %v5912 = vsub.f32 %v5842, %v5898
      %v5913 = vsub.f32 %v5843, %v5898
      %v5914 = vsub.f32 %v5844, %v5898
      %v5915 = vsub.f32 %v5845, %v5898
      %v5916 = vsub.f32 %v5846, %v5898
      %v5917 = vsub.f32 %v5847, %v5898
      %v5918 = vsub.f32 %v5848, %v5898
      %v5919 = vsub.f32 %v5849, %v5898
      %v5920 = vsub.f32 %v5850, %v5898
      %v5921 = vsub.f32 %v5851, %v5898
      %v5922 = vsub.f32 %v5852, %v5898
      %v5923 = vsub.f32 %v5853, %v5898
      %v5924 = vsub.f32 %v5854, %v5898
      %v5925 = vsub.f32 %v5855, %v5898
      %v5926 = vsub.f32 %v5856, %v5898
      %v5927 = vsub.f32 %v5857, %v5898
      %v5928 = vsub.f32 %v5858, %v5898
      %v5929 = vsub.f32 %v5859, %v5898
      %v5930 = vsub.f32 %v5860, %v5898
      %v5931 = vmul.f32 %v5899, %v5899
      %v5932 = vmul.f32 %v5900, %v5900
      %v5933 = vmul.f32 %v5901, %v5901
      %v5934 = vmul.f32 %v5902, %v5902
      %v5935 = vmul.f32 %v5903, %v5903
      %v5936 = vmul.f32 %v5904, %v5904
      %v5937 = vmul.f32 %v5905, %v5905
      %v5938 = vmul.f32 %v5906, %v5906
      %v5939 = vmul.f32 %v5907, %v5907
      %v5940 = vmul.f32 %v5908, %v5908
      %v5941 = vmul.f32 %v5909, %v5909
      %v5942 = vmul.f32 %v5910, %v5910
      %v5943 = vmul.f32 %v5911, %v5911
      %v5944 = vmul.f32 %v5912, %v5912
      %v5945 = vmul.f32 %v5913, %v5913
      %v5946 = vmul.f32 %v5914, %v5914
      %v5947 = vmul.f32 %v5915, %v5915
      %v5948 = vmul.f32 %v5916, %v5916
      %v5949 = vmul.f32 %v5917, %v5917
      %v5950 = vmul.f32 %v5918, %v5918
      %v5951 = vmul.f32 %v5919, %v5919
      %v5952 = vmul.f32 %v5920, %v5920
      %v5953 = vmul.f32 %v5921, %v5921
      %v5954 = vmul.f32 %v5922, %v5922
      %v5955 = vmul.f32 %v5923, %v5923
      %v5956 = vmul.f32 %v5924, %v5924
      %v5957 = vmul.f32 %v5925, %v5925
      %v5958 = vmul.f32 %v5926, %v5926
      %v5959 = vmul.f32 %v5927, %v5927
      %v5960 = vmul.f32 %v5928, %v5928
      %v5961 = vmul.f32 %v5929, %v5929
      %v5962 = vmul.f32 %v5930, %v5930
      %v5963 = vadd.f32 %v5931, %v5932
      %v5964 = vadd.f32 %v5963, %v5933
      %v5965 = vadd.f32 %v5964, %v5934
      %v5966 = vadd.f32 %v5965, %v5935
      %v5967 = vadd.f32 %v5966, %v5936
      %v5968 = vadd.f32 %v5967, %v5937
      %v5969 = vadd.f32 %v5968, %v5938
      %v5970 = vadd.f32 %v5969, %v5939
      %v5971 = vadd.f32 %v5970, %v5940
      %v5972 = vadd.f32 %v5971, %v5941
      %v5973 = vadd.f32 %v5972, %v5942
      %v5974 = vadd.f32 %v5973, %v5943
      %v5975 = vadd.f32 %v5974, %v5944
      %v5976 = vadd.f32 %v5975, %v5945
      %v5977 = vadd.f32 %v5976, %v5946
      %v5978 = vadd.f32 %v5977, %v5947
      %v5979 = vadd.f32 %v5978, %v5948
      %v5980 = vadd.f32 %v5979, %v5949
      %v5981 = vadd.f32 %v5980, %v5950
      %v5982 = vadd.f32 %v5981, %v5951
      %v5983 = vadd.f32 %v5982, %v5952
      %v5984 = vadd.f32 %v5983, %v5953
      %v5985 = vadd.f32 %v5984, %v5954
      %v5986 = vadd.f32 %v5985, %v5955
      %v5987 = vadd.f32 %v5986, %v5956
      %v5988 = vadd.f32 %v5987, %v5957
      %v5989 = vadd.f32 %v5988, %v5958
      %v5990 = vadd.f32 %v5989, %v5959
      %v5991 = vadd.f32 %v5990, %v5960
      %v5992 = vadd.f32 %v5991, %v5961
      %v5993 = vadd.f32 %v5992, %v5962
      %v5994 = vrot.slane %v5993, 4
      %v5995 = vadd.f32 %v5993, %v5994
      %v5996 = vrot.slane %v5995, 2
      %v5997 = vadd.f32 %v5995, %v5996
      %v5998 = vrot.slane %v5997, 1
      %v5999 = vadd.f32 %v5997, %v5998
      %6000 = vst [vmem:[%s262] sm:$0xff] %v5829
      %6001 = vst [vmem:[%s262 + $0x8] sm:$0xff] %v5830
      %6002 = vst [vmem:[%s262 + $0x10] sm:$0xff] %v5831
      %6003 = vst [vmem:[%s262 + $0x18] sm:$0xff] %v5832
      %6004 = vst [vmem:[%s262 + $0x20] sm:$0xff] %v5833
      %6005 = vst [vmem:[%s262 + $0x28] sm:$0xff] %v5834
      %6006 = vst [vmem:[%s262 + $0x30] sm:$0xff] %v5835
      %6007 = vst [vmem:[%s262 + $0x38] sm:$0xff] %v5836
      %6008 = vst [vmem:[%s262 + $0x40] sm:$0xff] %v5837
      %6009 = vst [vmem:[%s262 + $0x48] sm:$0xff] %v5838
      %6010 = vst [vmem:[%s262 + $0x50] sm:$0xff] %v5839
      %6011 = vst [vmem:[%s262 + $0x58] sm:$0xff] %v5840
      %6012 = vst [vmem:[%s262 + $0x60] sm:$0xff] %v5841
      %6013 = vst [vmem:[%s262 + $0x68] sm:$0xff] %v5842
      %6014 = vst [vmem:[%s262 + $0x70] sm:$0xff] %v5843
      %6015 = vst [vmem:[%s262 + $0x78] sm:$0xff] %v5844
      %6016 = vst [vmem:[%s262 + $0x80] sm:$0xff] %v5845
      %6017 = vst [vmem:[%s262 + $0x88] sm:$0xff] %v5846
      %6018 = vst [vmem:[%s262 + $0x90] sm:$0xff] %v5847
      %6019 = vst [vmem:[%s262 + $0x98] sm:$0xff] %v5848
      %6020 = vst [vmem:[%s262 + $0xa0] sm:$0xff] %v5849
      %6021 = vst [vmem:[%s262 + $0xa8] sm:$0xff] %v5850
      %6022 = vst [vmem:[%s262 + $0xb0] sm:$0xff] %v5851
      %6023 = vst [vmem:[%s262 + $0xb8] sm:$0xff] %v5852
      %6024 = vst [vmem:[%s262 + $0xc0] sm:$0xff] %v5853
      %6025 = vst [vmem:[%s262 + $0xc8] sm:$0xff] %v5854
      %6026 = vst [vmem:[%s262 + $0xd0] sm:$0xff] %v5855
      %6027 = vst [vmem:[%s262 + $0xd8] sm:$0xff] %v5856
      %6028 = vst [vmem:[%s262 + $0xe0] sm:$0xff] %v5857
      %6029 = vst [vmem:[%s262 + $0xe8] sm:$0xff] %v5858
      %6030 = vst [vmem:[%s262 + $0xf0] sm:$0xff] %v5859
      %6031 = vst [vmem:[%s262 + $0xf8] sm:$0xff] %v5860
      %6032 = vst [vmem:[%s265] sm:$0x1] %v5898
      %6033 = vst [vmem:[%s268] sm:$0x1] %v5999
      %p6034 = scmp.lt.s32.totalorder %s18, 1
      %s6035 = scalar_select %p6034, %s18, 1
      %s6036 = smul.addr %s6035, 32
      %s6037 = smul.addr %s6036, 8
      %s6038 = scalar_lea.vmem %s4, %s6037
      %p6039 = scmp.lt.s32.totalorder %s18, 1
      %s6040 = scalar_select %p6039, %s18, 1
      %s6041 = scalar_lea.vmem %s5, %s6040
      %p6042 = scmp.lt.s32.totalorder %s18, 1
      %s6043 = scalar_select %p6042, %s18, 1
      %s6044 = scalar_lea.vmem %s6, %s6043
      // Predicated region
      $region37: #{basic_block_forward.4} parent=35 // pred_check
        %p6045 = pneg %p125
      $region38: #{basic_block_forward.4} parent=35 // pred_check_branch
        %6047 = sbr.rel (%p6045) target = $region40
      $region39: #{basic_block_forward.4} parent=35 // pred_region
        _
      $region40: #{basic_block_forward.4} parent=35 // pred_fallthru
        _
      // Predicated region
      $region41: #{basic_block_forward.4} parent=35 // pred_check
        %p6048 = pneg %p151
      $region42: #{basic_block_forward.4} parent=35 // pred_check_branch
        %6050 = sbr.rel (%p6048) target = $region44
      $region43: #{basic_block_forward.4} parent=35 // pred_region
        _
      $region44: #{basic_block_forward.4} parent=35 // pred_fallthru
        _
      // Predicated region
      $region45: #{basic_block_forward.4} parent=35 // pred_check
        %p6051 = pneg %p177
      $region46: #{basic_block_forward.4} parent=35 // pred_check_branch
        %6053 = sbr.rel (%p6051) target = $region48
      $region47: #{basic_block_forward.4} parent=35 // pred_region
        _
      $region48: #{basic_block_forward.4} parent=35 // pred_fallthru
        _
    $region36: #{basic_block_forward.4} parent=5 // pred_fallthru
      _
    %p6054 = scmp.le.s32.totalorder 2, %s13
    // Predicated region
    $region49: #{basic_block_forward.4} parent=5 // pred_check
      %p6055 = pneg %p6054
    $region50: #{basic_block_forward.4} parent=5 // pred_check_branch
      %6057 = sbr.rel (%p6055) target = $region52
    $region51: #{basic_block_forward.4} parent=5 // pred_region
      %s6058 = ssub.s32 %s13, 2
      // Predicated region
      $region53: #{basic_block_forward.4} parent=51 // pred_check
        %p6059 = pneg %p131
      $region54: #{basic_block_forward.4} parent=51 // pred_check_branch
        %6061 = sbr.rel (%p6059) target = $region56
      $region55: #{basic_block_forward.4} parent=51 // pred_region
        %p6062 = scmp.lt.s32.totalorder %s19, 1
        %s6063 = scalar_select %p6062, %s19, 1
        %s6064 = smul.addr %s6063, 32
        %s6065 = smul.addr %s6064, 8
        %s6066 = scalar_lea.vmem %s4, %s6065
      $region56: #{basic_block_forward.4} parent=51 // pred_fallthru
        _
      // Predicated region
      $region57: #{basic_block_forward.4} parent=51 // pred_check
        %p6067 = pneg %p157
      $region58: #{basic_block_forward.4} parent=51 // pred_check_branch
        %6069 = sbr.rel (%p6067) target = $region60
      $region59: #{basic_block_forward.4} parent=51 // pred_region
        %p6070 = scmp.lt.s32.totalorder %s19, 1
        %s6071 = scalar_select %p6070, %s19, 1
        %s6072 = scalar_lea.vmem %s5, %s6071
      $region60: #{basic_block_forward.4} parent=51 // pred_fallthru
        _
      // Predicated region
      $region61: #{basic_block_forward.4} parent=51 // pred_check
        %p6073 = pneg %p183
      $region62: #{basic_block_forward.4} parent=51 // pred_check_branch
        %6075 = sbr.rel (%p6073) target = $region64
      $region63: #{basic_block_forward.4} parent=51 // pred_region
        %p6076 = scmp.lt.s32.totalorder %s19, 1
        %s6077 = scalar_select %p6076, %s19, 1
        %s6078 = scalar_lea.vmem %s6, %s6077
      $region64: #{basic_block_forward.4} parent=51 // pred_fallthru
        _
    $region52: #{basic_block_forward.4} parent=5 // pred_fallthru
      _
  $region6: #{basic_block_forward.4} parent=0 // loop_footer
    %s17 = sadd.s32 1, %s13
  $region7: #{basic_block_forward.4} parent=0 // loop_footer_branch
    %12 = sbr.rel target = $region3
  $region8: #{basic_block_forward.4} parent=0 // loop_exit
    _

</llo_original>
